<compile_context>
chip_gen: v5e
topology: v5e:2x2
jax: 0.10.0
libtpu: 0.0.40
codegen_flags: <defaults>
</compile_context>

<pallas_src>
import jax
import jax.numpy as jnp
from jax.experimental import pallas as pl
from jax.experimental.pallas import tpu as pltpu

# Static geometry implied by the module (28x28 input, fc1 expects 3*3*64).
_H0 = 28                 # input spatial
_H1, _C1 = 26, 32        # conv1 output
_P1 = 13                 # pool1 output
_H2, _C2 = 11, 64        # conv2 output
_P2 = 5                  # pool2 output
_H3, _C3 = 3, 64         # conv3 output
_NFC1, _NFC2 = 64, 10


# ----------------------------------------------------------------------------
# In-kernel building blocks (operate on lists of VMEM-resident (W, C) rows;
# only static slices, lane/sublane concats, elementwise max and 2D MXU dots
# are used — all robustly supported by Mosaic).
# ----------------------------------------------------------------------------
def _conv3x3_relu_rows(in_rows, w, b, oh, ow):
    """3x3 valid conv (stride 1) + bias + ReLU.

    in_rows: list of (W, Cin) rows.  w: (9*Cin, Cout) with rows ordered
    (kh, kw, cin).  Returns a list of `oh` rows, each (ow, Cout).
    """
    out_rows = []
    for h in range(oh):
        taps = []
        for kh in range(3):
            row = in_rows[h + kh]                      # (W, Cin)
            for kw in range(3):
                taps.append(row[kw:kw + ow, :])        # (ow, Cin) static slice
        cols = jnp.concatenate(taps, axis=-1)          # (ow, 9*Cin) im2col row
        acc = jnp.dot(cols, w, preferred_element_type=jnp.float32)
        out_rows.append(jnp.maximum(acc + b, 0.0))     # (ow, Cout)
    return out_rows


def _maxpool2x2_rows(in_rows, pw):
    """2x2 / stride-2 max pool (floor, like nn.MaxPool2d) on (W, C) rows."""
    out_rows = []
    for i in range(len(in_rows) // 2):
        r = jnp.maximum(in_rows[2 * i], in_rows[2 * i + 1])            # (W, C)
        cols = [jnp.maximum(r[2 * j:2 * j + 1, :], r[2 * j + 1:2 * j + 2, :])
                for j in range(pw)]                                    # (1, C)
        out_rows.append(jnp.concatenate(cols, axis=0))                 # (pw, C)
    return out_rows


def _mnist_fused_kernel(x_ref, w1_ref, b1_ref, w2_ref, b2_ref, w3_ref, b3_ref,
                        wfc1_ref, bfc1_ref, wfc2_ref, bfc2_ref, o_ref):
    """Entire forward pass for one image; all intermediates stay on-chip."""
    x = x_ref[0]                                       # (28, 28, 1) NHWC
    rows0 = [x[i] for i in range(_H0)]                 # 28 x (28, 1)

    w1, b1 = w1_ref[...], b1_ref[...]
    w2, b2 = w2_ref[...], b2_ref[...]
    w3, b3 = w3_ref[...], b3_ref[...]
    wfc1, bfc1 = wfc1_ref[...], bfc1_ref[...]
    wfc2, bfc2 = wfc2_ref[...], bfc2_ref[...]

    a1 = _conv3x3_relu_rows(rows0, w1, b1, _H1, _H1)   # 26 x (26, 32)
    p1 = _maxpool2x2_rows(a1, _P1)                     # 13 x (13, 32)
    a2 = _conv3x3_relu_rows(p1, w2, b2, _H2, _H2)      # 11 x (11, 64)
    p2 = _maxpool2x2_rows(a2, _P2)                     #  5 x ( 5, 64)
    a3 = _conv3x3_relu_rows(p2, w3, b3, _H3, _H3)      #  3 x ( 3, 64)

    # NHWC (h, w, c) flatten; fc1 weight rows were permuted once in
    # init_params, so this equals PyTorch's NCHW .view(-1, 576) path.
    flat = jnp.concatenate(
        [a3[h][ww:ww + 1, :] for h in range(_H3) for ww in range(_H3)],
        axis=-1)                                       # (1, 576)
    h1 = jnp.maximum(
        jnp.dot(flat, wfc1, preferred_element_type=jnp.float32) + bfc1, 0.0)
    logits = jnp.dot(h1, wfc2, preferred_element_type=jnp.float32) + bfc2
    o_ref[0] = logits.astype(o_ref.dtype)              # only lane-narrow store


# ----------------------------------------------------------------------------
# Host-side wrapper
# ----------------------------------------------------------------------------
def mnist_cnn_forward(x, params):
    """x: (N, 1, 28, 28) float32 (PyTorch NCHW layout). Returns (N, 10)."""
    N = x.shape[0]
    x = x.reshape(N, _H0, _H0, 1)      # NCHW -> NHWC is free because C == 1.

    out = pl.pallas_call(
        _mnist_fused_kernel,
        out_shape=jax.ShapeDtypeStruct((N, 1, _NFC2), jnp.float32),
        grid=(N,),
        in_specs=[
            pl.BlockSpec((1, _H0, _H0, 1), lambda b: (b, 0, 0, 0)),
            pl.BlockSpec((9, _C1), lambda b: (0, 0)),
            pl.BlockSpec((1, _C1), lambda b: (0, 0)),
            pl.BlockSpec((9 * _C1, _C2), lambda b: (0, 0)),
            pl.BlockSpec((1, _C2), lambda b: (0, 0)),
            pl.BlockSpec((9 * _C2, _C3), lambda b: (0, 0)),
            pl.BlockSpec((1, _C3), lambda b: (0, 0)),
            pl.BlockSpec((_H3 * _H3 * _C3, _NFC1), lambda b: (0, 0)),
            pl.BlockSpec((1, _NFC1), lambda b: (0, 0)),
            pl.BlockSpec((_NFC1, _NFC2), lambda b: (0, 0)),
            pl.BlockSpec((1, _NFC2), lambda b: (0, 0)),
        ],
        out_specs=pl.BlockSpec((1, 1, _NFC2), lambda b: (b, 0, 0)),
        compiler_params=pltpu.CompilerParams(
            dimension_semantics=("parallel",),   # v7x: shard batch over 2 TCs
            vmem_limit_bytes=32 * 1024 * 1024,   # well under v7x's 64 MiB cap
        ),
    )(x, params["w1"], params["b1"], params["w2"], params["b2"],
      params["w3"], params["b3"], params["wfc1"], params["bfc1"],
      params["wfc2"], params["bfc2"])
    return out.reshape(N, _NFC2)


def init_params(key):
    """Deterministic synthetic parameters in kernel-friendly (matmul) form."""
    keys = jax.random.split(key, 10)

    def conv_w(k, cout, cin):
        # PyTorch layout (Cout, Cin, 3, 3) -> (9*Cin, Cout), rows (kh, kw, cin).
        w = jax.random.normal(k, (cout, cin, 3, 3), jnp.float32) / jnp.sqrt(9 * cin)
        return jnp.transpose(w, (2, 3, 1, 0)).reshape(9 * cin, cout)

    def lin_w(k, din, dout):
        return jax.random.normal(k, (din, dout), jnp.float32) / jnp.sqrt(din)

    # fc1 generated with rows in PyTorch's NCHW flatten order (c*9 + h*3 + w),
    # then permuted ONCE to NHWC (h*192 + w*64 + c) so the kernel can flatten
    # conv3's output in NHWC order and skip the per-forward transpose.
    wfc1_pt = lin_w(keys[6], _H3 * _H3 * _C3, _NFC1)
    wfc1_nhwc = wfc1_pt.reshape(_C3, _H3, _H3, _NFC1).transpose(1, 2, 0, 3) \
                       .reshape(_H3 * _H3 * _C3, _NFC1)

    return {
        "w1": conv_w(keys[0], _C1, 1),
        "b1": 0.01 * jax.random.normal(keys[1], (1, _C1), jnp.float32),
        "w2": conv_w(keys[2], _C2, _C1),
        "b2": 0.01 * jax.random.normal(keys[3], (1, _C2), jnp.float32),
        "w3": conv_w(keys[4], _C3, _C2),
        "b3": 0.01 * jax.random.normal(keys[5], (1, _C3), jnp.float32),
        "wfc1": wfc1_nhwc,
        "bfc1": 0.01 * jax.random.normal(keys[7], (1, _NFC1), jnp.float32),
        "wfc2": lin_w(keys[8], _NFC1, _NFC2),
        "bfc2": 0.01 * jax.random.normal(keys[9], (1, _NFC2), jnp.float32),
    }


def _mnist_cnn_reference(x, params):
    """Pure-JAX reference with identical math / weight conventions."""
    N = x.shape[0]
    t = x.reshape(N, _H0, _H0, 1)

    def conv(t, wmat, b, cin, cout):
        w = wmat.reshape(3, 3, cin, cout)              # (kh, kw, cin, cout) = HWIO
        y = jax.lax.conv_general_dilated(
            t, w, window_strides=(1, 1), padding="VALID",
            dimension_numbers=("NHWC", "HWIO", "NHWC"),
            precision=jax.lax.Precision.HIGHEST)
        return jnp.maximum(y + b.reshape(1, 1, 1, cout), 0.0)

    def pool(t):
        return jax.lax.reduce_window(t, -jnp.inf, jax.lax.max,
                                     (1, 2, 2, 1), (1, 2, 2, 1), "VALID")

    t = conv(t, params["w1"], params["b1"], 1, _C1)
    t = pool(t)
    t = conv(t, params["w2"], params["b2"], _C1, _C2)
    t = pool(t)
    t = conv(t, params["w3"], params["b3"], _C2, _C3)
    flat = t.reshape(N, _H3 * _H3 * _C3)               # NHWC flatten
    h1 = jnp.maximum(
        jnp.dot(flat, params["wfc1"], precision=jax.lax.Precision.HIGHEST)
        + params["bfc1"], 0.0)
    return jnp.dot(h1, params["wfc2"],
                   precision=jax.lax.Precision.HIGHEST) + params["bfc2"]


if __name__ == "__main__":
    key = jax.random.PRNGKey(0)
    k_params, k_x = jax.random.split(key)
    params = init_params(k_params)

    # Spatial size is fixed at 28x28 by fc1 (3*3*64); batch kept small.
    x = jax.random.normal(k_x, (2, 1, 28, 28), jnp.float32)

    fwd = jax.jit(mnist_cnn_forward)
    out = fwd(x, params)
    jax.block_until_ready(out)
    assert out.shape == (2, 10) and out.dtype == jnp.float32

    # Cross-check the fused kernel against the pure-JAX reference (loose
    # tolerance: MXU f32 pass selection may differ between Mosaic and XLA).
    ref = _mnist_cnn_reference(x, params)
    assert jnp.allclose(out, ref, atol=5e-2, rtol=5e-2), float(
        jnp.max(jnp.abs(out - ref)))

    print("KERNEL_OK")
</pallas_src>

<mosaic_0001>
module attributes {stable_mosaic.version = 11 : i64} {
  func.func @_mnist_fused_kernel(%arg0: i32, %arg1: memref<1x28x28x1xf32, #tpu.memory_space<vmem>>, %arg2: memref<9x32xf32, #tpu.memory_space<vmem>>, %arg3: memref<1x32xf32, #tpu.memory_space<vmem>>, %arg4: memref<288x64xf32, #tpu.memory_space<vmem>>, %arg5: memref<1x64xf32, #tpu.memory_space<vmem>>, %arg6: memref<576x64xf32, #tpu.memory_space<vmem>>, %arg7: memref<1x64xf32, #tpu.memory_space<vmem>>, %arg8: memref<576x64xf32, #tpu.memory_space<vmem>>, %arg9: memref<1x64xf32, #tpu.memory_space<vmem>>, %arg10: memref<64x10xf32, #tpu.memory_space<vmem>>, %arg11: memref<1x10xf32, #tpu.memory_space<vmem>>, %arg12: memref<1x1x10xf32, #tpu.memory_space<vmem>>) attributes {dimension_semantics = [#tpu.dimension_semantics<parallel>], iteration_bounds = array<i64: 2>, scalar_prefetch = 0 : i64, scratch_operands = 0 : i64, tpu.core_type = #tpu.core_type<tc>, window_params = [{transform_indices = @transform_0, window_bounds = array<i64: 1, 28, 28, 1>}, {pipeline_mode = #tpu.pipeline_mode<synchronous>, transform_indices = @transform_1, window_bounds = array<i64: 9, 32>}, {pipeline_mode = #tpu.pipeline_mode<synchronous>, transform_indices = @transform_2, window_bounds = array<i64: 1, 32>}, {pipeline_mode = #tpu.pipeline_mode<synchronous>, transform_indices = @transform_3, window_bounds = array<i64: 288, 64>}, {pipeline_mode = #tpu.pipeline_mode<synchronous>, transform_indices = @transform_4, window_bounds = array<i64: 1, 64>}, {pipeline_mode = #tpu.pipeline_mode<synchronous>, transform_indices = @transform_5, window_bounds = array<i64: 576, 64>}, {pipeline_mode = #tpu.pipeline_mode<synchronous>, transform_indices = @transform_6, window_bounds = array<i64: 1, 64>}, {pipeline_mode = #tpu.pipeline_mode<synchronous>, transform_indices = @transform_7, window_bounds = array<i64: 576, 64>}, {pipeline_mode = #tpu.pipeline_mode<synchronous>, transform_indices = @transform_8, window_bounds = array<i64: 1, 64>}, {pipeline_mode = #tpu.pipeline_mode<synchronous>, transform_indices = @transform_9, window_bounds = array<i64: 64, 10>}, {pipeline_mode = #tpu.pipeline_mode<synchronous>, transform_indices = @transform_10, window_bounds = array<i64: 1, 10>}, {transform_indices = @transform_11, window_bounds = array<i64: 1, 1, 10>}]} {
    %c0 = arith.constant 0 : index
    %c0_0 = arith.constant 0 : index
    %c0_1 = arith.constant 0 : index
    %c0_2 = arith.constant 0 : index
    %0 = vector.load %arg1[%c0, %c0_0, %c0_1, %c0_2] : memref<1x28x28x1xf32, #tpu.memory_space<vmem>>, vector<1x28x28x1xf32>
    %1 = vector.shape_cast %0 : vector<1x28x28x1xf32> to vector<28x28x1xf32>
    %2 = vector.extract_strided_slice %1 {offsets = [0, 0, 0], sizes = [1, 28, 1], strides = [1, 1, 1]} : vector<28x28x1xf32> to vector<1x28x1xf32>
    %3 = vector.shape_cast %2 : vector<1x28x1xf32> to vector<28x1xf32>
    %4 = vector.extract_strided_slice %1 {offsets = [1, 0, 0], sizes = [1, 28, 1], strides = [1, 1, 1]} : vector<28x28x1xf32> to vector<1x28x1xf32>
    %5 = vector.shape_cast %4 : vector<1x28x1xf32> to vector<28x1xf32>
    %6 = vector.extract_strided_slice %1 {offsets = [2, 0, 0], sizes = [1, 28, 1], strides = [1, 1, 1]} : vector<28x28x1xf32> to vector<1x28x1xf32>
    %7 = vector.shape_cast %6 : vector<1x28x1xf32> to vector<28x1xf32>
    %8 = vector.extract_strided_slice %1 {offsets = [3, 0, 0], sizes = [1, 28, 1], strides = [1, 1, 1]} : vector<28x28x1xf32> to vector<1x28x1xf32>
    %9 = vector.shape_cast %8 : vector<1x28x1xf32> to vector<28x1xf32>
    %10 = vector.extract_strided_slice %1 {offsets = [4, 0, 0], sizes = [1, 28, 1], strides = [1, 1, 1]} : vector<28x28x1xf32> to vector<1x28x1xf32>
    %11 = vector.shape_cast %10 : vector<1x28x1xf32> to vector<28x1xf32>
    %12 = vector.extract_strided_slice %1 {offsets = [5, 0, 0], sizes = [1, 28, 1], strides = [1, 1, 1]} : vector<28x28x1xf32> to vector<1x28x1xf32>
    %13 = vector.shape_cast %12 : vector<1x28x1xf32> to vector<28x1xf32>
    %14 = vector.extract_strided_slice %1 {offsets = [6, 0, 0], sizes = [1, 28, 1], strides = [1, 1, 1]} : vector<28x28x1xf32> to vector<1x28x1xf32>
    %15 = vector.shape_cast %14 : vector<1x28x1xf32> to vector<28x1xf32>
    %16 = vector.extract_strided_slice %1 {offsets = [7, 0, 0], sizes = [1, 28, 1], strides = [1, 1, 1]} : vector<28x28x1xf32> to vector<1x28x1xf32>
    %17 = vector.shape_cast %16 : vector<1x28x1xf32> to vector<28x1xf32>
    %18 = vector.extract_strided_slice %1 {offsets = [8, 0, 0], sizes = [1, 28, 1], strides = [1, 1, 1]} : vector<28x28x1xf32> to vector<1x28x1xf32>
    %19 = vector.shape_cast %18 : vector<1x28x1xf32> to vector<28x1xf32>
    %20 = vector.extract_strided_slice %1 {offsets = [9, 0, 0], sizes = [1, 28, 1], strides = [1, 1, 1]} : vector<28x28x1xf32> to vector<1x28x1xf32>
    %21 = vector.shape_cast %20 : vector<1x28x1xf32> to vector<28x1xf32>
    %22 = vector.extract_strided_slice %1 {offsets = [10, 0, 0], sizes = [1, 28, 1], strides = [1, 1, 1]} : vector<28x28x1xf32> to vector<1x28x1xf32>
    %23 = vector.shape_cast %22 : vector<1x28x1xf32> to vector<28x1xf32>
    %24 = vector.extract_strided_slice %1 {offsets = [11, 0, 0], sizes = [1, 28, 1], strides = [1, 1, 1]} : vector<28x28x1xf32> to vector<1x28x1xf32>
    %25 = vector.shape_cast %24 : vector<1x28x1xf32> to vector<28x1xf32>
    %26 = vector.extract_strided_slice %1 {offsets = [12, 0, 0], sizes = [1, 28, 1], strides = [1, 1, 1]} : vector<28x28x1xf32> to vector<1x28x1xf32>
    %27 = vector.shape_cast %26 : vector<1x28x1xf32> to vector<28x1xf32>
    %28 = vector.extract_strided_slice %1 {offsets = [13, 0, 0], sizes = [1, 28, 1], strides = [1, 1, 1]} : vector<28x28x1xf32> to vector<1x28x1xf32>
    %29 = vector.shape_cast %28 : vector<1x28x1xf32> to vector<28x1xf32>
    %30 = vector.extract_strided_slice %1 {offsets = [14, 0, 0], sizes = [1, 28, 1], strides = [1, 1, 1]} : vector<28x28x1xf32> to vector<1x28x1xf32>
    %31 = vector.shape_cast %30 : vector<1x28x1xf32> to vector<28x1xf32>
    %32 = vector.extract_strided_slice %1 {offsets = [15, 0, 0], sizes = [1, 28, 1], strides = [1, 1, 1]} : vector<28x28x1xf32> to vector<1x28x1xf32>
    %33 = vector.shape_cast %32 : vector<1x28x1xf32> to vector<28x1xf32>
    %34 = vector.extract_strided_slice %1 {offsets = [16, 0, 0], sizes = [1, 28, 1], strides = [1, 1, 1]} : vector<28x28x1xf32> to vector<1x28x1xf32>
    %35 = vector.shape_cast %34 : vector<1x28x1xf32> to vector<28x1xf32>
    %36 = vector.extract_strided_slice %1 {offsets = [17, 0, 0], sizes = [1, 28, 1], strides = [1, 1, 1]} : vector<28x28x1xf32> to vector<1x28x1xf32>
    %37 = vector.shape_cast %36 : vector<1x28x1xf32> to vector<28x1xf32>
    %38 = vector.extract_strided_slice %1 {offsets = [18, 0, 0], sizes = [1, 28, 1], strides = [1, 1, 1]} : vector<28x28x1xf32> to vector<1x28x1xf32>
    %39 = vector.shape_cast %38 : vector<1x28x1xf32> to vector<28x1xf32>
    %40 = vector.extract_strided_slice %1 {offsets = [19, 0, 0], sizes = [1, 28, 1], strides = [1, 1, 1]} : vector<28x28x1xf32> to vector<1x28x1xf32>
    %41 = vector.shape_cast %40 : vector<1x28x1xf32> to vector<28x1xf32>
    %42 = vector.extract_strided_slice %1 {offsets = [20, 0, 0], sizes = [1, 28, 1], strides = [1, 1, 1]} : vector<28x28x1xf32> to vector<1x28x1xf32>
    %43 = vector.shape_cast %42 : vector<1x28x1xf32> to vector<28x1xf32>
    %44 = vector.extract_strided_slice %1 {offsets = [21, 0, 0], sizes = [1, 28, 1], strides = [1, 1, 1]} : vector<28x28x1xf32> to vector<1x28x1xf32>
    %45 = vector.shape_cast %44 : vector<1x28x1xf32> to vector<28x1xf32>
    %46 = vector.extract_strided_slice %1 {offsets = [22, 0, 0], sizes = [1, 28, 1], strides = [1, 1, 1]} : vector<28x28x1xf32> to vector<1x28x1xf32>
    %47 = vector.shape_cast %46 : vector<1x28x1xf32> to vector<28x1xf32>
    %48 = vector.extract_strided_slice %1 {offsets = [23, 0, 0], sizes = [1, 28, 1], strides = [1, 1, 1]} : vector<28x28x1xf32> to vector<1x28x1xf32>
    %49 = vector.shape_cast %48 : vector<1x28x1xf32> to vector<28x1xf32>
    %50 = vector.extract_strided_slice %1 {offsets = [24, 0, 0], sizes = [1, 28, 1], strides = [1, 1, 1]} : vector<28x28x1xf32> to vector<1x28x1xf32>
    %51 = vector.shape_cast %50 : vector<1x28x1xf32> to vector<28x1xf32>
    %52 = vector.extract_strided_slice %1 {offsets = [25, 0, 0], sizes = [1, 28, 1], strides = [1, 1, 1]} : vector<28x28x1xf32> to vector<1x28x1xf32>
    %53 = vector.shape_cast %52 : vector<1x28x1xf32> to vector<28x1xf32>
    %c0_3 = arith.constant 0 : index
    %c0_4 = arith.constant 0 : index
    %54 = vector.load %arg2[%c0_3, %c0_4] : memref<9x32xf32, #tpu.memory_space<vmem>>, vector<9x32xf32>
    %c0_5 = arith.constant 0 : index
    %c0_6 = arith.constant 0 : index
    %55 = vector.load %arg3[%c0_5, %c0_6] : memref<1x32xf32, #tpu.memory_space<vmem>>, vector<1x32xf32>
    %c0_7 = arith.constant 0 : index
    %c0_8 = arith.constant 0 : index
    %56 = vector.load %arg4[%c0_7, %c0_8] : memref<288x64xf32, #tpu.memory_space<vmem>>, vector<288x64xf32>
    %c0_9 = arith.constant 0 : index
    %c0_10 = arith.constant 0 : index
    %57 = vector.load %arg5[%c0_9, %c0_10] : memref<1x64xf32, #tpu.memory_space<vmem>>, vector<1x64xf32>
    %c0_11 = arith.constant 0 : index
    %c0_12 = arith.constant 0 : index
    %58 = vector.load %arg6[%c0_11, %c0_12] : memref<576x64xf32, #tpu.memory_space<vmem>>, vector<576x64xf32>
    %c0_13 = arith.constant 0 : index
    %c0_14 = arith.constant 0 : index
    %59 = vector.load %arg7[%c0_13, %c0_14] : memref<1x64xf32, #tpu.memory_space<vmem>>, vector<1x64xf32>
    %c0_15 = arith.constant 0 : index
    %c0_16 = arith.constant 0 : index
    %60 = vector.load %arg8[%c0_15, %c0_16] : memref<576x64xf32, #tpu.memory_space<vmem>>, vector<576x64xf32>
    %c0_17 = arith.constant 0 : index
    %c0_18 = arith.constant 0 : index
    %61 = vector.load %arg9[%c0_17, %c0_18] : memref<1x64xf32, #tpu.memory_space<vmem>>, vector<1x64xf32>
    %c0_19 = arith.constant 0 : index
    %c0_20 = arith.constant 0 : index
    %62 = vector.load %arg10[%c0_19, %c0_20] : memref<64x10xf32, #tpu.memory_space<vmem>>, vector<64x10xf32>
    %c0_21 = arith.constant 0 : index
    %c0_22 = arith.constant 0 : index
    %63 = vector.load %arg11[%c0_21, %c0_22] : memref<1x10xf32, #tpu.memory_space<vmem>>, vector<1x10xf32>
    %64 = vector.extract_strided_slice %3 {offsets = [0, 0], sizes = [26, 1], strides = [1, 1]} : vector<28x1xf32> to vector<26x1xf32>
    %65 = vector.extract_strided_slice %3 {offsets = [1, 0], sizes = [26, 1], strides = [1, 1]} : vector<28x1xf32> to vector<26x1xf32>
    %66 = vector.extract_strided_slice %3 {offsets = [2, 0], sizes = [26, 1], strides = [1, 1]} : vector<28x1xf32> to vector<26x1xf32>
    %67 = vector.extract_strided_slice %5 {offsets = [0, 0], sizes = [26, 1], strides = [1, 1]} : vector<28x1xf32> to vector<26x1xf32>
    %68 = vector.extract_strided_slice %5 {offsets = [1, 0], sizes = [26, 1], strides = [1, 1]} : vector<28x1xf32> to vector<26x1xf32>
    %69 = vector.extract_strided_slice %5 {offsets = [2, 0], sizes = [26, 1], strides = [1, 1]} : vector<28x1xf32> to vector<26x1xf32>
    %70 = vector.extract_strided_slice %7 {offsets = [0, 0], sizes = [26, 1], strides = [1, 1]} : vector<28x1xf32> to vector<26x1xf32>
    %71 = vector.extract_strided_slice %7 {offsets = [1, 0], sizes = [26, 1], strides = [1, 1]} : vector<28x1xf32> to vector<26x1xf32>
    %72 = vector.extract_strided_slice %7 {offsets = [2, 0], sizes = [26, 1], strides = [1, 1]} : vector<28x1xf32> to vector<26x1xf32>
    %73 = tpu.concatenate %64, %65, %66, %67, %68, %69, %70, %71, %72 in 1 : vector<26x1xf32>, vector<26x1xf32>, vector<26x1xf32>, vector<26x1xf32>, vector<26x1xf32>, vector<26x1xf32>, vector<26x1xf32>, vector<26x1xf32>, vector<26x1xf32> -> vector<26x9xf32>
    %cst = arith.constant dense<0.000000e+00> : vector<26x32xf32>
    %74 = tpu.matmul %73, %54, %cst {dimension_numbers = #tpu.dot_dimension_numbers<[1], [0], [0], [1], [0, 0, 1, 1], [], []>} : vector<26x9xf32>, vector<9x32xf32>, vector<26x32xf32> -> vector<26x32xf32>
    %75 = vector.broadcast %55 : vector<1x32xf32> to vector<26x32xf32>
    %76 = arith.addf %74, %75 : vector<26x32xf32>
    %cst_23 = arith.constant 0.000000e+00 : f32
    %77 = vector.broadcast %cst_23 : f32 to vector<26x32xf32>
    %78 = arith.maximumf %76, %77 : vector<26x32xf32>
    %79 = vector.extract_strided_slice %5 {offsets = [0, 0], sizes = [26, 1], strides = [1, 1]} : vector<28x1xf32> to vector<26x1xf32>
    %80 = vector.extract_strided_slice %5 {offsets = [1, 0], sizes = [26, 1], strides = [1, 1]} : vector<28x1xf32> to vector<26x1xf32>
    %81 = vector.extract_strided_slice %5 {offsets = [2, 0], sizes = [26, 1], strides = [1, 1]} : vector<28x1xf32> to vector<26x1xf32>
    %82 = vector.extract_strided_slice %7 {offsets = [0, 0], sizes = [26, 1], strides = [1, 1]} : vector<28x1xf32> to vector<26x1xf32>
    %83 = vector.extract_strided_slice %7 {offsets = [1, 0], sizes = [26, 1], strides = [1, 1]} : vector<28x1xf32> to vector<26x1xf32>
    %84 = vector.extract_strided_slice %7 {offsets = [2, 0], sizes = [26, 1], strides = [1, 1]} : vector<28x1xf32> to vector<26x1xf32>
    %85 = vector.extract_strided_slice %9 {offsets = [0, 0], sizes = [26, 1], strides = [1, 1]} : vector<28x1xf32> to vector<26x1xf32>
    %86 = vector.extract_strided_slice %9 {offsets = [1, 0], sizes = [26, 1], strides = [1, 1]} : vector<28x1xf32> to vector<26x1xf32>
    %87 = vector.extract_strided_slice %9 {offsets = [2, 0], sizes = [26, 1], strides = [1, 1]} : vector<28x1xf32> to vector<26x1xf32>
    %88 = tpu.concatenate %79, %80, %81, %82, %83, %84, %85, %86, %87 in 1 : vector<26x1xf32>, vector<26x1xf32>, vector<26x1xf32>, vector<26x1xf32>, vector<26x1xf32>, vector<26x1xf32>, vector<26x1xf32>, vector<26x1xf32>, vector<26x1xf32> -> vector<26x9xf32>
    %cst_24 = arith.constant dense<0.000000e+00> : vector<26x32xf32>
    %89 = tpu.matmul %88, %54, %cst_24 {dimension_numbers = #tpu.dot_dimension_numbers<[1], [0], [0], [1], [0, 0, 1, 1], [], []>} : vector<26x9xf32>, vector<9x32xf32>, vector<26x32xf32> -> vector<26x32xf32>
    %90 = vector.broadcast %55 : vector<1x32xf32> to vector<26x32xf32>
    %91 = arith.addf %89, %90 : vector<26x32xf32>
    %cst_25 = arith.constant 0.000000e+00 : f32
    %92 = vector.broadcast %cst_25 : f32 to vector<26x32xf32>
    %93 = arith.maximumf %91, %92 : vector<26x32xf32>
    %94 = vector.extract_strided_slice %7 {offsets = [0, 0], sizes = [26, 1], strides = [1, 1]} : vector<28x1xf32> to vector<26x1xf32>
    %95 = vector.extract_strided_slice %7 {offsets = [1, 0], sizes = [26, 1], strides = [1, 1]} : vector<28x1xf32> to vector<26x1xf32>
    %96 = vector.extract_strided_slice %7 {offsets = [2, 0], sizes = [26, 1], strides = [1, 1]} : vector<28x1xf32> to vector<26x1xf32>
    %97 = vector.extract_strided_slice %9 {offsets = [0, 0], sizes = [26, 1], strides = [1, 1]} : vector<28x1xf32> to vector<26x1xf32>
    %98 = vector.extract_strided_slice %9 {offsets = [1, 0], sizes = [26, 1], strides = [1, 1]} : vector<28x1xf32> to vector<26x1xf32>
    %99 = vector.extract_strided_slice %9 {offsets = [2, 0], sizes = [26, 1], strides = [1, 1]} : vector<28x1xf32> to vector<26x1xf32>
    %100 = vector.extract_strided_slice %11 {offsets = [0, 0], sizes = [26, 1], strides = [1, 1]} : vector<28x1xf32> to vector<26x1xf32>
    %101 = vector.extract_strided_slice %11 {offsets = [1, 0], sizes = [26, 1], strides = [1, 1]} : vector<28x1xf32> to vector<26x1xf32>
    %102 = vector.extract_strided_slice %11 {offsets = [2, 0], sizes = [26, 1], strides = [1, 1]} : vector<28x1xf32> to vector<26x1xf32>
    %103 = tpu.concatenate %94, %95, %96, %97, %98, %99, %100, %101, %102 in 1 : vector<26x1xf32>, vector<26x1xf32>, vector<26x1xf32>, vector<26x1xf32>, vector<26x1xf32>, vector<26x1xf32>, vector<26x1xf32>, vector<26x1xf32>, vector<26x1xf32> -> vector<26x9xf32>
    %cst_26 = arith.constant dense<0.000000e+00> : vector<26x32xf32>
    %104 = tpu.matmul %103, %54, %cst_26 {dimension_numbers = #tpu.dot_dimension_numbers<[1], [0], [0], [1], [0, 0, 1, 1], [], []>} : vector<26x9xf32>, vector<9x32xf32>, vector<26x32xf32> -> vector<26x32xf32>
    %105 = vector.broadcast %55 : vector<1x32xf32> to vector<26x32xf32>
    %106 = arith.addf %104, %105 : vector<26x32xf32>
    %cst_27 = arith.constant 0.000000e+00 : f32
    %107 = vector.broadcast %cst_27 : f32 to vector<26x32xf32>
    %108 = arith.maximumf %106, %107 : vector<26x32xf32>
    %109 = vector.extract_strided_slice %9 {offsets = [0, 0], sizes = [26, 1], strides = [1, 1]} : vector<28x1xf32> to vector<26x1xf32>
    %110 = vector.extract_strided_slice %9 {offsets = [1, 0], sizes = [26, 1], strides = [1, 1]} : vector<28x1xf32> to vector<26x1xf32>
    %111 = vector.extract_strided_slice %9 {offsets = [2, 0], sizes = [26, 1], strides = [1, 1]} : vector<28x1xf32> to vector<26x1xf32>
    %112 = vector.extract_strided_slice %11 {offsets = [0, 0], sizes = [26, 1], strides = [1, 1]} : vector<28x1xf32> to vector<26x1xf32>
    %113 = vector.extract_strided_slice %11 {offsets = [1, 0], sizes = [26, 1], strides = [1, 1]} : vector<28x1xf32> to vector<26x1xf32>
    %114 = vector.extract_strided_slice %11 {offsets = [2, 0], sizes = [26, 1], strides = [1, 1]} : vector<28x1xf32> to vector<26x1xf32>
    %115 = vector.extract_strided_slice %13 {offsets = [0, 0], sizes = [26, 1], strides = [1, 1]} : vector<28x1xf32> to vector<26x1xf32>
    %116 = vector.extract_strided_slice %13 {offsets = [1, 0], sizes = [26, 1], strides = [1, 1]} : vector<28x1xf32> to vector<26x1xf32>
    %117 = vector.extract_strided_slice %13 {offsets = [2, 0], sizes = [26, 1], strides = [1, 1]} : vector<28x1xf32> to vector<26x1xf32>
    %118 = tpu.concatenate %109, %110, %111, %112, %113, %114, %115, %116, %117 in 1 : vector<26x1xf32>, vector<26x1xf32>, vector<26x1xf32>, vector<26x1xf32>, vector<26x1xf32>, vector<26x1xf32>, vector<26x1xf32>, vector<26x1xf32>, vector<26x1xf32> -> vector<26x9xf32>
    %cst_28 = arith.constant dense<0.000000e+00> : vector<26x32xf32>
    %119 = tpu.matmul %118, %54, %cst_28 {dimension_numbers = #tpu.dot_dimension_numbers<[1], [0], [0], [1], [0, 0, 1, 1], [], []>} : vector<26x9xf32>, vector<9x32xf32>, vector<26x32xf32> -> vector<26x32xf32>
    %120 = vector.broadcast %55 : vector<1x32xf32> to vector<26x32xf32>
    %121 = arith.addf %119, %120 : vector<26x32xf32>
    %cst_29 = arith.constant 0.000000e+00 : f32
    %122 = vector.broadcast %cst_29 : f32 to vector<26x32xf32>
    %123 = arith.maximumf %121, %122 : vector<26x32xf32>
    %124 = vector.extract_strided_slice %11 {offsets = [0, 0], sizes = [26, 1], strides = [1, 1]} : vector<28x1xf32> to vector<26x1xf32>
    %125 = vector.extract_strided_slice %11 {offsets = [1, 0], sizes = [26, 1], strides = [1, 1]} : vector<28x1xf32> to vector<26x1xf32>
    %126 = vector.extract_strided_slice %11 {offsets = [2, 0], sizes = [26, 1], strides = [1, 1]} : vector<28x1xf32> to vector<26x1xf32>
    %127 = vector.extract_strided_slice %13 {offsets = [0, 0], sizes = [26, 1], strides = [1, 1]} : vector<28x1xf32> to vector<26x1xf32>
    %128 = vector.extract_strided_slice %13 {offsets = [1, 0], sizes = [26, 1], strides = [1, 1]} : vector<28x1xf32> to vector<26x1xf32>
    %129 = vector.extract_strided_slice %13 {offsets = [2, 0], sizes = [26, 1], strides = [1, 1]} : vector<28x1xf32> to vector<26x1xf32>
    %130 = vector.extract_strided_slice %15 {offsets = [0, 0], sizes = [26, 1], strides = [1, 1]} : vector<28x1xf32> to vector<26x1xf32>
    %131 = vector.extract_strided_slice %15 {offsets = [1, 0], sizes = [26, 1], strides = [1, 1]} : vector<28x1xf32> to vector<26x1xf32>
    %132 = vector.extract_strided_slice %15 {offsets = [2, 0], sizes = [26, 1], strides = [1, 1]} : vector<28x1xf32> to vector<26x1xf32>
    %133 = tpu.concatenate %124, %125, %126, %127, %128, %129, %130, %131, %132 in 1 : vector<26x1xf32>, vector<26x1xf32>, vector<26x1xf32>, vector<26x1xf32>, vector<26x1xf32>, vector<26x1xf32>, vector<26x1xf32>, vector<26x1xf32>, vector<26x1xf32> -> vector<26x9xf32>
    %cst_30 = arith.constant dense<0.000000e+00> : vector<26x32xf32>
    %134 = tpu.matmul %133, %54, %cst_30 {dimension_numbers = #tpu.dot_dimension_numbers<[1], [0], [0], [1], [0, 0, 1, 1], [], []>} : vector<26x9xf32>, vector<9x32xf32>, vector<26x32xf32> -> vector<26x32xf32>
    %135 = vector.broadcast %55 : vector<1x32xf32> to vector<26x32xf32>
    %136 = arith.addf %134, %135 : vector<26x32xf32>
    %cst_31 = arith.constant 0.000000e+00 : f32
    %137 = vector.broadcast %cst_31 : f32 to vector<26x32xf32>
    %138 = arith.maximumf %136, %137 : vector<26x32xf32>
    %139 = vector.extract_strided_slice %13 {offsets = [0, 0], sizes = [26, 1], strides = [1, 1]} : vector<28x1xf32> to vector<26x1xf32>
    %140 = vector.extract_strided_slice %13 {offsets = [1, 0], sizes = [26, 1], strides = [1, 1]} : vector<28x1xf32> to vector<26x1xf32>
    %141 = vector.extract_strided_slice %13 {offsets = [2, 0], sizes = [26, 1], strides = [1, 1]} : vector<28x1xf32> to vector<26x1xf32>
    %142 = vector.extract_strided_slice %15 {offsets = [0, 0], sizes = [26, 1], strides = [1, 1]} : vector<28x1xf32> to vector<26x1xf32>
    %143 = vector.extract_strided_slice %15 {offsets = [1, 0], sizes = [26, 1], strides = [1, 1]} : vector<28x1xf32> to vector<26x1xf32>
    %144 = vector.extract_strided_slice %15 {offsets = [2, 0], sizes = [26, 1], strides = [1, 1]} : vector<28x1xf32> to vector<26x1xf32>
    %145 = vector.extract_strided_slice %17 {offsets = [0, 0], sizes = [26, 1], strides = [1, 1]} : vector<28x1xf32> to vector<26x1xf32>
    %146 = vector.extract_strided_slice %17 {offsets = [1, 0], sizes = [26, 1], strides = [1, 1]} : vector<28x1xf32> to vector<26x1xf32>
    %147 = vector.extract_strided_slice %17 {offsets = [2, 0], sizes = [26, 1], strides = [1, 1]} : vector<28x1xf32> to vector<26x1xf32>
    %148 = tpu.concatenate %139, %140, %141, %142, %143, %144, %145, %146, %147 in 1 : vector<26x1xf32>, vector<26x1xf32>, vector<26x1xf32>, vector<26x1xf32>, vector<26x1xf32>, vector<26x1xf32>, vector<26x1xf32>, vector<26x1xf32>, vector<26x1xf32> -> vector<26x9xf32>
    %cst_32 = arith.constant dense<0.000000e+00> : vector<26x32xf32>
    %149 = tpu.matmul %148, %54, %cst_32 {dimension_numbers = #tpu.dot_dimension_numbers<[1], [0], [0], [1], [0, 0, 1, 1], [], []>} : vector<26x9xf32>, vector<9x32xf32>, vector<26x32xf32> -> vector<26x32xf32>
    %150 = vector.broadcast %55 : vector<1x32xf32> to vector<26x32xf32>
    %151 = arith.addf %149, %150 : vector<26x32xf32>
    %cst_33 = arith.constant 0.000000e+00 : f32
    %152 = vector.broadcast %cst_33 : f32 to vector<26x32xf32>
    %153 = arith.maximumf %151, %152 : vector<26x32xf32>
    %154 = vector.extract_strided_slice %15 {offsets = [0, 0], sizes = [26, 1], strides = [1, 1]} : vector<28x1xf32> to vector<26x1xf32>
    %155 = vector.extract_strided_slice %15 {offsets = [1, 0], sizes = [26, 1], strides = [1, 1]} : vector<28x1xf32> to vector<26x1xf32>
    %156 = vector.extract_strided_slice %15 {offsets = [2, 0], sizes = [26, 1], strides = [1, 1]} : vector<28x1xf32> to vector<26x1xf32>
    %157 = vector.extract_strided_slice %17 {offsets = [0, 0], sizes = [26, 1], strides = [1, 1]} : vector<28x1xf32> to vector<26x1xf32>
    %158 = vector.extract_strided_slice %17 {offsets = [1, 0], sizes = [26, 1], strides = [1, 1]} : vector<28x1xf32> to vector<26x1xf32>
    %159 = vector.extract_strided_slice %17 {offsets = [2, 0], sizes = [26, 1], strides = [1, 1]} : vector<28x1xf32> to vector<26x1xf32>
    %160 = vector.extract_strided_slice %19 {offsets = [0, 0], sizes = [26, 1], strides = [1, 1]} : vector<28x1xf32> to vector<26x1xf32>
    %161 = vector.extract_strided_slice %19 {offsets = [1, 0], sizes = [26, 1], strides = [1, 1]} : vector<28x1xf32> to vector<26x1xf32>
    %162 = vector.extract_strided_slice %19 {offsets = [2, 0], sizes = [26, 1], strides = [1, 1]} : vector<28x1xf32> to vector<26x1xf32>
    %163 = tpu.concatenate %154, %155, %156, %157, %158, %159, %160, %161, %162 in 1 : vector<26x1xf32>, vector<26x1xf32>, vector<26x1xf32>, vector<26x1xf32>, vector<26x1xf32>, vector<26x1xf32>, vector<26x1xf32>, vector<26x1xf32>, vector<26x1xf32> -> vector<26x9xf32>
    %cst_34 = arith.constant dense<0.000000e+00> : vector<26x32xf32>
    %164 = tpu.matmul %163, %54, %cst_34 {dimension_numbers = #tpu.dot_dimension_numbers<[1], [0], [0], [1], [0, 0, 1, 1], [], []>} : vector<26x9xf32>, vector<9x32xf32>, vector<26x32xf32> -> vector<26x32xf32>
    %165 = vector.broadcast %55 : vector<1x32xf32> to vector<26x32xf32>
    %166 = arith.addf %164, %165 : vector<26x32xf32>
    %cst_35 = arith.constant 0.000000e+00 : f32
    %167 = vector.broadcast %cst_35 : f32 to vector<26x32xf32>
    %168 = arith.maximumf %166, %167 : vector<26x32xf32>
    %169 = vector.extract_strided_slice %17 {offsets = [0, 0], sizes = [26, 1], strides = [1, 1]} : vector<28x1xf32> to vector<26x1xf32>
    %170 = vector.extract_strided_slice %17 {offsets = [1, 0], sizes = [26, 1], strides = [1, 1]} : vector<28x1xf32> to vector<26x1xf32>
    %171 = vector.extract_strided_slice %17 {offsets = [2, 0], sizes = [26, 1], strides = [1, 1]} : vector<28x1xf32> to vector<26x1xf32>
    %172 = vector.extract_strided_slice %19 {offsets = [0, 0], sizes = [26, 1], strides = [1, 1]} : vector<28x1xf32> to vector<26x1xf32>
    %173 = vector.extract_strided_slice %19 {offsets = [1, 0], sizes = [26, 1], strides = [1, 1]} : vector<28x1xf32> to vector<26x1xf32>
    %174 = vector.extract_strided_slice %19 {offsets = [2, 0], sizes = [26, 1], strides = [1, 1]} : vector<28x1xf32> to vector<26x1xf32>
    %175 = vector.extract_strided_slice %21 {offsets = [0, 0], sizes = [26, 1], strides = [1, 1]} : vector<28x1xf32> to vector<26x1xf32>
    %176 = vector.extract_strided_slice %21 {offsets = [1, 0], sizes = [26, 1], strides = [1, 1]} : vector<28x1xf32> to vector<26x1xf32>
    %177 = vector.extract_strided_slice %21 {offsets = [2, 0], sizes = [26, 1], strides = [1, 1]} : vector<28x1xf32> to vector<26x1xf32>
    %178 = tpu.concatenate %169, %170, %171, %172, %173, %174, %175, %176, %177 in 1 : vector<26x1xf32>, vector<26x1xf32>, vector<26x1xf32>, vector<26x1xf32>, vector<26x1xf32>, vector<26x1xf32>, vector<26x1xf32>, vector<26x1xf32>, vector<26x1xf32> -> vector<26x9xf32>
    %cst_36 = arith.constant dense<0.000000e+00> : vector<26x32xf32>
    %179 = tpu.matmul %178, %54, %cst_36 {dimension_numbers = #tpu.dot_dimension_numbers<[1], [0], [0], [1], [0, 0, 1, 1], [], []>} : vector<26x9xf32>, vector<9x32xf32>, vector<26x32xf32> -> vector<26x32xf32>
    %180 = vector.broadcast %55 : vector<1x32xf32> to vector<26x32xf32>
    %181 = arith.addf %179, %180 : vector<26x32xf32>
    %cst_37 = arith.constant 0.000000e+00 : f32
    %182 = vector.broadcast %cst_37 : f32 to vector<26x32xf32>
    %183 = arith.maximumf %181, %182 : vector<26x32xf32>
    %184 = vector.extract_strided_slice %19 {offsets = [0, 0], sizes = [26, 1], strides = [1, 1]} : vector<28x1xf32> to vector<26x1xf32>
    %185 = vector.extract_strided_slice %19 {offsets = [1, 0], sizes = [26, 1], strides = [1, 1]} : vector<28x1xf32> to vector<26x1xf32>
    %186 = vector.extract_strided_slice %19 {offsets = [2, 0], sizes = [26, 1], strides = [1, 1]} : vector<28x1xf32> to vector<26x1xf32>
    %187 = vector.extract_strided_slice %21 {offsets = [0, 0], sizes = [26, 1], strides = [1, 1]} : vector<28x1xf32> to vector<26x1xf32>
    %188 = vector.extract_strided_slice %21 {offsets = [1, 0], sizes = [26, 1], strides = [1, 1]} : vector<28x1xf32> to vector<26x1xf32>
    %189 = vector.extract_strided_slice %21 {offsets = [2, 0], sizes = [26, 1], strides = [1, 1]} : vector<28x1xf32> to vector<26x1xf32>
    %190 = vector.extract_strided_slice %23 {offsets = [0, 0], sizes = [26, 1], strides = [1, 1]} : vector<28x1xf32> to vector<26x1xf32>
    %191 = vector.extract_strided_slice %23 {offsets = [1, 0], sizes = [26, 1], strides = [1, 1]} : vector<28x1xf32> to vector<26x1xf32>
    %192 = vector.extract_strided_slice %23 {offsets = [2, 0], sizes = [26, 1], strides = [1, 1]} : vector<28x1xf32> to vector<26x1xf32>
    %193 = tpu.concatenate %184, %185, %186, %187, %188, %189, %190, %191, %192 in 1 : vector<26x1xf32>, vector<26x1xf32>, vector<26x1xf32>, vector<26x1xf32>, vector<26x1xf32>, vector<26x1xf32>, vector<26x1xf32>, vector<26x1xf32>, vector<26x1xf32> -> vector<26x9xf32>
    %cst_38 = arith.constant dense<0.000000e+00> : vector<26x32xf32>
    %194 = tpu.matmul %193, %54, %cst_38 {dimension_numbers = #tpu.dot_dimension_numbers<[1], [0], [0], [1], [0, 0, 1, 1], [], []>} : vector<26x9xf32>, vector<9x32xf32>, vector<26x32xf32> -> vector<26x32xf32>
    %195 = vector.broadcast %55 : vector<1x32xf32> to vector<26x32xf32>
    %196 = arith.addf %194, %195 : vector<26x32xf32>
    %cst_39 = arith.constant 0.000000e+00 : f32
    %197 = vector.broadcast %cst_39 : f32 to vector<26x32xf32>
    %198 = arith.maximumf %196, %197 : vector<26x32xf32>
    %199 = vector.extract_strided_slice %21 {offsets = [0, 0], sizes = [26, 1], strides = [1, 1]} : vector<28x1xf32> to vector<26x1xf32>
    %200 = vector.extract_strided_slice %21 {offsets = [1, 0], sizes = [26, 1], strides = [1, 1]} : vector<28x1xf32> to vector<26x1xf32>
    %201 = vector.extract_strided_slice %21 {offsets = [2, 0], sizes = [26, 1], strides = [1, 1]} : vector<28x1xf32> to vector<26x1xf32>
    %202 = vector.extract_strided_slice %23 {offsets = [0, 0], sizes = [26, 1], strides = [1, 1]} : vector<28x1xf32> to vector<26x1xf32>
    %203 = vector.extract_strided_slice %23 {offsets = [1, 0], sizes = [26, 1], strides = [1, 1]} : vector<28x1xf32> to vector<26x1xf32>
    %204 = vector.extract_strided_slice %23 {offsets = [2, 0], sizes = [26, 1], strides = [1, 1]} : vector<28x1xf32> to vector<26x1xf32>
    %205 = vector.extract_strided_slice %25 {offsets = [0, 0], sizes = [26, 1], strides = [1, 1]} : vector<28x1xf32> to vector<26x1xf32>
    %206 = vector.extract_strided_slice %25 {offsets = [1, 0], sizes = [26, 1], strides = [1, 1]} : vector<28x1xf32> to vector<26x1xf32>
    %207 = vector.extract_strided_slice %25 {offsets = [2, 0], sizes = [26, 1], strides = [1, 1]} : vector<28x1xf32> to vector<26x1xf32>
    %208 = tpu.concatenate %199, %200, %201, %202, %203, %204, %205, %206, %207 in 1 : vector<26x1xf32>, vector<26x1xf32>, vector<26x1xf32>, vector<26x1xf32>, vector<26x1xf32>, vector<26x1xf32>, vector<26x1xf32>, vector<26x1xf32>, vector<26x1xf32> -> vector<26x9xf32>
    %cst_40 = arith.constant dense<0.000000e+00> : vector<26x32xf32>
    %209 = tpu.matmul %208, %54, %cst_40 {dimension_numbers = #tpu.dot_dimension_numbers<[1], [0], [0], [1], [0, 0, 1, 1], [], []>} : vector<26x9xf32>, vector<9x32xf32>, vector<26x32xf32> -> vector<26x32xf32>
    %210 = vector.broadcast %55 : vector<1x32xf32> to vector<26x32xf32>
    %211 = arith.addf %209, %210 : vector<26x32xf32>
    %cst_41 = arith.constant 0.000000e+00 : f32
    %212 = vector.broadcast %cst_41 : f32 to vector<26x32xf32>
    %213 = arith.maximumf %211, %212 : vector<26x32xf32>
    %214 = vector.extract_strided_slice %23 {offsets = [0, 0], sizes = [26, 1], strides = [1, 1]} : vector<28x1xf32> to vector<26x1xf32>
    %215 = vector.extract_strided_slice %23 {offsets = [1, 0], sizes = [26, 1], strides = [1, 1]} : vector<28x1xf32> to vector<26x1xf32>
    %216 = vector.extract_strided_slice %23 {offsets = [2, 0], sizes = [26, 1], strides = [1, 1]} : vector<28x1xf32> to vector<26x1xf32>
    %217 = vector.extract_strided_slice %25 {offsets = [0, 0], sizes = [26, 1], strides = [1, 1]} : vector<28x1xf32> to vector<26x1xf32>
    %218 = vector.extract_strided_slice %25 {offsets = [1, 0], sizes = [26, 1], strides = [1, 1]} : vector<28x1xf32> to vector<26x1xf32>
    %219 = vector.extract_strided_slice %25 {offsets = [2, 0], sizes = [26, 1], strides = [1, 1]} : vector<28x1xf32> to vector<26x1xf32>
    %220 = vector.extract_strided_slice %27 {offsets = [0, 0], sizes = [26, 1], strides = [1, 1]} : vector<28x1xf32> to vector<26x1xf32>
    %221 = vector.extract_strided_slice %27 {offsets = [1, 0], sizes = [26, 1], strides = [1, 1]} : vector<28x1xf32> to vector<26x1xf32>
    %222 = vector.extract_strided_slice %27 {offsets = [2, 0], sizes = [26, 1], strides = [1, 1]} : vector<28x1xf32> to vector<26x1xf32>
    %223 = tpu.concatenate %214, %215, %216, %217, %218, %219, %220, %221, %222 in 1 : vector<26x1xf32>, vector<26x1xf32>, vector<26x1xf32>, vector<26x1xf32>, vector<26x1xf32>, vector<26x1xf32>, vector<26x1xf32>, vector<26x1xf32>, vector<26x1xf32> -> vector<26x9xf32>
    %cst_42 = arith.constant dense<0.000000e+00> : vector<26x32xf32>
    %224 = tpu.matmul %223, %54, %cst_42 {dimension_numbers = #tpu.dot_dimension_numbers<[1], [0], [0], [1], [0, 0, 1, 1], [], []>} : vector<26x9xf32>, vector<9x32xf32>, vector<26x32xf32> -> vector<26x32xf32>
    %225 = vector.broadcast %55 : vector<1x32xf32> to vector<26x32xf32>
    %226 = arith.addf %224, %225 : vector<26x32xf32>
    %cst_43 = arith.constant 0.000000e+00 : f32
    %227 = vector.broadcast %cst_43 : f32 to vector<26x32xf32>
    %228 = arith.maximumf %226, %227 : vector<26x32xf32>
    %229 = vector.extract_strided_slice %25 {offsets = [0, 0], sizes = [26, 1], strides = [1, 1]} : vector<28x1xf32> to vector<26x1xf32>
    %230 = vector.extract_strided_slice %25 {offsets = [1, 0], sizes = [26, 1], strides = [1, 1]} : vector<28x1xf32> to vector<26x1xf32>
    %231 = vector.extract_strided_slice %25 {offsets = [2, 0], sizes = [26, 1], strides = [1, 1]} : vector<28x1xf32> to vector<26x1xf32>
    %232 = vector.extract_strided_slice %27 {offsets = [0, 0], sizes = [26, 1], strides = [1, 1]} : vector<28x1xf32> to vector<26x1xf32>
    %233 = vector.extract_strided_slice %27 {offsets = [1, 0], sizes = [26, 1], strides = [1, 1]} : vector<28x1xf32> to vector<26x1xf32>
    %234 = vector.extract_strided_slice %27 {offsets = [2, 0], sizes = [26, 1], strides = [1, 1]} : vector<28x1xf32> to vector<26x1xf32>
    %235 = vector.extract_strided_slice %29 {offsets = [0, 0], sizes = [26, 1], strides = [1, 1]} : vector<28x1xf32> to vector<26x1xf32>
    %236 = vector.extract_strided_slice %29 {offsets = [1, 0], sizes = [26, 1], strides = [1, 1]} : vector<28x1xf32> to vector<26x1xf32>
    %237 = vector.extract_strided_slice %29 {offsets = [2, 0], sizes = [26, 1], strides = [1, 1]} : vector<28x1xf32> to vector<26x1xf32>
    %238 = tpu.concatenate %229, %230, %231, %232, %233, %234, %235, %236, %237 in 1 : vector<26x1xf32>, vector<26x1xf32>, vector<26x1xf32>, vector<26x1xf32>, vector<26x1xf32>, vector<26x1xf32>, vector<26x1xf32>, vector<26x1xf32>, vector<26x1xf32> -> vector<26x9xf32>
    %cst_44 = arith.constant dense<0.000000e+00> : vector<26x32xf32>
    %239 = tpu.matmul %238, %54, %cst_44 {dimension_numbers = #tpu.dot_dimension_numbers<[1], [0], [0], [1], [0, 0, 1, 1], [], []>} : vector<26x9xf32>, vector<9x32xf32>, vector<26x32xf32> -> vector<26x32xf32>
    %240 = vector.broadcast %55 : vector<1x32xf32> to vector<26x32xf32>
    %241 = arith.addf %239, %240 : vector<26x32xf32>
    %cst_45 = arith.constant 0.000000e+00 : f32
    %242 = vector.broadcast %cst_45 : f32 to vector<26x32xf32>
    %243 = arith.maximumf %241, %242 : vector<26x32xf32>
    %244 = vector.extract_strided_slice %27 {offsets = [0, 0], sizes = [26, 1], strides = [1, 1]} : vector<28x1xf32> to vector<26x1xf32>
    %245 = vector.extract_strided_slice %27 {offsets = [1, 0], sizes = [26, 1], strides = [1, 1]} : vector<28x1xf32> to vector<26x1xf32>
    %246 = vector.extract_strided_slice %27 {offsets = [2, 0], sizes = [26, 1], strides = [1, 1]} : vector<28x1xf32> to vector<26x1xf32>
    %247 = vector.extract_strided_slice %29 {offsets = [0, 0], sizes = [26, 1], strides = [1, 1]} : vector<28x1xf32> to vector<26x1xf32>
    %248 = vector.extract_strided_slice %29 {offsets = [1, 0], sizes = [26, 1], strides = [1, 1]} : vector<28x1xf32> to vector<26x1xf32>
    %249 = vector.extract_strided_slice %29 {offsets = [2, 0], sizes = [26, 1], strides = [1, 1]} : vector<28x1xf32> to vector<26x1xf32>
    %250 = vector.extract_strided_slice %31 {offsets = [0, 0], sizes = [26, 1], strides = [1, 1]} : vector<28x1xf32> to vector<26x1xf32>
    %251 = vector.extract_strided_slice %31 {offsets = [1, 0], sizes = [26, 1], strides = [1, 1]} : vector<28x1xf32> to vector<26x1xf32>
    %252 = vector.extract_strided_slice %31 {offsets = [2, 0], sizes = [26, 1], strides = [1, 1]} : vector<28x1xf32> to vector<26x1xf32>
    %253 = tpu.concatenate %244, %245, %246, %247, %248, %249, %250, %251, %252 in 1 : vector<26x1xf32>, vector<26x1xf32>, vector<26x1xf32>, vector<26x1xf32>, vector<26x1xf32>, vector<26x1xf32>, vector<26x1xf32>, vector<26x1xf32>, vector<26x1xf32> -> vector<26x9xf32>
    %cst_46 = arith.constant dense<0.000000e+00> : vector<26x32xf32>
    %254 = tpu.matmul %253, %54, %cst_46 {dimension_numbers = #tpu.dot_dimension_numbers<[1], [0], [0], [1], [0, 0, 1, 1], [], []>} : vector<26x9xf32>, vector<9x32xf32>, vector<26x32xf32> -> vector<26x32xf32>
    %255 = vector.broadcast %55 : vector<1x32xf32> to vector<26x32xf32>
    %256 = arith.addf %254, %255 : vector<26x32xf32>
    %cst_47 = arith.constant 0.000000e+00 : f32
    %257 = vector.broadcast %cst_47 : f32 to vector<26x32xf32>
    %258 = arith.maximumf %256, %257 : vector<26x32xf32>
    %259 = vector.extract_strided_slice %29 {offsets = [0, 0], sizes = [26, 1], strides = [1, 1]} : vector<28x1xf32> to vector<26x1xf32>
    %260 = vector.extract_strided_slice %29 {offsets = [1, 0], sizes = [26, 1], strides = [1, 1]} : vector<28x1xf32> to vector<26x1xf32>
    %261 = vector.extract_strided_slice %29 {offsets = [2, 0], sizes = [26, 1], strides = [1, 1]} : vector<28x1xf32> to vector<26x1xf32>
    %262 = vector.extract_strided_slice %31 {offsets = [0, 0], sizes = [26, 1], strides = [1, 1]} : vector<28x1xf32> to vector<26x1xf32>
    %263 = vector.extract_strided_slice %31 {offsets = [1, 0], sizes = [26, 1], strides = [1, 1]} : vector<28x1xf32> to vector<26x1xf32>
    %264 = vector.extract_strided_slice %31 {offsets = [2, 0], sizes = [26, 1], strides = [1, 1]} : vector<28x1xf32> to vector<26x1xf32>
    %265 = vector.extract_strided_slice %33 {offsets = [0, 0], sizes = [26, 1], strides = [1, 1]} : vector<28x1xf32> to vector<26x1xf32>
    %266 = vector.extract_strided_slice %33 {offsets = [1, 0], sizes = [26, 1], strides = [1, 1]} : vector<28x1xf32> to vector<26x1xf32>
    %267 = vector.extract_strided_slice %33 {offsets = [2, 0], sizes = [26, 1], strides = [1, 1]} : vector<28x1xf32> to vector<26x1xf32>
    %268 = tpu.concatenate %259, %260, %261, %262, %263, %264, %265, %266, %267 in 1 : vector<26x1xf32>, vector<26x1xf32>, vector<26x1xf32>, vector<26x1xf32>, vector<26x1xf32>, vector<26x1xf32>, vector<26x1xf32>, vector<26x1xf32>, vector<26x1xf32> -> vector<26x9xf32>
    %cst_48 = arith.constant dense<0.000000e+00> : vector<26x32xf32>
    %269 = tpu.matmul %268, %54, %cst_48 {dimension_numbers = #tpu.dot_dimension_numbers<[1], [0], [0], [1], [0, 0, 1, 1], [], []>} : vector<26x9xf32>, vector<9x32xf32>, vector<26x32xf32> -> vector<26x32xf32>
    %270 = vector.broadcast %55 : vector<1x32xf32> to vector<26x32xf32>
    %271 = arith.addf %269, %270 : vector<26x32xf32>
    %cst_49 = arith.constant 0.000000e+00 : f32
    %272 = vector.broadcast %cst_49 : f32 to vector<26x32xf32>
    %273 = arith.maximumf %271, %272 : vector<26x32xf32>
    %274 = vector.extract_strided_slice %31 {offsets = [0, 0], sizes = [26, 1], strides = [1, 1]} : vector<28x1xf32> to vector<26x1xf32>
    %275 = vector.extract_strided_slice %31 {offsets = [1, 0], sizes = [26, 1], strides = [1, 1]} : vector<28x1xf32> to vector<26x1xf32>
    %276 = vector.extract_strided_slice %31 {offsets = [2, 0], sizes = [26, 1], strides = [1, 1]} : vector<28x1xf32> to vector<26x1xf32>
    %277 = vector.extract_strided_slice %33 {offsets = [0, 0], sizes = [26, 1], strides = [1, 1]} : vector<28x1xf32> to vector<26x1xf32>
    %278 = vector.extract_strided_slice %33 {offsets = [1, 0], sizes = [26, 1], strides = [1, 1]} : vector<28x1xf32> to vector<26x1xf32>
    %279 = vector.extract_strided_slice %33 {offsets = [2, 0], sizes = [26, 1], strides = [1, 1]} : vector<28x1xf32> to vector<26x1xf32>
    %280 = vector.extract_strided_slice %35 {offsets = [0, 0], sizes = [26, 1], strides = [1, 1]} : vector<28x1xf32> to vector<26x1xf32>
    %281 = vector.extract_strided_slice %35 {offsets = [1, 0], sizes = [26, 1], strides = [1, 1]} : vector<28x1xf32> to vector<26x1xf32>
    %282 = vector.extract_strided_slice %35 {offsets = [2, 0], sizes = [26, 1], strides = [1, 1]} : vector<28x1xf32> to vector<26x1xf32>
    %283 = tpu.concatenate %274, %275, %276, %277, %278, %279, %280, %281, %282 in 1 : vector<26x1xf32>, vector<26x1xf32>, vector<26x1xf32>, vector<26x1xf32>, vector<26x1xf32>, vector<26x1xf32>, vector<26x1xf32>, vector<26x1xf32>, vector<26x1xf32> -> vector<26x9xf32>
    %cst_50 = arith.constant dense<0.000000e+00> : vector<26x32xf32>
    %284 = tpu.matmul %283, %54, %cst_50 {dimension_numbers = #tpu.dot_dimension_numbers<[1], [0], [0], [1], [0, 0, 1, 1], [], []>} : vector<26x9xf32>, vector<9x32xf32>, vector<26x32xf32> -> vector<26x32xf32>
    %285 = vector.broadcast %55 : vector<1x32xf32> to vector<26x32xf32>
    %286 = arith.addf %284, %285 : vector<26x32xf32>
    %cst_51 = arith.constant 0.000000e+00 : f32
    %287 = vector.broadcast %cst_51 : f32 to vector<26x32xf32>
    %288 = arith.maximumf %286, %287 : vector<26x32xf32>
    %289 = vector.extract_strided_slice %33 {offsets = [0, 0], sizes = [26, 1], strides = [1, 1]} : vector<28x1xf32> to vector<26x1xf32>
    %290 = vector.extract_strided_slice %33 {offsets = [1, 0], sizes = [26, 1], strides = [1, 1]} : vector<28x1xf32> to vector<26x1xf32>
    %291 = vector.extract_strided_slice %33 {offsets = [2, 0], sizes = [26, 1], strides = [1, 1]} : vector<28x1xf32> to vector<26x1xf32>
    %292 = vector.extract_strided_slice %35 {offsets = [0, 0], sizes = [26, 1], strides = [1, 1]} : vector<28x1xf32> to vector<26x1xf32>
    %293 = vector.extract_strided_slice %35 {offsets = [1, 0], sizes = [26, 1], strides = [1, 1]} : vector<28x1xf32> to vector<26x1xf32>
    %294 = vector.extract_strided_slice %35 {offsets = [2, 0], sizes = [26, 1], strides = [1, 1]} : vector<28x1xf32> to vector<26x1xf32>
    %295 = vector.extract_strided_slice %37 {offsets = [0, 0], sizes = [26, 1], strides = [1, 1]} : vector<28x1xf32> to vector<26x1xf32>
    %296 = vector.extract_strided_slice %37 {offsets = [1, 0], sizes = [26, 1], strides = [1, 1]} : vector<28x1xf32> to vector<26x1xf32>
    %297 = vector.extract_strided_slice %37 {offsets = [2, 0], sizes = [26, 1], strides = [1, 1]} : vector<28x1xf32> to vector<26x1xf32>
    %298 = tpu.concatenate %289, %290, %291, %292, %293, %294, %295, %296, %297 in 1 : vector<26x1xf32>, vector<26x1xf32>, vector<26x1xf32>, vector<26x1xf32>, vector<26x1xf32>, vector<26x1xf32>, vector<26x1xf32>, vector<26x1xf32>, vector<26x1xf32> -> vector<26x9xf32>
    %cst_52 = arith.constant dense<0.000000e+00> : vector<26x32xf32>
    %299 = tpu.matmul %298, %54, %cst_52 {dimension_numbers = #tpu.dot_dimension_numbers<[1], [0], [0], [1], [0, 0, 1, 1], [], []>} : vector<26x9xf32>, vector<9x32xf32>, vector<26x32xf32> -> vector<26x32xf32>
    %300 = vector.broadcast %55 : vector<1x32xf32> to vector<26x32xf32>
    %301 = arith.addf %299, %300 : vector<26x32xf32>
    %cst_53 = arith.constant 0.000000e+00 : f32
    %302 = vector.broadcast %cst_53 : f32 to vector<26x32xf32>
    %303 = arith.maximumf %301, %302 : vector<26x32xf32>
    %304 = vector.extract_strided_slice %35 {offsets = [0, 0], sizes = [26, 1], strides = [1, 1]} : vector<28x1xf32> to vector<26x1xf32>
    %305 = vector.extract_strided_slice %35 {offsets = [1, 0], sizes = [26, 1], strides = [1, 1]} : vector<28x1xf32> to vector<26x1xf32>
    %306 = vector.extract_strided_slice %35 {offsets = [2, 0], sizes = [26, 1], strides = [1, 1]} : vector<28x1xf32> to vector<26x1xf32>
    %307 = vector.extract_strided_slice %37 {offsets = [0, 0], sizes = [26, 1], strides = [1, 1]} : vector<28x1xf32> to vector<26x1xf32>
    %308 = vector.extract_strided_slice %37 {offsets = [1, 0], sizes = [26, 1], strides = [1, 1]} : vector<28x1xf32> to vector<26x1xf32>
    %309 = vector.extract_strided_slice %37 {offsets = [2, 0], sizes = [26, 1], strides = [1, 1]} : vector<28x1xf32> to vector<26x1xf32>
    %310 = vector.extract_strided_slice %39 {offsets = [0, 0], sizes = [26, 1], strides = [1, 1]} : vector<28x1xf32> to vector<26x1xf32>
    %311 = vector.extract_strided_slice %39 {offsets = [1, 0], sizes = [26, 1], strides = [1, 1]} : vector<28x1xf32> to vector<26x1xf32>
    %312 = vector.extract_strided_slice %39 {offsets = [2, 0], sizes = [26, 1], strides = [1, 1]} : vector<28x1xf32> to vector<26x1xf32>
    %313 = tpu.concatenate %304, %305, %306, %307, %308, %309, %310, %311, %312 in 1 : vector<26x1xf32>, vector<26x1xf32>, vector<26x1xf32>, vector<26x1xf32>, vector<26x1xf32>, vector<26x1xf32>, vector<26x1xf32>, vector<26x1xf32>, vector<26x1xf32> -> vector<26x9xf32>
    %cst_54 = arith.constant dense<0.000000e+00> : vector<26x32xf32>
    %314 = tpu.matmul %313, %54, %cst_54 {dimension_numbers = #tpu.dot_dimension_numbers<[1], [0], [0], [1], [0, 0, 1, 1], [], []>} : vector<26x9xf32>, vector<9x32xf32>, vector<26x32xf32> -> vector<26x32xf32>
    %315 = vector.broadcast %55 : vector<1x32xf32> to vector<26x32xf32>
    %316 = arith.addf %314, %315 : vector<26x32xf32>
    %cst_55 = arith.constant 0.000000e+00 : f32
    %317 = vector.broadcast %cst_55 : f32 to vector<26x32xf32>
    %318 = arith.maximumf %316, %317 : vector<26x32xf32>
    %319 = vector.extract_strided_slice %37 {offsets = [0, 0], sizes = [26, 1], strides = [1, 1]} : vector<28x1xf32> to vector<26x1xf32>
    %320 = vector.extract_strided_slice %37 {offsets = [1, 0], sizes = [26, 1], strides = [1, 1]} : vector<28x1xf32> to vector<26x1xf32>
    %321 = vector.extract_strided_slice %37 {offsets = [2, 0], sizes = [26, 1], strides = [1, 1]} : vector<28x1xf32> to vector<26x1xf32>
    %322 = vector.extract_strided_slice %39 {offsets = [0, 0], sizes = [26, 1], strides = [1, 1]} : vector<28x1xf32> to vector<26x1xf32>
    %323 = vector.extract_strided_slice %39 {offsets = [1, 0], sizes = [26, 1], strides = [1, 1]} : vector<28x1xf32> to vector<26x1xf32>
    %324 = vector.extract_strided_slice %39 {offsets = [2, 0], sizes = [26, 1], strides = [1, 1]} : vector<28x1xf32> to vector<26x1xf32>
    %325 = vector.extract_strided_slice %41 {offsets = [0, 0], sizes = [26, 1], strides = [1, 1]} : vector<28x1xf32> to vector<26x1xf32>
    %326 = vector.extract_strided_slice %41 {offsets = [1, 0], sizes = [26, 1], strides = [1, 1]} : vector<28x1xf32> to vector<26x1xf32>
    %327 = vector.extract_strided_slice %41 {offsets = [2, 0], sizes = [26, 1], strides = [1, 1]} : vector<28x1xf32> to vector<26x1xf32>
    %328 = tpu.concatenate %319, %320, %321, %322, %323, %324, %325, %326, %327 in 1 : vector<26x1xf32>, vector<26x1xf32>, vector<26x1xf32>, vector<26x1xf32>, vector<26x1xf32>, vector<26x1xf32>, vector<26x1xf32>, vector<26x1xf32>, vector<26x1xf32> -> vector<26x9xf32>
    %cst_56 = arith.constant dense<0.000000e+00> : vector<26x32xf32>
    %329 = tpu.matmul %328, %54, %cst_56 {dimension_numbers = #tpu.dot_dimension_numbers<[1], [0], [0], [1], [0, 0, 1, 1], [], []>} : vector<26x9xf32>, vector<9x32xf32>, vector<26x32xf32> -> vector<26x32xf32>
    %330 = vector.broadcast %55 : vector<1x32xf32> to vector<26x32xf32>
    %331 = arith.addf %329, %330 : vector<26x32xf32>
    %cst_57 = arith.constant 0.000000e+00 : f32
    %332 = vector.broadcast %cst_57 : f32 to vector<26x32xf32>
    %333 = arith.maximumf %331, %332 : vector<26x32xf32>
    %334 = vector.extract_strided_slice %39 {offsets = [0, 0], sizes = [26, 1], strides = [1, 1]} : vector<28x1xf32> to vector<26x1xf32>
    %335 = vector.extract_strided_slice %39 {offsets = [1, 0], sizes = [26, 1], strides = [1, 1]} : vector<28x1xf32> to vector<26x1xf32>
    %336 = vector.extract_strided_slice %39 {offsets = [2, 0], sizes = [26, 1], strides = [1, 1]} : vector<28x1xf32> to vector<26x1xf32>
    %337 = vector.extract_strided_slice %41 {offsets = [0, 0], sizes = [26, 1], strides = [1, 1]} : vector<28x1xf32> to vector<26x1xf32>
    %338 = vector.extract_strided_slice %41 {offsets = [1, 0], sizes = [26, 1], strides = [1, 1]} : vector<28x1xf32> to vector<26x1xf32>
    %339 = vector.extract_strided_slice %41 {offsets = [2, 0], sizes = [26, 1], strides = [1, 1]} : vector<28x1xf32> to vector<26x1xf32>
    %340 = vector.extract_strided_slice %43 {offsets = [0, 0], sizes = [26, 1], strides = [1, 1]} : vector<28x1xf32> to vector<26x1xf32>
    %341 = vector.extract_strided_slice %43 {offsets = [1, 0], sizes = [26, 1], strides = [1, 1]} : vector<28x1xf32> to vector<26x1xf32>
    %342 = vector.extract_strided_slice %43 {offsets = [2, 0], sizes = [26, 1], strides = [1, 1]} : vector<28x1xf32> to vector<26x1xf32>
    %343 = tpu.concatenate %334, %335, %336, %337, %338, %339, %340, %341, %342 in 1 : vector<26x1xf32>, vector<26x1xf32>, vector<26x1xf32>, vector<26x1xf32>, vector<26x1xf32>, vector<26x1xf32>, vector<26x1xf32>, vector<26x1xf32>, vector<26x1xf32> -> vector<26x9xf32>
    %cst_58 = arith.constant dense<0.000000e+00> : vector<26x32xf32>
    %344 = tpu.matmul %343, %54, %cst_58 {dimension_numbers = #tpu.dot_dimension_numbers<[1], [0], [0], [1], [0, 0, 1, 1], [], []>} : vector<26x9xf32>, vector<9x32xf32>, vector<26x32xf32> -> vector<26x32xf32>
    %345 = vector.broadcast %55 : vector<1x32xf32> to vector<26x32xf32>
    %346 = arith.addf %344, %345 : vector<26x32xf32>
    %cst_59 = arith.constant 0.000000e+00 : f32
    %347 = vector.broadcast %cst_59 : f32 to vector<26x32xf32>
    %348 = arith.maximumf %346, %347 : vector<26x32xf32>
    %349 = vector.extract_strided_slice %41 {offsets = [0, 0], sizes = [26, 1], strides = [1, 1]} : vector<28x1xf32> to vector<26x1xf32>
    %350 = vector.extract_strided_slice %41 {offsets = [1, 0], sizes = [26, 1], strides = [1, 1]} : vector<28x1xf32> to vector<26x1xf32>
    %351 = vector.extract_strided_slice %41 {offsets = [2, 0], sizes = [26, 1], strides = [1, 1]} : vector<28x1xf32> to vector<26x1xf32>
    %352 = vector.extract_strided_slice %43 {offsets = [0, 0], sizes = [26, 1], strides = [1, 1]} : vector<28x1xf32> to vector<26x1xf32>
    %353 = vector.extract_strided_slice %43 {offsets = [1, 0], sizes = [26, 1], strides = [1, 1]} : vector<28x1xf32> to vector<26x1xf32>
    %354 = vector.extract_strided_slice %43 {offsets = [2, 0], sizes = [26, 1], strides = [1, 1]} : vector<28x1xf32> to vector<26x1xf32>
    %355 = vector.extract_strided_slice %45 {offsets = [0, 0], sizes = [26, 1], strides = [1, 1]} : vector<28x1xf32> to vector<26x1xf32>
    %356 = vector.extract_strided_slice %45 {offsets = [1, 0], sizes = [26, 1], strides = [1, 1]} : vector<28x1xf32> to vector<26x1xf32>
    %357 = vector.extract_strided_slice %45 {offsets = [2, 0], sizes = [26, 1], strides = [1, 1]} : vector<28x1xf32> to vector<26x1xf32>
    %358 = tpu.concatenate %349, %350, %351, %352, %353, %354, %355, %356, %357 in 1 : vector<26x1xf32>, vector<26x1xf32>, vector<26x1xf32>, vector<26x1xf32>, vector<26x1xf32>, vector<26x1xf32>, vector<26x1xf32>, vector<26x1xf32>, vector<26x1xf32> -> vector<26x9xf32>
    %cst_60 = arith.constant dense<0.000000e+00> : vector<26x32xf32>
    %359 = tpu.matmul %358, %54, %cst_60 {dimension_numbers = #tpu.dot_dimension_numbers<[1], [0], [0], [1], [0, 0, 1, 1], [], []>} : vector<26x9xf32>, vector<9x32xf32>, vector<26x32xf32> -> vector<26x32xf32>
    %360 = vector.broadcast %55 : vector<1x32xf32> to vector<26x32xf32>
    %361 = arith.addf %359, %360 : vector<26x32xf32>
    %cst_61 = arith.constant 0.000000e+00 : f32
    %362 = vector.broadcast %cst_61 : f32 to vector<26x32xf32>
    %363 = arith.maximumf %361, %362 : vector<26x32xf32>
    %364 = vector.extract_strided_slice %43 {offsets = [0, 0], sizes = [26, 1], strides = [1, 1]} : vector<28x1xf32> to vector<26x1xf32>
    %365 = vector.extract_strided_slice %43 {offsets = [1, 0], sizes = [26, 1], strides = [1, 1]} : vector<28x1xf32> to vector<26x1xf32>
    %366 = vector.extract_strided_slice %43 {offsets = [2, 0], sizes = [26, 1], strides = [1, 1]} : vector<28x1xf32> to vector<26x1xf32>
    %367 = vector.extract_strided_slice %45 {offsets = [0, 0], sizes = [26, 1], strides = [1, 1]} : vector<28x1xf32> to vector<26x1xf32>
    %368 = vector.extract_strided_slice %45 {offsets = [1, 0], sizes = [26, 1], strides = [1, 1]} : vector<28x1xf32> to vector<26x1xf32>
    %369 = vector.extract_strided_slice %45 {offsets = [2, 0], sizes = [26, 1], strides = [1, 1]} : vector<28x1xf32> to vector<26x1xf32>
    %370 = vector.extract_strided_slice %47 {offsets = [0, 0], sizes = [26, 1], strides = [1, 1]} : vector<28x1xf32> to vector<26x1xf32>
    %371 = vector.extract_strided_slice %47 {offsets = [1, 0], sizes = [26, 1], strides = [1, 1]} : vector<28x1xf32> to vector<26x1xf32>
    %372 = vector.extract_strided_slice %47 {offsets = [2, 0], sizes = [26, 1], strides = [1, 1]} : vector<28x1xf32> to vector<26x1xf32>
    %373 = tpu.concatenate %364, %365, %366, %367, %368, %369, %370, %371, %372 in 1 : vector<26x1xf32>, vector<26x1xf32>, vector<26x1xf32>, vector<26x1xf32>, vector<26x1xf32>, vector<26x1xf32>, vector<26x1xf32>, vector<26x1xf32>, vector<26x1xf32> -> vector<26x9xf32>
    %cst_62 = arith.constant dense<0.000000e+00> : vector<26x32xf32>
    %374 = tpu.matmul %373, %54, %cst_62 {dimension_numbers = #tpu.dot_dimension_numbers<[1], [0], [0], [1], [0, 0, 1, 1], [], []>} : vector<26x9xf32>, vector<9x32xf32>, vector<26x32xf32> -> vector<26x32xf32>
    %375 = vector.broadcast %55 : vector<1x32xf32> to vector<26x32xf32>
    %376 = arith.addf %374, %375 : vector<26x32xf32>
    %cst_63 = arith.constant 0.000000e+00 : f32
    %377 = vector.broadcast %cst_63 : f32 to vector<26x32xf32>
    %378 = arith.maximumf %376, %377 : vector<26x32xf32>
    %379 = vector.extract_strided_slice %45 {offsets = [0, 0], sizes = [26, 1], strides = [1, 1]} : vector<28x1xf32> to vector<26x1xf32>
    %380 = vector.extract_strided_slice %45 {offsets = [1, 0], sizes = [26, 1], strides = [1, 1]} : vector<28x1xf32> to vector<26x1xf32>
    %381 = vector.extract_strided_slice %45 {offsets = [2, 0], sizes = [26, 1], strides = [1, 1]} : vector<28x1xf32> to vector<26x1xf32>
    %382 = vector.extract_strided_slice %47 {offsets = [0, 0], sizes = [26, 1], strides = [1, 1]} : vector<28x1xf32> to vector<26x1xf32>
    %383 = vector.extract_strided_slice %47 {offsets = [1, 0], sizes = [26, 1], strides = [1, 1]} : vector<28x1xf32> to vector<26x1xf32>
    %384 = vector.extract_strided_slice %47 {offsets = [2, 0], sizes = [26, 1], strides = [1, 1]} : vector<28x1xf32> to vector<26x1xf32>
    %385 = vector.extract_strided_slice %49 {offsets = [0, 0], sizes = [26, 1], strides = [1, 1]} : vector<28x1xf32> to vector<26x1xf32>
    %386 = vector.extract_strided_slice %49 {offsets = [1, 0], sizes = [26, 1], strides = [1, 1]} : vector<28x1xf32> to vector<26x1xf32>
    %387 = vector.extract_strided_slice %49 {offsets = [2, 0], sizes = [26, 1], strides = [1, 1]} : vector<28x1xf32> to vector<26x1xf32>
    %388 = tpu.concatenate %379, %380, %381, %382, %383, %384, %385, %386, %387 in 1 : vector<26x1xf32>, vector<26x1xf32>, vector<26x1xf32>, vector<26x1xf32>, vector<26x1xf32>, vector<26x1xf32>, vector<26x1xf32>, vector<26x1xf32>, vector<26x1xf32> -> vector<26x9xf32>
    %cst_64 = arith.constant dense<0.000000e+00> : vector<26x32xf32>
    %389 = tpu.matmul %388, %54, %cst_64 {dimension_numbers = #tpu.dot_dimension_numbers<[1], [0], [0], [1], [0, 0, 1, 1], [], []>} : vector<26x9xf32>, vector<9x32xf32>, vector<26x32xf32> -> vector<26x32xf32>
    %390 = vector.broadcast %55 : vector<1x32xf32> to vector<26x32xf32>
    %391 = arith.addf %389, %390 : vector<26x32xf32>
    %cst_65 = arith.constant 0.000000e+00 : f32
    %392 = vector.broadcast %cst_65 : f32 to vector<26x32xf32>
    %393 = arith.maximumf %391, %392 : vector<26x32xf32>
    %394 = vector.extract_strided_slice %47 {offsets = [0, 0], sizes = [26, 1], strides = [1, 1]} : vector<28x1xf32> to vector<26x1xf32>
    %395 = vector.extract_strided_slice %47 {offsets = [1, 0], sizes = [26, 1], strides = [1, 1]} : vector<28x1xf32> to vector<26x1xf32>
    %396 = vector.extract_strided_slice %47 {offsets = [2, 0], sizes = [26, 1], strides = [1, 1]} : vector<28x1xf32> to vector<26x1xf32>
    %397 = vector.extract_strided_slice %49 {offsets = [0, 0], sizes = [26, 1], strides = [1, 1]} : vector<28x1xf32> to vector<26x1xf32>
    %398 = vector.extract_strided_slice %49 {offsets = [1, 0], sizes = [26, 1], strides = [1, 1]} : vector<28x1xf32> to vector<26x1xf32>
    %399 = vector.extract_strided_slice %49 {offsets = [2, 0], sizes = [26, 1], strides = [1, 1]} : vector<28x1xf32> to vector<26x1xf32>
    %400 = vector.extract_strided_slice %51 {offsets = [0, 0], sizes = [26, 1], strides = [1, 1]} : vector<28x1xf32> to vector<26x1xf32>
    %401 = vector.extract_strided_slice %51 {offsets = [1, 0], sizes = [26, 1], strides = [1, 1]} : vector<28x1xf32> to vector<26x1xf32>
    %402 = vector.extract_strided_slice %51 {offsets = [2, 0], sizes = [26, 1], strides = [1, 1]} : vector<28x1xf32> to vector<26x1xf32>
    %403 = tpu.concatenate %394, %395, %396, %397, %398, %399, %400, %401, %402 in 1 : vector<26x1xf32>, vector<26x1xf32>, vector<26x1xf32>, vector<26x1xf32>, vector<26x1xf32>, vector<26x1xf32>, vector<26x1xf32>, vector<26x1xf32>, vector<26x1xf32> -> vector<26x9xf32>
    %cst_66 = arith.constant dense<0.000000e+00> : vector<26x32xf32>
    %404 = tpu.matmul %403, %54, %cst_66 {dimension_numbers = #tpu.dot_dimension_numbers<[1], [0], [0], [1], [0, 0, 1, 1], [], []>} : vector<26x9xf32>, vector<9x32xf32>, vector<26x32xf32> -> vector<26x32xf32>
    %405 = vector.broadcast %55 : vector<1x32xf32> to vector<26x32xf32>
    %406 = arith.addf %404, %405 : vector<26x32xf32>
    %cst_67 = arith.constant 0.000000e+00 : f32
    %407 = vector.broadcast %cst_67 : f32 to vector<26x32xf32>
    %408 = arith.maximumf %406, %407 : vector<26x32xf32>
    %409 = vector.extract_strided_slice %49 {offsets = [0, 0], sizes = [26, 1], strides = [1, 1]} : vector<28x1xf32> to vector<26x1xf32>
    %410 = vector.extract_strided_slice %49 {offsets = [1, 0], sizes = [26, 1], strides = [1, 1]} : vector<28x1xf32> to vector<26x1xf32>
    %411 = vector.extract_strided_slice %49 {offsets = [2, 0], sizes = [26, 1], strides = [1, 1]} : vector<28x1xf32> to vector<26x1xf32>
    %412 = vector.extract_strided_slice %51 {offsets = [0, 0], sizes = [26, 1], strides = [1, 1]} : vector<28x1xf32> to vector<26x1xf32>
    %413 = vector.extract_strided_slice %51 {offsets = [1, 0], sizes = [26, 1], strides = [1, 1]} : vector<28x1xf32> to vector<26x1xf32>
    %414 = vector.extract_strided_slice %51 {offsets = [2, 0], sizes = [26, 1], strides = [1, 1]} : vector<28x1xf32> to vector<26x1xf32>
    %415 = vector.extract_strided_slice %53 {offsets = [0, 0], sizes = [26, 1], strides = [1, 1]} : vector<28x1xf32> to vector<26x1xf32>
    %416 = vector.extract_strided_slice %53 {offsets = [1, 0], sizes = [26, 1], strides = [1, 1]} : vector<28x1xf32> to vector<26x1xf32>
    %417 = vector.extract_strided_slice %53 {offsets = [2, 0], sizes = [26, 1], strides = [1, 1]} : vector<28x1xf32> to vector<26x1xf32>
    %418 = tpu.concatenate %409, %410, %411, %412, %413, %414, %415, %416, %417 in 1 : vector<26x1xf32>, vector<26x1xf32>, vector<26x1xf32>, vector<26x1xf32>, vector<26x1xf32>, vector<26x1xf32>, vector<26x1xf32>, vector<26x1xf32>, vector<26x1xf32> -> vector<26x9xf32>
    %cst_68 = arith.constant dense<0.000000e+00> : vector<26x32xf32>
    %419 = tpu.matmul %418, %54, %cst_68 {dimension_numbers = #tpu.dot_dimension_numbers<[1], [0], [0], [1], [0, 0, 1, 1], [], []>} : vector<26x9xf32>, vector<9x32xf32>, vector<26x32xf32> -> vector<26x32xf32>
    %420 = vector.broadcast %55 : vector<1x32xf32> to vector<26x32xf32>
    %421 = arith.addf %419, %420 : vector<26x32xf32>
    %cst_69 = arith.constant 0.000000e+00 : f32
    %422 = vector.broadcast %cst_69 : f32 to vector<26x32xf32>
    %423 = arith.maximumf %421, %422 : vector<26x32xf32>
    %424 = arith.maximumf %78, %93 : vector<26x32xf32>
    %425 = vector.extract_strided_slice %424 {offsets = [0, 0], sizes = [1, 32], strides = [1, 1]} : vector<26x32xf32> to vector<1x32xf32>
    %426 = vector.extract_strided_slice %424 {offsets = [1, 0], sizes = [1, 32], strides = [1, 1]} : vector<26x32xf32> to vector<1x32xf32>
    %427 = arith.maximumf %425, %426 : vector<1x32xf32>
    %428 = vector.extract_strided_slice %424 {offsets = [2, 0], sizes = [1, 32], strides = [1, 1]} : vector<26x32xf32> to vector<1x32xf32>
    %429 = vector.extract_strided_slice %424 {offsets = [3, 0], sizes = [1, 32], strides = [1, 1]} : vector<26x32xf32> to vector<1x32xf32>
    %430 = arith.maximumf %428, %429 : vector<1x32xf32>
    %431 = vector.extract_strided_slice %424 {offsets = [4, 0], sizes = [1, 32], strides = [1, 1]} : vector<26x32xf32> to vector<1x32xf32>
    %432 = vector.extract_strided_slice %424 {offsets = [5, 0], sizes = [1, 32], strides = [1, 1]} : vector<26x32xf32> to vector<1x32xf32>
    %433 = arith.maximumf %431, %432 : vector<1x32xf32>
    %434 = vector.extract_strided_slice %424 {offsets = [6, 0], sizes = [1, 32], strides = [1, 1]} : vector<26x32xf32> to vector<1x32xf32>
    %435 = vector.extract_strided_slice %424 {offsets = [7, 0], sizes = [1, 32], strides = [1, 1]} : vector<26x32xf32> to vector<1x32xf32>
    %436 = arith.maximumf %434, %435 : vector<1x32xf32>
    %437 = vector.extract_strided_slice %424 {offsets = [8, 0], sizes = [1, 32], strides = [1, 1]} : vector<26x32xf32> to vector<1x32xf32>
    %438 = vector.extract_strided_slice %424 {offsets = [9, 0], sizes = [1, 32], strides = [1, 1]} : vector<26x32xf32> to vector<1x32xf32>
    %439 = arith.maximumf %437, %438 : vector<1x32xf32>
    %440 = vector.extract_strided_slice %424 {offsets = [10, 0], sizes = [1, 32], strides = [1, 1]} : vector<26x32xf32> to vector<1x32xf32>
    %441 = vector.extract_strided_slice %424 {offsets = [11, 0], sizes = [1, 32], strides = [1, 1]} : vector<26x32xf32> to vector<1x32xf32>
    %442 = arith.maximumf %440, %441 : vector<1x32xf32>
    %443 = vector.extract_strided_slice %424 {offsets = [12, 0], sizes = [1, 32], strides = [1, 1]} : vector<26x32xf32> to vector<1x32xf32>
    %444 = vector.extract_strided_slice %424 {offsets = [13, 0], sizes = [1, 32], strides = [1, 1]} : vector<26x32xf32> to vector<1x32xf32>
    %445 = arith.maximumf %443, %444 : vector<1x32xf32>
    %446 = vector.extract_strided_slice %424 {offsets = [14, 0], sizes = [1, 32], strides = [1, 1]} : vector<26x32xf32> to vector<1x32xf32>
    %447 = vector.extract_strided_slice %424 {offsets = [15, 0], sizes = [1, 32], strides = [1, 1]} : vector<26x32xf32> to vector<1x32xf32>
    %448 = arith.maximumf %446, %447 : vector<1x32xf32>
    %449 = vector.extract_strided_slice %424 {offsets = [16, 0], sizes = [1, 32], strides = [1, 1]} : vector<26x32xf32> to vector<1x32xf32>
    %450 = vector.extract_strided_slice %424 {offsets = [17, 0], sizes = [1, 32], strides = [1, 1]} : vector<26x32xf32> to vector<1x32xf32>
    %451 = arith.maximumf %449, %450 : vector<1x32xf32>
    %452 = vector.extract_strided_slice %424 {offsets = [18, 0], sizes = [1, 32], strides = [1, 1]} : vector<26x32xf32> to vector<1x32xf32>
    %453 = vector.extract_strided_slice %424 {offsets = [19, 0], sizes = [1, 32], strides = [1, 1]} : vector<26x32xf32> to vector<1x32xf32>
    %454 = arith.maximumf %452, %453 : vector<1x32xf32>
    %455 = vector.extract_strided_slice %424 {offsets = [20, 0], sizes = [1, 32], strides = [1, 1]} : vector<26x32xf32> to vector<1x32xf32>
    %456 = vector.extract_strided_slice %424 {offsets = [21, 0], sizes = [1, 32], strides = [1, 1]} : vector<26x32xf32> to vector<1x32xf32>
    %457 = arith.maximumf %455, %456 : vector<1x32xf32>
    %458 = vector.extract_strided_slice %424 {offsets = [22, 0], sizes = [1, 32], strides = [1, 1]} : vector<26x32xf32> to vector<1x32xf32>
    %459 = vector.extract_strided_slice %424 {offsets = [23, 0], sizes = [1, 32], strides = [1, 1]} : vector<26x32xf32> to vector<1x32xf32>
    %460 = arith.maximumf %458, %459 : vector<1x32xf32>
    %461 = vector.extract_strided_slice %424 {offsets = [24, 0], sizes = [1, 32], strides = [1, 1]} : vector<26x32xf32> to vector<1x32xf32>
    %462 = vector.extract_strided_slice %424 {offsets = [25, 0], sizes = [1, 32], strides = [1, 1]} : vector<26x32xf32> to vector<1x32xf32>
    %463 = arith.maximumf %461, %462 : vector<1x32xf32>
    %464 = tpu.concatenate %427, %430, %433, %436, %439, %442, %445, %448, %451, %454, %457, %460, %463 in 0 : vector<1x32xf32>, vector<1x32xf32>, vector<1x32xf32>, vector<1x32xf32>, vector<1x32xf32>, vector<1x32xf32>, vector<1x32xf32>, vector<1x32xf32>, vector<1x32xf32>, vector<1x32xf32>, vector<1x32xf32>, vector<1x32xf32>, vector<1x32xf32> -> vector<13x32xf32>
    %465 = arith.maximumf %108, %123 : vector<26x32xf32>
    %466 = vector.extract_strided_slice %465 {offsets = [0, 0], sizes = [1, 32], strides = [1, 1]} : vector<26x32xf32> to vector<1x32xf32>
    %467 = vector.extract_strided_slice %465 {offsets = [1, 0], sizes = [1, 32], strides = [1, 1]} : vector<26x32xf32> to vector<1x32xf32>
    %468 = arith.maximumf %466, %467 : vector<1x32xf32>
    %469 = vector.extract_strided_slice %465 {offsets = [2, 0], sizes = [1, 32], strides = [1, 1]} : vector<26x32xf32> to vector<1x32xf32>
    %470 = vector.extract_strided_slice %465 {offsets = [3, 0], sizes = [1, 32], strides = [1, 1]} : vector<26x32xf32> to vector<1x32xf32>
    %471 = arith.maximumf %469, %470 : vector<1x32xf32>
    %472 = vector.extract_strided_slice %465 {offsets = [4, 0], sizes = [1, 32], strides = [1, 1]} : vector<26x32xf32> to vector<1x32xf32>
    %473 = vector.extract_strided_slice %465 {offsets = [5, 0], sizes = [1, 32], strides = [1, 1]} : vector<26x32xf32> to vector<1x32xf32>
    %474 = arith.maximumf %472, %473 : vector<1x32xf32>
    %475 = vector.extract_strided_slice %465 {offsets = [6, 0], sizes = [1, 32], strides = [1, 1]} : vector<26x32xf32> to vector<1x32xf32>
    %476 = vector.extract_strided_slice %465 {offsets = [7, 0], sizes = [1, 32], strides = [1, 1]} : vector<26x32xf32> to vector<1x32xf32>
    %477 = arith.maximumf %475, %476 : vector<1x32xf32>
    %478 = vector.extract_strided_slice %465 {offsets = [8, 0], sizes = [1, 32], strides = [1, 1]} : vector<26x32xf32> to vector<1x32xf32>
    %479 = vector.extract_strided_slice %465 {offsets = [9, 0], sizes = [1, 32], strides = [1, 1]} : vector<26x32xf32> to vector<1x32xf32>
    %480 = arith.maximumf %478, %479 : vector<1x32xf32>
    %481 = vector.extract_strided_slice %465 {offsets = [10, 0], sizes = [1, 32], strides = [1, 1]} : vector<26x32xf32> to vector<1x32xf32>
    %482 = vector.extract_strided_slice %465 {offsets = [11, 0], sizes = [1, 32], strides = [1, 1]} : vector<26x32xf32> to vector<1x32xf32>
    %483 = arith.maximumf %481, %482 : vector<1x32xf32>
    %484 = vector.extract_strided_slice %465 {offsets = [12, 0], sizes = [1, 32], strides = [1, 1]} : vector<26x32xf32> to vector<1x32xf32>
    %485 = vector.extract_strided_slice %465 {offsets = [13, 0], sizes = [1, 32], strides = [1, 1]} : vector<26x32xf32> to vector<1x32xf32>
    %486 = arith.maximumf %484, %485 : vector<1x32xf32>
    %487 = vector.extract_strided_slice %465 {offsets = [14, 0], sizes = [1, 32], strides = [1, 1]} : vector<26x32xf32> to vector<1x32xf32>
    %488 = vector.extract_strided_slice %465 {offsets = [15, 0], sizes = [1, 32], strides = [1, 1]} : vector<26x32xf32> to vector<1x32xf32>
    %489 = arith.maximumf %487, %488 : vector<1x32xf32>
    %490 = vector.extract_strided_slice %465 {offsets = [16, 0], sizes = [1, 32], strides = [1, 1]} : vector<26x32xf32> to vector<1x32xf32>
    %491 = vector.extract_strided_slice %465 {offsets = [17, 0], sizes = [1, 32], strides = [1, 1]} : vector<26x32xf32> to vector<1x32xf32>
    %492 = arith.maximumf %490, %491 : vector<1x32xf32>
    %493 = vector.extract_strided_slice %465 {offsets = [18, 0], sizes = [1, 32], strides = [1, 1]} : vector<26x32xf32> to vector<1x32xf32>
    %494 = vector.extract_strided_slice %465 {offsets = [19, 0], sizes = [1, 32], strides = [1, 1]} : vector<26x32xf32> to vector<1x32xf32>
    %495 = arith.maximumf %493, %494 : vector<1x32xf32>
    %496 = vector.extract_strided_slice %465 {offsets = [20, 0], sizes = [1, 32], strides = [1, 1]} : vector<26x32xf32> to vector<1x32xf32>
    %497 = vector.extract_strided_slice %465 {offsets = [21, 0], sizes = [1, 32], strides = [1, 1]} : vector<26x32xf32> to vector<1x32xf32>
    %498 = arith.maximumf %496, %497 : vector<1x32xf32>
    %499 = vector.extract_strided_slice %465 {offsets = [22, 0], sizes = [1, 32], strides = [1, 1]} : vector<26x32xf32> to vector<1x32xf32>
    %500 = vector.extract_strided_slice %465 {offsets = [23, 0], sizes = [1, 32], strides = [1, 1]} : vector<26x32xf32> to vector<1x32xf32>
    %501 = arith.maximumf %499, %500 : vector<1x32xf32>
    %502 = vector.extract_strided_slice %465 {offsets = [24, 0], sizes = [1, 32], strides = [1, 1]} : vector<26x32xf32> to vector<1x32xf32>
    %503 = vector.extract_strided_slice %465 {offsets = [25, 0], sizes = [1, 32], strides = [1, 1]} : vector<26x32xf32> to vector<1x32xf32>
    %504 = arith.maximumf %502, %503 : vector<1x32xf32>
    %505 = tpu.concatenate %468, %471, %474, %477, %480, %483, %486, %489, %492, %495, %498, %501, %504 in 0 : vector<1x32xf32>, vector<1x32xf32>, vector<1x32xf32>, vector<1x32xf32>, vector<1x32xf32>, vector<1x32xf32>, vector<1x32xf32>, vector<1x32xf32>, vector<1x32xf32>, vector<1x32xf32>, vector<1x32xf32>, vector<1x32xf32>, vector<1x32xf32> -> vector<13x32xf32>
    %506 = arith.maximumf %138, %153 : vector<26x32xf32>
    %507 = vector.extract_strided_slice %506 {offsets = [0, 0], sizes = [1, 32], strides = [1, 1]} : vector<26x32xf32> to vector<1x32xf32>
    %508 = vector.extract_strided_slice %506 {offsets = [1, 0], sizes = [1, 32], strides = [1, 1]} : vector<26x32xf32> to vector<1x32xf32>
    %509 = arith.maximumf %507, %508 : vector<1x32xf32>
    %510 = vector.extract_strided_slice %506 {offsets = [2, 0], sizes = [1, 32], strides = [1, 1]} : vector<26x32xf32> to vector<1x32xf32>
    %511 = vector.extract_strided_slice %506 {offsets = [3, 0], sizes = [1, 32], strides = [1, 1]} : vector<26x32xf32> to vector<1x32xf32>
    %512 = arith.maximumf %510, %511 : vector<1x32xf32>
    %513 = vector.extract_strided_slice %506 {offsets = [4, 0], sizes = [1, 32], strides = [1, 1]} : vector<26x32xf32> to vector<1x32xf32>
    %514 = vector.extract_strided_slice %506 {offsets = [5, 0], sizes = [1, 32], strides = [1, 1]} : vector<26x32xf32> to vector<1x32xf32>
    %515 = arith.maximumf %513, %514 : vector<1x32xf32>
    %516 = vector.extract_strided_slice %506 {offsets = [6, 0], sizes = [1, 32], strides = [1, 1]} : vector<26x32xf32> to vector<1x32xf32>
    %517 = vector.extract_strided_slice %506 {offsets = [7, 0], sizes = [1, 32], strides = [1, 1]} : vector<26x32xf32> to vector<1x32xf32>
    %518 = arith.maximumf %516, %517 : vector<1x32xf32>
    %519 = vector.extract_strided_slice %506 {offsets = [8, 0], sizes = [1, 32], strides = [1, 1]} : vector<26x32xf32> to vector<1x32xf32>
    %520 = vector.extract_strided_slice %506 {offsets = [9, 0], sizes = [1, 32], strides = [1, 1]} : vector<26x32xf32> to vector<1x32xf32>
    %521 = arith.maximumf %519, %520 : vector<1x32xf32>
    %522 = vector.extract_strided_slice %506 {offsets = [10, 0], sizes = [1, 32], strides = [1, 1]} : vector<26x32xf32> to vector<1x32xf32>
    %523 = vector.extract_strided_slice %506 {offsets = [11, 0], sizes = [1, 32], strides = [1, 1]} : vector<26x32xf32> to vector<1x32xf32>
    %524 = arith.maximumf %522, %523 : vector<1x32xf32>
    %525 = vector.extract_strided_slice %506 {offsets = [12, 0], sizes = [1, 32], strides = [1, 1]} : vector<26x32xf32> to vector<1x32xf32>
    %526 = vector.extract_strided_slice %506 {offsets = [13, 0], sizes = [1, 32], strides = [1, 1]} : vector<26x32xf32> to vector<1x32xf32>
    %527 = arith.maximumf %525, %526 : vector<1x32xf32>
    %528 = vector.extract_strided_slice %506 {offsets = [14, 0], sizes = [1, 32], strides = [1, 1]} : vector<26x32xf32> to vector<1x32xf32>
    %529 = vector.extract_strided_slice %506 {offsets = [15, 0], sizes = [1, 32], strides = [1, 1]} : vector<26x32xf32> to vector<1x32xf32>
    %530 = arith.maximumf %528, %529 : vector<1x32xf32>
    %531 = vector.extract_strided_slice %506 {offsets = [16, 0], sizes = [1, 32], strides = [1, 1]} : vector<26x32xf32> to vector<1x32xf32>
    %532 = vector.extract_strided_slice %506 {offsets = [17, 0], sizes = [1, 32], strides = [1, 1]} : vector<26x32xf32> to vector<1x32xf32>
    %533 = arith.maximumf %531, %532 : vector<1x32xf32>
    %534 = vector.extract_strided_slice %506 {offsets = [18, 0], sizes = [1, 32], strides = [1, 1]} : vector<26x32xf32> to vector<1x32xf32>
    %535 = vector.extract_strided_slice %506 {offsets = [19, 0], sizes = [1, 32], strides = [1, 1]} : vector<26x32xf32> to vector<1x32xf32>
    %536 = arith.maximumf %534, %535 : vector<1x32xf32>
    %537 = vector.extract_strided_slice %506 {offsets = [20, 0], sizes = [1, 32], strides = [1, 1]} : vector<26x32xf32> to vector<1x32xf32>
    %538 = vector.extract_strided_slice %506 {offsets = [21, 0], sizes = [1, 32], strides = [1, 1]} : vector<26x32xf32> to vector<1x32xf32>
    %539 = arith.maximumf %537, %538 : vector<1x32xf32>
    %540 = vector.extract_strided_slice %506 {offsets = [22, 0], sizes = [1, 32], strides = [1, 1]} : vector<26x32xf32> to vector<1x32xf32>
    %541 = vector.extract_strided_slice %506 {offsets = [23, 0], sizes = [1, 32], strides = [1, 1]} : vector<26x32xf32> to vector<1x32xf32>
    %542 = arith.maximumf %540, %541 : vector<1x32xf32>
    %543 = vector.extract_strided_slice %506 {offsets = [24, 0], sizes = [1, 32], strides = [1, 1]} : vector<26x32xf32> to vector<1x32xf32>
    %544 = vector.extract_strided_slice %506 {offsets = [25, 0], sizes = [1, 32], strides = [1, 1]} : vector<26x32xf32> to vector<1x32xf32>
    %545 = arith.maximumf %543, %544 : vector<1x32xf32>
    %546 = tpu.concatenate %509, %512, %515, %518, %521, %524, %527, %530, %533, %536, %539, %542, %545 in 0 : vector<1x32xf32>, vector<1x32xf32>, vector<1x32xf32>, vector<1x32xf32>, vector<1x32xf32>, vector<1x32xf32>, vector<1x32xf32>, vector<1x32xf32>, vector<1x32xf32>, vector<1x32xf32>, vector<1x32xf32>, vector<1x32xf32>, vector<1x32xf32> -> vector<13x32xf32>
    %547 = arith.maximumf %168, %183 : vector<26x32xf32>
    %548 = vector.extract_strided_slice %547 {offsets = [0, 0], sizes = [1, 32], strides = [1, 1]} : vector<26x32xf32> to vector<1x32xf32>
    %549 = vector.extract_strided_slice %547 {offsets = [1, 0], sizes = [1, 32], strides = [1, 1]} : vector<26x32xf32> to vector<1x32xf32>
    %550 = arith.maximumf %548, %549 : vector<1x32xf32>
    %551 = vector.extract_strided_slice %547 {offsets = [2, 0], sizes = [1, 32], strides = [1, 1]} : vector<26x32xf32> to vector<1x32xf32>
    %552 = vector.extract_strided_slice %547 {offsets = [3, 0], sizes = [1, 32], strides = [1, 1]} : vector<26x32xf32> to vector<1x32xf32>
    %553 = arith.maximumf %551, %552 : vector<1x32xf32>
    %554 = vector.extract_strided_slice %547 {offsets = [4, 0], sizes = [1, 32], strides = [1, 1]} : vector<26x32xf32> to vector<1x32xf32>
    %555 = vector.extract_strided_slice %547 {offsets = [5, 0], sizes = [1, 32], strides = [1, 1]} : vector<26x32xf32> to vector<1x32xf32>
    %556 = arith.maximumf %554, %555 : vector<1x32xf32>
    %557 = vector.extract_strided_slice %547 {offsets = [6, 0], sizes = [1, 32], strides = [1, 1]} : vector<26x32xf32> to vector<1x32xf32>
    %558 = vector.extract_strided_slice %547 {offsets = [7, 0], sizes = [1, 32], strides = [1, 1]} : vector<26x32xf32> to vector<1x32xf32>
    %559 = arith.maximumf %557, %558 : vector<1x32xf32>
    %560 = vector.extract_strided_slice %547 {offsets = [8, 0], sizes = [1, 32], strides = [1, 1]} : vector<26x32xf32> to vector<1x32xf32>
    %561 = vector.extract_strided_slice %547 {offsets = [9, 0], sizes = [1, 32], strides = [1, 1]} : vector<26x32xf32> to vector<1x32xf32>
    %562 = arith.maximumf %560, %561 : vector<1x32xf32>
    %563 = vector.extract_strided_slice %547 {offsets = [10, 0], sizes = [1, 32], strides = [1, 1]} : vector<26x32xf32> to vector<1x32xf32>
    %564 = vector.extract_strided_slice %547 {offsets = [11, 0], sizes = [1, 32], strides = [1, 1]} : vector<26x32xf32> to vector<1x32xf32>
    %565 = arith.maximumf %563, %564 : vector<1x32xf32>
    %566 = vector.extract_strided_slice %547 {offsets = [12, 0], sizes = [1, 32], strides = [1, 1]} : vector<26x32xf32> to vector<1x32xf32>
    %567 = vector.extract_strided_slice %547 {offsets = [13, 0], sizes = [1, 32], strides = [1, 1]} : vector<26x32xf32> to vector<1x32xf32>
    %568 = arith.maximumf %566, %567 : vector<1x32xf32>
    %569 = vector.extract_strided_slice %547 {offsets = [14, 0], sizes = [1, 32], strides = [1, 1]} : vector<26x32xf32> to vector<1x32xf32>
    %570 = vector.extract_strided_slice %547 {offsets = [15, 0], sizes = [1, 32], strides = [1, 1]} : vector<26x32xf32> to vector<1x32xf32>
    %571 = arith.maximumf %569, %570 : vector<1x32xf32>
    %572 = vector.extract_strided_slice %547 {offsets = [16, 0], sizes = [1, 32], strides = [1, 1]} : vector<26x32xf32> to vector<1x32xf32>
    %573 = vector.extract_strided_slice %547 {offsets = [17, 0], sizes = [1, 32], strides = [1, 1]} : vector<26x32xf32> to vector<1x32xf32>
    %574 = arith.maximumf %572, %573 : vector<1x32xf32>
    %575 = vector.extract_strided_slice %547 {offsets = [18, 0], sizes = [1, 32], strides = [1, 1]} : vector<26x32xf32> to vector<1x32xf32>
    %576 = vector.extract_strided_slice %547 {offsets = [19, 0], sizes = [1, 32], strides = [1, 1]} : vector<26x32xf32> to vector<1x32xf32>
    %577 = arith.maximumf %575, %576 : vector<1x32xf32>
    %578 = vector.extract_strided_slice %547 {offsets = [20, 0], sizes = [1, 32], strides = [1, 1]} : vector<26x32xf32> to vector<1x32xf32>
    %579 = vector.extract_strided_slice %547 {offsets = [21, 0], sizes = [1, 32], strides = [1, 1]} : vector<26x32xf32> to vector<1x32xf32>
    %580 = arith.maximumf %578, %579 : vector<1x32xf32>
    %581 = vector.extract_strided_slice %547 {offsets = [22, 0], sizes = [1, 32], strides = [1, 1]} : vector<26x32xf32> to vector<1x32xf32>
    %582 = vector.extract_strided_slice %547 {offsets = [23, 0], sizes = [1, 32], strides = [1, 1]} : vector<26x32xf32> to vector<1x32xf32>
    %583 = arith.maximumf %581, %582 : vector<1x32xf32>
    %584 = vector.extract_strided_slice %547 {offsets = [24, 0], sizes = [1, 32], strides = [1, 1]} : vector<26x32xf32> to vector<1x32xf32>
    %585 = vector.extract_strided_slice %547 {offsets = [25, 0], sizes = [1, 32], strides = [1, 1]} : vector<26x32xf32> to vector<1x32xf32>
    %586 = arith.maximumf %584, %585 : vector<1x32xf32>
    %587 = tpu.concatenate %550, %553, %556, %559, %562, %565, %568, %571, %574, %577, %580, %583, %586 in 0 : vector<1x32xf32>, vector<1x32xf32>, vector<1x32xf32>, vector<1x32xf32>, vector<1x32xf32>, vector<1x32xf32>, vector<1x32xf32>, vector<1x32xf32>, vector<1x32xf32>, vector<1x32xf32>, vector<1x32xf32>, vector<1x32xf32>, vector<1x32xf32> -> vector<13x32xf32>
    %588 = arith.maximumf %198, %213 : vector<26x32xf32>
    %589 = vector.extract_strided_slice %588 {offsets = [0, 0], sizes = [1, 32], strides = [1, 1]} : vector<26x32xf32> to vector<1x32xf32>
    %590 = vector.extract_strided_slice %588 {offsets = [1, 0], sizes = [1, 32], strides = [1, 1]} : vector<26x32xf32> to vector<1x32xf32>
    %591 = arith.maximumf %589, %590 : vector<1x32xf32>
    %592 = vector.extract_strided_slice %588 {offsets = [2, 0], sizes = [1, 32], strides = [1, 1]} : vector<26x32xf32> to vector<1x32xf32>
    %593 = vector.extract_strided_slice %588 {offsets = [3, 0], sizes = [1, 32], strides = [1, 1]} : vector<26x32xf32> to vector<1x32xf32>
    %594 = arith.maximumf %592, %593 : vector<1x32xf32>
    %595 = vector.extract_strided_slice %588 {offsets = [4, 0], sizes = [1, 32], strides = [1, 1]} : vector<26x32xf32> to vector<1x32xf32>
    %596 = vector.extract_strided_slice %588 {offsets = [5, 0], sizes = [1, 32], strides = [1, 1]} : vector<26x32xf32> to vector<1x32xf32>
    %597 = arith.maximumf %595, %596 : vector<1x32xf32>
    %598 = vector.extract_strided_slice %588 {offsets = [6, 0], sizes = [1, 32], strides = [1, 1]} : vector<26x32xf32> to vector<1x32xf32>
    %599 = vector.extract_strided_slice %588 {offsets = [7, 0], sizes = [1, 32], strides = [1, 1]} : vector<26x32xf32> to vector<1x32xf32>
    %600 = arith.maximumf %598, %599 : vector<1x32xf32>
    %601 = vector.extract_strided_slice %588 {offsets = [8, 0], sizes = [1, 32], strides = [1, 1]} : vector<26x32xf32> to vector<1x32xf32>
    %602 = vector.extract_strided_slice %588 {offsets = [9, 0], sizes = [1, 32], strides = [1, 1]} : vector<26x32xf32> to vector<1x32xf32>
    %603 = arith.maximumf %601, %602 : vector<1x32xf32>
    %604 = vector.extract_strided_slice %588 {offsets = [10, 0], sizes = [1, 32], strides = [1, 1]} : vector<26x32xf32> to vector<1x32xf32>
    %605 = vector.extract_strided_slice %588 {offsets = [11, 0], sizes = [1, 32], strides = [1, 1]} : vector<26x32xf32> to vector<1x32xf32>
    %606 = arith.maximumf %604, %605 : vector<1x32xf32>
    %607 = vector.extract_strided_slice %588 {offsets = [12, 0], sizes = [1, 32], strides = [1, 1]} : vector<26x32xf32> to vector<1x32xf32>
    %608 = vector.extract_strided_slice %588 {offsets = [13, 0], sizes = [1, 32], strides = [1, 1]} : vector<26x32xf32> to vector<1x32xf32>
    %609 = arith.maximumf %607, %608 : vector<1x32xf32>
    %610 = vector.extract_strided_slice %588 {offsets = [14, 0], sizes = [1, 32], strides = [1, 1]} : vector<26x32xf32> to vector<1x32xf32>
    %611 = vector.extract_strided_slice %588 {offsets = [15, 0], sizes = [1, 32], strides = [1, 1]} : vector<26x32xf32> to vector<1x32xf32>
    %612 = arith.maximumf %610, %611 : vector<1x32xf32>
    %613 = vector.extract_strided_slice %588 {offsets = [16, 0], sizes = [1, 32], strides = [1, 1]} : vector<26x32xf32> to vector<1x32xf32>
    %614 = vector.extract_strided_slice %588 {offsets = [17, 0], sizes = [1, 32], strides = [1, 1]} : vector<26x32xf32> to vector<1x32xf32>
    %615 = arith.maximumf %613, %614 : vector<1x32xf32>
    %616 = vector.extract_strided_slice %588 {offsets = [18, 0], sizes = [1, 32], strides = [1, 1]} : vector<26x32xf32> to vector<1x32xf32>
    %617 = vector.extract_strided_slice %588 {offsets = [19, 0], sizes = [1, 32], strides = [1, 1]} : vector<26x32xf32> to vector<1x32xf32>
    %618 = arith.maximumf %616, %617 : vector<1x32xf32>
    %619 = vector.extract_strided_slice %588 {offsets = [20, 0], sizes = [1, 32], strides = [1, 1]} : vector<26x32xf32> to vector<1x32xf32>
    %620 = vector.extract_strided_slice %588 {offsets = [21, 0], sizes = [1, 32], strides = [1, 1]} : vector<26x32xf32> to vector<1x32xf32>
    %621 = arith.maximumf %619, %620 : vector<1x32xf32>
    %622 = vector.extract_strided_slice %588 {offsets = [22, 0], sizes = [1, 32], strides = [1, 1]} : vector<26x32xf32> to vector<1x32xf32>
    %623 = vector.extract_strided_slice %588 {offsets = [23, 0], sizes = [1, 32], strides = [1, 1]} : vector<26x32xf32> to vector<1x32xf32>
    %624 = arith.maximumf %622, %623 : vector<1x32xf32>
    %625 = vector.extract_strided_slice %588 {offsets = [24, 0], sizes = [1, 32], strides = [1, 1]} : vector<26x32xf32> to vector<1x32xf32>
    %626 = vector.extract_strided_slice %588 {offsets = [25, 0], sizes = [1, 32], strides = [1, 1]} : vector<26x32xf32> to vector<1x32xf32>
    %627 = arith.maximumf %625, %626 : vector<1x32xf32>
    %628 = tpu.concatenate %591, %594, %597, %600, %603, %606, %609, %612, %615, %618, %621, %624, %627 in 0 : vector<1x32xf32>, vector<1x32xf32>, vector<1x32xf32>, vector<1x32xf32>, vector<1x32xf32>, vector<1x32xf32>, vector<1x32xf32>, vector<1x32xf32>, vector<1x32xf32>, vector<1x32xf32>, vector<1x32xf32>, vector<1x32xf32>, vector<1x32xf32> -> vector<13x32xf32>
    %629 = arith.maximumf %228, %243 : vector<26x32xf32>
    %630 = vector.extract_strided_slice %629 {offsets = [0, 0], sizes = [1, 32], strides = [1, 1]} : vector<26x32xf32> to vector<1x32xf32>
    %631 = vector.extract_strided_slice %629 {offsets = [1, 0], sizes = [1, 32], strides = [1, 1]} : vector<26x32xf32> to vector<1x32xf32>
    %632 = arith.maximumf %630, %631 : vector<1x32xf32>
    %633 = vector.extract_strided_slice %629 {offsets = [2, 0], sizes = [1, 32], strides = [1, 1]} : vector<26x32xf32> to vector<1x32xf32>
    %634 = vector.extract_strided_slice %629 {offsets = [3, 0], sizes = [1, 32], strides = [1, 1]} : vector<26x32xf32> to vector<1x32xf32>
    %635 = arith.maximumf %633, %634 : vector<1x32xf32>
    %636 = vector.extract_strided_slice %629 {offsets = [4, 0], sizes = [1, 32], strides = [1, 1]} : vector<26x32xf32> to vector<1x32xf32>
    %637 = vector.extract_strided_slice %629 {offsets = [5, 0], sizes = [1, 32], strides = [1, 1]} : vector<26x32xf32> to vector<1x32xf32>
    %638 = arith.maximumf %636, %637 : vector<1x32xf32>
    %639 = vector.extract_strided_slice %629 {offsets = [6, 0], sizes = [1, 32], strides = [1, 1]} : vector<26x32xf32> to vector<1x32xf32>
    %640 = vector.extract_strided_slice %629 {offsets = [7, 0], sizes = [1, 32], strides = [1, 1]} : vector<26x32xf32> to vector<1x32xf32>
    %641 = arith.maximumf %639, %640 : vector<1x32xf32>
    %642 = vector.extract_strided_slice %629 {offsets = [8, 0], sizes = [1, 32], strides = [1, 1]} : vector<26x32xf32> to vector<1x32xf32>
    %643 = vector.extract_strided_slice %629 {offsets = [9, 0], sizes = [1, 32], strides = [1, 1]} : vector<26x32xf32> to vector<1x32xf32>
    %644 = arith.maximumf %642, %643 : vector<1x32xf32>
    %645 = vector.extract_strided_slice %629 {offsets = [10, 0], sizes = [1, 32], strides = [1, 1]} : vector<26x32xf32> to vector<1x32xf32>
    %646 = vector.extract_strided_slice %629 {offsets = [11, 0], sizes = [1, 32], strides = [1, 1]} : vector<26x32xf32> to vector<1x32xf32>
    %647 = arith.maximumf %645, %646 : vector<1x32xf32>
    %648 = vector.extract_strided_slice %629 {offsets = [12, 0], sizes = [1, 32], strides = [1, 1]} : vector<26x32xf32> to vector<1x32xf32>
    %649 = vector.extract_strided_slice %629 {offsets = [13, 0], sizes = [1, 32], strides = [1, 1]} : vector<26x32xf32> to vector<1x32xf32>
    %650 = arith.maximumf %648, %649 : vector<1x32xf32>
    %651 = vector.extract_strided_slice %629 {offsets = [14, 0], sizes = [1, 32], strides = [1, 1]} : vector<26x32xf32> to vector<1x32xf32>
    %652 = vector.extract_strided_slice %629 {offsets = [15, 0], sizes = [1, 32], strides = [1, 1]} : vector<26x32xf32> to vector<1x32xf32>
    %653 = arith.maximumf %651, %652 : vector<1x32xf32>
    %654 = vector.extract_strided_slice %629 {offsets = [16, 0], sizes = [1, 32], strides = [1, 1]} : vector<26x32xf32> to vector<1x32xf32>
    %655 = vector.extract_strided_slice %629 {offsets = [17, 0], sizes = [1, 32], strides = [1, 1]} : vector<26x32xf32> to vector<1x32xf32>
    %656 = arith.maximumf %654, %655 : vector<1x32xf32>
    %657 = vector.extract_strided_slice %629 {offsets = [18, 0], sizes = [1, 32], strides = [1, 1]} : vector<26x32xf32> to vector<1x32xf32>
    %658 = vector.extract_strided_slice %629 {offsets = [19, 0], sizes = [1, 32], strides = [1, 1]} : vector<26x32xf32> to vector<1x32xf32>
    %659 = arith.maximumf %657, %658 : vector<1x32xf32>
    %660 = vector.extract_strided_slice %629 {offsets = [20, 0], sizes = [1, 32], strides = [1, 1]} : vector<26x32xf32> to vector<1x32xf32>
    %661 = vector.extract_strided_slice %629 {offsets = [21, 0], sizes = [1, 32], strides = [1, 1]} : vector<26x32xf32> to vector<1x32xf32>
    %662 = arith.maximumf %660, %661 : vector<1x32xf32>
    %663 = vector.extract_strided_slice %629 {offsets = [22, 0], sizes = [1, 32], strides = [1, 1]} : vector<26x32xf32> to vector<1x32xf32>
    %664 = vector.extract_strided_slice %629 {offsets = [23, 0], sizes = [1, 32], strides = [1, 1]} : vector<26x32xf32> to vector<1x32xf32>
    %665 = arith.maximumf %663, %664 : vector<1x32xf32>
    %666 = vector.extract_strided_slice %629 {offsets = [24, 0], sizes = [1, 32], strides = [1, 1]} : vector<26x32xf32> to vector<1x32xf32>
    %667 = vector.extract_strided_slice %629 {offsets = [25, 0], sizes = [1, 32], strides = [1, 1]} : vector<26x32xf32> to vector<1x32xf32>
    %668 = arith.maximumf %666, %667 : vector<1x32xf32>
    %669 = tpu.concatenate %632, %635, %638, %641, %644, %647, %650, %653, %656, %659, %662, %665, %668 in 0 : vector<1x32xf32>, vector<1x32xf32>, vector<1x32xf32>, vector<1x32xf32>, vector<1x32xf32>, vector<1x32xf32>, vector<1x32xf32>, vector<1x32xf32>, vector<1x32xf32>, vector<1x32xf32>, vector<1x32xf32>, vector<1x32xf32>, vector<1x32xf32> -> vector<13x32xf32>
    %670 = arith.maximumf %258, %273 : vector<26x32xf32>
    %671 = vector.extract_strided_slice %670 {offsets = [0, 0], sizes = [1, 32], strides = [1, 1]} : vector<26x32xf32> to vector<1x32xf32>
    %672 = vector.extract_strided_slice %670 {offsets = [1, 0], sizes = [1, 32], strides = [1, 1]} : vector<26x32xf32> to vector<1x32xf32>
    %673 = arith.maximumf %671, %672 : vector<1x32xf32>
    %674 = vector.extract_strided_slice %670 {offsets = [2, 0], sizes = [1, 32], strides = [1, 1]} : vector<26x32xf32> to vector<1x32xf32>
    %675 = vector.extract_strided_slice %670 {offsets = [3, 0], sizes = [1, 32], strides = [1, 1]} : vector<26x32xf32> to vector<1x32xf32>
    %676 = arith.maximumf %674, %675 : vector<1x32xf32>
    %677 = vector.extract_strided_slice %670 {offsets = [4, 0], sizes = [1, 32], strides = [1, 1]} : vector<26x32xf32> to vector<1x32xf32>
    %678 = vector.extract_strided_slice %670 {offsets = [5, 0], sizes = [1, 32], strides = [1, 1]} : vector<26x32xf32> to vector<1x32xf32>
    %679 = arith.maximumf %677, %678 : vector<1x32xf32>
    %680 = vector.extract_strided_slice %670 {offsets = [6, 0], sizes = [1, 32], strides = [1, 1]} : vector<26x32xf32> to vector<1x32xf32>
    %681 = vector.extract_strided_slice %670 {offsets = [7, 0], sizes = [1, 32], strides = [1, 1]} : vector<26x32xf32> to vector<1x32xf32>
    %682 = arith.maximumf %680, %681 : vector<1x32xf32>
    %683 = vector.extract_strided_slice %670 {offsets = [8, 0], sizes = [1, 32], strides = [1, 1]} : vector<26x32xf32> to vector<1x32xf32>
    %684 = vector.extract_strided_slice %670 {offsets = [9, 0], sizes = [1, 32], strides = [1, 1]} : vector<26x32xf32> to vector<1x32xf32>
    %685 = arith.maximumf %683, %684 : vector<1x32xf32>
    %686 = vector.extract_strided_slice %670 {offsets = [10, 0], sizes = [1, 32], strides = [1, 1]} : vector<26x32xf32> to vector<1x32xf32>
    %687 = vector.extract_strided_slice %670 {offsets = [11, 0], sizes = [1, 32], strides = [1, 1]} : vector<26x32xf32> to vector<1x32xf32>
    %688 = arith.maximumf %686, %687 : vector<1x32xf32>
    %689 = vector.extract_strided_slice %670 {offsets = [12, 0], sizes = [1, 32], strides = [1, 1]} : vector<26x32xf32> to vector<1x32xf32>
    %690 = vector.extract_strided_slice %670 {offsets = [13, 0], sizes = [1, 32], strides = [1, 1]} : vector<26x32xf32> to vector<1x32xf32>
    %691 = arith.maximumf %689, %690 : vector<1x32xf32>
    %692 = vector.extract_strided_slice %670 {offsets = [14, 0], sizes = [1, 32], strides = [1, 1]} : vector<26x32xf32> to vector<1x32xf32>
    %693 = vector.extract_strided_slice %670 {offsets = [15, 0], sizes = [1, 32], strides = [1, 1]} : vector<26x32xf32> to vector<1x32xf32>
    %694 = arith.maximumf %692, %693 : vector<1x32xf32>
    %695 = vector.extract_strided_slice %670 {offsets = [16, 0], sizes = [1, 32], strides = [1, 1]} : vector<26x32xf32> to vector<1x32xf32>
    %696 = vector.extract_strided_slice %670 {offsets = [17, 0], sizes = [1, 32], strides = [1, 1]} : vector<26x32xf32> to vector<1x32xf32>
    %697 = arith.maximumf %695, %696 : vector<1x32xf32>
    %698 = vector.extract_strided_slice %670 {offsets = [18, 0], sizes = [1, 32], strides = [1, 1]} : vector<26x32xf32> to vector<1x32xf32>
    %699 = vector.extract_strided_slice %670 {offsets = [19, 0], sizes = [1, 32], strides = [1, 1]} : vector<26x32xf32> to vector<1x32xf32>
    %700 = arith.maximumf %698, %699 : vector<1x32xf32>
    %701 = vector.extract_strided_slice %670 {offsets = [20, 0], sizes = [1, 32], strides = [1, 1]} : vector<26x32xf32> to vector<1x32xf32>
    %702 = vector.extract_strided_slice %670 {offsets = [21, 0], sizes = [1, 32], strides = [1, 1]} : vector<26x32xf32> to vector<1x32xf32>
    %703 = arith.maximumf %701, %702 : vector<1x32xf32>
    %704 = vector.extract_strided_slice %670 {offsets = [22, 0], sizes = [1, 32], strides = [1, 1]} : vector<26x32xf32> to vector<1x32xf32>
    %705 = vector.extract_strided_slice %670 {offsets = [23, 0], sizes = [1, 32], strides = [1, 1]} : vector<26x32xf32> to vector<1x32xf32>
    %706 = arith.maximumf %704, %705 : vector<1x32xf32>
    %707 = vector.extract_strided_slice %670 {offsets = [24, 0], sizes = [1, 32], strides = [1, 1]} : vector<26x32xf32> to vector<1x32xf32>
    %708 = vector.extract_strided_slice %670 {offsets = [25, 0], sizes = [1, 32], strides = [1, 1]} : vector<26x32xf32> to vector<1x32xf32>
    %709 = arith.maximumf %707, %708 : vector<1x32xf32>
    %710 = tpu.concatenate %673, %676, %679, %682, %685, %688, %691, %694, %697, %700, %703, %706, %709 in 0 : vector<1x32xf32>, vector<1x32xf32>, vector<1x32xf32>, vector<1x32xf32>, vector<1x32xf32>, vector<1x32xf32>, vector<1x32xf32>, vector<1x32xf32>, vector<1x32xf32>, vector<1x32xf32>, vector<1x32xf32>, vector<1x32xf32>, vector<1x32xf32> -> vector<13x32xf32>
    %711 = arith.maximumf %288, %303 : vector<26x32xf32>
    %712 = vector.extract_strided_slice %711 {offsets = [0, 0], sizes = [1, 32], strides = [1, 1]} : vector<26x32xf32> to vector<1x32xf32>
    %713 = vector.extract_strided_slice %711 {offsets = [1, 0], sizes = [1, 32], strides = [1, 1]} : vector<26x32xf32> to vector<1x32xf32>
    %714 = arith.maximumf %712, %713 : vector<1x32xf32>
    %715 = vector.extract_strided_slice %711 {offsets = [2, 0], sizes = [1, 32], strides = [1, 1]} : vector<26x32xf32> to vector<1x32xf32>
    %716 = vector.extract_strided_slice %711 {offsets = [3, 0], sizes = [1, 32], strides = [1, 1]} : vector<26x32xf32> to vector<1x32xf32>
    %717 = arith.maximumf %715, %716 : vector<1x32xf32>
    %718 = vector.extract_strided_slice %711 {offsets = [4, 0], sizes = [1, 32], strides = [1, 1]} : vector<26x32xf32> to vector<1x32xf32>
    %719 = vector.extract_strided_slice %711 {offsets = [5, 0], sizes = [1, 32], strides = [1, 1]} : vector<26x32xf32> to vector<1x32xf32>
    %720 = arith.maximumf %718, %719 : vector<1x32xf32>
    %721 = vector.extract_strided_slice %711 {offsets = [6, 0], sizes = [1, 32], strides = [1, 1]} : vector<26x32xf32> to vector<1x32xf32>
    %722 = vector.extract_strided_slice %711 {offsets = [7, 0], sizes = [1, 32], strides = [1, 1]} : vector<26x32xf32> to vector<1x32xf32>
    %723 = arith.maximumf %721, %722 : vector<1x32xf32>
    %724 = vector.extract_strided_slice %711 {offsets = [8, 0], sizes = [1, 32], strides = [1, 1]} : vector<26x32xf32> to vector<1x32xf32>
    %725 = vector.extract_strided_slice %711 {offsets = [9, 0], sizes = [1, 32], strides = [1, 1]} : vector<26x32xf32> to vector<1x32xf32>
    %726 = arith.maximumf %724, %725 : vector<1x32xf32>
    %727 = vector.extract_strided_slice %711 {offsets = [10, 0], sizes = [1, 32], strides = [1, 1]} : vector<26x32xf32> to vector<1x32xf32>
    %728 = vector.extract_strided_slice %711 {offsets = [11, 0], sizes = [1, 32], strides = [1, 1]} : vector<26x32xf32> to vector<1x32xf32>
    %729 = arith.maximumf %727, %728 : vector<1x32xf32>
    %730 = vector.extract_strided_slice %711 {offsets = [12, 0], sizes = [1, 32], strides = [1, 1]} : vector<26x32xf32> to vector<1x32xf32>
    %731 = vector.extract_strided_slice %711 {offsets = [13, 0], sizes = [1, 32], strides = [1, 1]} : vector<26x32xf32> to vector<1x32xf32>
    %732 = arith.maximumf %730, %731 : vector<1x32xf32>
    %733 = vector.extract_strided_slice %711 {offsets = [14, 0], sizes = [1, 32], strides = [1, 1]} : vector<26x32xf32> to vector<1x32xf32>
    %734 = vector.extract_strided_slice %711 {offsets = [15, 0], sizes = [1, 32], strides = [1, 1]} : vector<26x32xf32> to vector<1x32xf32>
    %735 = arith.maximumf %733, %734 : vector<1x32xf32>
    %736 = vector.extract_strided_slice %711 {offsets = [16, 0], sizes = [1, 32], strides = [1, 1]} : vector<26x32xf32> to vector<1x32xf32>
    %737 = vector.extract_strided_slice %711 {offsets = [17, 0], sizes = [1, 32], strides = [1, 1]} : vector<26x32xf32> to vector<1x32xf32>
    %738 = arith.maximumf %736, %737 : vector<1x32xf32>
    %739 = vector.extract_strided_slice %711 {offsets = [18, 0], sizes = [1, 32], strides = [1, 1]} : vector<26x32xf32> to vector<1x32xf32>
    %740 = vector.extract_strided_slice %711 {offsets = [19, 0], sizes = [1, 32], strides = [1, 1]} : vector<26x32xf32> to vector<1x32xf32>
    %741 = arith.maximumf %739, %740 : vector<1x32xf32>
    %742 = vector.extract_strided_slice %711 {offsets = [20, 0], sizes = [1, 32], strides = [1, 1]} : vector<26x32xf32> to vector<1x32xf32>
    %743 = vector.extract_strided_slice %711 {offsets = [21, 0], sizes = [1, 32], strides = [1, 1]} : vector<26x32xf32> to vector<1x32xf32>
    %744 = arith.maximumf %742, %743 : vector<1x32xf32>
    %745 = vector.extract_strided_slice %711 {offsets = [22, 0], sizes = [1, 32], strides = [1, 1]} : vector<26x32xf32> to vector<1x32xf32>
    %746 = vector.extract_strided_slice %711 {offsets = [23, 0], sizes = [1, 32], strides = [1, 1]} : vector<26x32xf32> to vector<1x32xf32>
    %747 = arith.maximumf %745, %746 : vector<1x32xf32>
    %748 = vector.extract_strided_slice %711 {offsets = [24, 0], sizes = [1, 32], strides = [1, 1]} : vector<26x32xf32> to vector<1x32xf32>
    %749 = vector.extract_strided_slice %711 {offsets = [25, 0], sizes = [1, 32], strides = [1, 1]} : vector<26x32xf32> to vector<1x32xf32>
    %750 = arith.maximumf %748, %749 : vector<1x32xf32>
    %751 = tpu.concatenate %714, %717, %720, %723, %726, %729, %732, %735, %738, %741, %744, %747, %750 in 0 : vector<1x32xf32>, vector<1x32xf32>, vector<1x32xf32>, vector<1x32xf32>, vector<1x32xf32>, vector<1x32xf32>, vector<1x32xf32>, vector<1x32xf32>, vector<1x32xf32>, vector<1x32xf32>, vector<1x32xf32>, vector<1x32xf32>, vector<1x32xf32> -> vector<13x32xf32>
    %752 = arith.maximumf %318, %333 : vector<26x32xf32>
    %753 = vector.extract_strided_slice %752 {offsets = [0, 0], sizes = [1, 32], strides = [1, 1]} : vector<26x32xf32> to vector<1x32xf32>
    %754 = vector.extract_strided_slice %752 {offsets = [1, 0], sizes = [1, 32], strides = [1, 1]} : vector<26x32xf32> to vector<1x32xf32>
    %755 = arith.maximumf %753, %754 : vector<1x32xf32>
    %756 = vector.extract_strided_slice %752 {offsets = [2, 0], sizes = [1, 32], strides = [1, 1]} : vector<26x32xf32> to vector<1x32xf32>
    %757 = vector.extract_strided_slice %752 {offsets = [3, 0], sizes = [1, 32], strides = [1, 1]} : vector<26x32xf32> to vector<1x32xf32>
    %758 = arith.maximumf %756, %757 : vector<1x32xf32>
    %759 = vector.extract_strided_slice %752 {offsets = [4, 0], sizes = [1, 32], strides = [1, 1]} : vector<26x32xf32> to vector<1x32xf32>
    %760 = vector.extract_strided_slice %752 {offsets = [5, 0], sizes = [1, 32], strides = [1, 1]} : vector<26x32xf32> to vector<1x32xf32>
    %761 = arith.maximumf %759, %760 : vector<1x32xf32>
    %762 = vector.extract_strided_slice %752 {offsets = [6, 0], sizes = [1, 32], strides = [1, 1]} : vector<26x32xf32> to vector<1x32xf32>
    %763 = vector.extract_strided_slice %752 {offsets = [7, 0], sizes = [1, 32], strides = [1, 1]} : vector<26x32xf32> to vector<1x32xf32>
    %764 = arith.maximumf %762, %763 : vector<1x32xf32>
    %765 = vector.extract_strided_slice %752 {offsets = [8, 0], sizes = [1, 32], strides = [1, 1]} : vector<26x32xf32> to vector<1x32xf32>
    %766 = vector.extract_strided_slice %752 {offsets = [9, 0], sizes = [1, 32], strides = [1, 1]} : vector<26x32xf32> to vector<1x32xf32>
    %767 = arith.maximumf %765, %766 : vector<1x32xf32>
    %768 = vector.extract_strided_slice %752 {offsets = [10, 0], sizes = [1, 32], strides = [1, 1]} : vector<26x32xf32> to vector<1x32xf32>
    %769 = vector.extract_strided_slice %752 {offsets = [11, 0], sizes = [1, 32], strides = [1, 1]} : vector<26x32xf32> to vector<1x32xf32>
    %770 = arith.maximumf %768, %769 : vector<1x32xf32>
    %771 = vector.extract_strided_slice %752 {offsets = [12, 0], sizes = [1, 32], strides = [1, 1]} : vector<26x32xf32> to vector<1x32xf32>
    %772 = vector.extract_strided_slice %752 {offsets = [13, 0], sizes = [1, 32], strides = [1, 1]} : vector<26x32xf32> to vector<1x32xf32>
    %773 = arith.maximumf %771, %772 : vector<1x32xf32>
    %774 = vector.extract_strided_slice %752 {offsets = [14, 0], sizes = [1, 32], strides = [1, 1]} : vector<26x32xf32> to vector<1x32xf32>
    %775 = vector.extract_strided_slice %752 {offsets = [15, 0], sizes = [1, 32], strides = [1, 1]} : vector<26x32xf32> to vector<1x32xf32>
    %776 = arith.maximumf %774, %775 : vector<1x32xf32>
    %777 = vector.extract_strided_slice %752 {offsets = [16, 0], sizes = [1, 32], strides = [1, 1]} : vector<26x32xf32> to vector<1x32xf32>
    %778 = vector.extract_strided_slice %752 {offsets = [17, 0], sizes = [1, 32], strides = [1, 1]} : vector<26x32xf32> to vector<1x32xf32>
    %779 = arith.maximumf %777, %778 : vector<1x32xf32>
    %780 = vector.extract_strided_slice %752 {offsets = [18, 0], sizes = [1, 32], strides = [1, 1]} : vector<26x32xf32> to vector<1x32xf32>
    %781 = vector.extract_strided_slice %752 {offsets = [19, 0], sizes = [1, 32], strides = [1, 1]} : vector<26x32xf32> to vector<1x32xf32>
    %782 = arith.maximumf %780, %781 : vector<1x32xf32>
    %783 = vector.extract_strided_slice %752 {offsets = [20, 0], sizes = [1, 32], strides = [1, 1]} : vector<26x32xf32> to vector<1x32xf32>
    %784 = vector.extract_strided_slice %752 {offsets = [21, 0], sizes = [1, 32], strides = [1, 1]} : vector<26x32xf32> to vector<1x32xf32>
    %785 = arith.maximumf %783, %784 : vector<1x32xf32>
    %786 = vector.extract_strided_slice %752 {offsets = [22, 0], sizes = [1, 32], strides = [1, 1]} : vector<26x32xf32> to vector<1x32xf32>
    %787 = vector.extract_strided_slice %752 {offsets = [23, 0], sizes = [1, 32], strides = [1, 1]} : vector<26x32xf32> to vector<1x32xf32>
    %788 = arith.maximumf %786, %787 : vector<1x32xf32>
    %789 = vector.extract_strided_slice %752 {offsets = [24, 0], sizes = [1, 32], strides = [1, 1]} : vector<26x32xf32> to vector<1x32xf32>
    %790 = vector.extract_strided_slice %752 {offsets = [25, 0], sizes = [1, 32], strides = [1, 1]} : vector<26x32xf32> to vector<1x32xf32>
    %791 = arith.maximumf %789, %790 : vector<1x32xf32>
    %792 = tpu.concatenate %755, %758, %761, %764, %767, %770, %773, %776, %779, %782, %785, %788, %791 in 0 : vector<1x32xf32>, vector<1x32xf32>, vector<1x32xf32>, vector<1x32xf32>, vector<1x32xf32>, vector<1x32xf32>, vector<1x32xf32>, vector<1x32xf32>, vector<1x32xf32>, vector<1x32xf32>, vector<1x32xf32>, vector<1x32xf32>, vector<1x32xf32> -> vector<13x32xf32>
    %793 = arith.maximumf %348, %363 : vector<26x32xf32>
    %794 = vector.extract_strided_slice %793 {offsets = [0, 0], sizes = [1, 32], strides = [1, 1]} : vector<26x32xf32> to vector<1x32xf32>
    %795 = vector.extract_strided_slice %793 {offsets = [1, 0], sizes = [1, 32], strides = [1, 1]} : vector<26x32xf32> to vector<1x32xf32>
    %796 = arith.maximumf %794, %795 : vector<1x32xf32>
    %797 = vector.extract_strided_slice %793 {offsets = [2, 0], sizes = [1, 32], strides = [1, 1]} : vector<26x32xf32> to vector<1x32xf32>
    %798 = vector.extract_strided_slice %793 {offsets = [3, 0], sizes = [1, 32], strides = [1, 1]} : vector<26x32xf32> to vector<1x32xf32>
    %799 = arith.maximumf %797, %798 : vector<1x32xf32>
    %800 = vector.extract_strided_slice %793 {offsets = [4, 0], sizes = [1, 32], strides = [1, 1]} : vector<26x32xf32> to vector<1x32xf32>
    %801 = vector.extract_strided_slice %793 {offsets = [5, 0], sizes = [1, 32], strides = [1, 1]} : vector<26x32xf32> to vector<1x32xf32>
    %802 = arith.maximumf %800, %801 : vector<1x32xf32>
    %803 = vector.extract_strided_slice %793 {offsets = [6, 0], sizes = [1, 32], strides = [1, 1]} : vector<26x32xf32> to vector<1x32xf32>
    %804 = vector.extract_strided_slice %793 {offsets = [7, 0], sizes = [1, 32], strides = [1, 1]} : vector<26x32xf32> to vector<1x32xf32>
    %805 = arith.maximumf %803, %804 : vector<1x32xf32>
    %806 = vector.extract_strided_slice %793 {offsets = [8, 0], sizes = [1, 32], strides = [1, 1]} : vector<26x32xf32> to vector<1x32xf32>
    %807 = vector.extract_strided_slice %793 {offsets = [9, 0], sizes = [1, 32], strides = [1, 1]} : vector<26x32xf32> to vector<1x32xf32>
    %808 = arith.maximumf %806, %807 : vector<1x32xf32>
    %809 = vector.extract_strided_slice %793 {offsets = [10, 0], sizes = [1, 32], strides = [1, 1]} : vector<26x32xf32> to vector<1x32xf32>
    %810 = vector.extract_strided_slice %793 {offsets = [11, 0], sizes = [1, 32], strides = [1, 1]} : vector<26x32xf32> to vector<1x32xf32>
    %811 = arith.maximumf %809, %810 : vector<1x32xf32>
    %812 = vector.extract_strided_slice %793 {offsets = [12, 0], sizes = [1, 32], strides = [1, 1]} : vector<26x32xf32> to vector<1x32xf32>
    %813 = vector.extract_strided_slice %793 {offsets = [13, 0], sizes = [1, 32], strides = [1, 1]} : vector<26x32xf32> to vector<1x32xf32>
    %814 = arith.maximumf %812, %813 : vector<1x32xf32>
    %815 = vector.extract_strided_slice %793 {offsets = [14, 0], sizes = [1, 32], strides = [1, 1]} : vector<26x32xf32> to vector<1x32xf32>
    %816 = vector.extract_strided_slice %793 {offsets = [15, 0], sizes = [1, 32], strides = [1, 1]} : vector<26x32xf32> to vector<1x32xf32>
    %817 = arith.maximumf %815, %816 : vector<1x32xf32>
    %818 = vector.extract_strided_slice %793 {offsets = [16, 0], sizes = [1, 32], strides = [1, 1]} : vector<26x32xf32> to vector<1x32xf32>
    %819 = vector.extract_strided_slice %793 {offsets = [17, 0], sizes = [1, 32], strides = [1, 1]} : vector<26x32xf32> to vector<1x32xf32>
    %820 = arith.maximumf %818, %819 : vector<1x32xf32>
    %821 = vector.extract_strided_slice %793 {offsets = [18, 0], sizes = [1, 32], strides = [1, 1]} : vector<26x32xf32> to vector<1x32xf32>
    %822 = vector.extract_strided_slice %793 {offsets = [19, 0], sizes = [1, 32], strides = [1, 1]} : vector<26x32xf32> to vector<1x32xf32>
    %823 = arith.maximumf %821, %822 : vector<1x32xf32>
    %824 = vector.extract_strided_slice %793 {offsets = [20, 0], sizes = [1, 32], strides = [1, 1]} : vector<26x32xf32> to vector<1x32xf32>
    %825 = vector.extract_strided_slice %793 {offsets = [21, 0], sizes = [1, 32], strides = [1, 1]} : vector<26x32xf32> to vector<1x32xf32>
    %826 = arith.maximumf %824, %825 : vector<1x32xf32>
    %827 = vector.extract_strided_slice %793 {offsets = [22, 0], sizes = [1, 32], strides = [1, 1]} : vector<26x32xf32> to vector<1x32xf32>
    %828 = vector.extract_strided_slice %793 {offsets = [23, 0], sizes = [1, 32], strides = [1, 1]} : vector<26x32xf32> to vector<1x32xf32>
    %829 = arith.maximumf %827, %828 : vector<1x32xf32>
    %830 = vector.extract_strided_slice %793 {offsets = [24, 0], sizes = [1, 32], strides = [1, 1]} : vector<26x32xf32> to vector<1x32xf32>
    %831 = vector.extract_strided_slice %793 {offsets = [25, 0], sizes = [1, 32], strides = [1, 1]} : vector<26x32xf32> to vector<1x32xf32>
    %832 = arith.maximumf %830, %831 : vector<1x32xf32>
    %833 = tpu.concatenate %796, %799, %802, %805, %808, %811, %814, %817, %820, %823, %826, %829, %832 in 0 : vector<1x32xf32>, vector<1x32xf32>, vector<1x32xf32>, vector<1x32xf32>, vector<1x32xf32>, vector<1x32xf32>, vector<1x32xf32>, vector<1x32xf32>, vector<1x32xf32>, vector<1x32xf32>, vector<1x32xf32>, vector<1x32xf32>, vector<1x32xf32> -> vector<13x32xf32>
    %834 = arith.maximumf %378, %393 : vector<26x32xf32>
    %835 = vector.extract_strided_slice %834 {offsets = [0, 0], sizes = [1, 32], strides = [1, 1]} : vector<26x32xf32> to vector<1x32xf32>
    %836 = vector.extract_strided_slice %834 {offsets = [1, 0], sizes = [1, 32], strides = [1, 1]} : vector<26x32xf32> to vector<1x32xf32>
    %837 = arith.maximumf %835, %836 : vector<1x32xf32>
    %838 = vector.extract_strided_slice %834 {offsets = [2, 0], sizes = [1, 32], strides = [1, 1]} : vector<26x32xf32> to vector<1x32xf32>
    %839 = vector.extract_strided_slice %834 {offsets = [3, 0], sizes = [1, 32], strides = [1, 1]} : vector<26x32xf32> to vector<1x32xf32>
    %840 = arith.maximumf %838, %839 : vector<1x32xf32>
    %841 = vector.extract_strided_slice %834 {offsets = [4, 0], sizes = [1, 32], strides = [1, 1]} : vector<26x32xf32> to vector<1x32xf32>
    %842 = vector.extract_strided_slice %834 {offsets = [5, 0], sizes = [1, 32], strides = [1, 1]} : vector<26x32xf32> to vector<1x32xf32>
    %843 = arith.maximumf %841, %842 : vector<1x32xf32>
    %844 = vector.extract_strided_slice %834 {offsets = [6, 0], sizes = [1, 32], strides = [1, 1]} : vector<26x32xf32> to vector<1x32xf32>
    %845 = vector.extract_strided_slice %834 {offsets = [7, 0], sizes = [1, 32], strides = [1, 1]} : vector<26x32xf32> to vector<1x32xf32>
    %846 = arith.maximumf %844, %845 : vector<1x32xf32>
    %847 = vector.extract_strided_slice %834 {offsets = [8, 0], sizes = [1, 32], strides = [1, 1]} : vector<26x32xf32> to vector<1x32xf32>
    %848 = vector.extract_strided_slice %834 {offsets = [9, 0], sizes = [1, 32], strides = [1, 1]} : vector<26x32xf32> to vector<1x32xf32>
    %849 = arith.maximumf %847, %848 : vector<1x32xf32>
    %850 = vector.extract_strided_slice %834 {offsets = [10, 0], sizes = [1, 32], strides = [1, 1]} : vector<26x32xf32> to vector<1x32xf32>
    %851 = vector.extract_strided_slice %834 {offsets = [11, 0], sizes = [1, 32], strides = [1, 1]} : vector<26x32xf32> to vector<1x32xf32>
    %852 = arith.maximumf %850, %851 : vector<1x32xf32>
    %853 = vector.extract_strided_slice %834 {offsets = [12, 0], sizes = [1, 32], strides = [1, 1]} : vector<26x32xf32> to vector<1x32xf32>
    %854 = vector.extract_strided_slice %834 {offsets = [13, 0], sizes = [1, 32], strides = [1, 1]} : vector<26x32xf32> to vector<1x32xf32>
    %855 = arith.maximumf %853, %854 : vector<1x32xf32>
    %856 = vector.extract_strided_slice %834 {offsets = [14, 0], sizes = [1, 32], strides = [1, 1]} : vector<26x32xf32> to vector<1x32xf32>
    %857 = vector.extract_strided_slice %834 {offsets = [15, 0], sizes = [1, 32], strides = [1, 1]} : vector<26x32xf32> to vector<1x32xf32>
    %858 = arith.maximumf %856, %857 : vector<1x32xf32>
    %859 = vector.extract_strided_slice %834 {offsets = [16, 0], sizes = [1, 32], strides = [1, 1]} : vector<26x32xf32> to vector<1x32xf32>
    %860 = vector.extract_strided_slice %834 {offsets = [17, 0], sizes = [1, 32], strides = [1, 1]} : vector<26x32xf32> to vector<1x32xf32>
    %861 = arith.maximumf %859, %860 : vector<1x32xf32>
    %862 = vector.extract_strided_slice %834 {offsets = [18, 0], sizes = [1, 32], strides = [1, 1]} : vector<26x32xf32> to vector<1x32xf32>
    %863 = vector.extract_strided_slice %834 {offsets = [19, 0], sizes = [1, 32], strides = [1, 1]} : vector<26x32xf32> to vector<1x32xf32>
    %864 = arith.maximumf %862, %863 : vector<1x32xf32>
    %865 = vector.extract_strided_slice %834 {offsets = [20, 0], sizes = [1, 32], strides = [1, 1]} : vector<26x32xf32> to vector<1x32xf32>
    %866 = vector.extract_strided_slice %834 {offsets = [21, 0], sizes = [1, 32], strides = [1, 1]} : vector<26x32xf32> to vector<1x32xf32>
    %867 = arith.maximumf %865, %866 : vector<1x32xf32>
    %868 = vector.extract_strided_slice %834 {offsets = [22, 0], sizes = [1, 32], strides = [1, 1]} : vector<26x32xf32> to vector<1x32xf32>
    %869 = vector.extract_strided_slice %834 {offsets = [23, 0], sizes = [1, 32], strides = [1, 1]} : vector<26x32xf32> to vector<1x32xf32>
    %870 = arith.maximumf %868, %869 : vector<1x32xf32>
    %871 = vector.extract_strided_slice %834 {offsets = [24, 0], sizes = [1, 32], strides = [1, 1]} : vector<26x32xf32> to vector<1x32xf32>
    %872 = vector.extract_strided_slice %834 {offsets = [25, 0], sizes = [1, 32], strides = [1, 1]} : vector<26x32xf32> to vector<1x32xf32>
    %873 = arith.maximumf %871, %872 : vector<1x32xf32>
    %874 = tpu.concatenate %837, %840, %843, %846, %849, %852, %855, %858, %861, %864, %867, %870, %873 in 0 : vector<1x32xf32>, vector<1x32xf32>, vector<1x32xf32>, vector<1x32xf32>, vector<1x32xf32>, vector<1x32xf32>, vector<1x32xf32>, vector<1x32xf32>, vector<1x32xf32>, vector<1x32xf32>, vector<1x32xf32>, vector<1x32xf32>, vector<1x32xf32> -> vector<13x32xf32>
    %875 = arith.maximumf %408, %423 : vector<26x32xf32>
    %876 = vector.extract_strided_slice %875 {offsets = [0, 0], sizes = [1, 32], strides = [1, 1]} : vector<26x32xf32> to vector<1x32xf32>
    %877 = vector.extract_strided_slice %875 {offsets = [1, 0], sizes = [1, 32], strides = [1, 1]} : vector<26x32xf32> to vector<1x32xf32>
    %878 = arith.maximumf %876, %877 : vector<1x32xf32>
    %879 = vector.extract_strided_slice %875 {offsets = [2, 0], sizes = [1, 32], strides = [1, 1]} : vector<26x32xf32> to vector<1x32xf32>
    %880 = vector.extract_strided_slice %875 {offsets = [3, 0], sizes = [1, 32], strides = [1, 1]} : vector<26x32xf32> to vector<1x32xf32>
    %881 = arith.maximumf %879, %880 : vector<1x32xf32>
    %882 = vector.extract_strided_slice %875 {offsets = [4, 0], sizes = [1, 32], strides = [1, 1]} : vector<26x32xf32> to vector<1x32xf32>
    %883 = vector.extract_strided_slice %875 {offsets = [5, 0], sizes = [1, 32], strides = [1, 1]} : vector<26x32xf32> to vector<1x32xf32>
    %884 = arith.maximumf %882, %883 : vector<1x32xf32>
    %885 = vector.extract_strided_slice %875 {offsets = [6, 0], sizes = [1, 32], strides = [1, 1]} : vector<26x32xf32> to vector<1x32xf32>
    %886 = vector.extract_strided_slice %875 {offsets = [7, 0], sizes = [1, 32], strides = [1, 1]} : vector<26x32xf32> to vector<1x32xf32>
    %887 = arith.maximumf %885, %886 : vector<1x32xf32>
    %888 = vector.extract_strided_slice %875 {offsets = [8, 0], sizes = [1, 32], strides = [1, 1]} : vector<26x32xf32> to vector<1x32xf32>
    %889 = vector.extract_strided_slice %875 {offsets = [9, 0], sizes = [1, 32], strides = [1, 1]} : vector<26x32xf32> to vector<1x32xf32>
    %890 = arith.maximumf %888, %889 : vector<1x32xf32>
    %891 = vector.extract_strided_slice %875 {offsets = [10, 0], sizes = [1, 32], strides = [1, 1]} : vector<26x32xf32> to vector<1x32xf32>
    %892 = vector.extract_strided_slice %875 {offsets = [11, 0], sizes = [1, 32], strides = [1, 1]} : vector<26x32xf32> to vector<1x32xf32>
    %893 = arith.maximumf %891, %892 : vector<1x32xf32>
    %894 = vector.extract_strided_slice %875 {offsets = [12, 0], sizes = [1, 32], strides = [1, 1]} : vector<26x32xf32> to vector<1x32xf32>
    %895 = vector.extract_strided_slice %875 {offsets = [13, 0], sizes = [1, 32], strides = [1, 1]} : vector<26x32xf32> to vector<1x32xf32>
    %896 = arith.maximumf %894, %895 : vector<1x32xf32>
    %897 = vector.extract_strided_slice %875 {offsets = [14, 0], sizes = [1, 32], strides = [1, 1]} : vector<26x32xf32> to vector<1x32xf32>
    %898 = vector.extract_strided_slice %875 {offsets = [15, 0], sizes = [1, 32], strides = [1, 1]} : vector<26x32xf32> to vector<1x32xf32>
    %899 = arith.maximumf %897, %898 : vector<1x32xf32>
    %900 = vector.extract_strided_slice %875 {offsets = [16, 0], sizes = [1, 32], strides = [1, 1]} : vector<26x32xf32> to vector<1x32xf32>
    %901 = vector.extract_strided_slice %875 {offsets = [17, 0], sizes = [1, 32], strides = [1, 1]} : vector<26x32xf32> to vector<1x32xf32>
    %902 = arith.maximumf %900, %901 : vector<1x32xf32>
    %903 = vector.extract_strided_slice %875 {offsets = [18, 0], sizes = [1, 32], strides = [1, 1]} : vector<26x32xf32> to vector<1x32xf32>
    %904 = vector.extract_strided_slice %875 {offsets = [19, 0], sizes = [1, 32], strides = [1, 1]} : vector<26x32xf32> to vector<1x32xf32>
    %905 = arith.maximumf %903, %904 : vector<1x32xf32>
    %906 = vector.extract_strided_slice %875 {offsets = [20, 0], sizes = [1, 32], strides = [1, 1]} : vector<26x32xf32> to vector<1x32xf32>
    %907 = vector.extract_strided_slice %875 {offsets = [21, 0], sizes = [1, 32], strides = [1, 1]} : vector<26x32xf32> to vector<1x32xf32>
    %908 = arith.maximumf %906, %907 : vector<1x32xf32>
    %909 = vector.extract_strided_slice %875 {offsets = [22, 0], sizes = [1, 32], strides = [1, 1]} : vector<26x32xf32> to vector<1x32xf32>
    %910 = vector.extract_strided_slice %875 {offsets = [23, 0], sizes = [1, 32], strides = [1, 1]} : vector<26x32xf32> to vector<1x32xf32>
    %911 = arith.maximumf %909, %910 : vector<1x32xf32>
    %912 = vector.extract_strided_slice %875 {offsets = [24, 0], sizes = [1, 32], strides = [1, 1]} : vector<26x32xf32> to vector<1x32xf32>
    %913 = vector.extract_strided_slice %875 {offsets = [25, 0], sizes = [1, 32], strides = [1, 1]} : vector<26x32xf32> to vector<1x32xf32>
    %914 = arith.maximumf %912, %913 : vector<1x32xf32>
    %915 = tpu.concatenate %878, %881, %884, %887, %890, %893, %896, %899, %902, %905, %908, %911, %914 in 0 : vector<1x32xf32>, vector<1x32xf32>, vector<1x32xf32>, vector<1x32xf32>, vector<1x32xf32>, vector<1x32xf32>, vector<1x32xf32>, vector<1x32xf32>, vector<1x32xf32>, vector<1x32xf32>, vector<1x32xf32>, vector<1x32xf32>, vector<1x32xf32> -> vector<13x32xf32>
    %916 = vector.extract_strided_slice %464 {offsets = [0, 0], sizes = [11, 32], strides = [1, 1]} : vector<13x32xf32> to vector<11x32xf32>
    %917 = vector.extract_strided_slice %464 {offsets = [1, 0], sizes = [11, 32], strides = [1, 1]} : vector<13x32xf32> to vector<11x32xf32>
    %918 = vector.extract_strided_slice %464 {offsets = [2, 0], sizes = [11, 32], strides = [1, 1]} : vector<13x32xf32> to vector<11x32xf32>
    %919 = vector.extract_strided_slice %505 {offsets = [0, 0], sizes = [11, 32], strides = [1, 1]} : vector<13x32xf32> to vector<11x32xf32>
    %920 = vector.extract_strided_slice %505 {offsets = [1, 0], sizes = [11, 32], strides = [1, 1]} : vector<13x32xf32> to vector<11x32xf32>
    %921 = vector.extract_strided_slice %505 {offsets = [2, 0], sizes = [11, 32], strides = [1, 1]} : vector<13x32xf32> to vector<11x32xf32>
    %922 = vector.extract_strided_slice %546 {offsets = [0, 0], sizes = [11, 32], strides = [1, 1]} : vector<13x32xf32> to vector<11x32xf32>
    %923 = vector.extract_strided_slice %546 {offsets = [1, 0], sizes = [11, 32], strides = [1, 1]} : vector<13x32xf32> to vector<11x32xf32>
    %924 = vector.extract_strided_slice %546 {offsets = [2, 0], sizes = [11, 32], strides = [1, 1]} : vector<13x32xf32> to vector<11x32xf32>
    %925 = tpu.concatenate %916, %917, %918, %919, %920, %921, %922, %923, %924 in 1 : vector<11x32xf32>, vector<11x32xf32>, vector<11x32xf32>, vector<11x32xf32>, vector<11x32xf32>, vector<11x32xf32>, vector<11x32xf32>, vector<11x32xf32>, vector<11x32xf32> -> vector<11x288xf32>
    %cst_70 = arith.constant dense<0.000000e+00> : vector<11x64xf32>
    %926 = tpu.matmul %925, %56, %cst_70 {dimension_numbers = #tpu.dot_dimension_numbers<[1], [0], [0], [1], [0, 0, 1, 1], [], []>} : vector<11x288xf32>, vector<288x64xf32>, vector<11x64xf32> -> vector<11x64xf32>
    %927 = vector.broadcast %57 : vector<1x64xf32> to vector<11x64xf32>
    %928 = arith.addf %926, %927 : vector<11x64xf32>
    %cst_71 = arith.constant 0.000000e+00 : f32
    %929 = vector.broadcast %cst_71 : f32 to vector<11x64xf32>
    %930 = arith.maximumf %928, %929 : vector<11x64xf32>
    %931 = vector.extract_strided_slice %505 {offsets = [0, 0], sizes = [11, 32], strides = [1, 1]} : vector<13x32xf32> to vector<11x32xf32>
    %932 = vector.extract_strided_slice %505 {offsets = [1, 0], sizes = [11, 32], strides = [1, 1]} : vector<13x32xf32> to vector<11x32xf32>
    %933 = vector.extract_strided_slice %505 {offsets = [2, 0], sizes = [11, 32], strides = [1, 1]} : vector<13x32xf32> to vector<11x32xf32>
    %934 = vector.extract_strided_slice %546 {offsets = [0, 0], sizes = [11, 32], strides = [1, 1]} : vector<13x32xf32> to vector<11x32xf32>
    %935 = vector.extract_strided_slice %546 {offsets = [1, 0], sizes = [11, 32], strides = [1, 1]} : vector<13x32xf32> to vector<11x32xf32>
    %936 = vector.extract_strided_slice %546 {offsets = [2, 0], sizes = [11, 32], strides = [1, 1]} : vector<13x32xf32> to vector<11x32xf32>
    %937 = vector.extract_strided_slice %587 {offsets = [0, 0], sizes = [11, 32], strides = [1, 1]} : vector<13x32xf32> to vector<11x32xf32>
    %938 = vector.extract_strided_slice %587 {offsets = [1, 0], sizes = [11, 32], strides = [1, 1]} : vector<13x32xf32> to vector<11x32xf32>
    %939 = vector.extract_strided_slice %587 {offsets = [2, 0], sizes = [11, 32], strides = [1, 1]} : vector<13x32xf32> to vector<11x32xf32>
    %940 = tpu.concatenate %931, %932, %933, %934, %935, %936, %937, %938, %939 in 1 : vector<11x32xf32>, vector<11x32xf32>, vector<11x32xf32>, vector<11x32xf32>, vector<11x32xf32>, vector<11x32xf32>, vector<11x32xf32>, vector<11x32xf32>, vector<11x32xf32> -> vector<11x288xf32>
    %cst_72 = arith.constant dense<0.000000e+00> : vector<11x64xf32>
    %941 = tpu.matmul %940, %56, %cst_72 {dimension_numbers = #tpu.dot_dimension_numbers<[1], [0], [0], [1], [0, 0, 1, 1], [], []>} : vector<11x288xf32>, vector<288x64xf32>, vector<11x64xf32> -> vector<11x64xf32>
    %942 = vector.broadcast %57 : vector<1x64xf32> to vector<11x64xf32>
    %943 = arith.addf %941, %942 : vector<11x64xf32>
    %cst_73 = arith.constant 0.000000e+00 : f32
    %944 = vector.broadcast %cst_73 : f32 to vector<11x64xf32>
    %945 = arith.maximumf %943, %944 : vector<11x64xf32>
    %946 = vector.extract_strided_slice %546 {offsets = [0, 0], sizes = [11, 32], strides = [1, 1]} : vector<13x32xf32> to vector<11x32xf32>
    %947 = vector.extract_strided_slice %546 {offsets = [1, 0], sizes = [11, 32], strides = [1, 1]} : vector<13x32xf32> to vector<11x32xf32>
    %948 = vector.extract_strided_slice %546 {offsets = [2, 0], sizes = [11, 32], strides = [1, 1]} : vector<13x32xf32> to vector<11x32xf32>
    %949 = vector.extract_strided_slice %587 {offsets = [0, 0], sizes = [11, 32], strides = [1, 1]} : vector<13x32xf32> to vector<11x32xf32>
    %950 = vector.extract_strided_slice %587 {offsets = [1, 0], sizes = [11, 32], strides = [1, 1]} : vector<13x32xf32> to vector<11x32xf32>
    %951 = vector.extract_strided_slice %587 {offsets = [2, 0], sizes = [11, 32], strides = [1, 1]} : vector<13x32xf32> to vector<11x32xf32>
    %952 = vector.extract_strided_slice %628 {offsets = [0, 0], sizes = [11, 32], strides = [1, 1]} : vector<13x32xf32> to vector<11x32xf32>
    %953 = vector.extract_strided_slice %628 {offsets = [1, 0], sizes = [11, 32], strides = [1, 1]} : vector<13x32xf32> to vector<11x32xf32>
    %954 = vector.extract_strided_slice %628 {offsets = [2, 0], sizes = [11, 32], strides = [1, 1]} : vector<13x32xf32> to vector<11x32xf32>
    %955 = tpu.concatenate %946, %947, %948, %949, %950, %951, %952, %953, %954 in 1 : vector<11x32xf32>, vector<11x32xf32>, vector<11x32xf32>, vector<11x32xf32>, vector<11x32xf32>, vector<11x32xf32>, vector<11x32xf32>, vector<11x32xf32>, vector<11x32xf32> -> vector<11x288xf32>
    %cst_74 = arith.constant dense<0.000000e+00> : vector<11x64xf32>
    %956 = tpu.matmul %955, %56, %cst_74 {dimension_numbers = #tpu.dot_dimension_numbers<[1], [0], [0], [1], [0, 0, 1, 1], [], []>} : vector<11x288xf32>, vector<288x64xf32>, vector<11x64xf32> -> vector<11x64xf32>
    %957 = vector.broadcast %57 : vector<1x64xf32> to vector<11x64xf32>
    %958 = arith.addf %956, %957 : vector<11x64xf32>
    %cst_75 = arith.constant 0.000000e+00 : f32
    %959 = vector.broadcast %cst_75 : f32 to vector<11x64xf32>
    %960 = arith.maximumf %958, %959 : vector<11x64xf32>
    %961 = vector.extract_strided_slice %587 {offsets = [0, 0], sizes = [11, 32], strides = [1, 1]} : vector<13x32xf32> to vector<11x32xf32>
    %962 = vector.extract_strided_slice %587 {offsets = [1, 0], sizes = [11, 32], strides = [1, 1]} : vector<13x32xf32> to vector<11x32xf32>
    %963 = vector.extract_strided_slice %587 {offsets = [2, 0], sizes = [11, 32], strides = [1, 1]} : vector<13x32xf32> to vector<11x32xf32>
    %964 = vector.extract_strided_slice %628 {offsets = [0, 0], sizes = [11, 32], strides = [1, 1]} : vector<13x32xf32> to vector<11x32xf32>
    %965 = vector.extract_strided_slice %628 {offsets = [1, 0], sizes = [11, 32], strides = [1, 1]} : vector<13x32xf32> to vector<11x32xf32>
    %966 = vector.extract_strided_slice %628 {offsets = [2, 0], sizes = [11, 32], strides = [1, 1]} : vector<13x32xf32> to vector<11x32xf32>
    %967 = vector.extract_strided_slice %669 {offsets = [0, 0], sizes = [11, 32], strides = [1, 1]} : vector<13x32xf32> to vector<11x32xf32>
    %968 = vector.extract_strided_slice %669 {offsets = [1, 0], sizes = [11, 32], strides = [1, 1]} : vector<13x32xf32> to vector<11x32xf32>
    %969 = vector.extract_strided_slice %669 {offsets = [2, 0], sizes = [11, 32], strides = [1, 1]} : vector<13x32xf32> to vector<11x32xf32>
    %970 = tpu.concatenate %961, %962, %963, %964, %965, %966, %967, %968, %969 in 1 : vector<11x32xf32>, vector<11x32xf32>, vector<11x32xf32>, vector<11x32xf32>, vector<11x32xf32>, vector<11x32xf32>, vector<11x32xf32>, vector<11x32xf32>, vector<11x32xf32> -> vector<11x288xf32>
    %cst_76 = arith.constant dense<0.000000e+00> : vector<11x64xf32>
    %971 = tpu.matmul %970, %56, %cst_76 {dimension_numbers = #tpu.dot_dimension_numbers<[1], [0], [0], [1], [0, 0, 1, 1], [], []>} : vector<11x288xf32>, vector<288x64xf32>, vector<11x64xf32> -> vector<11x64xf32>
    %972 = vector.broadcast %57 : vector<1x64xf32> to vector<11x64xf32>
    %973 = arith.addf %971, %972 : vector<11x64xf32>
    %cst_77 = arith.constant 0.000000e+00 : f32
    %974 = vector.broadcast %cst_77 : f32 to vector<11x64xf32>
    %975 = arith.maximumf %973, %974 : vector<11x64xf32>
    %976 = vector.extract_strided_slice %628 {offsets = [0, 0], sizes = [11, 32], strides = [1, 1]} : vector<13x32xf32> to vector<11x32xf32>
    %977 = vector.extract_strided_slice %628 {offsets = [1, 0], sizes = [11, 32], strides = [1, 1]} : vector<13x32xf32> to vector<11x32xf32>
    %978 = vector.extract_strided_slice %628 {offsets = [2, 0], sizes = [11, 32], strides = [1, 1]} : vector<13x32xf32> to vector<11x32xf32>
    %979 = vector.extract_strided_slice %669 {offsets = [0, 0], sizes = [11, 32], strides = [1, 1]} : vector<13x32xf32> to vector<11x32xf32>
    %980 = vector.extract_strided_slice %669 {offsets = [1, 0], sizes = [11, 32], strides = [1, 1]} : vector<13x32xf32> to vector<11x32xf32>
    %981 = vector.extract_strided_slice %669 {offsets = [2, 0], sizes = [11, 32], strides = [1, 1]} : vector<13x32xf32> to vector<11x32xf32>
    %982 = vector.extract_strided_slice %710 {offsets = [0, 0], sizes = [11, 32], strides = [1, 1]} : vector<13x32xf32> to vector<11x32xf32>
    %983 = vector.extract_strided_slice %710 {offsets = [1, 0], sizes = [11, 32], strides = [1, 1]} : vector<13x32xf32> to vector<11x32xf32>
    %984 = vector.extract_strided_slice %710 {offsets = [2, 0], sizes = [11, 32], strides = [1, 1]} : vector<13x32xf32> to vector<11x32xf32>
    %985 = tpu.concatenate %976, %977, %978, %979, %980, %981, %982, %983, %984 in 1 : vector<11x32xf32>, vector<11x32xf32>, vector<11x32xf32>, vector<11x32xf32>, vector<11x32xf32>, vector<11x32xf32>, vector<11x32xf32>, vector<11x32xf32>, vector<11x32xf32> -> vector<11x288xf32>
    %cst_78 = arith.constant dense<0.000000e+00> : vector<11x64xf32>
    %986 = tpu.matmul %985, %56, %cst_78 {dimension_numbers = #tpu.dot_dimension_numbers<[1], [0], [0], [1], [0, 0, 1, 1], [], []>} : vector<11x288xf32>, vector<288x64xf32>, vector<11x64xf32> -> vector<11x64xf32>
    %987 = vector.broadcast %57 : vector<1x64xf32> to vector<11x64xf32>
    %988 = arith.addf %986, %987 : vector<11x64xf32>
    %cst_79 = arith.constant 0.000000e+00 : f32
    %989 = vector.broadcast %cst_79 : f32 to vector<11x64xf32>
    %990 = arith.maximumf %988, %989 : vector<11x64xf32>
    %991 = vector.extract_strided_slice %669 {offsets = [0, 0], sizes = [11, 32], strides = [1, 1]} : vector<13x32xf32> to vector<11x32xf32>
    %992 = vector.extract_strided_slice %669 {offsets = [1, 0], sizes = [11, 32], strides = [1, 1]} : vector<13x32xf32> to vector<11x32xf32>
    %993 = vector.extract_strided_slice %669 {offsets = [2, 0], sizes = [11, 32], strides = [1, 1]} : vector<13x32xf32> to vector<11x32xf32>
    %994 = vector.extract_strided_slice %710 {offsets = [0, 0], sizes = [11, 32], strides = [1, 1]} : vector<13x32xf32> to vector<11x32xf32>
    %995 = vector.extract_strided_slice %710 {offsets = [1, 0], sizes = [11, 32], strides = [1, 1]} : vector<13x32xf32> to vector<11x32xf32>
    %996 = vector.extract_strided_slice %710 {offsets = [2, 0], sizes = [11, 32], strides = [1, 1]} : vector<13x32xf32> to vector<11x32xf32>
    %997 = vector.extract_strided_slice %751 {offsets = [0, 0], sizes = [11, 32], strides = [1, 1]} : vector<13x32xf32> to vector<11x32xf32>
    %998 = vector.extract_strided_slice %751 {offsets = [1, 0], sizes = [11, 32], strides = [1, 1]} : vector<13x32xf32> to vector<11x32xf32>
    %999 = vector.extract_strided_slice %751 {offsets = [2, 0], sizes = [11, 32], strides = [1, 1]} : vector<13x32xf32> to vector<11x32xf32>
    %1000 = tpu.concatenate %991, %992, %993, %994, %995, %996, %997, %998, %999 in 1 : vector<11x32xf32>, vector<11x32xf32>, vector<11x32xf32>, vector<11x32xf32>, vector<11x32xf32>, vector<11x32xf32>, vector<11x32xf32>, vector<11x32xf32>, vector<11x32xf32> -> vector<11x288xf32>
    %cst_80 = arith.constant dense<0.000000e+00> : vector<11x64xf32>
    %1001 = tpu.matmul %1000, %56, %cst_80 {dimension_numbers = #tpu.dot_dimension_numbers<[1], [0], [0], [1], [0, 0, 1, 1], [], []>} : vector<11x288xf32>, vector<288x64xf32>, vector<11x64xf32> -> vector<11x64xf32>
    %1002 = vector.broadcast %57 : vector<1x64xf32> to vector<11x64xf32>
    %1003 = arith.addf %1001, %1002 : vector<11x64xf32>
    %cst_81 = arith.constant 0.000000e+00 : f32
    %1004 = vector.broadcast %cst_81 : f32 to vector<11x64xf32>
    %1005 = arith.maximumf %1003, %1004 : vector<11x64xf32>
    %1006 = vector.extract_strided_slice %710 {offsets = [0, 0], sizes = [11, 32], strides = [1, 1]} : vector<13x32xf32> to vector<11x32xf32>
    %1007 = vector.extract_strided_slice %710 {offsets = [1, 0], sizes = [11, 32], strides = [1, 1]} : vector<13x32xf32> to vector<11x32xf32>
    %1008 = vector.extract_strided_slice %710 {offsets = [2, 0], sizes = [11, 32], strides = [1, 1]} : vector<13x32xf32> to vector<11x32xf32>
    %1009 = vector.extract_strided_slice %751 {offsets = [0, 0], sizes = [11, 32], strides = [1, 1]} : vector<13x32xf32> to vector<11x32xf32>
    %1010 = vector.extract_strided_slice %751 {offsets = [1, 0], sizes = [11, 32], strides = [1, 1]} : vector<13x32xf32> to vector<11x32xf32>
    %1011 = vector.extract_strided_slice %751 {offsets = [2, 0], sizes = [11, 32], strides = [1, 1]} : vector<13x32xf32> to vector<11x32xf32>
    %1012 = vector.extract_strided_slice %792 {offsets = [0, 0], sizes = [11, 32], strides = [1, 1]} : vector<13x32xf32> to vector<11x32xf32>
    %1013 = vector.extract_strided_slice %792 {offsets = [1, 0], sizes = [11, 32], strides = [1, 1]} : vector<13x32xf32> to vector<11x32xf32>
    %1014 = vector.extract_strided_slice %792 {offsets = [2, 0], sizes = [11, 32], strides = [1, 1]} : vector<13x32xf32> to vector<11x32xf32>
    %1015 = tpu.concatenate %1006, %1007, %1008, %1009, %1010, %1011, %1012, %1013, %1014 in 1 : vector<11x32xf32>, vector<11x32xf32>, vector<11x32xf32>, vector<11x32xf32>, vector<11x32xf32>, vector<11x32xf32>, vector<11x32xf32>, vector<11x32xf32>, vector<11x32xf32> -> vector<11x288xf32>
    %cst_82 = arith.constant dense<0.000000e+00> : vector<11x64xf32>
    %1016 = tpu.matmul %1015, %56, %cst_82 {dimension_numbers = #tpu.dot_dimension_numbers<[1], [0], [0], [1], [0, 0, 1, 1], [], []>} : vector<11x288xf32>, vector<288x64xf32>, vector<11x64xf32> -> vector<11x64xf32>
    %1017 = vector.broadcast %57 : vector<1x64xf32> to vector<11x64xf32>
    %1018 = arith.addf %1016, %1017 : vector<11x64xf32>
    %cst_83 = arith.constant 0.000000e+00 : f32
    %1019 = vector.broadcast %cst_83 : f32 to vector<11x64xf32>
    %1020 = arith.maximumf %1018, %1019 : vector<11x64xf32>
    %1021 = vector.extract_strided_slice %751 {offsets = [0, 0], sizes = [11, 32], strides = [1, 1]} : vector<13x32xf32> to vector<11x32xf32>
    %1022 = vector.extract_strided_slice %751 {offsets = [1, 0], sizes = [11, 32], strides = [1, 1]} : vector<13x32xf32> to vector<11x32xf32>
    %1023 = vector.extract_strided_slice %751 {offsets = [2, 0], sizes = [11, 32], strides = [1, 1]} : vector<13x32xf32> to vector<11x32xf32>
    %1024 = vector.extract_strided_slice %792 {offsets = [0, 0], sizes = [11, 32], strides = [1, 1]} : vector<13x32xf32> to vector<11x32xf32>
    %1025 = vector.extract_strided_slice %792 {offsets = [1, 0], sizes = [11, 32], strides = [1, 1]} : vector<13x32xf32> to vector<11x32xf32>
    %1026 = vector.extract_strided_slice %792 {offsets = [2, 0], sizes = [11, 32], strides = [1, 1]} : vector<13x32xf32> to vector<11x32xf32>
    %1027 = vector.extract_strided_slice %833 {offsets = [0, 0], sizes = [11, 32], strides = [1, 1]} : vector<13x32xf32> to vector<11x32xf32>
    %1028 = vector.extract_strided_slice %833 {offsets = [1, 0], sizes = [11, 32], strides = [1, 1]} : vector<13x32xf32> to vector<11x32xf32>
    %1029 = vector.extract_strided_slice %833 {offsets = [2, 0], sizes = [11, 32], strides = [1, 1]} : vector<13x32xf32> to vector<11x32xf32>
    %1030 = tpu.concatenate %1021, %1022, %1023, %1024, %1025, %1026, %1027, %1028, %1029 in 1 : vector<11x32xf32>, vector<11x32xf32>, vector<11x32xf32>, vector<11x32xf32>, vector<11x32xf32>, vector<11x32xf32>, vector<11x32xf32>, vector<11x32xf32>, vector<11x32xf32> -> vector<11x288xf32>
    %cst_84 = arith.constant dense<0.000000e+00> : vector<11x64xf32>
    %1031 = tpu.matmul %1030, %56, %cst_84 {dimension_numbers = #tpu.dot_dimension_numbers<[1], [0], [0], [1], [0, 0, 1, 1], [], []>} : vector<11x288xf32>, vector<288x64xf32>, vector<11x64xf32> -> vector<11x64xf32>
    %1032 = vector.broadcast %57 : vector<1x64xf32> to vector<11x64xf32>
    %1033 = arith.addf %1031, %1032 : vector<11x64xf32>
    %cst_85 = arith.constant 0.000000e+00 : f32
    %1034 = vector.broadcast %cst_85 : f32 to vector<11x64xf32>
    %1035 = arith.maximumf %1033, %1034 : vector<11x64xf32>
    %1036 = vector.extract_strided_slice %792 {offsets = [0, 0], sizes = [11, 32], strides = [1, 1]} : vector<13x32xf32> to vector<11x32xf32>
    %1037 = vector.extract_strided_slice %792 {offsets = [1, 0], sizes = [11, 32], strides = [1, 1]} : vector<13x32xf32> to vector<11x32xf32>
    %1038 = vector.extract_strided_slice %792 {offsets = [2, 0], sizes = [11, 32], strides = [1, 1]} : vector<13x32xf32> to vector<11x32xf32>
    %1039 = vector.extract_strided_slice %833 {offsets = [0, 0], sizes = [11, 32], strides = [1, 1]} : vector<13x32xf32> to vector<11x32xf32>
    %1040 = vector.extract_strided_slice %833 {offsets = [1, 0], sizes = [11, 32], strides = [1, 1]} : vector<13x32xf32> to vector<11x32xf32>
    %1041 = vector.extract_strided_slice %833 {offsets = [2, 0], sizes = [11, 32], strides = [1, 1]} : vector<13x32xf32> to vector<11x32xf32>
    %1042 = vector.extract_strided_slice %874 {offsets = [0, 0], sizes = [11, 32], strides = [1, 1]} : vector<13x32xf32> to vector<11x32xf32>
    %1043 = vector.extract_strided_slice %874 {offsets = [1, 0], sizes = [11, 32], strides = [1, 1]} : vector<13x32xf32> to vector<11x32xf32>
    %1044 = vector.extract_strided_slice %874 {offsets = [2, 0], sizes = [11, 32], strides = [1, 1]} : vector<13x32xf32> to vector<11x32xf32>
    %1045 = tpu.concatenate %1036, %1037, %1038, %1039, %1040, %1041, %1042, %1043, %1044 in 1 : vector<11x32xf32>, vector<11x32xf32>, vector<11x32xf32>, vector<11x32xf32>, vector<11x32xf32>, vector<11x32xf32>, vector<11x32xf32>, vector<11x32xf32>, vector<11x32xf32> -> vector<11x288xf32>
    %cst_86 = arith.constant dense<0.000000e+00> : vector<11x64xf32>
    %1046 = tpu.matmul %1045, %56, %cst_86 {dimension_numbers = #tpu.dot_dimension_numbers<[1], [0], [0], [1], [0, 0, 1, 1], [], []>} : vector<11x288xf32>, vector<288x64xf32>, vector<11x64xf32> -> vector<11x64xf32>
    %1047 = vector.broadcast %57 : vector<1x64xf32> to vector<11x64xf32>
    %1048 = arith.addf %1046, %1047 : vector<11x64xf32>
    %cst_87 = arith.constant 0.000000e+00 : f32
    %1049 = vector.broadcast %cst_87 : f32 to vector<11x64xf32>
    %1050 = arith.maximumf %1048, %1049 : vector<11x64xf32>
    %1051 = vector.extract_strided_slice %833 {offsets = [0, 0], sizes = [11, 32], strides = [1, 1]} : vector<13x32xf32> to vector<11x32xf32>
    %1052 = vector.extract_strided_slice %833 {offsets = [1, 0], sizes = [11, 32], strides = [1, 1]} : vector<13x32xf32> to vector<11x32xf32>
    %1053 = vector.extract_strided_slice %833 {offsets = [2, 0], sizes = [11, 32], strides = [1, 1]} : vector<13x32xf32> to vector<11x32xf32>
    %1054 = vector.extract_strided_slice %874 {offsets = [0, 0], sizes = [11, 32], strides = [1, 1]} : vector<13x32xf32> to vector<11x32xf32>
    %1055 = vector.extract_strided_slice %874 {offsets = [1, 0], sizes = [11, 32], strides = [1, 1]} : vector<13x32xf32> to vector<11x32xf32>
    %1056 = vector.extract_strided_slice %874 {offsets = [2, 0], sizes = [11, 32], strides = [1, 1]} : vector<13x32xf32> to vector<11x32xf32>
    %1057 = vector.extract_strided_slice %915 {offsets = [0, 0], sizes = [11, 32], strides = [1, 1]} : vector<13x32xf32> to vector<11x32xf32>
    %1058 = vector.extract_strided_slice %915 {offsets = [1, 0], sizes = [11, 32], strides = [1, 1]} : vector<13x32xf32> to vector<11x32xf32>
    %1059 = vector.extract_strided_slice %915 {offsets = [2, 0], sizes = [11, 32], strides = [1, 1]} : vector<13x32xf32> to vector<11x32xf32>
    %1060 = tpu.concatenate %1051, %1052, %1053, %1054, %1055, %1056, %1057, %1058, %1059 in 1 : vector<11x32xf32>, vector<11x32xf32>, vector<11x32xf32>, vector<11x32xf32>, vector<11x32xf32>, vector<11x32xf32>, vector<11x32xf32>, vector<11x32xf32>, vector<11x32xf32> -> vector<11x288xf32>
    %cst_88 = arith.constant dense<0.000000e+00> : vector<11x64xf32>
    %1061 = tpu.matmul %1060, %56, %cst_88 {dimension_numbers = #tpu.dot_dimension_numbers<[1], [0], [0], [1], [0, 0, 1, 1], [], []>} : vector<11x288xf32>, vector<288x64xf32>, vector<11x64xf32> -> vector<11x64xf32>
    %1062 = vector.broadcast %57 : vector<1x64xf32> to vector<11x64xf32>
    %1063 = arith.addf %1061, %1062 : vector<11x64xf32>
    %cst_89 = arith.constant 0.000000e+00 : f32
    %1064 = vector.broadcast %cst_89 : f32 to vector<11x64xf32>
    %1065 = arith.maximumf %1063, %1064 : vector<11x64xf32>
    %1066 = arith.maximumf %930, %945 : vector<11x64xf32>
    %1067 = vector.extract_strided_slice %1066 {offsets = [0, 0], sizes = [1, 64], strides = [1, 1]} : vector<11x64xf32> to vector<1x64xf32>
    %1068 = vector.extract_strided_slice %1066 {offsets = [1, 0], sizes = [1, 64], strides = [1, 1]} : vector<11x64xf32> to vector<1x64xf32>
    %1069 = arith.maximumf %1067, %1068 : vector<1x64xf32>
    %1070 = vector.extract_strided_slice %1066 {offsets = [2, 0], sizes = [1, 64], strides = [1, 1]} : vector<11x64xf32> to vector<1x64xf32>
    %1071 = vector.extract_strided_slice %1066 {offsets = [3, 0], sizes = [1, 64], strides = [1, 1]} : vector<11x64xf32> to vector<1x64xf32>
    %1072 = arith.maximumf %1070, %1071 : vector<1x64xf32>
    %1073 = vector.extract_strided_slice %1066 {offsets = [4, 0], sizes = [1, 64], strides = [1, 1]} : vector<11x64xf32> to vector<1x64xf32>
    %1074 = vector.extract_strided_slice %1066 {offsets = [5, 0], sizes = [1, 64], strides = [1, 1]} : vector<11x64xf32> to vector<1x64xf32>
    %1075 = arith.maximumf %1073, %1074 : vector<1x64xf32>
    %1076 = vector.extract_strided_slice %1066 {offsets = [6, 0], sizes = [1, 64], strides = [1, 1]} : vector<11x64xf32> to vector<1x64xf32>
    %1077 = vector.extract_strided_slice %1066 {offsets = [7, 0], sizes = [1, 64], strides = [1, 1]} : vector<11x64xf32> to vector<1x64xf32>
    %1078 = arith.maximumf %1076, %1077 : vector<1x64xf32>
    %1079 = vector.extract_strided_slice %1066 {offsets = [8, 0], sizes = [1, 64], strides = [1, 1]} : vector<11x64xf32> to vector<1x64xf32>
    %1080 = vector.extract_strided_slice %1066 {offsets = [9, 0], sizes = [1, 64], strides = [1, 1]} : vector<11x64xf32> to vector<1x64xf32>
    %1081 = arith.maximumf %1079, %1080 : vector<1x64xf32>
    %1082 = tpu.concatenate %1069, %1072, %1075, %1078, %1081 in 0 : vector<1x64xf32>, vector<1x64xf32>, vector<1x64xf32>, vector<1x64xf32>, vector<1x64xf32> -> vector<5x64xf32>
    %1083 = arith.maximumf %960, %975 : vector<11x64xf32>
    %1084 = vector.extract_strided_slice %1083 {offsets = [0, 0], sizes = [1, 64], strides = [1, 1]} : vector<11x64xf32> to vector<1x64xf32>
    %1085 = vector.extract_strided_slice %1083 {offsets = [1, 0], sizes = [1, 64], strides = [1, 1]} : vector<11x64xf32> to vector<1x64xf32>
    %1086 = arith.maximumf %1084, %1085 : vector<1x64xf32>
    %1087 = vector.extract_strided_slice %1083 {offsets = [2, 0], sizes = [1, 64], strides = [1, 1]} : vector<11x64xf32> to vector<1x64xf32>
    %1088 = vector.extract_strided_slice %1083 {offsets = [3, 0], sizes = [1, 64], strides = [1, 1]} : vector<11x64xf32> to vector<1x64xf32>
    %1089 = arith.maximumf %1087, %1088 : vector<1x64xf32>
    %1090 = vector.extract_strided_slice %1083 {offsets = [4, 0], sizes = [1, 64], strides = [1, 1]} : vector<11x64xf32> to vector<1x64xf32>
    %1091 = vector.extract_strided_slice %1083 {offsets = [5, 0], sizes = [1, 64], strides = [1, 1]} : vector<11x64xf32> to vector<1x64xf32>
    %1092 = arith.maximumf %1090, %1091 : vector<1x64xf32>
    %1093 = vector.extract_strided_slice %1083 {offsets = [6, 0], sizes = [1, 64], strides = [1, 1]} : vector<11x64xf32> to vector<1x64xf32>
    %1094 = vector.extract_strided_slice %1083 {offsets = [7, 0], sizes = [1, 64], strides = [1, 1]} : vector<11x64xf32> to vector<1x64xf32>
    %1095 = arith.maximumf %1093, %1094 : vector<1x64xf32>
    %1096 = vector.extract_strided_slice %1083 {offsets = [8, 0], sizes = [1, 64], strides = [1, 1]} : vector<11x64xf32> to vector<1x64xf32>
    %1097 = vector.extract_strided_slice %1083 {offsets = [9, 0], sizes = [1, 64], strides = [1, 1]} : vector<11x64xf32> to vector<1x64xf32>
    %1098 = arith.maximumf %1096, %1097 : vector<1x64xf32>
    %1099 = tpu.concatenate %1086, %1089, %1092, %1095, %1098 in 0 : vector<1x64xf32>, vector<1x64xf32>, vector<1x64xf32>, vector<1x64xf32>, vector<1x64xf32> -> vector<5x64xf32>
    %1100 = arith.maximumf %990, %1005 : vector<11x64xf32>
    %1101 = vector.extract_strided_slice %1100 {offsets = [0, 0], sizes = [1, 64], strides = [1, 1]} : vector<11x64xf32> to vector<1x64xf32>
    %1102 = vector.extract_strided_slice %1100 {offsets = [1, 0], sizes = [1, 64], strides = [1, 1]} : vector<11x64xf32> to vector<1x64xf32>
    %1103 = arith.maximumf %1101, %1102 : vector<1x64xf32>
    %1104 = vector.extract_strided_slice %1100 {offsets = [2, 0], sizes = [1, 64], strides = [1, 1]} : vector<11x64xf32> to vector<1x64xf32>
    %1105 = vector.extract_strided_slice %1100 {offsets = [3, 0], sizes = [1, 64], strides = [1, 1]} : vector<11x64xf32> to vector<1x64xf32>
    %1106 = arith.maximumf %1104, %1105 : vector<1x64xf32>
    %1107 = vector.extract_strided_slice %1100 {offsets = [4, 0], sizes = [1, 64], strides = [1, 1]} : vector<11x64xf32> to vector<1x64xf32>
    %1108 = vector.extract_strided_slice %1100 {offsets = [5, 0], sizes = [1, 64], strides = [1, 1]} : vector<11x64xf32> to vector<1x64xf32>
    %1109 = arith.maximumf %1107, %1108 : vector<1x64xf32>
    %1110 = vector.extract_strided_slice %1100 {offsets = [6, 0], sizes = [1, 64], strides = [1, 1]} : vector<11x64xf32> to vector<1x64xf32>
    %1111 = vector.extract_strided_slice %1100 {offsets = [7, 0], sizes = [1, 64], strides = [1, 1]} : vector<11x64xf32> to vector<1x64xf32>
    %1112 = arith.maximumf %1110, %1111 : vector<1x64xf32>
    %1113 = vector.extract_strided_slice %1100 {offsets = [8, 0], sizes = [1, 64], strides = [1, 1]} : vector<11x64xf32> to vector<1x64xf32>
    %1114 = vector.extract_strided_slice %1100 {offsets = [9, 0], sizes = [1, 64], strides = [1, 1]} : vector<11x64xf32> to vector<1x64xf32>
    %1115 = arith.maximumf %1113, %1114 : vector<1x64xf32>
    %1116 = tpu.concatenate %1103, %1106, %1109, %1112, %1115 in 0 : vector<1x64xf32>, vector<1x64xf32>, vector<1x64xf32>, vector<1x64xf32>, vector<1x64xf32> -> vector<5x64xf32>
    %1117 = arith.maximumf %1020, %1035 : vector<11x64xf32>
    %1118 = vector.extract_strided_slice %1117 {offsets = [0, 0], sizes = [1, 64], strides = [1, 1]} : vector<11x64xf32> to vector<1x64xf32>
    %1119 = vector.extract_strided_slice %1117 {offsets = [1, 0], sizes = [1, 64], strides = [1, 1]} : vector<11x64xf32> to vector<1x64xf32>
    %1120 = arith.maximumf %1118, %1119 : vector<1x64xf32>
    %1121 = vector.extract_strided_slice %1117 {offsets = [2, 0], sizes = [1, 64], strides = [1, 1]} : vector<11x64xf32> to vector<1x64xf32>
    %1122 = vector.extract_strided_slice %1117 {offsets = [3, 0], sizes = [1, 64], strides = [1, 1]} : vector<11x64xf32> to vector<1x64xf32>
    %1123 = arith.maximumf %1121, %1122 : vector<1x64xf32>
    %1124 = vector.extract_strided_slice %1117 {offsets = [4, 0], sizes = [1, 64], strides = [1, 1]} : vector<11x64xf32> to vector<1x64xf32>
    %1125 = vector.extract_strided_slice %1117 {offsets = [5, 0], sizes = [1, 64], strides = [1, 1]} : vector<11x64xf32> to vector<1x64xf32>
    %1126 = arith.maximumf %1124, %1125 : vector<1x64xf32>
    %1127 = vector.extract_strided_slice %1117 {offsets = [6, 0], sizes = [1, 64], strides = [1, 1]} : vector<11x64xf32> to vector<1x64xf32>
    %1128 = vector.extract_strided_slice %1117 {offsets = [7, 0], sizes = [1, 64], strides = [1, 1]} : vector<11x64xf32> to vector<1x64xf32>
    %1129 = arith.maximumf %1127, %1128 : vector<1x64xf32>
    %1130 = vector.extract_strided_slice %1117 {offsets = [8, 0], sizes = [1, 64], strides = [1, 1]} : vector<11x64xf32> to vector<1x64xf32>
    %1131 = vector.extract_strided_slice %1117 {offsets = [9, 0], sizes = [1, 64], strides = [1, 1]} : vector<11x64xf32> to vector<1x64xf32>
    %1132 = arith.maximumf %1130, %1131 : vector<1x64xf32>
    %1133 = tpu.concatenate %1120, %1123, %1126, %1129, %1132 in 0 : vector<1x64xf32>, vector<1x64xf32>, vector<1x64xf32>, vector<1x64xf32>, vector<1x64xf32> -> vector<5x64xf32>
    %1134 = arith.maximumf %1050, %1065 : vector<11x64xf32>
    %1135 = vector.extract_strided_slice %1134 {offsets = [0, 0], sizes = [1, 64], strides = [1, 1]} : vector<11x64xf32> to vector<1x64xf32>
    %1136 = vector.extract_strided_slice %1134 {offsets = [1, 0], sizes = [1, 64], strides = [1, 1]} : vector<11x64xf32> to vector<1x64xf32>
    %1137 = arith.maximumf %1135, %1136 : vector<1x64xf32>
    %1138 = vector.extract_strided_slice %1134 {offsets = [2, 0], sizes = [1, 64], strides = [1, 1]} : vector<11x64xf32> to vector<1x64xf32>
    %1139 = vector.extract_strided_slice %1134 {offsets = [3, 0], sizes = [1, 64], strides = [1, 1]} : vector<11x64xf32> to vector<1x64xf32>
    %1140 = arith.maximumf %1138, %1139 : vector<1x64xf32>
    %1141 = vector.extract_strided_slice %1134 {offsets = [4, 0], sizes = [1, 64], strides = [1, 1]} : vector<11x64xf32> to vector<1x64xf32>
    %1142 = vector.extract_strided_slice %1134 {offsets = [5, 0], sizes = [1, 64], strides = [1, 1]} : vector<11x64xf32> to vector<1x64xf32>
    %1143 = arith.maximumf %1141, %1142 : vector<1x64xf32>
    %1144 = vector.extract_strided_slice %1134 {offsets = [6, 0], sizes = [1, 64], strides = [1, 1]} : vector<11x64xf32> to vector<1x64xf32>
    %1145 = vector.extract_strided_slice %1134 {offsets = [7, 0], sizes = [1, 64], strides = [1, 1]} : vector<11x64xf32> to vector<1x64xf32>
    %1146 = arith.maximumf %1144, %1145 : vector<1x64xf32>
    %1147 = vector.extract_strided_slice %1134 {offsets = [8, 0], sizes = [1, 64], strides = [1, 1]} : vector<11x64xf32> to vector<1x64xf32>
    %1148 = vector.extract_strided_slice %1134 {offsets = [9, 0], sizes = [1, 64], strides = [1, 1]} : vector<11x64xf32> to vector<1x64xf32>
    %1149 = arith.maximumf %1147, %1148 : vector<1x64xf32>
    %1150 = tpu.concatenate %1137, %1140, %1143, %1146, %1149 in 0 : vector<1x64xf32>, vector<1x64xf32>, vector<1x64xf32>, vector<1x64xf32>, vector<1x64xf32> -> vector<5x64xf32>
    %1151 = vector.extract_strided_slice %1082 {offsets = [0, 0], sizes = [3, 64], strides = [1, 1]} : vector<5x64xf32> to vector<3x64xf32>
    %1152 = vector.extract_strided_slice %1082 {offsets = [1, 0], sizes = [3, 64], strides = [1, 1]} : vector<5x64xf32> to vector<3x64xf32>
    %1153 = vector.extract_strided_slice %1082 {offsets = [2, 0], sizes = [3, 64], strides = [1, 1]} : vector<5x64xf32> to vector<3x64xf32>
    %1154 = vector.extract_strided_slice %1099 {offsets = [0, 0], sizes = [3, 64], strides = [1, 1]} : vector<5x64xf32> to vector<3x64xf32>
    %1155 = vector.extract_strided_slice %1099 {offsets = [1, 0], sizes = [3, 64], strides = [1, 1]} : vector<5x64xf32> to vector<3x64xf32>
    %1156 = vector.extract_strided_slice %1099 {offsets = [2, 0], sizes = [3, 64], strides = [1, 1]} : vector<5x64xf32> to vector<3x64xf32>
    %1157 = vector.extract_strided_slice %1116 {offsets = [0, 0], sizes = [3, 64], strides = [1, 1]} : vector<5x64xf32> to vector<3x64xf32>
    %1158 = vector.extract_strided_slice %1116 {offsets = [1, 0], sizes = [3, 64], strides = [1, 1]} : vector<5x64xf32> to vector<3x64xf32>
    %1159 = vector.extract_strided_slice %1116 {offsets = [2, 0], sizes = [3, 64], strides = [1, 1]} : vector<5x64xf32> to vector<3x64xf32>
    %1160 = tpu.concatenate %1151, %1152, %1153, %1154, %1155, %1156, %1157, %1158, %1159 in 1 : vector<3x64xf32>, vector<3x64xf32>, vector<3x64xf32>, vector<3x64xf32>, vector<3x64xf32>, vector<3x64xf32>, vector<3x64xf32>, vector<3x64xf32>, vector<3x64xf32> -> vector<3x576xf32>
    %cst_90 = arith.constant dense<0.000000e+00> : vector<3x64xf32>
    %1161 = tpu.matmul %1160, %58, %cst_90 {dimension_numbers = #tpu.dot_dimension_numbers<[1], [0], [0], [1], [0, 0, 1, 1], [], []>} : vector<3x576xf32>, vector<576x64xf32>, vector<3x64xf32> -> vector<3x64xf32>
    %1162 = vector.broadcast %59 : vector<1x64xf32> to vector<3x64xf32>
    %1163 = arith.addf %1161, %1162 : vector<3x64xf32>
    %cst_91 = arith.constant 0.000000e+00 : f32
    %1164 = vector.broadcast %cst_91 : f32 to vector<3x64xf32>
    %1165 = arith.maximumf %1163, %1164 : vector<3x64xf32>
    %1166 = vector.extract_strided_slice %1099 {offsets = [0, 0], sizes = [3, 64], strides = [1, 1]} : vector<5x64xf32> to vector<3x64xf32>
    %1167 = vector.extract_strided_slice %1099 {offsets = [1, 0], sizes = [3, 64], strides = [1, 1]} : vector<5x64xf32> to vector<3x64xf32>
    %1168 = vector.extract_strided_slice %1099 {offsets = [2, 0], sizes = [3, 64], strides = [1, 1]} : vector<5x64xf32> to vector<3x64xf32>
    %1169 = vector.extract_strided_slice %1116 {offsets = [0, 0], sizes = [3, 64], strides = [1, 1]} : vector<5x64xf32> to vector<3x64xf32>
    %1170 = vector.extract_strided_slice %1116 {offsets = [1, 0], sizes = [3, 64], strides = [1, 1]} : vector<5x64xf32> to vector<3x64xf32>
    %1171 = vector.extract_strided_slice %1116 {offsets = [2, 0], sizes = [3, 64], strides = [1, 1]} : vector<5x64xf32> to vector<3x64xf32>
    %1172 = vector.extract_strided_slice %1133 {offsets = [0, 0], sizes = [3, 64], strides = [1, 1]} : vector<5x64xf32> to vector<3x64xf32>
    %1173 = vector.extract_strided_slice %1133 {offsets = [1, 0], sizes = [3, 64], strides = [1, 1]} : vector<5x64xf32> to vector<3x64xf32>
    %1174 = vector.extract_strided_slice %1133 {offsets = [2, 0], sizes = [3, 64], strides = [1, 1]} : vector<5x64xf32> to vector<3x64xf32>
    %1175 = tpu.concatenate %1166, %1167, %1168, %1169, %1170, %1171, %1172, %1173, %1174 in 1 : vector<3x64xf32>, vector<3x64xf32>, vector<3x64xf32>, vector<3x64xf32>, vector<3x64xf32>, vector<3x64xf32>, vector<3x64xf32>, vector<3x64xf32>, vector<3x64xf32> -> vector<3x576xf32>
    %cst_92 = arith.constant dense<0.000000e+00> : vector<3x64xf32>
    %1176 = tpu.matmul %1175, %58, %cst_92 {dimension_numbers = #tpu.dot_dimension_numbers<[1], [0], [0], [1], [0, 0, 1, 1], [], []>} : vector<3x576xf32>, vector<576x64xf32>, vector<3x64xf32> -> vector<3x64xf32>
    %1177 = vector.broadcast %59 : vector<1x64xf32> to vector<3x64xf32>
    %1178 = arith.addf %1176, %1177 : vector<3x64xf32>
    %cst_93 = arith.constant 0.000000e+00 : f32
    %1179 = vector.broadcast %cst_93 : f32 to vector<3x64xf32>
    %1180 = arith.maximumf %1178, %1179 : vector<3x64xf32>
    %1181 = vector.extract_strided_slice %1116 {offsets = [0, 0], sizes = [3, 64], strides = [1, 1]} : vector<5x64xf32> to vector<3x64xf32>
    %1182 = vector.extract_strided_slice %1116 {offsets = [1, 0], sizes = [3, 64], strides = [1, 1]} : vector<5x64xf32> to vector<3x64xf32>
    %1183 = vector.extract_strided_slice %1116 {offsets = [2, 0], sizes = [3, 64], strides = [1, 1]} : vector<5x64xf32> to vector<3x64xf32>
    %1184 = vector.extract_strided_slice %1133 {offsets = [0, 0], sizes = [3, 64], strides = [1, 1]} : vector<5x64xf32> to vector<3x64xf32>
    %1185 = vector.extract_strided_slice %1133 {offsets = [1, 0], sizes = [3, 64], strides = [1, 1]} : vector<5x64xf32> to vector<3x64xf32>
    %1186 = vector.extract_strided_slice %1133 {offsets = [2, 0], sizes = [3, 64], strides = [1, 1]} : vector<5x64xf32> to vector<3x64xf32>
    %1187 = vector.extract_strided_slice %1150 {offsets = [0, 0], sizes = [3, 64], strides = [1, 1]} : vector<5x64xf32> to vector<3x64xf32>
    %1188 = vector.extract_strided_slice %1150 {offsets = [1, 0], sizes = [3, 64], strides = [1, 1]} : vector<5x64xf32> to vector<3x64xf32>
    %1189 = vector.extract_strided_slice %1150 {offsets = [2, 0], sizes = [3, 64], strides = [1, 1]} : vector<5x64xf32> to vector<3x64xf32>
    %1190 = tpu.concatenate %1181, %1182, %1183, %1184, %1185, %1186, %1187, %1188, %1189 in 1 : vector<3x64xf32>, vector<3x64xf32>, vector<3x64xf32>, vector<3x64xf32>, vector<3x64xf32>, vector<3x64xf32>, vector<3x64xf32>, vector<3x64xf32>, vector<3x64xf32> -> vector<3x576xf32>
    %cst_94 = arith.constant dense<0.000000e+00> : vector<3x64xf32>
    %1191 = tpu.matmul %1190, %58, %cst_94 {dimension_numbers = #tpu.dot_dimension_numbers<[1], [0], [0], [1], [0, 0, 1, 1], [], []>} : vector<3x576xf32>, vector<576x64xf32>, vector<3x64xf32> -> vector<3x64xf32>
    %1192 = vector.broadcast %59 : vector<1x64xf32> to vector<3x64xf32>
    %1193 = arith.addf %1191, %1192 : vector<3x64xf32>
    %cst_95 = arith.constant 0.000000e+00 : f32
    %1194 = vector.broadcast %cst_95 : f32 to vector<3x64xf32>
    %1195 = arith.maximumf %1193, %1194 : vector<3x64xf32>
    %1196 = vector.extract_strided_slice %1165 {offsets = [0, 0], sizes = [1, 64], strides = [1, 1]} : vector<3x64xf32> to vector<1x64xf32>
    %1197 = vector.extract_strided_slice %1165 {offsets = [1, 0], sizes = [1, 64], strides = [1, 1]} : vector<3x64xf32> to vector<1x64xf32>
    %1198 = vector.extract_strided_slice %1165 {offsets = [2, 0], sizes = [1, 64], strides = [1, 1]} : vector<3x64xf32> to vector<1x64xf32>
    %1199 = vector.extract_strided_slice %1180 {offsets = [0, 0], sizes = [1, 64], strides = [1, 1]} : vector<3x64xf32> to vector<1x64xf32>
    %1200 = vector.extract_strided_slice %1180 {offsets = [1, 0], sizes = [1, 64], strides = [1, 1]} : vector<3x64xf32> to vector<1x64xf32>
    %1201 = vector.extract_strided_slice %1180 {offsets = [2, 0], sizes = [1, 64], strides = [1, 1]} : vector<3x64xf32> to vector<1x64xf32>
    %1202 = vector.extract_strided_slice %1195 {offsets = [0, 0], sizes = [1, 64], strides = [1, 1]} : vector<3x64xf32> to vector<1x64xf32>
    %1203 = vector.extract_strided_slice %1195 {offsets = [1, 0], sizes = [1, 64], strides = [1, 1]} : vector<3x64xf32> to vector<1x64xf32>
    %1204 = vector.extract_strided_slice %1195 {offsets = [2, 0], sizes = [1, 64], strides = [1, 1]} : vector<3x64xf32> to vector<1x64xf32>
    %1205 = tpu.concatenate %1196, %1197, %1198, %1199, %1200, %1201, %1202, %1203, %1204 in 1 : vector<1x64xf32>, vector<1x64xf32>, vector<1x64xf32>, vector<1x64xf32>, vector<1x64xf32>, vector<1x64xf32>, vector<1x64xf32>, vector<1x64xf32>, vector<1x64xf32> -> vector<1x576xf32>
    %cst_96 = arith.constant dense<0.000000e+00> : vector<1x64xf32>
    %1206 = tpu.matmul %1205, %60, %cst_96 {dimension_numbers = #tpu.dot_dimension_numbers<[1], [0], [0], [1], [0, 0, 1, 1], [], []>} : vector<1x576xf32>, vector<576x64xf32>, vector<1x64xf32> -> vector<1x64xf32>
    %1207 = arith.addf %1206, %61 : vector<1x64xf32>
    %cst_97 = arith.constant 0.000000e+00 : f32
    %1208 = vector.broadcast %cst_97 : f32 to vector<1x64xf32>
    %1209 = arith.maximumf %1207, %1208 : vector<1x64xf32>
    %cst_98 = arith.constant dense<0.000000e+00> : vector<1x10xf32>
    %1210 = tpu.matmul %1209, %62, %cst_98 {dimension_numbers = #tpu.dot_dimension_numbers<[1], [0], [0], [1], [0, 0, 1, 1], [], []>} : vector<1x64xf32>, vector<64x10xf32>, vector<1x10xf32> -> vector<1x10xf32>
    %1211 = arith.addf %1210, %63 : vector<1x10xf32>
    %c0_99 = arith.constant 0 : index
    %c0_100 = arith.constant 0 : index
    %c0_101 = arith.constant 0 : index
    %1212 = vector.load %arg12[%c0_99, %c0_100, %c0_101] : memref<1x1x10xf32, #tpu.memory_space<vmem>>, vector<1x1x10xf32>
    %1213 = vector.shape_cast %1212 : vector<1x1x10xf32> to vector<1x10xf32>
    %1214 = vector.shape_cast %1211 : vector<1x10xf32> to vector<1x1x10xf32>
    tpu.vector_store %arg12[%c0_99, %c0_100, %c0_101], %1214 {strides = array<i32>} : memref<1x1x10xf32, #tpu.memory_space<vmem>>, vector<1x1x10xf32>,
    return
  }
  func.func @transform_0(%arg0: i32) -> (i32, i32, i32, i32) {
    %c0_i32 = arith.constant 0 : i32
    %c0_i32_0 = arith.constant 0 : i32
    %c0_i32_1 = arith.constant 0 : i32
    %c0_i32_2 = arith.constant 0 : i32
    return %arg0, %c0_i32, %c0_i32_0, %c0_i32_1 : i32, i32, i32, i32
  }
  func.func @transform_1(%arg0: i32) -> (i32, i32) {
    %c0_i32 = arith.constant 0 : i32
    %c0_i32_0 = arith.constant 0 : i32
    %c0_i32_1 = arith.constant 0 : i32
    return %c0_i32, %c0_i32_0 : i32, i32
  }
  func.func @transform_2(%arg0: i32) -> (i32, i32) {
    %c0_i32 = arith.constant 0 : i32
    %c0_i32_0 = arith.constant 0 : i32
    %c0_i32_1 = arith.constant 0 : i32
    return %c0_i32, %c0_i32_0 : i32, i32
  }
  func.func @transform_3(%arg0: i32) -> (i32, i32) {
    %c0_i32 = arith.constant 0 : i32
    %c0_i32_0 = arith.constant 0 : i32
    %c0_i32_1 = arith.constant 0 : i32
    return %c0_i32, %c0_i32_0 : i32, i32
  }
  func.func @transform_4(%arg0: i32) -> (i32, i32) {
    %c0_i32 = arith.constant 0 : i32
    %c0_i32_0 = arith.constant 0 : i32
    %c0_i32_1 = arith.constant 0 : i32
    return %c0_i32, %c0_i32_0 : i32, i32
  }
  func.func @transform_5(%arg0: i32) -> (i32, i32) {
    %c0_i32 = arith.constant 0 : i32
    %c0_i32_0 = arith.constant 0 : i32
    %c0_i32_1 = arith.constant 0 : i32
    return %c0_i32, %c0_i32_0 : i32, i32
  }
  func.func @transform_6(%arg0: i32) -> (i32, i32) {
    %c0_i32 = arith.constant 0 : i32
    %c0_i32_0 = arith.constant 0 : i32
    %c0_i32_1 = arith.constant 0 : i32
    return %c0_i32, %c0_i32_0 : i32, i32
  }
  func.func @transform_7(%arg0: i32) -> (i32, i32) {
    %c0_i32 = arith.constant 0 : i32
    %c0_i32_0 = arith.constant 0 : i32
    %c0_i32_1 = arith.constant 0 : i32
    return %c0_i32, %c0_i32_0 : i32, i32
  }
  func.func @transform_8(%arg0: i32) -> (i32, i32) {
    %c0_i32 = arith.constant 0 : i32
    %c0_i32_0 = arith.constant 0 : i32
    %c0_i32_1 = arith.constant 0 : i32
    return %c0_i32, %c0_i32_0 : i32, i32
  }
  func.func @transform_9(%arg0: i32) -> (i32, i32) {
    %c0_i32 = arith.constant 0 : i32
    %c0_i32_0 = arith.constant 0 : i32
    %c0_i32_1 = arith.constant 0 : i32
    return %c0_i32, %c0_i32_0 : i32, i32
  }
  func.func @transform_10(%arg0: i32) -> (i32, i32) {
    %c0_i32 = arith.constant 0 : i32
    %c0_i32_0 = arith.constant 0 : i32
    %c0_i32_1 = arith.constant 0 : i32
    return %c0_i32, %c0_i32_0 : i32, i32
  }
  func.func @transform_11(%arg0: i32) -> (i32, i32, i32) {
    %c0_i32 = arith.constant 0 : i32
    %c0_i32_0 = arith.constant 0 : i32
    %c0_i32_1 = arith.constant 0 : i32
    return %arg0, %c0_i32, %c0_i32_0 : i32, i32, i32
  }
}

</mosaic_0001>

<llo_original>
// kernel: mnist_cnn_forward.1
$region0: #{mnist_cnn_forward.1}
  #allocation0 [shape = 'u32[]', space=smem, size = 0x4, offset = 0x4, fixed_abs, tag = 'smem constant byte address 0x4 - core index']
  #allocation1 [shape = 'u32[72,128]{1,0:T(1,128)}', space=vmem, size = 0x9000, scoped, tag = 'internal scratch']
  %s0 = inlined_call_operand.vmem [shape: f32[2,28,28,1], index: 0, kind: input, shape index: {}]
  %s1 = inlined_call_operand.vmem [shape: f32[9,32], index: 1, kind: input, shape index: {}]
  %s2 = inlined_call_operand.vmem [shape: f32[1,32], index: 2, kind: input, shape index: {}]
  %s3 = inlined_call_operand.vmem [shape: f32[288,64], index: 3, kind: input, shape index: {}]
  %s4 = inlined_call_operand.vmem [shape: f32[1,64], index: 4, kind: input, shape index: {}]
  %s5 = inlined_call_operand.vmem [shape: f32[576,64], index: 5, kind: input, shape index: {}]
  %s6 = inlined_call_operand.vmem [shape: f32[1,64], index: 6, kind: input, shape index: {}]
  %s7 = inlined_call_operand.vmem [shape: f32[576,64], index: 7, kind: input, shape index: {}]
  %s8 = inlined_call_operand.vmem [shape: f32[1,64], index: 8, kind: input, shape index: {}]
  %s9 = inlined_call_operand.vmem [shape: f32[64,10], index: 9, kind: input, shape index: {}]
  %s10 = inlined_call_operand.vmem [shape: f32[1,10], index: 10, kind: input, shape index: {}]
  %s11 = inlined_call_operand.hbm [shape: f32[2,1,10], index: 11, kind: output, shape index: {}]
  %s12 = sld [smem:[#allocation0]]
  $region77: #{mnist_cnn_forward.1} parent=0
    _
  %s14 = ssub.s32 1, %s12
  %s15 = scalar_select 0, %s14, %s12
  $region1: #{mnist_cnn_forward.1} parent=0
    #allocation2 [shape = 'u8[1024]{0}', space=vmem, size = 0x400, scoped, tag = 'output window, operand 0']
    #allocation3 [shape = 's32[2]{0}', space=sflag, size = 0x8, scoped, tag = 'scoped memory for mnist_cnn_forward.1']
    %16 = vsyncpa [#allocation3], 0
    %s17 = scalar_lea.sflag [#allocation3], 1
    %18 = vsyncpa %s17, 0
    loop: start=0, step=1, limit=4
    $region2: #{mnist_cnn_forward.1} parent=1 // loop_pre_header
      _
    $region3: #{mnist_cnn_forward.1} parent=1 // loop_header
      %s20 = sphi 0, %s24
      %p21 = scmp.ge.s32.totalorder %s20, 4
      %s30 = sphi 0, %s32
      %s33 = sphi 0, %s30
      %s34 = sphi 0, %s33
      %s50 = sphi 0, %s34
      %s54 = sphi 0, %s54
      %s56 = sphi 0, %s54
      %s57 = sphi 0, %s56
      %s71 = sphi 0, %s57
      %s75 = sphi 0, %s75
      %s77 = sphi 0, %s75
      %s78 = sphi 0, %s77
      %s92 = sphi 0, %s78
      %s96 = sphi 0, %s96
      %s98 = sphi 0, %s96
      %s99 = sphi 0, %s98
      %s113 = sphi 0, %s99
      %s117 = sphi 0, %s117
      %s119 = sphi 0, %s117
      %s120 = sphi 0, %s119
      %s134 = sphi 0, %s120
      %s138 = sphi 0, %s138
      %s140 = sphi 0, %s138
      %s141 = sphi 0, %s140
      %s155 = sphi 0, %s141
      %s159 = sphi 0, %s159
      %s161 = sphi 0, %s159
      %s162 = sphi 0, %s161
      %s176 = sphi 0, %s162
      %s180 = sphi 0, %s180
      %s182 = sphi 0, %s180
      %s183 = sphi 0, %s182
      %s197 = sphi 0, %s183
      %s201 = sphi 0, %s201
      %s203 = sphi 0, %s201
      %s204 = sphi 0, %s203
      %s218 = sphi 0, %s204
      %s222 = sphi 0, %s222
      %s224 = sphi 0, %s222
      %s225 = sphi 0, %s224
      %s239 = sphi 0, %s225
      %s243 = sphi 0, %s243
      %s245 = sphi 0, %s243
      %s246 = sphi 0, %s245
      %s260 = sphi 0, %s246
      %s266 = sphi 0, %s268
      %s269 = sphi 0, %s266
      %s270 = sphi 0, %s269
      %s286 = sphi 0, %s270
    $region4: #{mnist_cnn_forward.1} parent=1 // loop_header_branch
      %23 = sbr.rel (%p21) target = $region8
    $region5: #{mnist_cnn_forward.1} parent=1 // loop_body
      %s25 = ssub.s32 %s20, 1
      %s26 = ssub.s32 %s20, 2
      %s27 = sadd.s32 %s20, 1
      %s28 = ssub.s32 %s20, %s27
      %p29 = scmp.eq.s32.totalorder %s28, 0
      %s31 = sadd.s32 %s30, 1
      %s32 = scalar_select %p29, %s30, %s31
      %p35 = pneg %p29
      %p36 = scmp.eq.s32.totalorder %s20, 1
      %p37 = por %p35, %p36
      %p38 = scmp.ne.s32.totalorder %s30, %s33
      %p39 = scmp.eq.s32.totalorder %s20, 0
      %p40 = por %p38, %p39
      %p41 = scmp.ne.s32.totalorder %s30, %s33
      %p42 = scmp.eq.s32.totalorder %s25, 1
      %p43 = por %p41, %p42
      %p44 = scmp.ne.s32.totalorder %s33, %s34
      %p45 = scmp.eq.s32.totalorder %s25, 0
      %p46 = por %p44, %p45
      %p47 = scmp.ne.s32.totalorder %s33, %s34
      %p48 = scmp.eq.s32.totalorder %s26, 1
      %p49 = por %p47, %p48
      %p51 = scmp.ne.s32.totalorder %s34, %s50
      %p52 = scmp.eq.s32.totalorder %s26, 0
      %p53 = por %p51, %p52
      %s55 = sadd.s32 %s54, 1
      %p58 = scmp.eq.s32.totalorder %s20, 1
      %p59 = scmp.ne.s32.totalorder %s54, %s56
      %p60 = scmp.eq.s32.totalorder %s20, 0
      %p61 = por %p59, %p60
      %p62 = scmp.ne.s32.totalorder %s54, %s56
      %p63 = scmp.eq.s32.totalorder %s25, 1
      %p64 = por %p62, %p63
      %p65 = scmp.ne.s32.totalorder %s56, %s57
      %p66 = scmp.eq.s32.totalorder %s25, 0
      %p67 = por %p65, %p66
      %p68 = scmp.ne.s32.totalorder %s56, %s57
      %p69 = scmp.eq.s32.totalorder %s26, 1
      %p70 = por %p68, %p69
      %p72 = scmp.ne.s32.totalorder %s57, %s71
      %p73 = scmp.eq.s32.totalorder %s26, 0
      %p74 = por %p72, %p73
      %s76 = sadd.s32 %s75, 1
      %p79 = scmp.eq.s32.totalorder %s20, 1
      %p80 = scmp.ne.s32.totalorder %s75, %s77
      %p81 = scmp.eq.s32.totalorder %s20, 0
      %p82 = por %p80, %p81
      %p83 = scmp.ne.s32.totalorder %s75, %s77
      %p84 = scmp.eq.s32.totalorder %s25, 1
      %p85 = por %p83, %p84
      %p86 = scmp.ne.s32.totalorder %s77, %s78
      %p87 = scmp.eq.s32.totalorder %s25, 0
      %p88 = por %p86, %p87
      %p89 = scmp.ne.s32.totalorder %s77, %s78
      %p90 = scmp.eq.s32.totalorder %s26, 1
      %p91 = por %p89, %p90
      %p93 = scmp.ne.s32.totalorder %s78, %s92
      %p94 = scmp.eq.s32.totalorder %s26, 0
      %p95 = por %p93, %p94
      %s97 = sadd.s32 %s96, 1
      %p100 = scmp.eq.s32.totalorder %s20, 1
      %p101 = scmp.ne.s32.totalorder %s96, %s98
      %p102 = scmp.eq.s32.totalorder %s20, 0
      %p103 = por %p101, %p102
      %p104 = scmp.ne.s32.totalorder %s96, %s98
      %p105 = scmp.eq.s32.totalorder %s25, 1
      %p106 = por %p104, %p105
      %p107 = scmp.ne.s32.totalorder %s98, %s99
      %p108 = scmp.eq.s32.totalorder %s25, 0
      %p109 = por %p107, %p108
      %p110 = scmp.ne.s32.totalorder %s98, %s99
      %p111 = scmp.eq.s32.totalorder %s26, 1
      %p112 = por %p110, %p111
      %p114 = scmp.ne.s32.totalorder %s99, %s113
      %p115 = scmp.eq.s32.totalorder %s26, 0
      %p116 = por %p114, %p115
      %s118 = sadd.s32 %s117, 1
      %p121 = scmp.eq.s32.totalorder %s20, 1
      %p122 = scmp.ne.s32.totalorder %s117, %s119
      %p123 = scmp.eq.s32.totalorder %s20, 0
      %p124 = por %p122, %p123
      %p125 = scmp.ne.s32.totalorder %s117, %s119
      %p126 = scmp.eq.s32.totalorder %s25, 1
      %p127 = por %p125, %p126
      %p128 = scmp.ne.s32.totalorder %s119, %s120
      %p129 = scmp.eq.s32.totalorder %s25, 0
      %p130 = por %p128, %p129
      %p131 = scmp.ne.s32.totalorder %s119, %s120
      %p132 = scmp.eq.s32.totalorder %s26, 1
      %p133 = por %p131, %p132
      %p135 = scmp.ne.s32.totalorder %s120, %s134
      %p136 = scmp.eq.s32.totalorder %s26, 0
      %p137 = por %p135, %p136
      %s139 = sadd.s32 %s138, 1
      %p142 = scmp.eq.s32.totalorder %s20, 1
      %p143 = scmp.ne.s32.totalorder %s138, %s140
      %p144 = scmp.eq.s32.totalorder %s20, 0
      %p145 = por %p143, %p144
      %p146 = scmp.ne.s32.totalorder %s138, %s140
      %p147 = scmp.eq.s32.totalorder %s25, 1
      %p148 = por %p146, %p147
      %p149 = scmp.ne.s32.totalorder %s140, %s141
      %p150 = scmp.eq.s32.totalorder %s25, 0
      %p151 = por %p149, %p150
      %p152 = scmp.ne.s32.totalorder %s140, %s141
      %p153 = scmp.eq.s32.totalorder %s26, 1
      %p154 = por %p152, %p153
      %p156 = scmp.ne.s32.totalorder %s141, %s155
      %p157 = scmp.eq.s32.totalorder %s26, 0
      %p158 = por %p156, %p157
      %s160 = sadd.s32 %s159, 1
      %p163 = scmp.eq.s32.totalorder %s20, 1
      %p164 = scmp.ne.s32.totalorder %s159, %s161
      %p165 = scmp.eq.s32.totalorder %s20, 0
      %p166 = por %p164, %p165
      %p167 = scmp.ne.s32.totalorder %s159, %s161
      %p168 = scmp.eq.s32.totalorder %s25, 1
      %p169 = por %p167, %p168
      %p170 = scmp.ne.s32.totalorder %s161, %s162
      %p171 = scmp.eq.s32.totalorder %s25, 0
      %p172 = por %p170, %p171
      %p173 = scmp.ne.s32.totalorder %s161, %s162
      %p174 = scmp.eq.s32.totalorder %s26, 1
      %p175 = por %p173, %p174
      %p177 = scmp.ne.s32.totalorder %s162, %s176
      %p178 = scmp.eq.s32.totalorder %s26, 0
      %p179 = por %p177, %p178
      %s181 = sadd.s32 %s180, 1
      %p184 = scmp.eq.s32.totalorder %s20, 1
      %p185 = scmp.ne.s32.totalorder %s180, %s182
      %p186 = scmp.eq.s32.totalorder %s20, 0
      %p187 = por %p185, %p186
      %p188 = scmp.ne.s32.totalorder %s180, %s182
      %p189 = scmp.eq.s32.totalorder %s25, 1
      %p190 = por %p188, %p189
      %p191 = scmp.ne.s32.totalorder %s182, %s183
      %p192 = scmp.eq.s32.totalorder %s25, 0
      %p193 = por %p191, %p192
      %p194 = scmp.ne.s32.totalorder %s182, %s183
      %p195 = scmp.eq.s32.totalorder %s26, 1
      %p196 = por %p194, %p195
      %p198 = scmp.ne.s32.totalorder %s183, %s197
      %p199 = scmp.eq.s32.totalorder %s26, 0
      %p200 = por %p198, %p199
      %s202 = sadd.s32 %s201, 1
      %p205 = scmp.eq.s32.totalorder %s20, 1
      %p206 = scmp.ne.s32.totalorder %s201, %s203
      %p207 = scmp.eq.s32.totalorder %s20, 0
      %p208 = por %p206, %p207
      %p209 = scmp.ne.s32.totalorder %s201, %s203
      %p210 = scmp.eq.s32.totalorder %s25, 1
      %p211 = por %p209, %p210
      %p212 = scmp.ne.s32.totalorder %s203, %s204
      %p213 = scmp.eq.s32.totalorder %s25, 0
      %p214 = por %p212, %p213
      %p215 = scmp.ne.s32.totalorder %s203, %s204
      %p216 = scmp.eq.s32.totalorder %s26, 1
      %p217 = por %p215, %p216
      %p219 = scmp.ne.s32.totalorder %s204, %s218
      %p220 = scmp.eq.s32.totalorder %s26, 0
      %p221 = por %p219, %p220
      %s223 = sadd.s32 %s222, 1
      %p226 = scmp.eq.s32.totalorder %s20, 1
      %p227 = scmp.ne.s32.totalorder %s222, %s224
      %p228 = scmp.eq.s32.totalorder %s20, 0
      %p229 = por %p227, %p228
      %p230 = scmp.ne.s32.totalorder %s222, %s224
      %p231 = scmp.eq.s32.totalorder %s25, 1
      %p232 = por %p230, %p231
      %p233 = scmp.ne.s32.totalorder %s224, %s225
      %p234 = scmp.eq.s32.totalorder %s25, 0
      %p235 = por %p233, %p234
      %p236 = scmp.ne.s32.totalorder %s224, %s225
      %p237 = scmp.eq.s32.totalorder %s26, 1
      %p238 = por %p236, %p237
      %p240 = scmp.ne.s32.totalorder %s225, %s239
      %p241 = scmp.eq.s32.totalorder %s26, 0
      %p242 = por %p240, %p241
      %s244 = sadd.s32 %s243, 1
      %p247 = scmp.eq.s32.totalorder %s20, 1
      %p248 = scmp.ne.s32.totalorder %s243, %s245
      %p249 = scmp.eq.s32.totalorder %s20, 0
      %p250 = por %p248, %p249
      %p251 = scmp.ne.s32.totalorder %s243, %s245
      %p252 = scmp.eq.s32.totalorder %s25, 1
      %p253 = por %p251, %p252
      %p254 = scmp.ne.s32.totalorder %s245, %s246
      %p255 = scmp.eq.s32.totalorder %s25, 0
      %p256 = por %p254, %p255
      %p257 = scmp.ne.s32.totalorder %s245, %s246
      %p258 = scmp.eq.s32.totalorder %s26, 1
      %p259 = por %p257, %p258
      %p261 = scmp.ne.s32.totalorder %s246, %s260
      %p262 = scmp.eq.s32.totalorder %s26, 0
      %p263 = por %p261, %p262
      %s264 = ssub.s32 %s20, %s27
      %p265 = scmp.eq.s32.totalorder %s264, 0
      %s267 = sadd.s32 %s266, 1
      %s268 = scalar_select %p265, %s266, %s267
      %p271 = pneg %p265
      %p272 = scmp.eq.s32.totalorder %s20, 1
      %p273 = por %p271, %p272
      %p274 = scmp.ne.s32.totalorder %s266, %s269
      %p275 = scmp.eq.s32.totalorder %s20, 0
      %p276 = por %p274, %p275
      %p277 = scmp.ne.s32.totalorder %s266, %s269
      %p278 = scmp.eq.s32.totalorder %s25, 1
      %p279 = por %p277, %p278
      %p280 = scmp.ne.s32.totalorder %s269, %s270
      %p281 = scmp.eq.s32.totalorder %s25, 0
      %p282 = por %p280, %p281
      %p283 = scmp.ne.s32.totalorder %s269, %s270
      %p284 = scmp.eq.s32.totalorder %s26, 1
      %p285 = por %p283, %p284
      %p287 = scmp.ne.s32.totalorder %s270, %s286
      %p288 = scmp.eq.s32.totalorder %s26, 0
      %p289 = por %p287, %p288
      %p290 = scmp.le.s32.totalorder 1, %s20
      %p291 = scmp.lt.s32.totalorder %s20, 3
      %p292 = pnand %p290, %p291
      %p293 = pneg %p292
      // Predicated region
      $region9: #{mnist_cnn_forward.1} parent=5 // pred_check
        _
      $region10: #{mnist_cnn_forward.1} parent=5 // pred_check_branch
        %295 = sbr.rel (%p292) target = $region12
      $region11: #{mnist_cnn_forward.1} parent=5 // pred_region
        %s296 = ssub.s32 %s20, 1
        // Predicated region
        $region13: #{mnist_cnn_forward.1} parent=11 // pred_check
          %p297 = pneg %p67
        $region14: #{mnist_cnn_forward.1} parent=11 // pred_check_branch
          %299 = sbr.rel (%p297) target = $region16
        $region15: #{mnist_cnn_forward.1} parent=11 // pred_region
          _
        $region16: #{mnist_cnn_forward.1} parent=11 // pred_fallthru
          _
        // Predicated region
        $region17: #{mnist_cnn_forward.1} parent=11 // pred_check
          %p300 = pneg %p88
        $region18: #{mnist_cnn_forward.1} parent=11 // pred_check_branch
          %302 = sbr.rel (%p300) target = $region20
        $region19: #{mnist_cnn_forward.1} parent=11 // pred_region
          _
        $region20: #{mnist_cnn_forward.1} parent=11 // pred_fallthru
          _
        // Predicated region
        $region21: #{mnist_cnn_forward.1} parent=11 // pred_check
          %p303 = pneg %p109
        $region22: #{mnist_cnn_forward.1} parent=11 // pred_check_branch
          %305 = sbr.rel (%p303) target = $region24
        $region23: #{mnist_cnn_forward.1} parent=11 // pred_region
          _
        $region24: #{mnist_cnn_forward.1} parent=11 // pred_fallthru
          _
        // Predicated region
        $region25: #{mnist_cnn_forward.1} parent=11 // pred_check
          %p306 = pneg %p130
        $region26: #{mnist_cnn_forward.1} parent=11 // pred_check_branch
          %308 = sbr.rel (%p306) target = $region28
        $region27: #{mnist_cnn_forward.1} parent=11 // pred_region
          _
        $region28: #{mnist_cnn_forward.1} parent=11 // pred_fallthru
          _
        // Predicated region
        $region29: #{mnist_cnn_forward.1} parent=11 // pred_check
          %p309 = pneg %p151
        $region30: #{mnist_cnn_forward.1} parent=11 // pred_check_branch
          %311 = sbr.rel (%p309) target = $region32
        $region31: #{mnist_cnn_forward.1} parent=11 // pred_region
          _
        $region32: #{mnist_cnn_forward.1} parent=11 // pred_fallthru
          _
        // Predicated region
        $region33: #{mnist_cnn_forward.1} parent=11 // pred_check
          %p312 = pneg %p172
        $region34: #{mnist_cnn_forward.1} parent=11 // pred_check_branch
          %314 = sbr.rel (%p312) target = $region36
        $region35: #{mnist_cnn_forward.1} parent=11 // pred_region
          _
        $region36: #{mnist_cnn_forward.1} parent=11 // pred_fallthru
          _
        // Predicated region
        $region37: #{mnist_cnn_forward.1} parent=11 // pred_check
          %p315 = pneg %p193
        $region38: #{mnist_cnn_forward.1} parent=11 // pred_check_branch
          %317 = sbr.rel (%p315) target = $region40
        $region39: #{mnist_cnn_forward.1} parent=11 // pred_region
          _
        $region40: #{mnist_cnn_forward.1} parent=11 // pred_fallthru
          _
        // Predicated region
        $region41: #{mnist_cnn_forward.1} parent=11 // pred_check
          %p318 = pneg %p214
        $region42: #{mnist_cnn_forward.1} parent=11 // pred_check_branch
          %320 = sbr.rel (%p318) target = $region44
        $region43: #{mnist_cnn_forward.1} parent=11 // pred_region
          _
        $region44: #{mnist_cnn_forward.1} parent=11 // pred_fallthru
          _
        // Predicated region
        $region45: #{mnist_cnn_forward.1} parent=11 // pred_check
          %p321 = pneg %p235
        $region46: #{mnist_cnn_forward.1} parent=11 // pred_check_branch
          %323 = sbr.rel (%p321) target = $region48
        $region47: #{mnist_cnn_forward.1} parent=11 // pred_region
          _
        $region48: #{mnist_cnn_forward.1} parent=11 // pred_fallthru
          _
        // Predicated region
        $region49: #{mnist_cnn_forward.1} parent=11 // pred_check
          %p324 = pneg %p256
        $region50: #{mnist_cnn_forward.1} parent=11 // pred_check_branch
          %326 = sbr.rel (%p324) target = $region52
        $region51: #{mnist_cnn_forward.1} parent=11 // pred_region
          _
        $region52: #{mnist_cnn_forward.1} parent=11 // pred_fallthru
          _
      $region12: #{mnist_cnn_forward.1} parent=5 // pred_fallthru
        _
      %p327 = scmp.lt.s32.totalorder %s20, 2
      // Predicated region
      $region53: #{mnist_cnn_forward.1} parent=5 // pred_check
        %p328 = pneg %p327
      $region54: #{mnist_cnn_forward.1} parent=5 // pred_check_branch
        %330 = sbr.rel (%p328) target = $region56
      $region55: #{mnist_cnn_forward.1} parent=5 // pred_region
        // Predicated region
        $region57: #{mnist_cnn_forward.1} parent=55 // pred_check
          %p331 = pneg %p40
        $region58: #{mnist_cnn_forward.1} parent=55 // pred_check_branch
          %333 = sbr.rel (%p331) target = $region60
        $region59: #{mnist_cnn_forward.1} parent=55 // pred_region
          %p334 = scmp.lt.s32.totalorder %s20, 1
          %s335 = scalar_select %p334, %s20, 1
          %s336 = smul.addr %s335, 112
          %s337 = smul.addr %s336, 8
          %s338 = scalar_lea.vmem %s0, %s337
        $region60: #{mnist_cnn_forward.1} parent=55 // pred_fallthru
          _
      $region56: #{mnist_cnn_forward.1} parent=5 // pred_fallthru
        _
      %p339 = scmp.le.s32.totalorder 1, %s20
      %p340 = scmp.lt.s32.totalorder %s20, 3
      %p341 = pnand %p339, %p340
      %p342 = pneg %p341
      // Predicated region
      $region61: #{mnist_cnn_forward.1} parent=5 // pred_check
        _
      $region62: #{mnist_cnn_forward.1} parent=5 // pred_check_branch
        %344 = sbr.rel (%p341) target = $region64
      $region63: #{mnist_cnn_forward.1} parent=5 // pred_region
        %s345 = ssub.s32 %s20, 1
        %p346 = scmp.lt.s32.totalorder %s25, 1
        %s347 = scalar_select %p346, %s25, 1
        %s348 = smul.addr %s347, 112
        %s349 = smul.addr %s348, 8
        %s350 = scalar_lea.vmem %s0, %s349
        %p351 = pneg %p46
        %p352 = pneg %p43
        %p353 = pneg %p67
        %p354 = pneg %p64
        %p355 = pneg %p88
        %p356 = pneg %p85
        %p357 = pneg %p109
        %p358 = pneg %p106
        %p359 = pneg %p130
        %p360 = pneg %p127
        %p361 = pneg %p151
        %p362 = pneg %p148
        %p363 = pneg %p172
        %p364 = pneg %p169
        %p365 = pneg %p193
        %p366 = pneg %p190
        %p367 = pneg %p214
        %p368 = pneg %p211
        %p369 = pneg %p235
        %p370 = pneg %p232
        %p371 = pneg %p256
        %p372 = pneg %p253
        %p373 = pneg %p282
        %p374 = pneg %p279
        %s375 = sand.u32 %s269, 1
        %s376 = scalar_lea.sflag [#allocation3], %s375
        %s377 = sand.u32 %s269, 1
        %s378 = scalar_lea.vmem [#allocation2], %s377
        %p379 = scmp.lt.s32.totalorder %s25, 1
        %s380 = scalar_select %p379, %s25, 1
        %s381 = smul.addr %s380, 112
        %s382 = smul.addr %s381, 8
        %s383 = scalar_lea.vmem %s0, %s382
        %v384 = vld [vmem:[%s383] sm:$0xff]
        %v385 = vld [vmem:[%s383 + $0x8] sm:$0xff]
        %v386 = vld [vmem:[%s383 + $0x10] sm:$0xff]
        %v387 = vld [vmem:[%s383 + $0x18] sm:$0xf]
        %v388 = vld [vmem:[%s383 + $0x20] sm:$0xff]
        %v389 = vld [vmem:[%s383 + $0x28] sm:$0xff]
        %v390 = vld [vmem:[%s383 + $0x30] sm:$0xff]
        %v391 = vld [vmem:[%s383 + $0x38] sm:$0xf]
        %v392 = vld [vmem:[%s383 + $0x40] sm:$0xff]
        %v393 = vld [vmem:[%s383 + $0x48] sm:$0xff]
        %v394 = vld [vmem:[%s383 + $0x50] sm:$0xff]
        %v395 = vld [vmem:[%s383 + $0x58] sm:$0xf]
        %v396 = vld [vmem:[%s383 + $0x60] sm:$0xff]
        %v397 = vld [vmem:[%s383 + $0x68] sm:$0xff]
        %v398 = vld [vmem:[%s383 + $0x70] sm:$0xff]
        %v399 = vld [vmem:[%s383 + $0x78] sm:$0xf]
        %v400 = vld [vmem:[%s383 + $0x80] sm:$0xff]
        %v401 = vld [vmem:[%s383 + $0x88] sm:$0xff]
        %v402 = vld [vmem:[%s383 + $0x90] sm:$0xff]
        %v403 = vld [vmem:[%s383 + $0x98] sm:$0xf]
        %v404 = vld [vmem:[%s383 + $0xa0] sm:$0xff]
        %v405 = vld [vmem:[%s383 + $0xa8] sm:$0xff]
        %v406 = vld [vmem:[%s383 + $0xb0] sm:$0xff]
        %v407 = vld [vmem:[%s383 + $0xb8] sm:$0xf]
        %v408 = vld [vmem:[%s383 + $0xc0] sm:$0xff]
        %v409 = vld [vmem:[%s383 + $0xc8] sm:$0xff]
        %v410 = vld [vmem:[%s383 + $0xd0] sm:$0xff]
        %v411 = vld [vmem:[%s383 + $0xd8] sm:$0xf]
        %v412 = vld [vmem:[%s383 + $0xe0] sm:$0xff]
        %v413 = vld [vmem:[%s383 + $0xe8] sm:$0xff]
        %v414 = vld [vmem:[%s383 + $0xf0] sm:$0xff]
        %v415 = vld [vmem:[%s383 + $0xf8] sm:$0xf]
        %v416 = vld [vmem:[%s383 + $0x100] sm:$0xff]
        %v417 = vld [vmem:[%s383 + $0x108] sm:$0xff]
        %v418 = vld [vmem:[%s383 + $0x110] sm:$0xff]
        %v419 = vld [vmem:[%s383 + $0x118] sm:$0xf]
        %v420 = vld [vmem:[%s383 + $0x120] sm:$0xff]
        %v421 = vld [vmem:[%s383 + $0x128] sm:$0xff]
        %v422 = vld [vmem:[%s383 + $0x130] sm:$0xff]
        %v423 = vld [vmem:[%s383 + $0x138] sm:$0xf]
        %v424 = vld [vmem:[%s383 + $0x140] sm:$0xff]
        %v425 = vld [vmem:[%s383 + $0x148] sm:$0xff]
        %v426 = vld [vmem:[%s383 + $0x150] sm:$0xff]
        %v427 = vld [vmem:[%s383 + $0x158] sm:$0xf]
        %v428 = vld [vmem:[%s383 + $0x160] sm:$0xff]
        %v429 = vld [vmem:[%s383 + $0x168] sm:$0xff]
        %v430 = vld [vmem:[%s383 + $0x170] sm:$0xff]
        %v431 = vld [vmem:[%s383 + $0x178] sm:$0xf]
        %v432 = vld [vmem:[%s383 + $0x180] sm:$0xff]
        %v433 = vld [vmem:[%s383 + $0x188] sm:$0xff]
        %v434 = vld [vmem:[%s383 + $0x190] sm:$0xff]
        %v435 = vld [vmem:[%s383 + $0x198] sm:$0xf]
        %v436 = vld [vmem:[%s383 + $0x1a0] sm:$0xff]
        %v437 = vld [vmem:[%s383 + $0x1a8] sm:$0xff]
        %v438 = vld [vmem:[%s383 + $0x1b0] sm:$0xff]
        %v439 = vld [vmem:[%s383 + $0x1b8] sm:$0xf]
        %v440 = vld [vmem:[%s383 + $0x1c0] sm:$0xff]
        %v441 = vld [vmem:[%s383 + $0x1c8] sm:$0xff]
        %v442 = vld [vmem:[%s383 + $0x1d0] sm:$0xff]
        %v443 = vld [vmem:[%s383 + $0x1d8] sm:$0xf]
        %v444 = vld [vmem:[%s383 + $0x1e0] sm:$0xff]
        %v445 = vld [vmem:[%s383 + $0x1e8] sm:$0xff]
        %v446 = vld [vmem:[%s383 + $0x1f0] sm:$0xff]
        %v447 = vld [vmem:[%s383 + $0x1f8] sm:$0xf]
        %v448 = vld [vmem:[%s383 + $0x200] sm:$0xff]
        %v449 = vld [vmem:[%s383 + $0x208] sm:$0xff]
        %v450 = vld [vmem:[%s383 + $0x210] sm:$0xff]
        %v451 = vld [vmem:[%s383 + $0x218] sm:$0xf]
        %v452 = vld [vmem:[%s383 + $0x220] sm:$0xff]
        %v453 = vld [vmem:[%s383 + $0x228] sm:$0xff]
        %v454 = vld [vmem:[%s383 + $0x230] sm:$0xff]
        %v455 = vld [vmem:[%s383 + $0x238] sm:$0xf]
        %v456 = vld [vmem:[%s383 + $0x240] sm:$0xff]
        %v457 = vld [vmem:[%s383 + $0x248] sm:$0xff]
        %v458 = vld [vmem:[%s383 + $0x250] sm:$0xff]
        %v459 = vld [vmem:[%s383 + $0x258] sm:$0xf]
        %v460 = vld [vmem:[%s383 + $0x260] sm:$0xff]
        %v461 = vld [vmem:[%s383 + $0x268] sm:$0xff]
        %v462 = vld [vmem:[%s383 + $0x270] sm:$0xff]
        %v463 = vld [vmem:[%s383 + $0x278] sm:$0xf]
        %v464 = vld [vmem:[%s383 + $0x280] sm:$0xff]
        %v465 = vld [vmem:[%s383 + $0x288] sm:$0xff]
        %v466 = vld [vmem:[%s383 + $0x290] sm:$0xff]
        %v467 = vld [vmem:[%s383 + $0x298] sm:$0xf]
        %v468 = vld [vmem:[%s383 + $0x2a0] sm:$0xff]
        %v469 = vld [vmem:[%s383 + $0x2a8] sm:$0xff]
        %v470 = vld [vmem:[%s383 + $0x2b0] sm:$0xff]
        %v471 = vld [vmem:[%s383 + $0x2b8] sm:$0xf]
        %v472 = vld [vmem:[%s383 + $0x2c0] sm:$0xff]
        %v473 = vld [vmem:[%s383 + $0x2c8] sm:$0xff]
        %v474 = vld [vmem:[%s383 + $0x2d0] sm:$0xff]
        %v475 = vld [vmem:[%s383 + $0x2d8] sm:$0xf]
        %v476 = vld [vmem:[%s383 + $0x2e0] sm:$0xff]
        %v477 = vld [vmem:[%s383 + $0x2e8] sm:$0xff]
        %v478 = vld [vmem:[%s383 + $0x2f0] sm:$0xff]
        %v479 = vld [vmem:[%s383 + $0x2f8] sm:$0xf]
        %v480 = vld [vmem:[%s383 + $0x300] sm:$0xff]
        %v481 = vld [vmem:[%s383 + $0x308] sm:$0xff]
        %v482 = vld [vmem:[%s383 + $0x310] sm:$0xff]
        %v483 = vld [vmem:[%s383 + $0x318] sm:$0xf]
        %v484 = vld [vmem:[%s383 + $0x320] sm:$0xff]
        %v485 = vld [vmem:[%s383 + $0x328] sm:$0xff]
        %v486 = vld [vmem:[%s383 + $0x330] sm:$0xff]
        %v487 = vld [vmem:[%s383 + $0x338] sm:$0xf]
        %v488 = vld [vmem:[%s1] sm:$0xff]
        %v489 = vld [vmem:[%s1 + $0x8] sm:$0x1]
        %v490 = vld [vmem:[%s2] sm:$0x1]
        %v491 = vld [vmem:[%s3] sm:$0xff]
        %v492 = vld [vmem:[%s3 + $0x8] sm:$0xff]
        %v493 = vld [vmem:[%s3 + $0x10] sm:$0xff]
        %v494 = vld [vmem:[%s3 + $0x18] sm:$0xff]
        %v495 = vld [vmem:[%s3 + $0x20] sm:$0xff]
        %v496 = vld [vmem:[%s3 + $0x28] sm:$0xff]
        %v497 = vld [vmem:[%s3 + $0x30] sm:$0xff]
        %v498 = vld [vmem:[%s3 + $0x38] sm:$0xff]
        %v499 = vld [vmem:[%s3 + $0x40] sm:$0xff]
        %v500 = vld [vmem:[%s3 + $0x48] sm:$0xff]
        %v501 = vld [vmem:[%s3 + $0x50] sm:$0xff]
        %v502 = vld [vmem:[%s3 + $0x58] sm:$0xff]
        %v503 = vld [vmem:[%s3 + $0x60] sm:$0xff]
        %v504 = vld [vmem:[%s3 + $0x68] sm:$0xff]
        %v505 = vld [vmem:[%s3 + $0x70] sm:$0xff]
        %v506 = vld [vmem:[%s3 + $0x78] sm:$0xff]
        %v507 = vld [vmem:[%s3 + $0x80] sm:$0xff]
        %v508 = vld [vmem:[%s3 + $0x88] sm:$0xff]
        %v509 = vld [vmem:[%s3 + $0x90] sm:$0xff]
        %v510 = vld [vmem:[%s3 + $0x98] sm:$0xff]
        %v511 = vld [vmem:[%s3 + $0xa0] sm:$0xff]
        %v512 = vld [vmem:[%s3 + $0xa8] sm:$0xff]
        %v513 = vld [vmem:[%s3 + $0xb0] sm:$0xff]
        %v514 = vld [vmem:[%s3 + $0xb8] sm:$0xff]
        %v515 = vld [vmem:[%s3 + $0xc0] sm:$0xff]
        %v516 = vld [vmem:[%s3 + $0xc8] sm:$0xff]
        %v517 = vld [vmem:[%s3 + $0xd0] sm:$0xff]
        %v518 = vld [vmem:[%s3 + $0xd8] sm:$0xff]
        %v519 = vld [vmem:[%s3 + $0xe0] sm:$0xff]
        %v520 = vld [vmem:[%s3 + $0xe8] sm:$0xff]
        %v521 = vld [vmem:[%s3 + $0xf0] sm:$0xff]
        %v522 = vld [vmem:[%s3 + $0xf8] sm:$0xff]
        %v523 = vld [vmem:[%s3 + $0x100] sm:$0xff]
        %v524 = vld [vmem:[%s3 + $0x108] sm:$0xff]
        %v525 = vld [vmem:[%s3 + $0x110] sm:$0xff]
        %v526 = vld [vmem:[%s3 + $0x118] sm:$0xff]
        %v527 = vld [vmem:[%s4] sm:$0x1]
        %v528 = vld [vmem:[%s5] sm:$0xff]
        %v529 = vld [vmem:[%s5 + $0x8] sm:$0xff]
        %v530 = vld [vmem:[%s5 + $0x10] sm:$0xff]
        %v531 = vld [vmem:[%s5 + $0x18] sm:$0xff]
        %v532 = vld [vmem:[%s5 + $0x20] sm:$0xff]
        %v533 = vld [vmem:[%s5 + $0x28] sm:$0xff]
        %v534 = vld [vmem:[%s5 + $0x30] sm:$0xff]
        %v535 = vld [vmem:[%s5 + $0x38] sm:$0xff]
        %v536 = vld [vmem:[%s5 + $0x40] sm:$0xff]
        %v537 = vld [vmem:[%s5 + $0x48] sm:$0xff]
        %v538 = vld [vmem:[%s5 + $0x50] sm:$0xff]
        %v539 = vld [vmem:[%s5 + $0x58] sm:$0xff]
        %v540 = vld [vmem:[%s5 + $0x60] sm:$0xff]
        %v541 = vld [vmem:[%s5 + $0x68] sm:$0xff]
        %v542 = vld [vmem:[%s5 + $0x70] sm:$0xff]
        %v543 = vld [vmem:[%s5 + $0x78] sm:$0xff]
        %v544 = vld [vmem:[%s5 + $0x80] sm:$0xff]
        %v545 = vld [vmem:[%s5 + $0x88] sm:$0xff]
        %v546 = vld [vmem:[%s5 + $0x90] sm:$0xff]
        %v547 = vld [vmem:[%s5 + $0x98] sm:$0xff]
        %v548 = vld [vmem:[%s5 + $0xa0] sm:$0xff]
        %v549 = vld [vmem:[%s5 + $0xa8] sm:$0xff]
        %v550 = vld [vmem:[%s5 + $0xb0] sm:$0xff]
        %v551 = vld [vmem:[%s5 + $0xb8] sm:$0xff]
        %v552 = vld [vmem:[%s5 + $0xc0] sm:$0xff]
        %v553 = vld [vmem:[%s5 + $0xc8] sm:$0xff]
        %v554 = vld [vmem:[%s5 + $0xd0] sm:$0xff]
        %v555 = vld [vmem:[%s5 + $0xd8] sm:$0xff]
        %v556 = vld [vmem:[%s5 + $0xe0] sm:$0xff]
        %v557 = vld [vmem:[%s5 + $0xe8] sm:$0xff]
        %v558 = vld [vmem:[%s5 + $0xf0] sm:$0xff]
        %v559 = vld [vmem:[%s5 + $0xf8] sm:$0xff]
        %v560 = vld [vmem:[%s5 + $0x100] sm:$0xff]
        %v561 = vld [vmem:[%s5 + $0x108] sm:$0xff]
        %v562 = vld [vmem:[%s5 + $0x110] sm:$0xff]
        %v563 = vld [vmem:[%s5 + $0x118] sm:$0xff]
        %v564 = vld [vmem:[%s5 + $0x120] sm:$0xff]
        %v565 = vld [vmem:[%s5 + $0x128] sm:$0xff]
        %v566 = vld [vmem:[%s5 + $0x130] sm:$0xff]
        %v567 = vld [vmem:[%s5 + $0x138] sm:$0xff]
        %v568 = vld [vmem:[%s5 + $0x140] sm:$0xff]
        %v569 = vld [vmem:[%s5 + $0x148] sm:$0xff]
        %v570 = vld [vmem:[%s5 + $0x150] sm:$0xff]
        %v571 = vld [vmem:[%s5 + $0x158] sm:$0xff]
        %v572 = vld [vmem:[%s5 + $0x160] sm:$0xff]
        %v573 = vld [vmem:[%s5 + $0x168] sm:$0xff]
        %v574 = vld [vmem:[%s5 + $0x170] sm:$0xff]
        %v575 = vld [vmem:[%s5 + $0x178] sm:$0xff]
        %v576 = vld [vmem:[%s5 + $0x180] sm:$0xff]
        %v577 = vld [vmem:[%s5 + $0x188] sm:$0xff]
        %v578 = vld [vmem:[%s5 + $0x190] sm:$0xff]
        %v579 = vld [vmem:[%s5 + $0x198] sm:$0xff]
        %v580 = vld [vmem:[%s5 + $0x1a0] sm:$0xff]
        %v581 = vld [vmem:[%s5 + $0x1a8] sm:$0xff]
        %v582 = vld [vmem:[%s5 + $0x1b0] sm:$0xff]
        %v583 = vld [vmem:[%s5 + $0x1b8] sm:$0xff]
        %v584 = vld [vmem:[%s5 + $0x1c0] sm:$0xff]
        %v585 = vld [vmem:[%s5 + $0x1c8] sm:$0xff]
        %v586 = vld [vmem:[%s5 + $0x1d0] sm:$0xff]
        %v587 = vld [vmem:[%s5 + $0x1d8] sm:$0xff]
        %v588 = vld [vmem:[%s5 + $0x1e0] sm:$0xff]
        %v589 = vld [vmem:[%s5 + $0x1e8] sm:$0xff]
        %v590 = vld [vmem:[%s5 + $0x1f0] sm:$0xff]
        %v591 = vld [vmem:[%s5 + $0x1f8] sm:$0xff]
        %v592 = vld [vmem:[%s5 + $0x200] sm:$0xff]
        %v593 = vld [vmem:[%s5 + $0x208] sm:$0xff]
        %v594 = vld [vmem:[%s5 + $0x210] sm:$0xff]
        %v595 = vld [vmem:[%s5 + $0x218] sm:$0xff]
        %v596 = vld [vmem:[%s5 + $0x220] sm:$0xff]
        %v597 = vld [vmem:[%s5 + $0x228] sm:$0xff]
        %v598 = vld [vmem:[%s5 + $0x230] sm:$0xff]
        %v599 = vld [vmem:[%s5 + $0x238] sm:$0xff]
        %v600 = vld [vmem:[%s6] sm:$0x1]
        %v601 = vld [vmem:[%s7] sm:$0xff]
        %v602 = vld [vmem:[%s7 + $0x8] sm:$0xff]
        %v603 = vld [vmem:[%s7 + $0x10] sm:$0xff]
        %v604 = vld [vmem:[%s7 + $0x18] sm:$0xff]
        %v605 = vld [vmem:[%s7 + $0x20] sm:$0xff]
        %v606 = vld [vmem:[%s7 + $0x28] sm:$0xff]
        %v607 = vld [vmem:[%s7 + $0x30] sm:$0xff]
        %v608 = vld [vmem:[%s7 + $0x38] sm:$0xff]
        %v609 = vld [vmem:[%s7 + $0x40] sm:$0xff]
        %v610 = vld [vmem:[%s7 + $0x48] sm:$0xff]
        %v611 = vld [vmem:[%s7 + $0x50] sm:$0xff]
        %v612 = vld [vmem:[%s7 + $0x58] sm:$0xff]
        %v613 = vld [vmem:[%s7 + $0x60] sm:$0xff]
        %v614 = vld [vmem:[%s7 + $0x68] sm:$0xff]
        %v615 = vld [vmem:[%s7 + $0x70] sm:$0xff]
        %v616 = vld [vmem:[%s7 + $0x78] sm:$0xff]
        %v617 = vld [vmem:[%s7 + $0x80] sm:$0xff]
        %v618 = vld [vmem:[%s7 + $0x88] sm:$0xff]
        %v619 = vld [vmem:[%s7 + $0x90] sm:$0xff]
        %v620 = vld [vmem:[%s7 + $0x98] sm:$0xff]
        %v621 = vld [vmem:[%s7 + $0xa0] sm:$0xff]
        %v622 = vld [vmem:[%s7 + $0xa8] sm:$0xff]
        %v623 = vld [vmem:[%s7 + $0xb0] sm:$0xff]
        %v624 = vld [vmem:[%s7 + $0xb8] sm:$0xff]
        %v625 = vld [vmem:[%s7 + $0xc0] sm:$0xff]
        %v626 = vld [vmem:[%s7 + $0xc8] sm:$0xff]
        %v627 = vld [vmem:[%s7 + $0xd0] sm:$0xff]
        %v628 = vld [vmem:[%s7 + $0xd8] sm:$0xff]
        %v629 = vld [vmem:[%s7 + $0xe0] sm:$0xff]
        %v630 = vld [vmem:[%s7 + $0xe8] sm:$0xff]
        %v631 = vld [vmem:[%s7 + $0xf0] sm:$0xff]
        %v632 = vld [vmem:[%s7 + $0xf8] sm:$0xff]
        %v633 = vld [vmem:[%s7 + $0x100] sm:$0xff]
        %v634 = vld [vmem:[%s7 + $0x108] sm:$0xff]
        %v635 = vld [vmem:[%s7 + $0x110] sm:$0xff]
        %v636 = vld [vmem:[%s7 + $0x118] sm:$0xff]
        %v637 = vld [vmem:[%s7 + $0x120] sm:$0xff]
        %v638 = vld [vmem:[%s7 + $0x128] sm:$0xff]
        %v639 = vld [vmem:[%s7 + $0x130] sm:$0xff]
        %v640 = vld [vmem:[%s7 + $0x138] sm:$0xff]
        %v641 = vld [vmem:[%s7 + $0x140] sm:$0xff]
        %v642 = vld [vmem:[%s7 + $0x148] sm:$0xff]
        %v643 = vld [vmem:[%s7 + $0x150] sm:$0xff]
        %v644 = vld [vmem:[%s7 + $0x158] sm:$0xff]
        %v645 = vld [vmem:[%s7 + $0x160] sm:$0xff]
        %v646 = vld [vmem:[%s7 + $0x168] sm:$0xff]
        %v647 = vld [vmem:[%s7 + $0x170] sm:$0xff]
        %v648 = vld [vmem:[%s7 + $0x178] sm:$0xff]
        %v649 = vld [vmem:[%s7 + $0x180] sm:$0xff]
        %v650 = vld [vmem:[%s7 + $0x188] sm:$0xff]
        %v651 = vld [vmem:[%s7 + $0x190] sm:$0xff]
        %v652 = vld [vmem:[%s7 + $0x198] sm:$0xff]
        %v653 = vld [vmem:[%s7 + $0x1a0] sm:$0xff]
        %v654 = vld [vmem:[%s7 + $0x1a8] sm:$0xff]
        %v655 = vld [vmem:[%s7 + $0x1b0] sm:$0xff]
        %v656 = vld [vmem:[%s7 + $0x1b8] sm:$0xff]
        %v657 = vld [vmem:[%s7 + $0x1c0] sm:$0xff]
        %v658 = vld [vmem:[%s7 + $0x1c8] sm:$0xff]
        %v659 = vld [vmem:[%s7 + $0x1d0] sm:$0xff]
        %v660 = vld [vmem:[%s7 + $0x1d8] sm:$0xff]
        %v661 = vld [vmem:[%s7 + $0x1e0] sm:$0xff]
        %v662 = vld [vmem:[%s7 + $0x1e8] sm:$0xff]
        %v663 = vld [vmem:[%s7 + $0x1f0] sm:$0xff]
        %v664 = vld [vmem:[%s7 + $0x1f8] sm:$0xff]
        %v665 = vld [vmem:[%s7 + $0x200] sm:$0xff]
        %v666 = vld [vmem:[%s7 + $0x208] sm:$0xff]
        %v667 = vld [vmem:[%s7 + $0x210] sm:$0xff]
        %v668 = vld [vmem:[%s7 + $0x218] sm:$0xff]
        %v669 = vld [vmem:[%s7 + $0x220] sm:$0xff]
        %v670 = vld [vmem:[%s7 + $0x228] sm:$0xff]
        %v671 = vld [vmem:[%s7 + $0x230] sm:$0xff]
        %v672 = vld [vmem:[%s7 + $0x238] sm:$0xff]
        %v673 = vld [vmem:[%s8] sm:$0x1]
        %v674 = vld [vmem:[%s9] sm:$0xff]
        %v675 = vld [vmem:[%s9 + $0x8] sm:$0xff]
        %v676 = vld [vmem:[%s9 + $0x10] sm:$0xff]
        %v677 = vld [vmem:[%s9 + $0x18] sm:$0xff]
        %v678 = vld [vmem:[%s9 + $0x20] sm:$0xff]
        %v679 = vld [vmem:[%s9 + $0x28] sm:$0xff]
        %v680 = vld [vmem:[%s9 + $0x30] sm:$0xff]
        %v681 = vld [vmem:[%s9 + $0x38] sm:$0xff]
        %v682 = vld [vmem:[%s10] sm:$0x1]
        %vm687 = vcmask 1046528
        %v688 = vrot.slane %v384, 1
        %v689 = vrot.slane %v385, 1
        %v690 = vsel %vm687, %v688, %v689
        %v691 = vrot.slane %v386, 1
        %v692 = vsel %vm687, %v689, %v691
        %v693 = vrot.slane %v387, 1
        %v694 = vsel %vm687, %v691, %v693
        %695 = vrot.lane.b32.xlu0 %v690, 1
        %v696 = vpop.permute.xlu0 %695
        %697 = vrot.lane.b32.xlu0 %v692, 1
        %v698 = vpop.permute.xlu0 %697
        %699 = vrot.lane.b32.xlu0 %v694, 1
        %v700 = vpop.permute.xlu0 %699
        %701 = vrot.lane.b32.xlu0 %v693, 1
        %v702 = vpop.permute.xlu0 %701
        %vm707 = vcmask 1045504
        %v708 = vrot.slane %v384, 2
        %v709 = vrot.slane %v385, 2
        %v710 = vsel %vm707, %v708, %v709
        %v711 = vrot.slane %v386, 2
        %v712 = vsel %vm707, %v709, %v711
        %v713 = vrot.slane %v387, 2
        %v714 = vsel %vm707, %v711, %v713
        %715 = vrot.lane.b32.xlu0 %v710, 2
        %v716 = vpop.permute.xlu0 %715
        %717 = vrot.lane.b32.xlu0 %v712, 2
        %v718 = vpop.permute.xlu0 %717
        %719 = vrot.lane.b32.xlu0 %v714, 2
        %v720 = vpop.permute.xlu0 %719
        %721 = vrot.lane.b32.xlu0 %v713, 2
        %v722 = vpop.permute.xlu0 %721
        %731 = vrot.lane.b32.xlu0 %v388, 3
        %v732 = vpop.permute.xlu0 %731
        %733 = vrot.lane.b32.xlu0 %v389, 3
        %v734 = vpop.permute.xlu0 %733
        %735 = vrot.lane.b32.xlu0 %v390, 3
        %v736 = vpop.permute.xlu0 %735
        %737 = vrot.lane.b32.xlu0 %v391, 3
        %v738 = vpop.permute.xlu0 %737
        %v743 = vrot.slane %v388, 1
        %v744 = vrot.slane %v389, 1
        %v745 = vsel %vm687, %v743, %v744
        %v746 = vrot.slane %v390, 1
        %v747 = vsel %vm687, %v744, %v746
        %v748 = vrot.slane %v391, 1
        %v749 = vsel %vm687, %v746, %v748
        %750 = vrot.lane.b32.xlu0 %v745, 4
        %v751 = vpop.permute.xlu0 %750
        %752 = vrot.lane.b32.xlu0 %v747, 4
        %v753 = vpop.permute.xlu0 %752
        %754 = vrot.lane.b32.xlu0 %v749, 4
        %v755 = vpop.permute.xlu0 %754
        %756 = vrot.lane.b32.xlu0 %v748, 4
        %v757 = vpop.permute.xlu0 %756
        %v762 = vrot.slane %v388, 2
        %v763 = vrot.slane %v389, 2
        %v764 = vsel %vm707, %v762, %v763
        %v765 = vrot.slane %v390, 2
        %v766 = vsel %vm707, %v763, %v765
        %v767 = vrot.slane %v391, 2
        %v768 = vsel %vm707, %v765, %v767
        %769 = vrot.lane.b32.xlu0 %v764, 5
        %v770 = vpop.permute.xlu0 %769
        %771 = vrot.lane.b32.xlu0 %v766, 5
        %v772 = vpop.permute.xlu0 %771
        %773 = vrot.lane.b32.xlu0 %v768, 5
        %v774 = vpop.permute.xlu0 %773
        %775 = vrot.lane.b32.xlu0 %v767, 5
        %v776 = vpop.permute.xlu0 %775
        %785 = vrot.lane.b32.xlu0 %v392, 6
        %v786 = vpop.permute.xlu0 %785
        %787 = vrot.lane.b32.xlu0 %v393, 6
        %v788 = vpop.permute.xlu0 %787
        %789 = vrot.lane.b32.xlu0 %v394, 6
        %v790 = vpop.permute.xlu0 %789
        %791 = vrot.lane.b32.xlu0 %v395, 6
        %v792 = vpop.permute.xlu0 %791
        %v797 = vrot.slane %v392, 1
        %v798 = vrot.slane %v393, 1
        %v799 = vsel %vm687, %v797, %v798
        %v800 = vrot.slane %v394, 1
        %v801 = vsel %vm687, %v798, %v800
        %v802 = vrot.slane %v395, 1
        %v803 = vsel %vm687, %v800, %v802
        %804 = vrot.lane.b32.xlu0 %v799, 7
        %v805 = vpop.permute.xlu0 %804
        %806 = vrot.lane.b32.xlu0 %v801, 7
        %v807 = vpop.permute.xlu0 %806
        %808 = vrot.lane.b32.xlu0 %v803, 7
        %v809 = vpop.permute.xlu0 %808
        %810 = vrot.lane.b32.xlu0 %v802, 7
        %v811 = vpop.permute.xlu0 %810
        %v816 = vrot.slane %v392, 2
        %v817 = vrot.slane %v393, 2
        %v818 = vsel %vm707, %v816, %v817
        %v819 = vrot.slane %v394, 2
        %v820 = vsel %vm707, %v817, %v819
        %v821 = vrot.slane %v395, 2
        %v822 = vsel %vm707, %v819, %v821
        %823 = vrot.lane.b32.xlu0 %v818, 8
        %v824 = vpop.permute.xlu0 %823
        %825 = vrot.lane.b32.xlu0 %v820, 8
        %v826 = vpop.permute.xlu0 %825
        %827 = vrot.lane.b32.xlu0 %v822, 8
        %v828 = vpop.permute.xlu0 %827
        %829 = vrot.lane.b32.xlu0 %v821, 8
        %v830 = vpop.permute.xlu0 %829
        %vm835 = vcmask 7168
        %v836 = vsel %vm835, %v384, %v696
        %v837 = vsel %vm835, %v385, %v698
        %v838 = vsel %vm835, %v386, %v700
        %v839 = vsel %vm835, %v387, %v702
        %vm840 = vcmask 15360
        %v841 = vsel %vm840, %v836, %v716
        %v842 = vsel %vm840, %v837, %v718
        %v843 = vsel %vm840, %v838, %v720
        %v844 = vsel %vm840, %v839, %v722
        %vm845 = vcmask 23552
        %v846 = vsel %vm845, %v841, %v732
        %v847 = vsel %vm845, %v842, %v734
        %v848 = vsel %vm845, %v843, %v736
        %v849 = vsel %vm845, %v844, %v738
        %vm850 = vcmask 31744
        %v851 = vsel %vm850, %v846, %v751
        %v852 = vsel %vm850, %v847, %v753
        %v853 = vsel %vm850, %v848, %v755
        %v854 = vsel %vm850, %v849, %v757
        %vm855 = vcmask 39936
        %v856 = vsel %vm855, %v851, %v770
        %v857 = vsel %vm855, %v852, %v772
        %v858 = vsel %vm855, %v853, %v774
        %v859 = vsel %vm855, %v854, %v776
        %vm860 = vcmask 48128
        %v861 = vsel %vm860, %v856, %v786
        %v862 = vsel %vm860, %v857, %v788
        %v863 = vsel %vm860, %v858, %v790
        %v864 = vsel %vm860, %v859, %v792
        %vm865 = vcmask 56320
        %v866 = vsel %vm865, %v861, %v805
        %v867 = vsel %vm865, %v862, %v807
        %v868 = vsel %vm865, %v863, %v809
        %v869 = vsel %vm865, %v864, %v811
        %vm870 = vcmask 64512
        %v871 = vsel %vm870, %v866, %v824
        %v872 = vsel %vm870, %v867, %v826
        %v873 = vsel %vm870, %v868, %v828
        %v874 = vsel %vm870, %v869, %v830
        %v876 = vperm.slane %v490, 0
        %vm878 = vcmask 72704
        %v880 = vsel %vm878, %v871, 0
        %v883 = vsel %vm878, %v872, 0
        %v886 = vsel %vm878, %v873, 0
        %v889 = vsel %vm878, %v874, 0
        %vm891 = vcmask 1040384
        %v893 = vsel %vm891, %v489, 0
        %895 = vmatpush.msra.mxu0 0.0
        %896 = vmatpush.msra.mxu0 0.0
        %897 = vmatpush.msra.mxu0 0.0
        %898 = vmatpush.msra.mxu0 0.0
        %899 = vmatpush.msra.mxu0 0.0
        %900 = vmatpush.msra.mxu0 0.0
        %901 = vmatpush.msra.mxu0 0.0
        %902 = vmatpush.msra.mxu0 0.0
        %903 = vmatpush.msra.mxu0 0.0
        %904 = vmatpush.msra.mxu0 0.0
        %905 = vmatpush.msra.mxu0 0.0
        %906 = vmatpush.msra.mxu0 0.0
        %907 = vmatpush.msra.mxu0 0.0
        %908 = vmatpush.msra.mxu0 0.0
        %909 = vmatpush.msra.mxu0 %v893
        %910 = vmatpush.msra.mxu0 %v488
        %911 = vmatmul.f32.gmra.mxu0 %v880
        %v912 = vpop.f32.mrf.mxu0
        %v913 = vadd.f32 %v876, %v912
        %914 = vmatmul.f32.gmra.mxu0 %v883
        %v915 = vpop.f32.mrf.mxu0
        %v916 = vadd.f32 %v876, %v915
        %917 = vmatmul.f32.gmra.mxu0 %v886
        %v918 = vpop.f32.mrf.mxu0
        %v919 = vadd.f32 %v876, %v918
        %920 = vmatmul.f32.gmra.mxu0 %v889
        %v921 = vpop.f32.mrf.mxu0
        %v922 = vadd.f32 %v876, %v921
        %923 = vdwg.mxu0
        %v924 = vmax.f32 %v913, 0.0
        %v925 = vmax.f32 %v916, 0.0
        %v926 = vmax.f32 %v919, 0.0
        %v927 = vmax.f32 %v922, 0.0
        %928 = vrot.lane.b32.xlu0 %v745, 1
        %v929 = vpop.permute.xlu0 %928
        %930 = vrot.lane.b32.xlu0 %v747, 1
        %v931 = vpop.permute.xlu0 %930
        %932 = vrot.lane.b32.xlu0 %v749, 1
        %v933 = vpop.permute.xlu0 %932
        %934 = vrot.lane.b32.xlu0 %v748, 1
        %v935 = vpop.permute.xlu0 %934
        %940 = vrot.lane.b32.xlu0 %v764, 2
        %v941 = vpop.permute.xlu0 %940
        %942 = vrot.lane.b32.xlu0 %v766, 2
        %v943 = vpop.permute.xlu0 %942
        %944 = vrot.lane.b32.xlu0 %v768, 2
        %v945 = vpop.permute.xlu0 %944
        %946 = vrot.lane.b32.xlu0 %v767, 2
        %v947 = vpop.permute.xlu0 %946
        %952 = vrot.lane.b32.xlu0 %v392, 3
        %v953 = vpop.permute.xlu0 %952
        %954 = vrot.lane.b32.xlu0 %v393, 3
        %v955 = vpop.permute.xlu0 %954
        %956 = vrot.lane.b32.xlu0 %v394, 3
        %v957 = vpop.permute.xlu0 %956
        %958 = vrot.lane.b32.xlu0 %v395, 3
        %v959 = vpop.permute.xlu0 %958
        %964 = vrot.lane.b32.xlu0 %v799, 4
        %v965 = vpop.permute.xlu0 %964
        %966 = vrot.lane.b32.xlu0 %v801, 4
        %v967 = vpop.permute.xlu0 %966
        %968 = vrot.lane.b32.xlu0 %v803, 4
        %v969 = vpop.permute.xlu0 %968
        %970 = vrot.lane.b32.xlu0 %v802, 4
        %v971 = vpop.permute.xlu0 %970
        %976 = vrot.lane.b32.xlu0 %v818, 5
        %v977 = vpop.permute.xlu0 %976
        %978 = vrot.lane.b32.xlu0 %v820, 5
        %v979 = vpop.permute.xlu0 %978
        %980 = vrot.lane.b32.xlu0 %v822, 5
        %v981 = vpop.permute.xlu0 %980
        %982 = vrot.lane.b32.xlu0 %v821, 5
        %v983 = vpop.permute.xlu0 %982
        %992 = vrot.lane.b32.xlu0 %v396, 6
        %v993 = vpop.permute.xlu0 %992
        %994 = vrot.lane.b32.xlu0 %v397, 6
        %v995 = vpop.permute.xlu0 %994
        %996 = vrot.lane.b32.xlu0 %v398, 6
        %v997 = vpop.permute.xlu0 %996
        %998 = vrot.lane.b32.xlu0 %v399, 6
        %v999 = vpop.permute.xlu0 %998
        %v1004 = vrot.slane %v396, 1
        %v1005 = vrot.slane %v397, 1
        %v1006 = vsel %vm687, %v1004, %v1005
        %v1007 = vrot.slane %v398, 1
        %v1008 = vsel %vm687, %v1005, %v1007
        %v1009 = vrot.slane %v399, 1
        %v1010 = vsel %vm687, %v1007, %v1009
        %1011 = vrot.lane.b32.xlu0 %v1006, 7
        %v1012 = vpop.permute.xlu0 %1011
        %1013 = vrot.lane.b32.xlu0 %v1008, 7
        %v1014 = vpop.permute.xlu0 %1013
        %1015 = vrot.lane.b32.xlu0 %v1010, 7
        %v1016 = vpop.permute.xlu0 %1015
        %1017 = vrot.lane.b32.xlu0 %v1009, 7
        %v1018 = vpop.permute.xlu0 %1017
        %v1023 = vrot.slane %v396, 2
        %v1024 = vrot.slane %v397, 2
        %v1025 = vsel %vm707, %v1023, %v1024
        %v1026 = vrot.slane %v398, 2
        %v1027 = vsel %vm707, %v1024, %v1026
        %v1028 = vrot.slane %v399, 2
        %v1029 = vsel %vm707, %v1026, %v1028
        %1030 = vrot.lane.b32.xlu0 %v1025, 8
        %v1031 = vpop.permute.xlu0 %1030
        %1032 = vrot.lane.b32.xlu0 %v1027, 8
        %v1033 = vpop.permute.xlu0 %1032
        %1034 = vrot.lane.b32.xlu0 %v1029, 8
        %v1035 = vpop.permute.xlu0 %1034
        %1036 = vrot.lane.b32.xlu0 %v1028, 8
        %v1037 = vpop.permute.xlu0 %1036
        %v1042 = vsel %vm835, %v388, %v929
        %v1043 = vsel %vm835, %v389, %v931
        %v1044 = vsel %vm835, %v390, %v933
        %v1045 = vsel %vm835, %v391, %v935
        %v1046 = vsel %vm840, %v1042, %v941
        %v1047 = vsel %vm840, %v1043, %v943
        %v1048 = vsel %vm840, %v1044, %v945
        %v1049 = vsel %vm840, %v1045, %v947
        %v1050 = vsel %vm845, %v1046, %v953
        %v1051 = vsel %vm845, %v1047, %v955
        %v1052 = vsel %vm845, %v1048, %v957
        %v1053 = vsel %vm845, %v1049, %v959
        %v1054 = vsel %vm850, %v1050, %v965
        %v1055 = vsel %vm850, %v1051, %v967
        %v1056 = vsel %vm850, %v1052, %v969
        %v1057 = vsel %vm850, %v1053, %v971
        %v1058 = vsel %vm855, %v1054, %v977
        %v1059 = vsel %vm855, %v1055, %v979
        %v1060 = vsel %vm855, %v1056, %v981
        %v1061 = vsel %vm855, %v1057, %v983
        %v1062 = vsel %vm860, %v1058, %v993
        %v1063 = vsel %vm860, %v1059, %v995
        %v1064 = vsel %vm860, %v1060, %v997
        %v1065 = vsel %vm860, %v1061, %v999
        %v1066 = vsel %vm865, %v1062, %v1012
        %v1067 = vsel %vm865, %v1063, %v1014
        %v1068 = vsel %vm865, %v1064, %v1016
        %v1069 = vsel %vm865, %v1065, %v1018
        %v1070 = vsel %vm870, %v1066, %v1031
        %v1071 = vsel %vm870, %v1067, %v1033
        %v1072 = vsel %vm870, %v1068, %v1035
        %v1073 = vsel %vm870, %v1069, %v1037
        %v1075 = vsel %vm878, %v1070, 0
        %v1078 = vsel %vm878, %v1071, 0
        %v1081 = vsel %vm878, %v1072, 0
        %v1084 = vsel %vm878, %v1073, 0
        %1086 = vmatpush.msra.mxu0 0.0
        %1087 = vmatpush.msra.mxu0 0.0
        %1088 = vmatpush.msra.mxu0 0.0
        %1089 = vmatpush.msra.mxu0 0.0
        %1090 = vmatpush.msra.mxu0 0.0
        %1091 = vmatpush.msra.mxu0 0.0
        %1092 = vmatpush.msra.mxu0 0.0
        %1093 = vmatpush.msra.mxu0 0.0
        %1094 = vmatpush.msra.mxu0 0.0
        %1095 = vmatpush.msra.mxu0 0.0
        %1096 = vmatpush.msra.mxu0 0.0
        %1097 = vmatpush.msra.mxu0 0.0
        %1098 = vmatpush.msra.mxu0 0.0
        %1099 = vmatpush.msra.mxu0 0.0
        %1100 = vmatpush.msra.mxu0 %v893
        %1101 = vmatpush.msra.mxu0 %v488
        %1102 = vmatmul.f32.gmra.mxu0 %v1075
        %v1103 = vpop.f32.mrf.mxu0
        %v1104 = vadd.f32 %v876, %v1103
        %1105 = vmatmul.f32.gmra.mxu0 %v1078
        %v1106 = vpop.f32.mrf.mxu0
        %v1107 = vadd.f32 %v876, %v1106
        %1108 = vmatmul.f32.gmra.mxu0 %v1081
        %v1109 = vpop.f32.mrf.mxu0
        %v1110 = vadd.f32 %v876, %v1109
        %1111 = vmatmul.f32.gmra.mxu0 %v1084
        %v1112 = vpop.f32.mrf.mxu0
        %v1113 = vadd.f32 %v876, %v1112
        %1114 = vdwg.mxu0
        %v1115 = vmax.f32 %v1104, 0.0
        %v1116 = vmax.f32 %v1107, 0.0
        %v1117 = vmax.f32 %v1110, 0.0
        %v1118 = vmax.f32 %v1113, 0.0
        %1119 = vrot.lane.b32.xlu0 %v799, 1
        %v1120 = vpop.permute.xlu0 %1119
        %1121 = vrot.lane.b32.xlu0 %v801, 1
        %v1122 = vpop.permute.xlu0 %1121
        %1123 = vrot.lane.b32.xlu0 %v803, 1
        %v1124 = vpop.permute.xlu0 %1123
        %1125 = vrot.lane.b32.xlu0 %v802, 1
        %v1126 = vpop.permute.xlu0 %1125
        %1131 = vrot.lane.b32.xlu0 %v818, 2
        %v1132 = vpop.permute.xlu0 %1131
        %1133 = vrot.lane.b32.xlu0 %v820, 2
        %v1134 = vpop.permute.xlu0 %1133
        %1135 = vrot.lane.b32.xlu0 %v822, 2
        %v1136 = vpop.permute.xlu0 %1135
        %1137 = vrot.lane.b32.xlu0 %v821, 2
        %v1138 = vpop.permute.xlu0 %1137
        %1143 = vrot.lane.b32.xlu0 %v396, 3
        %v1144 = vpop.permute.xlu0 %1143
        %1145 = vrot.lane.b32.xlu0 %v397, 3
        %v1146 = vpop.permute.xlu0 %1145
        %1147 = vrot.lane.b32.xlu0 %v398, 3
        %v1148 = vpop.permute.xlu0 %1147
        %1149 = vrot.lane.b32.xlu0 %v399, 3
        %v1150 = vpop.permute.xlu0 %1149
        %1155 = vrot.lane.b32.xlu0 %v1006, 4
        %v1156 = vpop.permute.xlu0 %1155
        %1157 = vrot.lane.b32.xlu0 %v1008, 4
        %v1158 = vpop.permute.xlu0 %1157
        %1159 = vrot.lane.b32.xlu0 %v1010, 4
        %v1160 = vpop.permute.xlu0 %1159
        %1161 = vrot.lane.b32.xlu0 %v1009, 4
        %v1162 = vpop.permute.xlu0 %1161
        %1167 = vrot.lane.b32.xlu0 %v1025, 5
        %v1168 = vpop.permute.xlu0 %1167
        %1169 = vrot.lane.b32.xlu0 %v1027, 5
        %v1170 = vpop.permute.xlu0 %1169
        %1171 = vrot.lane.b32.xlu0 %v1029, 5
        %v1172 = vpop.permute.xlu0 %1171
        %1173 = vrot.lane.b32.xlu0 %v1028, 5
        %v1174 = vpop.permute.xlu0 %1173
        %1183 = vrot.lane.b32.xlu0 %v400, 6
        %v1184 = vpop.permute.xlu0 %1183
        %1185 = vrot.lane.b32.xlu0 %v401, 6
        %v1186 = vpop.permute.xlu0 %1185
        %1187 = vrot.lane.b32.xlu0 %v402, 6
        %v1188 = vpop.permute.xlu0 %1187
        %1189 = vrot.lane.b32.xlu0 %v403, 6
        %v1190 = vpop.permute.xlu0 %1189
        %v1195 = vrot.slane %v400, 1
        %v1196 = vrot.slane %v401, 1
        %v1197 = vsel %vm687, %v1195, %v1196
        %v1198 = vrot.slane %v402, 1
        %v1199 = vsel %vm687, %v1196, %v1198
        %v1200 = vrot.slane %v403, 1
        %v1201 = vsel %vm687, %v1198, %v1200
        %1202 = vrot.lane.b32.xlu0 %v1197, 7
        %v1203 = vpop.permute.xlu0 %1202
        %1204 = vrot.lane.b32.xlu0 %v1199, 7
        %v1205 = vpop.permute.xlu0 %1204
        %1206 = vrot.lane.b32.xlu0 %v1201, 7
        %v1207 = vpop.permute.xlu0 %1206
        %1208 = vrot.lane.b32.xlu0 %v1200, 7
        %v1209 = vpop.permute.xlu0 %1208
        %v1214 = vrot.slane %v400, 2
        %v1215 = vrot.slane %v401, 2
        %v1216 = vsel %vm707, %v1214, %v1215
        %v1217 = vrot.slane %v402, 2
        %v1218 = vsel %vm707, %v1215, %v1217
        %v1219 = vrot.slane %v403, 2
        %v1220 = vsel %vm707, %v1217, %v1219
        %1221 = vrot.lane.b32.xlu0 %v1216, 8
        %v1222 = vpop.permute.xlu0 %1221
        %1223 = vrot.lane.b32.xlu0 %v1218, 8
        %v1224 = vpop.permute.xlu0 %1223
        %1225 = vrot.lane.b32.xlu0 %v1220, 8
        %v1226 = vpop.permute.xlu0 %1225
        %1227 = vrot.lane.b32.xlu0 %v1219, 8
        %v1228 = vpop.permute.xlu0 %1227
        %v1233 = vsel %vm835, %v392, %v1120
        %v1234 = vsel %vm835, %v393, %v1122
        %v1235 = vsel %vm835, %v394, %v1124
        %v1236 = vsel %vm835, %v395, %v1126
        %v1237 = vsel %vm840, %v1233, %v1132
        %v1238 = vsel %vm840, %v1234, %v1134
        %v1239 = vsel %vm840, %v1235, %v1136
        %v1240 = vsel %vm840, %v1236, %v1138
        %v1241 = vsel %vm845, %v1237, %v1144
        %v1242 = vsel %vm845, %v1238, %v1146
        %v1243 = vsel %vm845, %v1239, %v1148
        %v1244 = vsel %vm845, %v1240, %v1150
        %v1245 = vsel %vm850, %v1241, %v1156
        %v1246 = vsel %vm850, %v1242, %v1158
        %v1247 = vsel %vm850, %v1243, %v1160
        %v1248 = vsel %vm850, %v1244, %v1162
        %v1249 = vsel %vm855, %v1245, %v1168
        %v1250 = vsel %vm855, %v1246, %v1170
        %v1251 = vsel %vm855, %v1247, %v1172
        %v1252 = vsel %vm855, %v1248, %v1174
        %v1253 = vsel %vm860, %v1249, %v1184
        %v1254 = vsel %vm860, %v1250, %v1186
        %v1255 = vsel %vm860, %v1251, %v1188
        %v1256 = vsel %vm860, %v1252, %v1190
        %v1257 = vsel %vm865, %v1253, %v1203
        %v1258 = vsel %vm865, %v1254, %v1205
        %v1259 = vsel %vm865, %v1255, %v1207
        %v1260 = vsel %vm865, %v1256, %v1209
        %v1261 = vsel %vm870, %v1257, %v1222
        %v1262 = vsel %vm870, %v1258, %v1224
        %v1263 = vsel %vm870, %v1259, %v1226
        %v1264 = vsel %vm870, %v1260, %v1228
        %v1266 = vsel %vm878, %v1261, 0
        %v1269 = vsel %vm878, %v1262, 0
        %v1272 = vsel %vm878, %v1263, 0
        %v1275 = vsel %vm878, %v1264, 0
        %1277 = vmatpush.msra.mxu0 0.0
        %1278 = vmatpush.msra.mxu0 0.0
        %1279 = vmatpush.msra.mxu0 0.0
        %1280 = vmatpush.msra.mxu0 0.0
        %1281 = vmatpush.msra.mxu0 0.0
        %1282 = vmatpush.msra.mxu0 0.0
        %1283 = vmatpush.msra.mxu0 0.0
        %1284 = vmatpush.msra.mxu0 0.0
        %1285 = vmatpush.msra.mxu0 0.0
        %1286 = vmatpush.msra.mxu0 0.0
        %1287 = vmatpush.msra.mxu0 0.0
        %1288 = vmatpush.msra.mxu0 0.0
        %1289 = vmatpush.msra.mxu0 0.0
        %1290 = vmatpush.msra.mxu0 0.0
        %1291 = vmatpush.msra.mxu0 %v893
        %1292 = vmatpush.msra.mxu0 %v488
        %1293 = vmatmul.f32.gmra.mxu0 %v1266
        %v1294 = vpop.f32.mrf.mxu0
        %v1295 = vadd.f32 %v876, %v1294
        %1296 = vmatmul.f32.gmra.mxu0 %v1269
        %v1297 = vpop.f32.mrf.mxu0
        %v1298 = vadd.f32 %v876, %v1297
        %1299 = vmatmul.f32.gmra.mxu0 %v1272
        %v1300 = vpop.f32.mrf.mxu0
        %v1301 = vadd.f32 %v876, %v1300
        %1302 = vmatmul.f32.gmra.mxu0 %v1275
        %v1303 = vpop.f32.mrf.mxu0
        %v1304 = vadd.f32 %v876, %v1303
        %1305 = vdwg.mxu0
        %v1306 = vmax.f32 %v1295, 0.0
        %v1307 = vmax.f32 %v1298, 0.0
        %v1308 = vmax.f32 %v1301, 0.0
        %v1309 = vmax.f32 %v1304, 0.0
        %1310 = vrot.lane.b32.xlu0 %v1006, 1
        %v1311 = vpop.permute.xlu0 %1310
        %1312 = vrot.lane.b32.xlu0 %v1008, 1
        %v1313 = vpop.permute.xlu0 %1312
        %1314 = vrot.lane.b32.xlu0 %v1010, 1
        %v1315 = vpop.permute.xlu0 %1314
        %1316 = vrot.lane.b32.xlu0 %v1009, 1
        %v1317 = vpop.permute.xlu0 %1316
        %1322 = vrot.lane.b32.xlu0 %v1025, 2
        %v1323 = vpop.permute.xlu0 %1322
        %1324 = vrot.lane.b32.xlu0 %v1027, 2
        %v1325 = vpop.permute.xlu0 %1324
        %1326 = vrot.lane.b32.xlu0 %v1029, 2
        %v1327 = vpop.permute.xlu0 %1326
        %1328 = vrot.lane.b32.xlu0 %v1028, 2
        %v1329 = vpop.permute.xlu0 %1328
        %1334 = vrot.lane.b32.xlu0 %v400, 3
        %v1335 = vpop.permute.xlu0 %1334
        %1336 = vrot.lane.b32.xlu0 %v401, 3
        %v1337 = vpop.permute.xlu0 %1336
        %1338 = vrot.lane.b32.xlu0 %v402, 3
        %v1339 = vpop.permute.xlu0 %1338
        %1340 = vrot.lane.b32.xlu0 %v403, 3
        %v1341 = vpop.permute.xlu0 %1340
        %1346 = vrot.lane.b32.xlu0 %v1197, 4
        %v1347 = vpop.permute.xlu0 %1346
        %1348 = vrot.lane.b32.xlu0 %v1199, 4
        %v1349 = vpop.permute.xlu0 %1348
        %1350 = vrot.lane.b32.xlu0 %v1201, 4
        %v1351 = vpop.permute.xlu0 %1350
        %1352 = vrot.lane.b32.xlu0 %v1200, 4
        %v1353 = vpop.permute.xlu0 %1352
        %1358 = vrot.lane.b32.xlu0 %v1216, 5
        %v1359 = vpop.permute.xlu0 %1358
        %1360 = vrot.lane.b32.xlu0 %v1218, 5
        %v1361 = vpop.permute.xlu0 %1360
        %1362 = vrot.lane.b32.xlu0 %v1220, 5
        %v1363 = vpop.permute.xlu0 %1362
        %1364 = vrot.lane.b32.xlu0 %v1219, 5
        %v1365 = vpop.permute.xlu0 %1364
        %1374 = vrot.lane.b32.xlu0 %v404, 6
        %v1375 = vpop.permute.xlu0 %1374
        %1376 = vrot.lane.b32.xlu0 %v405, 6
        %v1377 = vpop.permute.xlu0 %1376
        %1378 = vrot.lane.b32.xlu0 %v406, 6
        %v1379 = vpop.permute.xlu0 %1378
        %1380 = vrot.lane.b32.xlu0 %v407, 6
        %v1381 = vpop.permute.xlu0 %1380
        %v1386 = vrot.slane %v404, 1
        %v1387 = vrot.slane %v405, 1
        %v1388 = vsel %vm687, %v1386, %v1387
        %v1389 = vrot.slane %v406, 1
        %v1390 = vsel %vm687, %v1387, %v1389
        %v1391 = vrot.slane %v407, 1
        %v1392 = vsel %vm687, %v1389, %v1391
        %1393 = vrot.lane.b32.xlu0 %v1388, 7
        %v1394 = vpop.permute.xlu0 %1393
        %1395 = vrot.lane.b32.xlu0 %v1390, 7
        %v1396 = vpop.permute.xlu0 %1395
        %1397 = vrot.lane.b32.xlu0 %v1392, 7
        %v1398 = vpop.permute.xlu0 %1397
        %1399 = vrot.lane.b32.xlu0 %v1391, 7
        %v1400 = vpop.permute.xlu0 %1399
        %v1405 = vrot.slane %v404, 2
        %v1406 = vrot.slane %v405, 2
        %v1407 = vsel %vm707, %v1405, %v1406
        %v1408 = vrot.slane %v406, 2
        %v1409 = vsel %vm707, %v1406, %v1408
        %v1410 = vrot.slane %v407, 2
        %v1411 = vsel %vm707, %v1408, %v1410
        %1412 = vrot.lane.b32.xlu0 %v1407, 8
        %v1413 = vpop.permute.xlu0 %1412
        %1414 = vrot.lane.b32.xlu0 %v1409, 8
        %v1415 = vpop.permute.xlu0 %1414
        %1416 = vrot.lane.b32.xlu0 %v1411, 8
        %v1417 = vpop.permute.xlu0 %1416
        %1418 = vrot.lane.b32.xlu0 %v1410, 8
        %v1419 = vpop.permute.xlu0 %1418
        %v1424 = vsel %vm835, %v396, %v1311
        %v1425 = vsel %vm835, %v397, %v1313
        %v1426 = vsel %vm835, %v398, %v1315
        %v1427 = vsel %vm835, %v399, %v1317
        %v1428 = vsel %vm840, %v1424, %v1323
        %v1429 = vsel %vm840, %v1425, %v1325
        %v1430 = vsel %vm840, %v1426, %v1327
        %v1431 = vsel %vm840, %v1427, %v1329
        %v1432 = vsel %vm845, %v1428, %v1335
        %v1433 = vsel %vm845, %v1429, %v1337
        %v1434 = vsel %vm845, %v1430, %v1339
        %v1435 = vsel %vm845, %v1431, %v1341
        %v1436 = vsel %vm850, %v1432, %v1347
        %v1437 = vsel %vm850, %v1433, %v1349
        %v1438 = vsel %vm850, %v1434, %v1351
        %v1439 = vsel %vm850, %v1435, %v1353
        %v1440 = vsel %vm855, %v1436, %v1359
        %v1441 = vsel %vm855, %v1437, %v1361
        %v1442 = vsel %vm855, %v1438, %v1363
        %v1443 = vsel %vm855, %v1439, %v1365
        %v1444 = vsel %vm860, %v1440, %v1375
        %v1445 = vsel %vm860, %v1441, %v1377
        %v1446 = vsel %vm860, %v1442, %v1379
        %v1447 = vsel %vm860, %v1443, %v1381
        %v1448 = vsel %vm865, %v1444, %v1394
        %v1449 = vsel %vm865, %v1445, %v1396
        %v1450 = vsel %vm865, %v1446, %v1398
        %v1451 = vsel %vm865, %v1447, %v1400
        %v1452 = vsel %vm870, %v1448, %v1413
        %v1453 = vsel %vm870, %v1449, %v1415
        %v1454 = vsel %vm870, %v1450, %v1417
        %v1455 = vsel %vm870, %v1451, %v1419
        %v1457 = vsel %vm878, %v1452, 0
        %v1460 = vsel %vm878, %v1453, 0
        %v1463 = vsel %vm878, %v1454, 0
        %v1466 = vsel %vm878, %v1455, 0
        %1468 = vmatpush.msra.mxu0 0.0
        %1469 = vmatpush.msra.mxu0 0.0
        %1470 = vmatpush.msra.mxu0 0.0
        %1471 = vmatpush.msra.mxu0 0.0
        %1472 = vmatpush.msra.mxu0 0.0
        %1473 = vmatpush.msra.mxu0 0.0
        %1474 = vmatpush.msra.mxu0 0.0
        %1475 = vmatpush.msra.mxu0 0.0
        %1476 = vmatpush.msra.mxu0 0.0
        %1477 = vmatpush.msra.mxu0 0.0
        %1478 = vmatpush.msra.mxu0 0.0
        %1479 = vmatpush.msra.mxu0 0.0
        %1480 = vmatpush.msra.mxu0 0.0
        %1481 = vmatpush.msra.mxu0 0.0
        %1482 = vmatpush.msra.mxu0 %v893
        %1483 = vmatpush.msra.mxu0 %v488
        %1484 = vmatmul.f32.gmra.mxu0 %v1457
        %v1485 = vpop.f32.mrf.mxu0
        %v1486 = vadd.f32 %v876, %v1485
        %1487 = vmatmul.f32.gmra.mxu0 %v1460
        %v1488 = vpop.f32.mrf.mxu0
        %v1489 = vadd.f32 %v876, %v1488
        %1490 = vmatmul.f32.gmra.mxu0 %v1463
        %v1491 = vpop.f32.mrf.mxu0
        %v1492 = vadd.f32 %v876, %v1491
        %1493 = vmatmul.f32.gmra.mxu0 %v1466
        %v1494 = vpop.f32.mrf.mxu0
        %v1495 = vadd.f32 %v876, %v1494
        %1496 = vdwg.mxu0
        %v1497 = vmax.f32 %v1486, 0.0
        %v1498 = vmax.f32 %v1489, 0.0
        %v1499 = vmax.f32 %v1492, 0.0
        %v1500 = vmax.f32 %v1495, 0.0
        %1501 = vrot.lane.b32.xlu0 %v1197, 1
        %v1502 = vpop.permute.xlu0 %1501
        %1503 = vrot.lane.b32.xlu0 %v1199, 1
        %v1504 = vpop.permute.xlu0 %1503
        %1505 = vrot.lane.b32.xlu0 %v1201, 1
        %v1506 = vpop.permute.xlu0 %1505
        %1507 = vrot.lane.b32.xlu0 %v1200, 1
        %v1508 = vpop.permute.xlu0 %1507
        %1513 = vrot.lane.b32.xlu0 %v1216, 2
        %v1514 = vpop.permute.xlu0 %1513
        %1515 = vrot.lane.b32.xlu0 %v1218, 2
        %v1516 = vpop.permute.xlu0 %1515
        %1517 = vrot.lane.b32.xlu0 %v1220, 2
        %v1518 = vpop.permute.xlu0 %1517
        %1519 = vrot.lane.b32.xlu0 %v1219, 2
        %v1520 = vpop.permute.xlu0 %1519
        %1525 = vrot.lane.b32.xlu0 %v404, 3
        %v1526 = vpop.permute.xlu0 %1525
        %1527 = vrot.lane.b32.xlu0 %v405, 3
        %v1528 = vpop.permute.xlu0 %1527
        %1529 = vrot.lane.b32.xlu0 %v406, 3
        %v1530 = vpop.permute.xlu0 %1529
        %1531 = vrot.lane.b32.xlu0 %v407, 3
        %v1532 = vpop.permute.xlu0 %1531
        %1537 = vrot.lane.b32.xlu0 %v1388, 4
        %v1538 = vpop.permute.xlu0 %1537
        %1539 = vrot.lane.b32.xlu0 %v1390, 4
        %v1540 = vpop.permute.xlu0 %1539
        %1541 = vrot.lane.b32.xlu0 %v1392, 4
        %v1542 = vpop.permute.xlu0 %1541
        %1543 = vrot.lane.b32.xlu0 %v1391, 4
        %v1544 = vpop.permute.xlu0 %1543
        %1549 = vrot.lane.b32.xlu0 %v1407, 5
        %v1550 = vpop.permute.xlu0 %1549
        %1551 = vrot.lane.b32.xlu0 %v1409, 5
        %v1552 = vpop.permute.xlu0 %1551
        %1553 = vrot.lane.b32.xlu0 %v1411, 5
        %v1554 = vpop.permute.xlu0 %1553
        %1555 = vrot.lane.b32.xlu0 %v1410, 5
        %v1556 = vpop.permute.xlu0 %1555
        %1565 = vrot.lane.b32.xlu0 %v408, 6
        %v1566 = vpop.permute.xlu0 %1565
        %1567 = vrot.lane.b32.xlu0 %v409, 6
        %v1568 = vpop.permute.xlu0 %1567
        %1569 = vrot.lane.b32.xlu0 %v410, 6
        %v1570 = vpop.permute.xlu0 %1569
        %1571 = vrot.lane.b32.xlu0 %v411, 6
        %v1572 = vpop.permute.xlu0 %1571
        %v1577 = vrot.slane %v408, 1
        %v1578 = vrot.slane %v409, 1
        %v1579 = vsel %vm687, %v1577, %v1578
        %v1580 = vrot.slane %v410, 1
        %v1581 = vsel %vm687, %v1578, %v1580
        %v1582 = vrot.slane %v411, 1
        %v1583 = vsel %vm687, %v1580, %v1582
        %1584 = vrot.lane.b32.xlu0 %v1579, 7
        %v1585 = vpop.permute.xlu0 %1584
        %1586 = vrot.lane.b32.xlu0 %v1581, 7
        %v1587 = vpop.permute.xlu0 %1586
        %1588 = vrot.lane.b32.xlu0 %v1583, 7
        %v1589 = vpop.permute.xlu0 %1588
        %1590 = vrot.lane.b32.xlu0 %v1582, 7
        %v1591 = vpop.permute.xlu0 %1590
        %v1596 = vrot.slane %v408, 2
        %v1597 = vrot.slane %v409, 2
        %v1598 = vsel %vm707, %v1596, %v1597
        %v1599 = vrot.slane %v410, 2
        %v1600 = vsel %vm707, %v1597, %v1599
        %v1601 = vrot.slane %v411, 2
        %v1602 = vsel %vm707, %v1599, %v1601
        %1603 = vrot.lane.b32.xlu0 %v1598, 8
        %v1604 = vpop.permute.xlu0 %1603
        %1605 = vrot.lane.b32.xlu0 %v1600, 8
        %v1606 = vpop.permute.xlu0 %1605
        %1607 = vrot.lane.b32.xlu0 %v1602, 8
        %v1608 = vpop.permute.xlu0 %1607
        %1609 = vrot.lane.b32.xlu0 %v1601, 8
        %v1610 = vpop.permute.xlu0 %1609
        %v1615 = vsel %vm835, %v400, %v1502
        %v1616 = vsel %vm835, %v401, %v1504
        %v1617 = vsel %vm835, %v402, %v1506
        %v1618 = vsel %vm835, %v403, %v1508
        %v1619 = vsel %vm840, %v1615, %v1514
        %v1620 = vsel %vm840, %v1616, %v1516
        %v1621 = vsel %vm840, %v1617, %v1518
        %v1622 = vsel %vm840, %v1618, %v1520
        %v1623 = vsel %vm845, %v1619, %v1526
        %v1624 = vsel %vm845, %v1620, %v1528
        %v1625 = vsel %vm845, %v1621, %v1530
        %v1626 = vsel %vm845, %v1622, %v1532
        %v1627 = vsel %vm850, %v1623, %v1538
        %v1628 = vsel %vm850, %v1624, %v1540
        %v1629 = vsel %vm850, %v1625, %v1542
        %v1630 = vsel %vm850, %v1626, %v1544
        %v1631 = vsel %vm855, %v1627, %v1550
        %v1632 = vsel %vm855, %v1628, %v1552
        %v1633 = vsel %vm855, %v1629, %v1554
        %v1634 = vsel %vm855, %v1630, %v1556
        %v1635 = vsel %vm860, %v1631, %v1566
        %v1636 = vsel %vm860, %v1632, %v1568
        %v1637 = vsel %vm860, %v1633, %v1570
        %v1638 = vsel %vm860, %v1634, %v1572
        %v1639 = vsel %vm865, %v1635, %v1585
        %v1640 = vsel %vm865, %v1636, %v1587
        %v1641 = vsel %vm865, %v1637, %v1589
        %v1642 = vsel %vm865, %v1638, %v1591
        %v1643 = vsel %vm870, %v1639, %v1604
        %v1644 = vsel %vm870, %v1640, %v1606
        %v1645 = vsel %vm870, %v1641, %v1608
        %v1646 = vsel %vm870, %v1642, %v1610
        %v1648 = vsel %vm878, %v1643, 0
        %v1651 = vsel %vm878, %v1644, 0
        %v1654 = vsel %vm878, %v1645, 0
        %v1657 = vsel %vm878, %v1646, 0
        %1659 = vmatpush.msra.mxu0 0.0
        %1660 = vmatpush.msra.mxu0 0.0
        %1661 = vmatpush.msra.mxu0 0.0
        %1662 = vmatpush.msra.mxu0 0.0
        %1663 = vmatpush.msra.mxu0 0.0
        %1664 = vmatpush.msra.mxu0 0.0
        %1665 = vmatpush.msra.mxu0 0.0
        %1666 = vmatpush.msra.mxu0 0.0
        %1667 = vmatpush.msra.mxu0 0.0
        %1668 = vmatpush.msra.mxu0 0.0
        %1669 = vmatpush.msra.mxu0 0.0
        %1670 = vmatpush.msra.mxu0 0.0
        %1671 = vmatpush.msra.mxu0 0.0
        %1672 = vmatpush.msra.mxu0 0.0
        %1673 = vmatpush.msra.mxu0 %v893
        %1674 = vmatpush.msra.mxu0 %v488
        %1675 = vmatmul.f32.gmra.mxu0 %v1648
        %v1676 = vpop.f32.mrf.mxu0
        %v1677 = vadd.f32 %v876, %v1676
        %1678 = vmatmul.f32.gmra.mxu0 %v1651
        %v1679 = vpop.f32.mrf.mxu0
        %v1680 = vadd.f32 %v876, %v1679
        %1681 = vmatmul.f32.gmra.mxu0 %v1654
        %v1682 = vpop.f32.mrf.mxu0
        %v1683 = vadd.f32 %v876, %v1682
        %1684 = vmatmul.f32.gmra.mxu0 %v1657
        %v1685 = vpop.f32.mrf.mxu0
        %v1686 = vadd.f32 %v876, %v1685
        %1687 = vdwg.mxu0
        %v1688 = vmax.f32 %v1677, 0.0
        %v1689 = vmax.f32 %v1680, 0.0
        %v1690 = vmax.f32 %v1683, 0.0
        %v1691 = vmax.f32 %v1686, 0.0
        %1692 = vrot.lane.b32.xlu0 %v1388, 1
        %v1693 = vpop.permute.xlu0 %1692
        %1694 = vrot.lane.b32.xlu0 %v1390, 1
        %v1695 = vpop.permute.xlu0 %1694
        %1696 = vrot.lane.b32.xlu0 %v1392, 1
        %v1697 = vpop.permute.xlu0 %1696
        %1698 = vrot.lane.b32.xlu0 %v1391, 1
        %v1699 = vpop.permute.xlu0 %1698
        %1704 = vrot.lane.b32.xlu0 %v1407, 2
        %v1705 = vpop.permute.xlu0 %1704
        %1706 = vrot.lane.b32.xlu0 %v1409, 2
        %v1707 = vpop.permute.xlu0 %1706
        %1708 = vrot.lane.b32.xlu0 %v1411, 2
        %v1709 = vpop.permute.xlu0 %1708
        %1710 = vrot.lane.b32.xlu0 %v1410, 2
        %v1711 = vpop.permute.xlu0 %1710
        %1716 = vrot.lane.b32.xlu0 %v408, 3
        %v1717 = vpop.permute.xlu0 %1716
        %1718 = vrot.lane.b32.xlu0 %v409, 3
        %v1719 = vpop.permute.xlu0 %1718
        %1720 = vrot.lane.b32.xlu0 %v410, 3
        %v1721 = vpop.permute.xlu0 %1720
        %1722 = vrot.lane.b32.xlu0 %v411, 3
        %v1723 = vpop.permute.xlu0 %1722
        %1728 = vrot.lane.b32.xlu0 %v1579, 4
        %v1729 = vpop.permute.xlu0 %1728
        %1730 = vrot.lane.b32.xlu0 %v1581, 4
        %v1731 = vpop.permute.xlu0 %1730
        %1732 = vrot.lane.b32.xlu0 %v1583, 4
        %v1733 = vpop.permute.xlu0 %1732
        %1734 = vrot.lane.b32.xlu0 %v1582, 4
        %v1735 = vpop.permute.xlu0 %1734
        %1740 = vrot.lane.b32.xlu0 %v1598, 5
        %v1741 = vpop.permute.xlu0 %1740
        %1742 = vrot.lane.b32.xlu0 %v1600, 5
        %v1743 = vpop.permute.xlu0 %1742
        %1744 = vrot.lane.b32.xlu0 %v1602, 5
        %v1745 = vpop.permute.xlu0 %1744
        %1746 = vrot.lane.b32.xlu0 %v1601, 5
        %v1747 = vpop.permute.xlu0 %1746
        %1756 = vrot.lane.b32.xlu0 %v412, 6
        %v1757 = vpop.permute.xlu0 %1756
        %1758 = vrot.lane.b32.xlu0 %v413, 6
        %v1759 = vpop.permute.xlu0 %1758
        %1760 = vrot.lane.b32.xlu0 %v414, 6
        %v1761 = vpop.permute.xlu0 %1760
        %1762 = vrot.lane.b32.xlu0 %v415, 6
        %v1763 = vpop.permute.xlu0 %1762
        %v1768 = vrot.slane %v412, 1
        %v1769 = vrot.slane %v413, 1
        %v1770 = vsel %vm687, %v1768, %v1769
        %v1771 = vrot.slane %v414, 1
        %v1772 = vsel %vm687, %v1769, %v1771
        %v1773 = vrot.slane %v415, 1
        %v1774 = vsel %vm687, %v1771, %v1773
        %1775 = vrot.lane.b32.xlu0 %v1770, 7
        %v1776 = vpop.permute.xlu0 %1775
        %1777 = vrot.lane.b32.xlu0 %v1772, 7
        %v1778 = vpop.permute.xlu0 %1777
        %1779 = vrot.lane.b32.xlu0 %v1774, 7
        %v1780 = vpop.permute.xlu0 %1779
        %1781 = vrot.lane.b32.xlu0 %v1773, 7
        %v1782 = vpop.permute.xlu0 %1781
        %v1787 = vrot.slane %v412, 2
        %v1788 = vrot.slane %v413, 2
        %v1789 = vsel %vm707, %v1787, %v1788
        %v1790 = vrot.slane %v414, 2
        %v1791 = vsel %vm707, %v1788, %v1790
        %v1792 = vrot.slane %v415, 2
        %v1793 = vsel %vm707, %v1790, %v1792
        %1794 = vrot.lane.b32.xlu0 %v1789, 8
        %v1795 = vpop.permute.xlu0 %1794
        %1796 = vrot.lane.b32.xlu0 %v1791, 8
        %v1797 = vpop.permute.xlu0 %1796
        %1798 = vrot.lane.b32.xlu0 %v1793, 8
        %v1799 = vpop.permute.xlu0 %1798
        %1800 = vrot.lane.b32.xlu0 %v1792, 8
        %v1801 = vpop.permute.xlu0 %1800
        %v1806 = vsel %vm835, %v404, %v1693
        %v1807 = vsel %vm835, %v405, %v1695
        %v1808 = vsel %vm835, %v406, %v1697
        %v1809 = vsel %vm835, %v407, %v1699
        %v1810 = vsel %vm840, %v1806, %v1705
        %v1811 = vsel %vm840, %v1807, %v1707
        %v1812 = vsel %vm840, %v1808, %v1709
        %v1813 = vsel %vm840, %v1809, %v1711
        %v1814 = vsel %vm845, %v1810, %v1717
        %v1815 = vsel %vm845, %v1811, %v1719
        %v1816 = vsel %vm845, %v1812, %v1721
        %v1817 = vsel %vm845, %v1813, %v1723
        %v1818 = vsel %vm850, %v1814, %v1729
        %v1819 = vsel %vm850, %v1815, %v1731
        %v1820 = vsel %vm850, %v1816, %v1733
        %v1821 = vsel %vm850, %v1817, %v1735
        %v1822 = vsel %vm855, %v1818, %v1741
        %v1823 = vsel %vm855, %v1819, %v1743
        %v1824 = vsel %vm855, %v1820, %v1745
        %v1825 = vsel %vm855, %v1821, %v1747
        %v1826 = vsel %vm860, %v1822, %v1757
        %v1827 = vsel %vm860, %v1823, %v1759
        %v1828 = vsel %vm860, %v1824, %v1761
        %v1829 = vsel %vm860, %v1825, %v1763
        %v1830 = vsel %vm865, %v1826, %v1776
        %v1831 = vsel %vm865, %v1827, %v1778
        %v1832 = vsel %vm865, %v1828, %v1780
        %v1833 = vsel %vm865, %v1829, %v1782
        %v1834 = vsel %vm870, %v1830, %v1795
        %v1835 = vsel %vm870, %v1831, %v1797
        %v1836 = vsel %vm870, %v1832, %v1799
        %v1837 = vsel %vm870, %v1833, %v1801
        %v1839 = vsel %vm878, %v1834, 0
        %v1842 = vsel %vm878, %v1835, 0
        %v1845 = vsel %vm878, %v1836, 0
        %v1848 = vsel %vm878, %v1837, 0
        %1850 = vmatpush.msra.mxu0 0.0
        %1851 = vmatpush.msra.mxu0 0.0
        %1852 = vmatpush.msra.mxu0 0.0
        %1853 = vmatpush.msra.mxu0 0.0
        %1854 = vmatpush.msra.mxu0 0.0
        %1855 = vmatpush.msra.mxu0 0.0
        %1856 = vmatpush.msra.mxu0 0.0
        %1857 = vmatpush.msra.mxu0 0.0
        %1858 = vmatpush.msra.mxu0 0.0
        %1859 = vmatpush.msra.mxu0 0.0
        %1860 = vmatpush.msra.mxu0 0.0
        %1861 = vmatpush.msra.mxu0 0.0
        %1862 = vmatpush.msra.mxu0 0.0
        %1863 = vmatpush.msra.mxu0 0.0
        %1864 = vmatpush.msra.mxu0 %v893
        %1865 = vmatpush.msra.mxu0 %v488
        %1866 = vmatmul.f32.gmra.mxu0 %v1839
        %v1867 = vpop.f32.mrf.mxu0
        %v1868 = vadd.f32 %v876, %v1867
        %1869 = vmatmul.f32.gmra.mxu0 %v1842
        %v1870 = vpop.f32.mrf.mxu0
        %v1871 = vadd.f32 %v876, %v1870
        %1872 = vmatmul.f32.gmra.mxu0 %v1845
        %v1873 = vpop.f32.mrf.mxu0
        %v1874 = vadd.f32 %v876, %v1873
        %1875 = vmatmul.f32.gmra.mxu0 %v1848
        %v1876 = vpop.f32.mrf.mxu0
        %v1877 = vadd.f32 %v876, %v1876
        %1878 = vdwg.mxu0
        %v1879 = vmax.f32 %v1868, 0.0
        %v1880 = vmax.f32 %v1871, 0.0
        %v1881 = vmax.f32 %v1874, 0.0
        %v1882 = vmax.f32 %v1877, 0.0
        %1883 = vrot.lane.b32.xlu0 %v1579, 1
        %v1884 = vpop.permute.xlu0 %1883
        %1885 = vrot.lane.b32.xlu0 %v1581, 1
        %v1886 = vpop.permute.xlu0 %1885
        %1887 = vrot.lane.b32.xlu0 %v1583, 1
        %v1888 = vpop.permute.xlu0 %1887
        %1889 = vrot.lane.b32.xlu0 %v1582, 1
        %v1890 = vpop.permute.xlu0 %1889
        %1895 = vrot.lane.b32.xlu0 %v1598, 2
        %v1896 = vpop.permute.xlu0 %1895
        %1897 = vrot.lane.b32.xlu0 %v1600, 2
        %v1898 = vpop.permute.xlu0 %1897
        %1899 = vrot.lane.b32.xlu0 %v1602, 2
        %v1900 = vpop.permute.xlu0 %1899
        %1901 = vrot.lane.b32.xlu0 %v1601, 2
        %v1902 = vpop.permute.xlu0 %1901
        %1907 = vrot.lane.b32.xlu0 %v412, 3
        %v1908 = vpop.permute.xlu0 %1907
        %1909 = vrot.lane.b32.xlu0 %v413, 3
        %v1910 = vpop.permute.xlu0 %1909
        %1911 = vrot.lane.b32.xlu0 %v414, 3
        %v1912 = vpop.permute.xlu0 %1911
        %1913 = vrot.lane.b32.xlu0 %v415, 3
        %v1914 = vpop.permute.xlu0 %1913
        %1919 = vrot.lane.b32.xlu0 %v1770, 4
        %v1920 = vpop.permute.xlu0 %1919
        %1921 = vrot.lane.b32.xlu0 %v1772, 4
        %v1922 = vpop.permute.xlu0 %1921
        %1923 = vrot.lane.b32.xlu0 %v1774, 4
        %v1924 = vpop.permute.xlu0 %1923
        %1925 = vrot.lane.b32.xlu0 %v1773, 4
        %v1926 = vpop.permute.xlu0 %1925
        %1931 = vrot.lane.b32.xlu0 %v1789, 5
        %v1932 = vpop.permute.xlu0 %1931
        %1933 = vrot.lane.b32.xlu0 %v1791, 5
        %v1934 = vpop.permute.xlu0 %1933
        %1935 = vrot.lane.b32.xlu0 %v1793, 5
        %v1936 = vpop.permute.xlu0 %1935
        %1937 = vrot.lane.b32.xlu0 %v1792, 5
        %v1938 = vpop.permute.xlu0 %1937
        %1947 = vrot.lane.b32.xlu0 %v416, 6
        %v1948 = vpop.permute.xlu0 %1947
        %1949 = vrot.lane.b32.xlu0 %v417, 6
        %v1950 = vpop.permute.xlu0 %1949
        %1951 = vrot.lane.b32.xlu0 %v418, 6
        %v1952 = vpop.permute.xlu0 %1951
        %1953 = vrot.lane.b32.xlu0 %v419, 6
        %v1954 = vpop.permute.xlu0 %1953
        %v1959 = vrot.slane %v416, 1
        %v1960 = vrot.slane %v417, 1
        %v1961 = vsel %vm687, %v1959, %v1960
        %v1962 = vrot.slane %v418, 1
        %v1963 = vsel %vm687, %v1960, %v1962
        %v1964 = vrot.slane %v419, 1
        %v1965 = vsel %vm687, %v1962, %v1964
        %1966 = vrot.lane.b32.xlu0 %v1961, 7
        %v1967 = vpop.permute.xlu0 %1966
        %1968 = vrot.lane.b32.xlu0 %v1963, 7
        %v1969 = vpop.permute.xlu0 %1968
        %1970 = vrot.lane.b32.xlu0 %v1965, 7
        %v1971 = vpop.permute.xlu0 %1970
        %1972 = vrot.lane.b32.xlu0 %v1964, 7
        %v1973 = vpop.permute.xlu0 %1972
        %v1978 = vrot.slane %v416, 2
        %v1979 = vrot.slane %v417, 2
        %v1980 = vsel %vm707, %v1978, %v1979
        %v1981 = vrot.slane %v418, 2
        %v1982 = vsel %vm707, %v1979, %v1981
        %v1983 = vrot.slane %v419, 2
        %v1984 = vsel %vm707, %v1981, %v1983
        %1985 = vrot.lane.b32.xlu0 %v1980, 8
        %v1986 = vpop.permute.xlu0 %1985
        %1987 = vrot.lane.b32.xlu0 %v1982, 8
        %v1988 = vpop.permute.xlu0 %1987
        %1989 = vrot.lane.b32.xlu0 %v1984, 8
        %v1990 = vpop.permute.xlu0 %1989
        %1991 = vrot.lane.b32.xlu0 %v1983, 8
        %v1992 = vpop.permute.xlu0 %1991
        %v1997 = vsel %vm835, %v408, %v1884
        %v1998 = vsel %vm835, %v409, %v1886
        %v1999 = vsel %vm835, %v410, %v1888
        %v2000 = vsel %vm835, %v411, %v1890
        %v2001 = vsel %vm840, %v1997, %v1896
        %v2002 = vsel %vm840, %v1998, %v1898
        %v2003 = vsel %vm840, %v1999, %v1900
        %v2004 = vsel %vm840, %v2000, %v1902
        %v2005 = vsel %vm845, %v2001, %v1908
        %v2006 = vsel %vm845, %v2002, %v1910
        %v2007 = vsel %vm845, %v2003, %v1912
        %v2008 = vsel %vm845, %v2004, %v1914
        %v2009 = vsel %vm850, %v2005, %v1920
        %v2010 = vsel %vm850, %v2006, %v1922
        %v2011 = vsel %vm850, %v2007, %v1924
        %v2012 = vsel %vm850, %v2008, %v1926
        %v2013 = vsel %vm855, %v2009, %v1932
        %v2014 = vsel %vm855, %v2010, %v1934
        %v2015 = vsel %vm855, %v2011, %v1936
        %v2016 = vsel %vm855, %v2012, %v1938
        %v2017 = vsel %vm860, %v2013, %v1948
        %v2018 = vsel %vm860, %v2014, %v1950
        %v2019 = vsel %vm860, %v2015, %v1952
        %v2020 = vsel %vm860, %v2016, %v1954
        %v2021 = vsel %vm865, %v2017, %v1967
        %v2022 = vsel %vm865, %v2018, %v1969
        %v2023 = vsel %vm865, %v2019, %v1971
        %v2024 = vsel %vm865, %v2020, %v1973
        %v2025 = vsel %vm870, %v2021, %v1986
        %v2026 = vsel %vm870, %v2022, %v1988
        %v2027 = vsel %vm870, %v2023, %v1990
        %v2028 = vsel %vm870, %v2024, %v1992
        %v2030 = vsel %vm878, %v2025, 0
        %v2033 = vsel %vm878, %v2026, 0
        %v2036 = vsel %vm878, %v2027, 0
        %v2039 = vsel %vm878, %v2028, 0
        %2041 = vmatpush.msra.mxu0 0.0
        %2042 = vmatpush.msra.mxu0 0.0
        %2043 = vmatpush.msra.mxu0 0.0
        %2044 = vmatpush.msra.mxu0 0.0
        %2045 = vmatpush.msra.mxu0 0.0
        %2046 = vmatpush.msra.mxu0 0.0
        %2047 = vmatpush.msra.mxu0 0.0
        %2048 = vmatpush.msra.mxu0 0.0
        %2049 = vmatpush.msra.mxu0 0.0
        %2050 = vmatpush.msra.mxu0 0.0
        %2051 = vmatpush.msra.mxu0 0.0
        %2052 = vmatpush.msra.mxu0 0.0
        %2053 = vmatpush.msra.mxu0 0.0
        %2054 = vmatpush.msra.mxu0 0.0
        %2055 = vmatpush.msra.mxu0 %v893
        %2056 = vmatpush.msra.mxu0 %v488
        %2057 = vmatmul.f32.gmra.mxu0 %v2030
        %v2058 = vpop.f32.mrf.mxu0
        %v2059 = vadd.f32 %v876, %v2058
        %2060 = vmatmul.f32.gmra.mxu0 %v2033
        %v2061 = vpop.f32.mrf.mxu0
        %v2062 = vadd.f32 %v876, %v2061
        %2063 = vmatmul.f32.gmra.mxu0 %v2036
        %v2064 = vpop.f32.mrf.mxu0
        %v2065 = vadd.f32 %v876, %v2064
        %2066 = vmatmul.f32.gmra.mxu0 %v2039
        %v2067 = vpop.f32.mrf.mxu0
        %v2068 = vadd.f32 %v876, %v2067
        %2069 = vdwg.mxu0
        %v2070 = vmax.f32 %v2059, 0.0
        %v2071 = vmax.f32 %v2062, 0.0
        %v2072 = vmax.f32 %v2065, 0.0
        %v2073 = vmax.f32 %v2068, 0.0
        %2074 = vrot.lane.b32.xlu0 %v1770, 1
        %v2075 = vpop.permute.xlu0 %2074
        %2076 = vrot.lane.b32.xlu0 %v1772, 1
        %v2077 = vpop.permute.xlu0 %2076
        %2078 = vrot.lane.b32.xlu0 %v1774, 1
        %v2079 = vpop.permute.xlu0 %2078
        %2080 = vrot.lane.b32.xlu0 %v1773, 1
        %v2081 = vpop.permute.xlu0 %2080
        %2086 = vrot.lane.b32.xlu0 %v1789, 2
        %v2087 = vpop.permute.xlu0 %2086
        %2088 = vrot.lane.b32.xlu0 %v1791, 2
        %v2089 = vpop.permute.xlu0 %2088
        %2090 = vrot.lane.b32.xlu0 %v1793, 2
        %v2091 = vpop.permute.xlu0 %2090
        %2092 = vrot.lane.b32.xlu0 %v1792, 2
        %v2093 = vpop.permute.xlu0 %2092
        %2098 = vrot.lane.b32.xlu0 %v416, 3
        %v2099 = vpop.permute.xlu0 %2098
        %2100 = vrot.lane.b32.xlu0 %v417, 3
        %v2101 = vpop.permute.xlu0 %2100
        %2102 = vrot.lane.b32.xlu0 %v418, 3
        %v2103 = vpop.permute.xlu0 %2102
        %2104 = vrot.lane.b32.xlu0 %v419, 3
        %v2105 = vpop.permute.xlu0 %2104
        %2110 = vrot.lane.b32.xlu0 %v1961, 4
        %v2111 = vpop.permute.xlu0 %2110
        %2112 = vrot.lane.b32.xlu0 %v1963, 4
        %v2113 = vpop.permute.xlu0 %2112
        %2114 = vrot.lane.b32.xlu0 %v1965, 4
        %v2115 = vpop.permute.xlu0 %2114
        %2116 = vrot.lane.b32.xlu0 %v1964, 4
        %v2117 = vpop.permute.xlu0 %2116
        %2122 = vrot.lane.b32.xlu0 %v1980, 5
        %v2123 = vpop.permute.xlu0 %2122
        %2124 = vrot.lane.b32.xlu0 %v1982, 5
        %v2125 = vpop.permute.xlu0 %2124
        %2126 = vrot.lane.b32.xlu0 %v1984, 5
        %v2127 = vpop.permute.xlu0 %2126
        %2128 = vrot.lane.b32.xlu0 %v1983, 5
        %v2129 = vpop.permute.xlu0 %2128
        %2138 = vrot.lane.b32.xlu0 %v420, 6
        %v2139 = vpop.permute.xlu0 %2138
        %2140 = vrot.lane.b32.xlu0 %v421, 6
        %v2141 = vpop.permute.xlu0 %2140
        %2142 = vrot.lane.b32.xlu0 %v422, 6
        %v2143 = vpop.permute.xlu0 %2142
        %2144 = vrot.lane.b32.xlu0 %v423, 6
        %v2145 = vpop.permute.xlu0 %2144
        %v2150 = vrot.slane %v420, 1
        %v2151 = vrot.slane %v421, 1
        %v2152 = vsel %vm687, %v2150, %v2151
        %v2153 = vrot.slane %v422, 1
        %v2154 = vsel %vm687, %v2151, %v2153
        %v2155 = vrot.slane %v423, 1
        %v2156 = vsel %vm687, %v2153, %v2155
        %2157 = vrot.lane.b32.xlu0 %v2152, 7
        %v2158 = vpop.permute.xlu0 %2157
        %2159 = vrot.lane.b32.xlu0 %v2154, 7
        %v2160 = vpop.permute.xlu0 %2159
        %2161 = vrot.lane.b32.xlu0 %v2156, 7
        %v2162 = vpop.permute.xlu0 %2161
        %2163 = vrot.lane.b32.xlu0 %v2155, 7
        %v2164 = vpop.permute.xlu0 %2163
        %v2169 = vrot.slane %v420, 2
        %v2170 = vrot.slane %v421, 2
        %v2171 = vsel %vm707, %v2169, %v2170
        %v2172 = vrot.slane %v422, 2
        %v2173 = vsel %vm707, %v2170, %v2172
        %v2174 = vrot.slane %v423, 2
        %v2175 = vsel %vm707, %v2172, %v2174
        %2176 = vrot.lane.b32.xlu0 %v2171, 8
        %v2177 = vpop.permute.xlu0 %2176
        %2178 = vrot.lane.b32.xlu0 %v2173, 8
        %v2179 = vpop.permute.xlu0 %2178
        %2180 = vrot.lane.b32.xlu0 %v2175, 8
        %v2181 = vpop.permute.xlu0 %2180
        %2182 = vrot.lane.b32.xlu0 %v2174, 8
        %v2183 = vpop.permute.xlu0 %2182
        %v2188 = vsel %vm835, %v412, %v2075
        %v2189 = vsel %vm835, %v413, %v2077
        %v2190 = vsel %vm835, %v414, %v2079
        %v2191 = vsel %vm835, %v415, %v2081
        %v2192 = vsel %vm840, %v2188, %v2087
        %v2193 = vsel %vm840, %v2189, %v2089
        %v2194 = vsel %vm840, %v2190, %v2091
        %v2195 = vsel %vm840, %v2191, %v2093
        %v2196 = vsel %vm845, %v2192, %v2099
        %v2197 = vsel %vm845, %v2193, %v2101
        %v2198 = vsel %vm845, %v2194, %v2103
        %v2199 = vsel %vm845, %v2195, %v2105
        %v2200 = vsel %vm850, %v2196, %v2111
        %v2201 = vsel %vm850, %v2197, %v2113
        %v2202 = vsel %vm850, %v2198, %v2115
        %v2203 = vsel %vm850, %v2199, %v2117
        %v2204 = vsel %vm855, %v2200, %v2123
        %v2205 = vsel %vm855, %v2201, %v2125
        %v2206 = vsel %vm855, %v2202, %v2127
        %v2207 = vsel %vm855, %v2203, %v2129
        %v2208 = vsel %vm860, %v2204, %v2139
        %v2209 = vsel %vm860, %v2205, %v2141
        %v2210 = vsel %vm860, %v2206, %v2143
        %v2211 = vsel %vm860, %v2207, %v2145
        %v2212 = vsel %vm865, %v2208, %v2158
        %v2213 = vsel %vm865, %v2209, %v2160
        %v2214 = vsel %vm865, %v2210, %v2162
        %v2215 = vsel %vm865, %v2211, %v2164
        %v2216 = vsel %vm870, %v2212, %v2177
        %v2217 = vsel %vm870, %v2213, %v2179
        %v2218 = vsel %vm870, %v2214, %v2181
        %v2219 = vsel %vm870, %v2215, %v2183
        %v2221 = vsel %vm878, %v2216, 0
        %v2224 = vsel %vm878, %v2217, 0
        %v2227 = vsel %vm878, %v2218, 0
        %v2230 = vsel %vm878, %v2219, 0
        %2232 = vmatpush.msra.mxu0 0.0
        %2233 = vmatpush.msra.mxu0 0.0
        %2234 = vmatpush.msra.mxu0 0.0
        %2235 = vmatpush.msra.mxu0 0.0
        %2236 = vmatpush.msra.mxu0 0.0
        %2237 = vmatpush.msra.mxu0 0.0
        %2238 = vmatpush.msra.mxu0 0.0
        %2239 = vmatpush.msra.mxu0 0.0
        %2240 = vmatpush.msra.mxu0 0.0
        %2241 = vmatpush.msra.mxu0 0.0
        %2242 = vmatpush.msra.mxu0 0.0
        %2243 = vmatpush.msra.mxu0 0.0
        %2244 = vmatpush.msra.mxu0 0.0
        %2245 = vmatpush.msra.mxu0 0.0
        %2246 = vmatpush.msra.mxu0 %v893
        %2247 = vmatpush.msra.mxu0 %v488
        %2248 = vmatmul.f32.gmra.mxu0 %v2221
        %v2249 = vpop.f32.mrf.mxu0
        %v2250 = vadd.f32 %v876, %v2249
        %2251 = vmatmul.f32.gmra.mxu0 %v2224
        %v2252 = vpop.f32.mrf.mxu0
        %v2253 = vadd.f32 %v876, %v2252
        %2254 = vmatmul.f32.gmra.mxu0 %v2227
        %v2255 = vpop.f32.mrf.mxu0
        %v2256 = vadd.f32 %v876, %v2255
        %2257 = vmatmul.f32.gmra.mxu0 %v2230
        %v2258 = vpop.f32.mrf.mxu0
        %v2259 = vadd.f32 %v876, %v2258
        %2260 = vdwg.mxu0
        %v2261 = vmax.f32 %v2250, 0.0
        %v2262 = vmax.f32 %v2253, 0.0
        %v2263 = vmax.f32 %v2256, 0.0
        %v2264 = vmax.f32 %v2259, 0.0
        %2265 = vrot.lane.b32.xlu0 %v1961, 1
        %v2266 = vpop.permute.xlu0 %2265
        %2267 = vrot.lane.b32.xlu0 %v1963, 1
        %v2268 = vpop.permute.xlu0 %2267
        %2269 = vrot.lane.b32.xlu0 %v1965, 1
        %v2270 = vpop.permute.xlu0 %2269
        %2271 = vrot.lane.b32.xlu0 %v1964, 1
        %v2272 = vpop.permute.xlu0 %2271
        %2277 = vrot.lane.b32.xlu0 %v1980, 2
        %v2278 = vpop.permute.xlu0 %2277
        %2279 = vrot.lane.b32.xlu0 %v1982, 2
        %v2280 = vpop.permute.xlu0 %2279
        %2281 = vrot.lane.b32.xlu0 %v1984, 2
        %v2282 = vpop.permute.xlu0 %2281
        %2283 = vrot.lane.b32.xlu0 %v1983, 2
        %v2284 = vpop.permute.xlu0 %2283
        %2289 = vrot.lane.b32.xlu0 %v420, 3
        %v2290 = vpop.permute.xlu0 %2289
        %2291 = vrot.lane.b32.xlu0 %v421, 3
        %v2292 = vpop.permute.xlu0 %2291
        %2293 = vrot.lane.b32.xlu0 %v422, 3
        %v2294 = vpop.permute.xlu0 %2293
        %2295 = vrot.lane.b32.xlu0 %v423, 3
        %v2296 = vpop.permute.xlu0 %2295
        %2301 = vrot.lane.b32.xlu0 %v2152, 4
        %v2302 = vpop.permute.xlu0 %2301
        %2303 = vrot.lane.b32.xlu0 %v2154, 4
        %v2304 = vpop.permute.xlu0 %2303
        %2305 = vrot.lane.b32.xlu0 %v2156, 4
        %v2306 = vpop.permute.xlu0 %2305
        %2307 = vrot.lane.b32.xlu0 %v2155, 4
        %v2308 = vpop.permute.xlu0 %2307
        %2313 = vrot.lane.b32.xlu0 %v2171, 5
        %v2314 = vpop.permute.xlu0 %2313
        %2315 = vrot.lane.b32.xlu0 %v2173, 5
        %v2316 = vpop.permute.xlu0 %2315
        %2317 = vrot.lane.b32.xlu0 %v2175, 5
        %v2318 = vpop.permute.xlu0 %2317
        %2319 = vrot.lane.b32.xlu0 %v2174, 5
        %v2320 = vpop.permute.xlu0 %2319
        %2329 = vrot.lane.b32.xlu0 %v424, 6
        %v2330 = vpop.permute.xlu0 %2329
        %2331 = vrot.lane.b32.xlu0 %v425, 6
        %v2332 = vpop.permute.xlu0 %2331
        %2333 = vrot.lane.b32.xlu0 %v426, 6
        %v2334 = vpop.permute.xlu0 %2333
        %2335 = vrot.lane.b32.xlu0 %v427, 6
        %v2336 = vpop.permute.xlu0 %2335
        %v2341 = vrot.slane %v424, 1
        %v2342 = vrot.slane %v425, 1
        %v2343 = vsel %vm687, %v2341, %v2342
        %v2344 = vrot.slane %v426, 1
        %v2345 = vsel %vm687, %v2342, %v2344
        %v2346 = vrot.slane %v427, 1
        %v2347 = vsel %vm687, %v2344, %v2346
        %2348 = vrot.lane.b32.xlu0 %v2343, 7
        %v2349 = vpop.permute.xlu0 %2348
        %2350 = vrot.lane.b32.xlu0 %v2345, 7
        %v2351 = vpop.permute.xlu0 %2350
        %2352 = vrot.lane.b32.xlu0 %v2347, 7
        %v2353 = vpop.permute.xlu0 %2352
        %2354 = vrot.lane.b32.xlu0 %v2346, 7
        %v2355 = vpop.permute.xlu0 %2354
        %v2360 = vrot.slane %v424, 2
        %v2361 = vrot.slane %v425, 2
        %v2362 = vsel %vm707, %v2360, %v2361
        %v2363 = vrot.slane %v426, 2
        %v2364 = vsel %vm707, %v2361, %v2363
        %v2365 = vrot.slane %v427, 2
        %v2366 = vsel %vm707, %v2363, %v2365
        %2367 = vrot.lane.b32.xlu0 %v2362, 8
        %v2368 = vpop.permute.xlu0 %2367
        %2369 = vrot.lane.b32.xlu0 %v2364, 8
        %v2370 = vpop.permute.xlu0 %2369
        %2371 = vrot.lane.b32.xlu0 %v2366, 8
        %v2372 = vpop.permute.xlu0 %2371
        %2373 = vrot.lane.b32.xlu0 %v2365, 8
        %v2374 = vpop.permute.xlu0 %2373
        %v2379 = vsel %vm835, %v416, %v2266
        %v2380 = vsel %vm835, %v417, %v2268
        %v2381 = vsel %vm835, %v418, %v2270
        %v2382 = vsel %vm835, %v419, %v2272
        %v2383 = vsel %vm840, %v2379, %v2278
        %v2384 = vsel %vm840, %v2380, %v2280
        %v2385 = vsel %vm840, %v2381, %v2282
        %v2386 = vsel %vm840, %v2382, %v2284
        %v2387 = vsel %vm845, %v2383, %v2290
        %v2388 = vsel %vm845, %v2384, %v2292
        %v2389 = vsel %vm845, %v2385, %v2294
        %v2390 = vsel %vm845, %v2386, %v2296
        %v2391 = vsel %vm850, %v2387, %v2302
        %v2392 = vsel %vm850, %v2388, %v2304
        %v2393 = vsel %vm850, %v2389, %v2306
        %v2394 = vsel %vm850, %v2390, %v2308
        %v2395 = vsel %vm855, %v2391, %v2314
        %v2396 = vsel %vm855, %v2392, %v2316
        %v2397 = vsel %vm855, %v2393, %v2318
        %v2398 = vsel %vm855, %v2394, %v2320
        %v2399 = vsel %vm860, %v2395, %v2330
        %v2400 = vsel %vm860, %v2396, %v2332
        %v2401 = vsel %vm860, %v2397, %v2334
        %v2402 = vsel %vm860, %v2398, %v2336
        %v2403 = vsel %vm865, %v2399, %v2349
        %v2404 = vsel %vm865, %v2400, %v2351
        %v2405 = vsel %vm865, %v2401, %v2353
        %v2406 = vsel %vm865, %v2402, %v2355
        %v2407 = vsel %vm870, %v2403, %v2368
        %v2408 = vsel %vm870, %v2404, %v2370
        %v2409 = vsel %vm870, %v2405, %v2372
        %v2410 = vsel %vm870, %v2406, %v2374
        %v2412 = vsel %vm878, %v2407, 0
        %v2415 = vsel %vm878, %v2408, 0
        %v2418 = vsel %vm878, %v2409, 0
        %v2421 = vsel %vm878, %v2410, 0
        %2423 = vmatpush.msra.mxu0 0.0
        %2424 = vmatpush.msra.mxu0 0.0
        %2425 = vmatpush.msra.mxu0 0.0
        %2426 = vmatpush.msra.mxu0 0.0
        %2427 = vmatpush.msra.mxu0 0.0
        %2428 = vmatpush.msra.mxu0 0.0
        %2429 = vmatpush.msra.mxu0 0.0
        %2430 = vmatpush.msra.mxu0 0.0
        %2431 = vmatpush.msra.mxu0 0.0
        %2432 = vmatpush.msra.mxu0 0.0
        %2433 = vmatpush.msra.mxu0 0.0
        %2434 = vmatpush.msra.mxu0 0.0
        %2435 = vmatpush.msra.mxu0 0.0
        %2436 = vmatpush.msra.mxu0 0.0
        %2437 = vmatpush.msra.mxu0 %v893
        %2438 = vmatpush.msra.mxu0 %v488
        %2439 = vmatmul.f32.gmra.mxu0 %v2412
        %v2440 = vpop.f32.mrf.mxu0
        %v2441 = vadd.f32 %v876, %v2440
        %2442 = vmatmul.f32.gmra.mxu0 %v2415
        %v2443 = vpop.f32.mrf.mxu0
        %v2444 = vadd.f32 %v876, %v2443
        %2445 = vmatmul.f32.gmra.mxu0 %v2418
        %v2446 = vpop.f32.mrf.mxu0
        %v2447 = vadd.f32 %v876, %v2446
        %2448 = vmatmul.f32.gmra.mxu0 %v2421
        %v2449 = vpop.f32.mrf.mxu0
        %v2450 = vadd.f32 %v876, %v2449
        %2451 = vdwg.mxu0
        %v2452 = vmax.f32 %v2441, 0.0
        %v2453 = vmax.f32 %v2444, 0.0
        %v2454 = vmax.f32 %v2447, 0.0
        %v2455 = vmax.f32 %v2450, 0.0
        %2456 = vrot.lane.b32.xlu0 %v2152, 1
        %v2457 = vpop.permute.xlu0 %2456
        %2458 = vrot.lane.b32.xlu0 %v2154, 1
        %v2459 = vpop.permute.xlu0 %2458
        %2460 = vrot.lane.b32.xlu0 %v2156, 1
        %v2461 = vpop.permute.xlu0 %2460
        %2462 = vrot.lane.b32.xlu0 %v2155, 1
        %v2463 = vpop.permute.xlu0 %2462
        %2468 = vrot.lane.b32.xlu0 %v2171, 2
        %v2469 = vpop.permute.xlu0 %2468
        %2470 = vrot.lane.b32.xlu0 %v2173, 2
        %v2471 = vpop.permute.xlu0 %2470
        %2472 = vrot.lane.b32.xlu0 %v2175, 2
        %v2473 = vpop.permute.xlu0 %2472
        %2474 = vrot.lane.b32.xlu0 %v2174, 2
        %v2475 = vpop.permute.xlu0 %2474
        %2480 = vrot.lane.b32.xlu0 %v424, 3
        %v2481 = vpop.permute.xlu0 %2480
        %2482 = vrot.lane.b32.xlu0 %v425, 3
        %v2483 = vpop.permute.xlu0 %2482
        %2484 = vrot.lane.b32.xlu0 %v426, 3
        %v2485 = vpop.permute.xlu0 %2484
        %2486 = vrot.lane.b32.xlu0 %v427, 3
        %v2487 = vpop.permute.xlu0 %2486
        %2492 = vrot.lane.b32.xlu0 %v2343, 4
        %v2493 = vpop.permute.xlu0 %2492
        %2494 = vrot.lane.b32.xlu0 %v2345, 4
        %v2495 = vpop.permute.xlu0 %2494
        %2496 = vrot.lane.b32.xlu0 %v2347, 4
        %v2497 = vpop.permute.xlu0 %2496
        %2498 = vrot.lane.b32.xlu0 %v2346, 4
        %v2499 = vpop.permute.xlu0 %2498
        %2504 = vrot.lane.b32.xlu0 %v2362, 5
        %v2505 = vpop.permute.xlu0 %2504
        %2506 = vrot.lane.b32.xlu0 %v2364, 5
        %v2507 = vpop.permute.xlu0 %2506
        %2508 = vrot.lane.b32.xlu0 %v2366, 5
        %v2509 = vpop.permute.xlu0 %2508
        %2510 = vrot.lane.b32.xlu0 %v2365, 5
        %v2511 = vpop.permute.xlu0 %2510
        %2520 = vrot.lane.b32.xlu0 %v428, 6
        %v2521 = vpop.permute.xlu0 %2520
        %2522 = vrot.lane.b32.xlu0 %v429, 6
        %v2523 = vpop.permute.xlu0 %2522
        %2524 = vrot.lane.b32.xlu0 %v430, 6
        %v2525 = vpop.permute.xlu0 %2524
        %2526 = vrot.lane.b32.xlu0 %v431, 6
        %v2527 = vpop.permute.xlu0 %2526
        %v2532 = vrot.slane %v428, 1
        %v2533 = vrot.slane %v429, 1
        %v2534 = vsel %vm687, %v2532, %v2533
        %v2535 = vrot.slane %v430, 1
        %v2536 = vsel %vm687, %v2533, %v2535
        %v2537 = vrot.slane %v431, 1
        %v2538 = vsel %vm687, %v2535, %v2537
        %2539 = vrot.lane.b32.xlu0 %v2534, 7
        %v2540 = vpop.permute.xlu0 %2539
        %2541 = vrot.lane.b32.xlu0 %v2536, 7
        %v2542 = vpop.permute.xlu0 %2541
        %2543 = vrot.lane.b32.xlu0 %v2538, 7
        %v2544 = vpop.permute.xlu0 %2543
        %2545 = vrot.lane.b32.xlu0 %v2537, 7
        %v2546 = vpop.permute.xlu0 %2545
        %v2551 = vrot.slane %v428, 2
        %v2552 = vrot.slane %v429, 2
        %v2553 = vsel %vm707, %v2551, %v2552
        %v2554 = vrot.slane %v430, 2
        %v2555 = vsel %vm707, %v2552, %v2554
        %v2556 = vrot.slane %v431, 2
        %v2557 = vsel %vm707, %v2554, %v2556
        %2558 = vrot.lane.b32.xlu0 %v2553, 8
        %v2559 = vpop.permute.xlu0 %2558
        %2560 = vrot.lane.b32.xlu0 %v2555, 8
        %v2561 = vpop.permute.xlu0 %2560
        %2562 = vrot.lane.b32.xlu0 %v2557, 8
        %v2563 = vpop.permute.xlu0 %2562
        %2564 = vrot.lane.b32.xlu0 %v2556, 8
        %v2565 = vpop.permute.xlu0 %2564
        %v2570 = vsel %vm835, %v420, %v2457
        %v2571 = vsel %vm835, %v421, %v2459
        %v2572 = vsel %vm835, %v422, %v2461
        %v2573 = vsel %vm835, %v423, %v2463
        %v2574 = vsel %vm840, %v2570, %v2469
        %v2575 = vsel %vm840, %v2571, %v2471
        %v2576 = vsel %vm840, %v2572, %v2473
        %v2577 = vsel %vm840, %v2573, %v2475
        %v2578 = vsel %vm845, %v2574, %v2481
        %v2579 = vsel %vm845, %v2575, %v2483
        %v2580 = vsel %vm845, %v2576, %v2485
        %v2581 = vsel %vm845, %v2577, %v2487
        %v2582 = vsel %vm850, %v2578, %v2493
        %v2583 = vsel %vm850, %v2579, %v2495
        %v2584 = vsel %vm850, %v2580, %v2497
        %v2585 = vsel %vm850, %v2581, %v2499
        %v2586 = vsel %vm855, %v2582, %v2505
        %v2587 = vsel %vm855, %v2583, %v2507
        %v2588 = vsel %vm855, %v2584, %v2509
        %v2589 = vsel %vm855, %v2585, %v2511
        %v2590 = vsel %vm860, %v2586, %v2521
        %v2591 = vsel %vm860, %v2587, %v2523
        %v2592 = vsel %vm860, %v2588, %v2525
        %v2593 = vsel %vm860, %v2589, %v2527
        %v2594 = vsel %vm865, %v2590, %v2540
        %v2595 = vsel %vm865, %v2591, %v2542
        %v2596 = vsel %vm865, %v2592, %v2544
        %v2597 = vsel %vm865, %v2593, %v2546
        %v2598 = vsel %vm870, %v2594, %v2559
        %v2599 = vsel %vm870, %v2595, %v2561
        %v2600 = vsel %vm870, %v2596, %v2563
        %v2601 = vsel %vm870, %v2597, %v2565
        %v2603 = vsel %vm878, %v2598, 0
        %v2606 = vsel %vm878, %v2599, 0
        %v2609 = vsel %vm878, %v2600, 0
        %v2612 = vsel %vm878, %v2601, 0
        %2614 = vmatpush.msra.mxu0 0.0
        %2615 = vmatpush.msra.mxu0 0.0
        %2616 = vmatpush.msra.mxu0 0.0
        %2617 = vmatpush.msra.mxu0 0.0
        %2618 = vmatpush.msra.mxu0 0.0
        %2619 = vmatpush.msra.mxu0 0.0
        %2620 = vmatpush.msra.mxu0 0.0
        %2621 = vmatpush.msra.mxu0 0.0
        %2622 = vmatpush.msra.mxu0 0.0
        %2623 = vmatpush.msra.mxu0 0.0
        %2624 = vmatpush.msra.mxu0 0.0
        %2625 = vmatpush.msra.mxu0 0.0
        %2626 = vmatpush.msra.mxu0 0.0
        %2627 = vmatpush.msra.mxu0 0.0
        %2628 = vmatpush.msra.mxu0 %v893
        %2629 = vmatpush.msra.mxu0 %v488
        %2630 = vmatmul.f32.gmra.mxu0 %v2603
        %v2631 = vpop.f32.mrf.mxu0
        %v2632 = vadd.f32 %v876, %v2631
        %2633 = vmatmul.f32.gmra.mxu0 %v2606
        %v2634 = vpop.f32.mrf.mxu0
        %v2635 = vadd.f32 %v876, %v2634
        %2636 = vmatmul.f32.gmra.mxu0 %v2609
        %v2637 = vpop.f32.mrf.mxu0
        %v2638 = vadd.f32 %v876, %v2637
        %2639 = vmatmul.f32.gmra.mxu0 %v2612
        %v2640 = vpop.f32.mrf.mxu0
        %v2641 = vadd.f32 %v876, %v2640
        %2642 = vdwg.mxu0
        %v2643 = vmax.f32 %v2632, 0.0
        %v2644 = vmax.f32 %v2635, 0.0
        %v2645 = vmax.f32 %v2638, 0.0
        %v2646 = vmax.f32 %v2641, 0.0
        %2647 = vrot.lane.b32.xlu0 %v2343, 1
        %v2648 = vpop.permute.xlu0 %2647
        %2649 = vrot.lane.b32.xlu0 %v2345, 1
        %v2650 = vpop.permute.xlu0 %2649
        %2651 = vrot.lane.b32.xlu0 %v2347, 1
        %v2652 = vpop.permute.xlu0 %2651
        %2653 = vrot.lane.b32.xlu0 %v2346, 1
        %v2654 = vpop.permute.xlu0 %2653
        %2659 = vrot.lane.b32.xlu0 %v2362, 2
        %v2660 = vpop.permute.xlu0 %2659
        %2661 = vrot.lane.b32.xlu0 %v2364, 2
        %v2662 = vpop.permute.xlu0 %2661
        %2663 = vrot.lane.b32.xlu0 %v2366, 2
        %v2664 = vpop.permute.xlu0 %2663
        %2665 = vrot.lane.b32.xlu0 %v2365, 2
        %v2666 = vpop.permute.xlu0 %2665
        %2671 = vrot.lane.b32.xlu0 %v428, 3
        %v2672 = vpop.permute.xlu0 %2671
        %2673 = vrot.lane.b32.xlu0 %v429, 3
        %v2674 = vpop.permute.xlu0 %2673
        %2675 = vrot.lane.b32.xlu0 %v430, 3
        %v2676 = vpop.permute.xlu0 %2675
        %2677 = vrot.lane.b32.xlu0 %v431, 3
        %v2678 = vpop.permute.xlu0 %2677
        %2683 = vrot.lane.b32.xlu0 %v2534, 4
        %v2684 = vpop.permute.xlu0 %2683
        %2685 = vrot.lane.b32.xlu0 %v2536, 4
        %v2686 = vpop.permute.xlu0 %2685
        %2687 = vrot.lane.b32.xlu0 %v2538, 4
        %v2688 = vpop.permute.xlu0 %2687
        %2689 = vrot.lane.b32.xlu0 %v2537, 4
        %v2690 = vpop.permute.xlu0 %2689
        %2695 = vrot.lane.b32.xlu0 %v2553, 5
        %v2696 = vpop.permute.xlu0 %2695
        %2697 = vrot.lane.b32.xlu0 %v2555, 5
        %v2698 = vpop.permute.xlu0 %2697
        %2699 = vrot.lane.b32.xlu0 %v2557, 5
        %v2700 = vpop.permute.xlu0 %2699
        %2701 = vrot.lane.b32.xlu0 %v2556, 5
        %v2702 = vpop.permute.xlu0 %2701
        %2711 = vrot.lane.b32.xlu0 %v432, 6
        %v2712 = vpop.permute.xlu0 %2711
        %2713 = vrot.lane.b32.xlu0 %v433, 6
        %v2714 = vpop.permute.xlu0 %2713
        %2715 = vrot.lane.b32.xlu0 %v434, 6
        %v2716 = vpop.permute.xlu0 %2715
        %2717 = vrot.lane.b32.xlu0 %v435, 6
        %v2718 = vpop.permute.xlu0 %2717
        %v2723 = vrot.slane %v432, 1
        %v2724 = vrot.slane %v433, 1
        %v2725 = vsel %vm687, %v2723, %v2724
        %v2726 = vrot.slane %v434, 1
        %v2727 = vsel %vm687, %v2724, %v2726
        %v2728 = vrot.slane %v435, 1
        %v2729 = vsel %vm687, %v2726, %v2728
        %2730 = vrot.lane.b32.xlu0 %v2725, 7
        %v2731 = vpop.permute.xlu0 %2730
        %2732 = vrot.lane.b32.xlu0 %v2727, 7
        %v2733 = vpop.permute.xlu0 %2732
        %2734 = vrot.lane.b32.xlu0 %v2729, 7
        %v2735 = vpop.permute.xlu0 %2734
        %2736 = vrot.lane.b32.xlu0 %v2728, 7
        %v2737 = vpop.permute.xlu0 %2736
        %v2742 = vrot.slane %v432, 2
        %v2743 = vrot.slane %v433, 2
        %v2744 = vsel %vm707, %v2742, %v2743
        %v2745 = vrot.slane %v434, 2
        %v2746 = vsel %vm707, %v2743, %v2745
        %v2747 = vrot.slane %v435, 2
        %v2748 = vsel %vm707, %v2745, %v2747
        %2749 = vrot.lane.b32.xlu0 %v2744, 8
        %v2750 = vpop.permute.xlu0 %2749
        %2751 = vrot.lane.b32.xlu0 %v2746, 8
        %v2752 = vpop.permute.xlu0 %2751
        %2753 = vrot.lane.b32.xlu0 %v2748, 8
        %v2754 = vpop.permute.xlu0 %2753
        %2755 = vrot.lane.b32.xlu0 %v2747, 8
        %v2756 = vpop.permute.xlu0 %2755
        %v2761 = vsel %vm835, %v424, %v2648
        %v2762 = vsel %vm835, %v425, %v2650
        %v2763 = vsel %vm835, %v426, %v2652
        %v2764 = vsel %vm835, %v427, %v2654
        %v2765 = vsel %vm840, %v2761, %v2660
        %v2766 = vsel %vm840, %v2762, %v2662
        %v2767 = vsel %vm840, %v2763, %v2664
        %v2768 = vsel %vm840, %v2764, %v2666
        %v2769 = vsel %vm845, %v2765, %v2672
        %v2770 = vsel %vm845, %v2766, %v2674
        %v2771 = vsel %vm845, %v2767, %v2676
        %v2772 = vsel %vm845, %v2768, %v2678
        %v2773 = vsel %vm850, %v2769, %v2684
        %v2774 = vsel %vm850, %v2770, %v2686
        %v2775 = vsel %vm850, %v2771, %v2688
        %v2776 = vsel %vm850, %v2772, %v2690
        %v2777 = vsel %vm855, %v2773, %v2696
        %v2778 = vsel %vm855, %v2774, %v2698
        %v2779 = vsel %vm855, %v2775, %v2700
        %v2780 = vsel %vm855, %v2776, %v2702
        %v2781 = vsel %vm860, %v2777, %v2712
        %v2782 = vsel %vm860, %v2778, %v2714
        %v2783 = vsel %vm860, %v2779, %v2716
        %v2784 = vsel %vm860, %v2780, %v2718
        %v2785 = vsel %vm865, %v2781, %v2731
        %v2786 = vsel %vm865, %v2782, %v2733
        %v2787 = vsel %vm865, %v2783, %v2735
        %v2788 = vsel %vm865, %v2784, %v2737
        %v2789 = vsel %vm870, %v2785, %v2750
        %v2790 = vsel %vm870, %v2786, %v2752
        %v2791 = vsel %vm870, %v2787, %v2754
        %v2792 = vsel %vm870, %v2788, %v2756
        %v2794 = vsel %vm878, %v2789, 0
        %v2797 = vsel %vm878, %v2790, 0
        %v2800 = vsel %vm878, %v2791, 0
        %v2803 = vsel %vm878, %v2792, 0
        %2805 = vmatpush.msra.mxu0 0.0
        %2806 = vmatpush.msra.mxu0 0.0
        %2807 = vmatpush.msra.mxu0 0.0
        %2808 = vmatpush.msra.mxu0 0.0
        %2809 = vmatpush.msra.mxu0 0.0
        %2810 = vmatpush.msra.mxu0 0.0
        %2811 = vmatpush.msra.mxu0 0.0
        %2812 = vmatpush.msra.mxu0 0.0
        %2813 = vmatpush.msra.mxu0 0.0
        %2814 = vmatpush.msra.mxu0 0.0
        %2815 = vmatpush.msra.mxu0 0.0
        %2816 = vmatpush.msra.mxu0 0.0
        %2817 = vmatpush.msra.mxu0 0.0
        %2818 = vmatpush.msra.mxu0 0.0
        %2819 = vmatpush.msra.mxu0 %v893
        %2820 = vmatpush.msra.mxu0 %v488
        %2821 = vmatmul.f32.gmra.mxu0 %v2794
        %v2822 = vpop.f32.mrf.mxu0
        %v2823 = vadd.f32 %v876, %v2822
        %2824 = vmatmul.f32.gmra.mxu0 %v2797
        %v2825 = vpop.f32.mrf.mxu0
        %v2826 = vadd.f32 %v876, %v2825
        %2827 = vmatmul.f32.gmra.mxu0 %v2800
        %v2828 = vpop.f32.mrf.mxu0
        %v2829 = vadd.f32 %v876, %v2828
        %2830 = vmatmul.f32.gmra.mxu0 %v2803
        %v2831 = vpop.f32.mrf.mxu0
        %v2832 = vadd.f32 %v876, %v2831
        %2833 = vdwg.mxu0
        %v2834 = vmax.f32 %v2823, 0.0
        %v2835 = vmax.f32 %v2826, 0.0
        %v2836 = vmax.f32 %v2829, 0.0
        %v2837 = vmax.f32 %v2832, 0.0
        %2838 = vrot.lane.b32.xlu0 %v2534, 1
        %v2839 = vpop.permute.xlu0 %2838
        %2840 = vrot.lane.b32.xlu0 %v2536, 1
        %v2841 = vpop.permute.xlu0 %2840
        %2842 = vrot.lane.b32.xlu0 %v2538, 1
        %v2843 = vpop.permute.xlu0 %2842
        %2844 = vrot.lane.b32.xlu0 %v2537, 1
        %v2845 = vpop.permute.xlu0 %2844
        %2850 = vrot.lane.b32.xlu0 %v2553, 2
        %v2851 = vpop.permute.xlu0 %2850
        %2852 = vrot.lane.b32.xlu0 %v2555, 2
        %v2853 = vpop.permute.xlu0 %2852
        %2854 = vrot.lane.b32.xlu0 %v2557, 2
        %v2855 = vpop.permute.xlu0 %2854
        %2856 = vrot.lane.b32.xlu0 %v2556, 2
        %v2857 = vpop.permute.xlu0 %2856
        %2862 = vrot.lane.b32.xlu0 %v432, 3
        %v2863 = vpop.permute.xlu0 %2862
        %2864 = vrot.lane.b32.xlu0 %v433, 3
        %v2865 = vpop.permute.xlu0 %2864
        %2866 = vrot.lane.b32.xlu0 %v434, 3
        %v2867 = vpop.permute.xlu0 %2866
        %2868 = vrot.lane.b32.xlu0 %v435, 3
        %v2869 = vpop.permute.xlu0 %2868
        %2874 = vrot.lane.b32.xlu0 %v2725, 4
        %v2875 = vpop.permute.xlu0 %2874
        %2876 = vrot.lane.b32.xlu0 %v2727, 4
        %v2877 = vpop.permute.xlu0 %2876
        %2878 = vrot.lane.b32.xlu0 %v2729, 4
        %v2879 = vpop.permute.xlu0 %2878
        %2880 = vrot.lane.b32.xlu0 %v2728, 4
        %v2881 = vpop.permute.xlu0 %2880
        %2886 = vrot.lane.b32.xlu0 %v2744, 5
        %v2887 = vpop.permute.xlu0 %2886
        %2888 = vrot.lane.b32.xlu0 %v2746, 5
        %v2889 = vpop.permute.xlu0 %2888
        %2890 = vrot.lane.b32.xlu0 %v2748, 5
        %v2891 = vpop.permute.xlu0 %2890
        %2892 = vrot.lane.b32.xlu0 %v2747, 5
        %v2893 = vpop.permute.xlu0 %2892
        %2902 = vrot.lane.b32.xlu0 %v436, 6
        %v2903 = vpop.permute.xlu0 %2902
        %2904 = vrot.lane.b32.xlu0 %v437, 6
        %v2905 = vpop.permute.xlu0 %2904
        %2906 = vrot.lane.b32.xlu0 %v438, 6
        %v2907 = vpop.permute.xlu0 %2906
        %2908 = vrot.lane.b32.xlu0 %v439, 6
        %v2909 = vpop.permute.xlu0 %2908
        %v2914 = vrot.slane %v436, 1
        %v2915 = vrot.slane %v437, 1
        %v2916 = vsel %vm687, %v2914, %v2915
        %v2917 = vrot.slane %v438, 1
        %v2918 = vsel %vm687, %v2915, %v2917
        %v2919 = vrot.slane %v439, 1
        %v2920 = vsel %vm687, %v2917, %v2919
        %2921 = vrot.lane.b32.xlu0 %v2916, 7
        %v2922 = vpop.permute.xlu0 %2921
        %2923 = vrot.lane.b32.xlu0 %v2918, 7
        %v2924 = vpop.permute.xlu0 %2923
        %2925 = vrot.lane.b32.xlu0 %v2920, 7
        %v2926 = vpop.permute.xlu0 %2925
        %2927 = vrot.lane.b32.xlu0 %v2919, 7
        %v2928 = vpop.permute.xlu0 %2927
        %v2933 = vrot.slane %v436, 2
        %v2934 = vrot.slane %v437, 2
        %v2935 = vsel %vm707, %v2933, %v2934
        %v2936 = vrot.slane %v438, 2
        %v2937 = vsel %vm707, %v2934, %v2936
        %v2938 = vrot.slane %v439, 2
        %v2939 = vsel %vm707, %v2936, %v2938
        %2940 = vrot.lane.b32.xlu0 %v2935, 8
        %v2941 = vpop.permute.xlu0 %2940
        %2942 = vrot.lane.b32.xlu0 %v2937, 8
        %v2943 = vpop.permute.xlu0 %2942
        %2944 = vrot.lane.b32.xlu0 %v2939, 8
        %v2945 = vpop.permute.xlu0 %2944
        %2946 = vrot.lane.b32.xlu0 %v2938, 8
        %v2947 = vpop.permute.xlu0 %2946
        %v2952 = vsel %vm835, %v428, %v2839
        %v2953 = vsel %vm835, %v429, %v2841
        %v2954 = vsel %vm835, %v430, %v2843
        %v2955 = vsel %vm835, %v431, %v2845
        %v2956 = vsel %vm840, %v2952, %v2851
        %v2957 = vsel %vm840, %v2953, %v2853
        %v2958 = vsel %vm840, %v2954, %v2855
        %v2959 = vsel %vm840, %v2955, %v2857
        %v2960 = vsel %vm845, %v2956, %v2863
        %v2961 = vsel %vm845, %v2957, %v2865
        %v2962 = vsel %vm845, %v2958, %v2867
        %v2963 = vsel %vm845, %v2959, %v2869
        %v2964 = vsel %vm850, %v2960, %v2875
        %v2965 = vsel %vm850, %v2961, %v2877
        %v2966 = vsel %vm850, %v2962, %v2879
        %v2967 = vsel %vm850, %v2963, %v2881
        %v2968 = vsel %vm855, %v2964, %v2887
        %v2969 = vsel %vm855, %v2965, %v2889
        %v2970 = vsel %vm855, %v2966, %v2891
        %v2971 = vsel %vm855, %v2967, %v2893
        %v2972 = vsel %vm860, %v2968, %v2903
        %v2973 = vsel %vm860, %v2969, %v2905
        %v2974 = vsel %vm860, %v2970, %v2907
        %v2975 = vsel %vm860, %v2971, %v2909
        %v2976 = vsel %vm865, %v2972, %v2922
        %v2977 = vsel %vm865, %v2973, %v2924
        %v2978 = vsel %vm865, %v2974, %v2926
        %v2979 = vsel %vm865, %v2975, %v2928
        %v2980 = vsel %vm870, %v2976, %v2941
        %v2981 = vsel %vm870, %v2977, %v2943
        %v2982 = vsel %vm870, %v2978, %v2945
        %v2983 = vsel %vm870, %v2979, %v2947
        %v2985 = vsel %vm878, %v2980, 0
        %v2988 = vsel %vm878, %v2981, 0
        %v2991 = vsel %vm878, %v2982, 0
        %v2994 = vsel %vm878, %v2983, 0
        %2996 = vmatpush.msra.mxu0 0.0
        %2997 = vmatpush.msra.mxu0 0.0
        %2998 = vmatpush.msra.mxu0 0.0
        %2999 = vmatpush.msra.mxu0 0.0
        %3000 = vmatpush.msra.mxu0 0.0
        %3001 = vmatpush.msra.mxu0 0.0
        %3002 = vmatpush.msra.mxu0 0.0
        %3003 = vmatpush.msra.mxu0 0.0
        %3004 = vmatpush.msra.mxu0 0.0
        %3005 = vmatpush.msra.mxu0 0.0
        %3006 = vmatpush.msra.mxu0 0.0
        %3007 = vmatpush.msra.mxu0 0.0
        %3008 = vmatpush.msra.mxu0 0.0
        %3009 = vmatpush.msra.mxu0 0.0
        %3010 = vmatpush.msra.mxu0 %v893
        %3011 = vmatpush.msra.mxu0 %v488
        %3012 = vmatmul.f32.gmra.mxu0 %v2985
        %v3013 = vpop.f32.mrf.mxu0
        %v3014 = vadd.f32 %v876, %v3013
        %3015 = vmatmul.f32.gmra.mxu0 %v2988
        %v3016 = vpop.f32.mrf.mxu0
        %v3017 = vadd.f32 %v876, %v3016
        %3018 = vmatmul.f32.gmra.mxu0 %v2991
        %v3019 = vpop.f32.mrf.mxu0
        %v3020 = vadd.f32 %v876, %v3019
        %3021 = vmatmul.f32.gmra.mxu0 %v2994
        %v3022 = vpop.f32.mrf.mxu0
        %v3023 = vadd.f32 %v876, %v3022
        %3024 = vdwg.mxu0
        %v3025 = vmax.f32 %v3014, 0.0
        %v3026 = vmax.f32 %v3017, 0.0
        %v3027 = vmax.f32 %v3020, 0.0
        %v3028 = vmax.f32 %v3023, 0.0
        %3029 = vrot.lane.b32.xlu0 %v2725, 1
        %v3030 = vpop.permute.xlu0 %3029
        %3031 = vrot.lane.b32.xlu0 %v2727, 1
        %v3032 = vpop.permute.xlu0 %3031
        %3033 = vrot.lane.b32.xlu0 %v2729, 1
        %v3034 = vpop.permute.xlu0 %3033
        %3035 = vrot.lane.b32.xlu0 %v2728, 1
        %v3036 = vpop.permute.xlu0 %3035
        %3041 = vrot.lane.b32.xlu0 %v2744, 2
        %v3042 = vpop.permute.xlu0 %3041
        %3043 = vrot.lane.b32.xlu0 %v2746, 2
        %v3044 = vpop.permute.xlu0 %3043
        %3045 = vrot.lane.b32.xlu0 %v2748, 2
        %v3046 = vpop.permute.xlu0 %3045
        %3047 = vrot.lane.b32.xlu0 %v2747, 2
        %v3048 = vpop.permute.xlu0 %3047
        %3053 = vrot.lane.b32.xlu0 %v436, 3
        %v3054 = vpop.permute.xlu0 %3053
        %3055 = vrot.lane.b32.xlu0 %v437, 3
        %v3056 = vpop.permute.xlu0 %3055
        %3057 = vrot.lane.b32.xlu0 %v438, 3
        %v3058 = vpop.permute.xlu0 %3057
        %3059 = vrot.lane.b32.xlu0 %v439, 3
        %v3060 = vpop.permute.xlu0 %3059
        %3065 = vrot.lane.b32.xlu0 %v2916, 4
        %v3066 = vpop.permute.xlu0 %3065
        %3067 = vrot.lane.b32.xlu0 %v2918, 4
        %v3068 = vpop.permute.xlu0 %3067
        %3069 = vrot.lane.b32.xlu0 %v2920, 4
        %v3070 = vpop.permute.xlu0 %3069
        %3071 = vrot.lane.b32.xlu0 %v2919, 4
        %v3072 = vpop.permute.xlu0 %3071
        %3077 = vrot.lane.b32.xlu0 %v2935, 5
        %v3078 = vpop.permute.xlu0 %3077
        %3079 = vrot.lane.b32.xlu0 %v2937, 5
        %v3080 = vpop.permute.xlu0 %3079
        %3081 = vrot.lane.b32.xlu0 %v2939, 5
        %v3082 = vpop.permute.xlu0 %3081
        %3083 = vrot.lane.b32.xlu0 %v2938, 5
        %v3084 = vpop.permute.xlu0 %3083
        %3093 = vrot.lane.b32.xlu0 %v440, 6
        %v3094 = vpop.permute.xlu0 %3093
        %3095 = vrot.lane.b32.xlu0 %v441, 6
        %v3096 = vpop.permute.xlu0 %3095
        %3097 = vrot.lane.b32.xlu0 %v442, 6
        %v3098 = vpop.permute.xlu0 %3097
        %3099 = vrot.lane.b32.xlu0 %v443, 6
        %v3100 = vpop.permute.xlu0 %3099
        %v3105 = vrot.slane %v440, 1
        %v3106 = vrot.slane %v441, 1
        %v3107 = vsel %vm687, %v3105, %v3106
        %v3108 = vrot.slane %v442, 1
        %v3109 = vsel %vm687, %v3106, %v3108
        %v3110 = vrot.slane %v443, 1
        %v3111 = vsel %vm687, %v3108, %v3110
        %3112 = vrot.lane.b32.xlu0 %v3107, 7
        %v3113 = vpop.permute.xlu0 %3112
        %3114 = vrot.lane.b32.xlu0 %v3109, 7
        %v3115 = vpop.permute.xlu0 %3114
        %3116 = vrot.lane.b32.xlu0 %v3111, 7
        %v3117 = vpop.permute.xlu0 %3116
        %3118 = vrot.lane.b32.xlu0 %v3110, 7
        %v3119 = vpop.permute.xlu0 %3118
        %v3124 = vrot.slane %v440, 2
        %v3125 = vrot.slane %v441, 2
        %v3126 = vsel %vm707, %v3124, %v3125
        %v3127 = vrot.slane %v442, 2
        %v3128 = vsel %vm707, %v3125, %v3127
        %v3129 = vrot.slane %v443, 2
        %v3130 = vsel %vm707, %v3127, %v3129
        %3131 = vrot.lane.b32.xlu0 %v3126, 8
        %v3132 = vpop.permute.xlu0 %3131
        %3133 = vrot.lane.b32.xlu0 %v3128, 8
        %v3134 = vpop.permute.xlu0 %3133
        %3135 = vrot.lane.b32.xlu0 %v3130, 8
        %v3136 = vpop.permute.xlu0 %3135
        %3137 = vrot.lane.b32.xlu0 %v3129, 8
        %v3138 = vpop.permute.xlu0 %3137
        %v3143 = vsel %vm835, %v432, %v3030
        %v3144 = vsel %vm835, %v433, %v3032
        %v3145 = vsel %vm835, %v434, %v3034
        %v3146 = vsel %vm835, %v435, %v3036
        %v3147 = vsel %vm840, %v3143, %v3042
        %v3148 = vsel %vm840, %v3144, %v3044
        %v3149 = vsel %vm840, %v3145, %v3046
        %v3150 = vsel %vm840, %v3146, %v3048
        %v3151 = vsel %vm845, %v3147, %v3054
        %v3152 = vsel %vm845, %v3148, %v3056
        %v3153 = vsel %vm845, %v3149, %v3058
        %v3154 = vsel %vm845, %v3150, %v3060
        %v3155 = vsel %vm850, %v3151, %v3066
        %v3156 = vsel %vm850, %v3152, %v3068
        %v3157 = vsel %vm850, %v3153, %v3070
        %v3158 = vsel %vm850, %v3154, %v3072
        %v3159 = vsel %vm855, %v3155, %v3078
        %v3160 = vsel %vm855, %v3156, %v3080
        %v3161 = vsel %vm855, %v3157, %v3082
        %v3162 = vsel %vm855, %v3158, %v3084
        %v3163 = vsel %vm860, %v3159, %v3094
        %v3164 = vsel %vm860, %v3160, %v3096
        %v3165 = vsel %vm860, %v3161, %v3098
        %v3166 = vsel %vm860, %v3162, %v3100
        %v3167 = vsel %vm865, %v3163, %v3113
        %v3168 = vsel %vm865, %v3164, %v3115
        %v3169 = vsel %vm865, %v3165, %v3117
        %v3170 = vsel %vm865, %v3166, %v3119
        %v3171 = vsel %vm870, %v3167, %v3132
        %v3172 = vsel %vm870, %v3168, %v3134
        %v3173 = vsel %vm870, %v3169, %v3136
        %v3174 = vsel %vm870, %v3170, %v3138
        %v3176 = vsel %vm878, %v3171, 0
        %v3179 = vsel %vm878, %v3172, 0
        %v3182 = vsel %vm878, %v3173, 0
        %v3185 = vsel %vm878, %v3174, 0
        %3187 = vmatpush.msra.mxu0 0.0
        %3188 = vmatpush.msra.mxu0 0.0
        %3189 = vmatpush.msra.mxu0 0.0
        %3190 = vmatpush.msra.mxu0 0.0
        %3191 = vmatpush.msra.mxu0 0.0
        %3192 = vmatpush.msra.mxu0 0.0
        %3193 = vmatpush.msra.mxu0 0.0
        %3194 = vmatpush.msra.mxu0 0.0
        %3195 = vmatpush.msra.mxu0 0.0
        %3196 = vmatpush.msra.mxu0 0.0
        %3197 = vmatpush.msra.mxu0 0.0
        %3198 = vmatpush.msra.mxu0 0.0
        %3199 = vmatpush.msra.mxu0 0.0
        %3200 = vmatpush.msra.mxu0 0.0
        %3201 = vmatpush.msra.mxu0 %v893
        %3202 = vmatpush.msra.mxu0 %v488
        %3203 = vmatmul.f32.gmra.mxu0 %v3176
        %v3204 = vpop.f32.mrf.mxu0
        %v3205 = vadd.f32 %v876, %v3204
        %3206 = vmatmul.f32.gmra.mxu0 %v3179
        %v3207 = vpop.f32.mrf.mxu0
        %v3208 = vadd.f32 %v876, %v3207
        %3209 = vmatmul.f32.gmra.mxu0 %v3182
        %v3210 = vpop.f32.mrf.mxu0
        %v3211 = vadd.f32 %v876, %v3210
        %3212 = vmatmul.f32.gmra.mxu0 %v3185
        %v3213 = vpop.f32.mrf.mxu0
        %v3214 = vadd.f32 %v876, %v3213
        %3215 = vdwg.mxu0
        %v3216 = vmax.f32 %v3205, 0.0
        %v3217 = vmax.f32 %v3208, 0.0
        %v3218 = vmax.f32 %v3211, 0.0
        %v3219 = vmax.f32 %v3214, 0.0
        %3220 = vrot.lane.b32.xlu0 %v2916, 1
        %v3221 = vpop.permute.xlu0 %3220
        %3222 = vrot.lane.b32.xlu0 %v2918, 1
        %v3223 = vpop.permute.xlu0 %3222
        %3224 = vrot.lane.b32.xlu0 %v2920, 1
        %v3225 = vpop.permute.xlu0 %3224
        %3226 = vrot.lane.b32.xlu0 %v2919, 1
        %v3227 = vpop.permute.xlu0 %3226
        %3232 = vrot.lane.b32.xlu0 %v2935, 2
        %v3233 = vpop.permute.xlu0 %3232
        %3234 = vrot.lane.b32.xlu0 %v2937, 2
        %v3235 = vpop.permute.xlu0 %3234
        %3236 = vrot.lane.b32.xlu0 %v2939, 2
        %v3237 = vpop.permute.xlu0 %3236
        %3238 = vrot.lane.b32.xlu0 %v2938, 2
        %v3239 = vpop.permute.xlu0 %3238
        %3244 = vrot.lane.b32.xlu0 %v440, 3
        %v3245 = vpop.permute.xlu0 %3244
        %3246 = vrot.lane.b32.xlu0 %v441, 3
        %v3247 = vpop.permute.xlu0 %3246
        %3248 = vrot.lane.b32.xlu0 %v442, 3
        %v3249 = vpop.permute.xlu0 %3248
        %3250 = vrot.lane.b32.xlu0 %v443, 3
        %v3251 = vpop.permute.xlu0 %3250
        %3256 = vrot.lane.b32.xlu0 %v3107, 4
        %v3257 = vpop.permute.xlu0 %3256
        %3258 = vrot.lane.b32.xlu0 %v3109, 4
        %v3259 = vpop.permute.xlu0 %3258
        %3260 = vrot.lane.b32.xlu0 %v3111, 4
        %v3261 = vpop.permute.xlu0 %3260
        %3262 = vrot.lane.b32.xlu0 %v3110, 4
        %v3263 = vpop.permute.xlu0 %3262
        %3268 = vrot.lane.b32.xlu0 %v3126, 5
        %v3269 = vpop.permute.xlu0 %3268
        %3270 = vrot.lane.b32.xlu0 %v3128, 5
        %v3271 = vpop.permute.xlu0 %3270
        %3272 = vrot.lane.b32.xlu0 %v3130, 5
        %v3273 = vpop.permute.xlu0 %3272
        %3274 = vrot.lane.b32.xlu0 %v3129, 5
        %v3275 = vpop.permute.xlu0 %3274
        %3284 = vrot.lane.b32.xlu0 %v444, 6
        %v3285 = vpop.permute.xlu0 %3284
        %3286 = vrot.lane.b32.xlu0 %v445, 6
        %v3287 = vpop.permute.xlu0 %3286
        %3288 = vrot.lane.b32.xlu0 %v446, 6
        %v3289 = vpop.permute.xlu0 %3288
        %3290 = vrot.lane.b32.xlu0 %v447, 6
        %v3291 = vpop.permute.xlu0 %3290
        %v3296 = vrot.slane %v444, 1
        %v3297 = vrot.slane %v445, 1
        %v3298 = vsel %vm687, %v3296, %v3297
        %v3299 = vrot.slane %v446, 1
        %v3300 = vsel %vm687, %v3297, %v3299
        %v3301 = vrot.slane %v447, 1
        %v3302 = vsel %vm687, %v3299, %v3301
        %3303 = vrot.lane.b32.xlu0 %v3298, 7
        %v3304 = vpop.permute.xlu0 %3303
        %3305 = vrot.lane.b32.xlu0 %v3300, 7
        %v3306 = vpop.permute.xlu0 %3305
        %3307 = vrot.lane.b32.xlu0 %v3302, 7
        %v3308 = vpop.permute.xlu0 %3307
        %3309 = vrot.lane.b32.xlu0 %v3301, 7
        %v3310 = vpop.permute.xlu0 %3309
        %v3315 = vrot.slane %v444, 2
        %v3316 = vrot.slane %v445, 2
        %v3317 = vsel %vm707, %v3315, %v3316
        %v3318 = vrot.slane %v446, 2
        %v3319 = vsel %vm707, %v3316, %v3318
        %v3320 = vrot.slane %v447, 2
        %v3321 = vsel %vm707, %v3318, %v3320
        %3322 = vrot.lane.b32.xlu0 %v3317, 8
        %v3323 = vpop.permute.xlu0 %3322
        %3324 = vrot.lane.b32.xlu0 %v3319, 8
        %v3325 = vpop.permute.xlu0 %3324
        %3326 = vrot.lane.b32.xlu0 %v3321, 8
        %v3327 = vpop.permute.xlu0 %3326
        %3328 = vrot.lane.b32.xlu0 %v3320, 8
        %v3329 = vpop.permute.xlu0 %3328
        %v3334 = vsel %vm835, %v436, %v3221
        %v3335 = vsel %vm835, %v437, %v3223
        %v3336 = vsel %vm835, %v438, %v3225
        %v3337 = vsel %vm835, %v439, %v3227
        %v3338 = vsel %vm840, %v3334, %v3233
        %v3339 = vsel %vm840, %v3335, %v3235
        %v3340 = vsel %vm840, %v3336, %v3237
        %v3341 = vsel %vm840, %v3337, %v3239
        %v3342 = vsel %vm845, %v3338, %v3245
        %v3343 = vsel %vm845, %v3339, %v3247
        %v3344 = vsel %vm845, %v3340, %v3249
        %v3345 = vsel %vm845, %v3341, %v3251
        %v3346 = vsel %vm850, %v3342, %v3257
        %v3347 = vsel %vm850, %v3343, %v3259
        %v3348 = vsel %vm850, %v3344, %v3261
        %v3349 = vsel %vm850, %v3345, %v3263
        %v3350 = vsel %vm855, %v3346, %v3269
        %v3351 = vsel %vm855, %v3347, %v3271
        %v3352 = vsel %vm855, %v3348, %v3273
        %v3353 = vsel %vm855, %v3349, %v3275
        %v3354 = vsel %vm860, %v3350, %v3285
        %v3355 = vsel %vm860, %v3351, %v3287
        %v3356 = vsel %vm860, %v3352, %v3289
        %v3357 = vsel %vm860, %v3353, %v3291
        %v3358 = vsel %vm865, %v3354, %v3304
        %v3359 = vsel %vm865, %v3355, %v3306
        %v3360 = vsel %vm865, %v3356, %v3308
        %v3361 = vsel %vm865, %v3357, %v3310
        %v3362 = vsel %vm870, %v3358, %v3323
        %v3363 = vsel %vm870, %v3359, %v3325
        %v3364 = vsel %vm870, %v3360, %v3327
        %v3365 = vsel %vm870, %v3361, %v3329
        %v3367 = vsel %vm878, %v3362, 0
        %v3370 = vsel %vm878, %v3363, 0
        %v3373 = vsel %vm878, %v3364, 0
        %v3376 = vsel %vm878, %v3365, 0
        %3378 = vmatpush.msra.mxu0 0.0
        %3379 = vmatpush.msra.mxu0 0.0
        %3380 = vmatpush.msra.mxu0 0.0
        %3381 = vmatpush.msra.mxu0 0.0
        %3382 = vmatpush.msra.mxu0 0.0
        %3383 = vmatpush.msra.mxu0 0.0
        %3384 = vmatpush.msra.mxu0 0.0
        %3385 = vmatpush.msra.mxu0 0.0
        %3386 = vmatpush.msra.mxu0 0.0
        %3387 = vmatpush.msra.mxu0 0.0
        %3388 = vmatpush.msra.mxu0 0.0
        %3389 = vmatpush.msra.mxu0 0.0
        %3390 = vmatpush.msra.mxu0 0.0
        %3391 = vmatpush.msra.mxu0 0.0
        %3392 = vmatpush.msra.mxu0 %v893
        %3393 = vmatpush.msra.mxu0 %v488
        %3394 = vmatmul.f32.gmra.mxu0 %v3367
        %v3395 = vpop.f32.mrf.mxu0
        %v3396 = vadd.f32 %v876, %v3395
        %3397 = vmatmul.f32.gmra.mxu0 %v3370
        %v3398 = vpop.f32.mrf.mxu0
        %v3399 = vadd.f32 %v876, %v3398
        %3400 = vmatmul.f32.gmra.mxu0 %v3373
        %v3401 = vpop.f32.mrf.mxu0
        %v3402 = vadd.f32 %v876, %v3401
        %3403 = vmatmul.f32.gmra.mxu0 %v3376
        %v3404 = vpop.f32.mrf.mxu0
        %v3405 = vadd.f32 %v876, %v3404
        %3406 = vdwg.mxu0
        %v3407 = vmax.f32 %v3396, 0.0
        %v3408 = vmax.f32 %v3399, 0.0
        %v3409 = vmax.f32 %v3402, 0.0
        %v3410 = vmax.f32 %v3405, 0.0
        %3411 = vrot.lane.b32.xlu0 %v3107, 1
        %v3412 = vpop.permute.xlu0 %3411
        %3413 = vrot.lane.b32.xlu0 %v3109, 1
        %v3414 = vpop.permute.xlu0 %3413
        %3415 = vrot.lane.b32.xlu0 %v3111, 1
        %v3416 = vpop.permute.xlu0 %3415
        %3417 = vrot.lane.b32.xlu0 %v3110, 1
        %v3418 = vpop.permute.xlu0 %3417
        %3423 = vrot.lane.b32.xlu0 %v3126, 2
        %v3424 = vpop.permute.xlu0 %3423
        %3425 = vrot.lane.b32.xlu0 %v3128, 2
        %v3426 = vpop.permute.xlu0 %3425
        %3427 = vrot.lane.b32.xlu0 %v3130, 2
        %v3428 = vpop.permute.xlu0 %3427
        %3429 = vrot.lane.b32.xlu0 %v3129, 2
        %v3430 = vpop.permute.xlu0 %3429
        %3435 = vrot.lane.b32.xlu0 %v444, 3
        %v3436 = vpop.permute.xlu0 %3435
        %3437 = vrot.lane.b32.xlu0 %v445, 3
        %v3438 = vpop.permute.xlu0 %3437
        %3439 = vrot.lane.b32.xlu0 %v446, 3
        %v3440 = vpop.permute.xlu0 %3439
        %3441 = vrot.lane.b32.xlu0 %v447, 3
        %v3442 = vpop.permute.xlu0 %3441
        %3447 = vrot.lane.b32.xlu0 %v3298, 4
        %v3448 = vpop.permute.xlu0 %3447
        %3449 = vrot.lane.b32.xlu0 %v3300, 4
        %v3450 = vpop.permute.xlu0 %3449
        %3451 = vrot.lane.b32.xlu0 %v3302, 4
        %v3452 = vpop.permute.xlu0 %3451
        %3453 = vrot.lane.b32.xlu0 %v3301, 4
        %v3454 = vpop.permute.xlu0 %3453
        %3459 = vrot.lane.b32.xlu0 %v3317, 5
        %v3460 = vpop.permute.xlu0 %3459
        %3461 = vrot.lane.b32.xlu0 %v3319, 5
        %v3462 = vpop.permute.xlu0 %3461
        %3463 = vrot.lane.b32.xlu0 %v3321, 5
        %v3464 = vpop.permute.xlu0 %3463
        %3465 = vrot.lane.b32.xlu0 %v3320, 5
        %v3466 = vpop.permute.xlu0 %3465
        %3475 = vrot.lane.b32.xlu0 %v448, 6
        %v3476 = vpop.permute.xlu0 %3475
        %3477 = vrot.lane.b32.xlu0 %v449, 6
        %v3478 = vpop.permute.xlu0 %3477
        %3479 = vrot.lane.b32.xlu0 %v450, 6
        %v3480 = vpop.permute.xlu0 %3479
        %3481 = vrot.lane.b32.xlu0 %v451, 6
        %v3482 = vpop.permute.xlu0 %3481
        %v3487 = vrot.slane %v448, 1
        %v3488 = vrot.slane %v449, 1
        %v3489 = vsel %vm687, %v3487, %v3488
        %v3490 = vrot.slane %v450, 1
        %v3491 = vsel %vm687, %v3488, %v3490
        %v3492 = vrot.slane %v451, 1
        %v3493 = vsel %vm687, %v3490, %v3492
        %3494 = vrot.lane.b32.xlu0 %v3489, 7
        %v3495 = vpop.permute.xlu0 %3494
        %3496 = vrot.lane.b32.xlu0 %v3491, 7
        %v3497 = vpop.permute.xlu0 %3496
        %3498 = vrot.lane.b32.xlu0 %v3493, 7
        %v3499 = vpop.permute.xlu0 %3498
        %3500 = vrot.lane.b32.xlu0 %v3492, 7
        %v3501 = vpop.permute.xlu0 %3500
        %v3506 = vrot.slane %v448, 2
        %v3507 = vrot.slane %v449, 2
        %v3508 = vsel %vm707, %v3506, %v3507
        %v3509 = vrot.slane %v450, 2
        %v3510 = vsel %vm707, %v3507, %v3509
        %v3511 = vrot.slane %v451, 2
        %v3512 = vsel %vm707, %v3509, %v3511
        %3513 = vrot.lane.b32.xlu0 %v3508, 8
        %v3514 = vpop.permute.xlu0 %3513
        %3515 = vrot.lane.b32.xlu0 %v3510, 8
        %v3516 = vpop.permute.xlu0 %3515
        %3517 = vrot.lane.b32.xlu0 %v3512, 8
        %v3518 = vpop.permute.xlu0 %3517
        %3519 = vrot.lane.b32.xlu0 %v3511, 8
        %v3520 = vpop.permute.xlu0 %3519
        %v3525 = vsel %vm835, %v440, %v3412
        %v3526 = vsel %vm835, %v441, %v3414
        %v3527 = vsel %vm835, %v442, %v3416
        %v3528 = vsel %vm835, %v443, %v3418
        %v3529 = vsel %vm840, %v3525, %v3424
        %v3530 = vsel %vm840, %v3526, %v3426
        %v3531 = vsel %vm840, %v3527, %v3428
        %v3532 = vsel %vm840, %v3528, %v3430
        %v3533 = vsel %vm845, %v3529, %v3436
        %v3534 = vsel %vm845, %v3530, %v3438
        %v3535 = vsel %vm845, %v3531, %v3440
        %v3536 = vsel %vm845, %v3532, %v3442
        %v3537 = vsel %vm850, %v3533, %v3448
        %v3538 = vsel %vm850, %v3534, %v3450
        %v3539 = vsel %vm850, %v3535, %v3452
        %v3540 = vsel %vm850, %v3536, %v3454
        %v3541 = vsel %vm855, %v3537, %v3460
        %v3542 = vsel %vm855, %v3538, %v3462
        %v3543 = vsel %vm855, %v3539, %v3464
        %v3544 = vsel %vm855, %v3540, %v3466
        %v3545 = vsel %vm860, %v3541, %v3476
        %v3546 = vsel %vm860, %v3542, %v3478
        %v3547 = vsel %vm860, %v3543, %v3480
        %v3548 = vsel %vm860, %v3544, %v3482
        %v3549 = vsel %vm865, %v3545, %v3495
        %v3550 = vsel %vm865, %v3546, %v3497
        %v3551 = vsel %vm865, %v3547, %v3499
        %v3552 = vsel %vm865, %v3548, %v3501
        %v3553 = vsel %vm870, %v3549, %v3514
        %v3554 = vsel %vm870, %v3550, %v3516
        %v3555 = vsel %vm870, %v3551, %v3518
        %v3556 = vsel %vm870, %v3552, %v3520
        %v3558 = vsel %vm878, %v3553, 0
        %v3561 = vsel %vm878, %v3554, 0
        %v3564 = vsel %vm878, %v3555, 0
        %v3567 = vsel %vm878, %v3556, 0
        %3569 = vmatpush.msra.mxu0 0.0
        %3570 = vmatpush.msra.mxu0 0.0
        %3571 = vmatpush.msra.mxu0 0.0
        %3572 = vmatpush.msra.mxu0 0.0
        %3573 = vmatpush.msra.mxu0 0.0
        %3574 = vmatpush.msra.mxu0 0.0
        %3575 = vmatpush.msra.mxu0 0.0
        %3576 = vmatpush.msra.mxu0 0.0
        %3577 = vmatpush.msra.mxu0 0.0
        %3578 = vmatpush.msra.mxu0 0.0
        %3579 = vmatpush.msra.mxu0 0.0
        %3580 = vmatpush.msra.mxu0 0.0
        %3581 = vmatpush.msra.mxu0 0.0
        %3582 = vmatpush.msra.mxu0 0.0
        %3583 = vmatpush.msra.mxu0 %v893
        %3584 = vmatpush.msra.mxu0 %v488
        %3585 = vmatmul.f32.gmra.mxu0 %v3558
        %v3586 = vpop.f32.mrf.mxu0
        %v3587 = vadd.f32 %v876, %v3586
        %3588 = vmatmul.f32.gmra.mxu0 %v3561
        %v3589 = vpop.f32.mrf.mxu0
        %v3590 = vadd.f32 %v876, %v3589
        %3591 = vmatmul.f32.gmra.mxu0 %v3564
        %v3592 = vpop.f32.mrf.mxu0
        %v3593 = vadd.f32 %v876, %v3592
        %3594 = vmatmul.f32.gmra.mxu0 %v3567
        %v3595 = vpop.f32.mrf.mxu0
        %v3596 = vadd.f32 %v876, %v3595
        %3597 = vdwg.mxu0
        %v3598 = vmax.f32 %v3587, 0.0
        %v3599 = vmax.f32 %v3590, 0.0
        %v3600 = vmax.f32 %v3593, 0.0
        %v3601 = vmax.f32 %v3596, 0.0
        %3602 = vrot.lane.b32.xlu0 %v3298, 1
        %v3603 = vpop.permute.xlu0 %3602
        %3604 = vrot.lane.b32.xlu0 %v3300, 1
        %v3605 = vpop.permute.xlu0 %3604
        %3606 = vrot.lane.b32.xlu0 %v3302, 1
        %v3607 = vpop.permute.xlu0 %3606
        %3608 = vrot.lane.b32.xlu0 %v3301, 1
        %v3609 = vpop.permute.xlu0 %3608
        %3614 = vrot.lane.b32.xlu0 %v3317, 2
        %v3615 = vpop.permute.xlu0 %3614
        %3616 = vrot.lane.b32.xlu0 %v3319, 2
        %v3617 = vpop.permute.xlu0 %3616
        %3618 = vrot.lane.b32.xlu0 %v3321, 2
        %v3619 = vpop.permute.xlu0 %3618
        %3620 = vrot.lane.b32.xlu0 %v3320, 2
        %v3621 = vpop.permute.xlu0 %3620
        %3626 = vrot.lane.b32.xlu0 %v448, 3
        %v3627 = vpop.permute.xlu0 %3626
        %3628 = vrot.lane.b32.xlu0 %v449, 3
        %v3629 = vpop.permute.xlu0 %3628
        %3630 = vrot.lane.b32.xlu0 %v450, 3
        %v3631 = vpop.permute.xlu0 %3630
        %3632 = vrot.lane.b32.xlu0 %v451, 3
        %v3633 = vpop.permute.xlu0 %3632
        %3638 = vrot.lane.b32.xlu0 %v3489, 4
        %v3639 = vpop.permute.xlu0 %3638
        %3640 = vrot.lane.b32.xlu0 %v3491, 4
        %v3641 = vpop.permute.xlu0 %3640
        %3642 = vrot.lane.b32.xlu0 %v3493, 4
        %v3643 = vpop.permute.xlu0 %3642
        %3644 = vrot.lane.b32.xlu0 %v3492, 4
        %v3645 = vpop.permute.xlu0 %3644
        %3650 = vrot.lane.b32.xlu0 %v3508, 5
        %v3651 = vpop.permute.xlu0 %3650
        %3652 = vrot.lane.b32.xlu0 %v3510, 5
        %v3653 = vpop.permute.xlu0 %3652
        %3654 = vrot.lane.b32.xlu0 %v3512, 5
        %v3655 = vpop.permute.xlu0 %3654
        %3656 = vrot.lane.b32.xlu0 %v3511, 5
        %v3657 = vpop.permute.xlu0 %3656
        %3666 = vrot.lane.b32.xlu0 %v452, 6
        %v3667 = vpop.permute.xlu0 %3666
        %3668 = vrot.lane.b32.xlu0 %v453, 6
        %v3669 = vpop.permute.xlu0 %3668
        %3670 = vrot.lane.b32.xlu0 %v454, 6
        %v3671 = vpop.permute.xlu0 %3670
        %3672 = vrot.lane.b32.xlu0 %v455, 6
        %v3673 = vpop.permute.xlu0 %3672
        %v3678 = vrot.slane %v452, 1
        %v3679 = vrot.slane %v453, 1
        %v3680 = vsel %vm687, %v3678, %v3679
        %v3681 = vrot.slane %v454, 1
        %v3682 = vsel %vm687, %v3679, %v3681
        %v3683 = vrot.slane %v455, 1
        %v3684 = vsel %vm687, %v3681, %v3683
        %3685 = vrot.lane.b32.xlu0 %v3680, 7
        %v3686 = vpop.permute.xlu0 %3685
        %3687 = vrot.lane.b32.xlu0 %v3682, 7
        %v3688 = vpop.permute.xlu0 %3687
        %3689 = vrot.lane.b32.xlu0 %v3684, 7
        %v3690 = vpop.permute.xlu0 %3689
        %3691 = vrot.lane.b32.xlu0 %v3683, 7
        %v3692 = vpop.permute.xlu0 %3691
        %v3697 = vrot.slane %v452, 2
        %v3698 = vrot.slane %v453, 2
        %v3699 = vsel %vm707, %v3697, %v3698
        %v3700 = vrot.slane %v454, 2
        %v3701 = vsel %vm707, %v3698, %v3700
        %v3702 = vrot.slane %v455, 2
        %v3703 = vsel %vm707, %v3700, %v3702
        %3704 = vrot.lane.b32.xlu0 %v3699, 8
        %v3705 = vpop.permute.xlu0 %3704
        %3706 = vrot.lane.b32.xlu0 %v3701, 8
        %v3707 = vpop.permute.xlu0 %3706
        %3708 = vrot.lane.b32.xlu0 %v3703, 8
        %v3709 = vpop.permute.xlu0 %3708
        %3710 = vrot.lane.b32.xlu0 %v3702, 8
        %v3711 = vpop.permute.xlu0 %3710
        %v3716 = vsel %vm835, %v444, %v3603
        %v3717 = vsel %vm835, %v445, %v3605
        %v3718 = vsel %vm835, %v446, %v3607
        %v3719 = vsel %vm835, %v447, %v3609
        %v3720 = vsel %vm840, %v3716, %v3615
        %v3721 = vsel %vm840, %v3717, %v3617
        %v3722 = vsel %vm840, %v3718, %v3619
        %v3723 = vsel %vm840, %v3719, %v3621
        %v3724 = vsel %vm845, %v3720, %v3627
        %v3725 = vsel %vm845, %v3721, %v3629
        %v3726 = vsel %vm845, %v3722, %v3631
        %v3727 = vsel %vm845, %v3723, %v3633
        %v3728 = vsel %vm850, %v3724, %v3639
        %v3729 = vsel %vm850, %v3725, %v3641
        %v3730 = vsel %vm850, %v3726, %v3643
        %v3731 = vsel %vm850, %v3727, %v3645
        %v3732 = vsel %vm855, %v3728, %v3651
        %v3733 = vsel %vm855, %v3729, %v3653
        %v3734 = vsel %vm855, %v3730, %v3655
        %v3735 = vsel %vm855, %v3731, %v3657
        %v3736 = vsel %vm860, %v3732, %v3667
        %v3737 = vsel %vm860, %v3733, %v3669
        %v3738 = vsel %vm860, %v3734, %v3671
        %v3739 = vsel %vm860, %v3735, %v3673
        %v3740 = vsel %vm865, %v3736, %v3686
        %v3741 = vsel %vm865, %v3737, %v3688
        %v3742 = vsel %vm865, %v3738, %v3690
        %v3743 = vsel %vm865, %v3739, %v3692
        %v3744 = vsel %vm870, %v3740, %v3705
        %v3745 = vsel %vm870, %v3741, %v3707
        %v3746 = vsel %vm870, %v3742, %v3709
        %v3747 = vsel %vm870, %v3743, %v3711
        %v3749 = vsel %vm878, %v3744, 0
        %v3752 = vsel %vm878, %v3745, 0
        %v3755 = vsel %vm878, %v3746, 0
        %v3758 = vsel %vm878, %v3747, 0
        %3760 = vmatpush.msra.mxu0 0.0
        %3761 = vmatpush.msra.mxu0 0.0
        %3762 = vmatpush.msra.mxu0 0.0
        %3763 = vmatpush.msra.mxu0 0.0
        %3764 = vmatpush.msra.mxu0 0.0
        %3765 = vmatpush.msra.mxu0 0.0
        %3766 = vmatpush.msra.mxu0 0.0
        %3767 = vmatpush.msra.mxu0 0.0
        %3768 = vmatpush.msra.mxu0 0.0
        %3769 = vmatpush.msra.mxu0 0.0
        %3770 = vmatpush.msra.mxu0 0.0
        %3771 = vmatpush.msra.mxu0 0.0
        %3772 = vmatpush.msra.mxu0 0.0
        %3773 = vmatpush.msra.mxu0 0.0
        %3774 = vmatpush.msra.mxu0 %v893
        %3775 = vmatpush.msra.mxu0 %v488
        %3776 = vmatmul.f32.gmra.mxu0 %v3749
        %v3777 = vpop.f32.mrf.mxu0
        %v3778 = vadd.f32 %v876, %v3777
        %3779 = vmatmul.f32.gmra.mxu0 %v3752
        %v3780 = vpop.f32.mrf.mxu0
        %v3781 = vadd.f32 %v876, %v3780
        %3782 = vmatmul.f32.gmra.mxu0 %v3755
        %v3783 = vpop.f32.mrf.mxu0
        %v3784 = vadd.f32 %v876, %v3783
        %3785 = vmatmul.f32.gmra.mxu0 %v3758
        %v3786 = vpop.f32.mrf.mxu0
        %v3787 = vadd.f32 %v876, %v3786
        %3788 = vdwg.mxu0
        %v3789 = vmax.f32 %v3778, 0.0
        %v3790 = vmax.f32 %v3781, 0.0
        %v3791 = vmax.f32 %v3784, 0.0
        %v3792 = vmax.f32 %v3787, 0.0
        %3793 = vrot.lane.b32.xlu0 %v3489, 1
        %v3794 = vpop.permute.xlu0 %3793
        %3795 = vrot.lane.b32.xlu0 %v3491, 1
        %v3796 = vpop.permute.xlu0 %3795
        %3797 = vrot.lane.b32.xlu0 %v3493, 1
        %v3798 = vpop.permute.xlu0 %3797
        %3799 = vrot.lane.b32.xlu0 %v3492, 1
        %v3800 = vpop.permute.xlu0 %3799
        %3805 = vrot.lane.b32.xlu0 %v3508, 2
        %v3806 = vpop.permute.xlu0 %3805
        %3807 = vrot.lane.b32.xlu0 %v3510, 2
        %v3808 = vpop.permute.xlu0 %3807
        %3809 = vrot.lane.b32.xlu0 %v3512, 2
        %v3810 = vpop.permute.xlu0 %3809
        %3811 = vrot.lane.b32.xlu0 %v3511, 2
        %v3812 = vpop.permute.xlu0 %3811
        %3817 = vrot.lane.b32.xlu0 %v452, 3
        %v3818 = vpop.permute.xlu0 %3817
        %3819 = vrot.lane.b32.xlu0 %v453, 3
        %v3820 = vpop.permute.xlu0 %3819
        %3821 = vrot.lane.b32.xlu0 %v454, 3
        %v3822 = vpop.permute.xlu0 %3821
        %3823 = vrot.lane.b32.xlu0 %v455, 3
        %v3824 = vpop.permute.xlu0 %3823
        %3829 = vrot.lane.b32.xlu0 %v3680, 4
        %v3830 = vpop.permute.xlu0 %3829
        %3831 = vrot.lane.b32.xlu0 %v3682, 4
        %v3832 = vpop.permute.xlu0 %3831
        %3833 = vrot.lane.b32.xlu0 %v3684, 4
        %v3834 = vpop.permute.xlu0 %3833
        %3835 = vrot.lane.b32.xlu0 %v3683, 4
        %v3836 = vpop.permute.xlu0 %3835
        %3841 = vrot.lane.b32.xlu0 %v3699, 5
        %v3842 = vpop.permute.xlu0 %3841
        %3843 = vrot.lane.b32.xlu0 %v3701, 5
        %v3844 = vpop.permute.xlu0 %3843
        %3845 = vrot.lane.b32.xlu0 %v3703, 5
        %v3846 = vpop.permute.xlu0 %3845
        %3847 = vrot.lane.b32.xlu0 %v3702, 5
        %v3848 = vpop.permute.xlu0 %3847
        %3857 = vrot.lane.b32.xlu0 %v456, 6
        %v3858 = vpop.permute.xlu0 %3857
        %3859 = vrot.lane.b32.xlu0 %v457, 6
        %v3860 = vpop.permute.xlu0 %3859
        %3861 = vrot.lane.b32.xlu0 %v458, 6
        %v3862 = vpop.permute.xlu0 %3861
        %3863 = vrot.lane.b32.xlu0 %v459, 6
        %v3864 = vpop.permute.xlu0 %3863
        %v3869 = vrot.slane %v456, 1
        %v3870 = vrot.slane %v457, 1
        %v3871 = vsel %vm687, %v3869, %v3870
        %v3872 = vrot.slane %v458, 1
        %v3873 = vsel %vm687, %v3870, %v3872
        %v3874 = vrot.slane %v459, 1
        %v3875 = vsel %vm687, %v3872, %v3874
        %3876 = vrot.lane.b32.xlu0 %v3871, 7
        %v3877 = vpop.permute.xlu0 %3876
        %3878 = vrot.lane.b32.xlu0 %v3873, 7
        %v3879 = vpop.permute.xlu0 %3878
        %3880 = vrot.lane.b32.xlu0 %v3875, 7
        %v3881 = vpop.permute.xlu0 %3880
        %3882 = vrot.lane.b32.xlu0 %v3874, 7
        %v3883 = vpop.permute.xlu0 %3882
        %v3888 = vrot.slane %v456, 2
        %v3889 = vrot.slane %v457, 2
        %v3890 = vsel %vm707, %v3888, %v3889
        %v3891 = vrot.slane %v458, 2
        %v3892 = vsel %vm707, %v3889, %v3891
        %v3893 = vrot.slane %v459, 2
        %v3894 = vsel %vm707, %v3891, %v3893
        %3895 = vrot.lane.b32.xlu0 %v3890, 8
        %v3896 = vpop.permute.xlu0 %3895
        %3897 = vrot.lane.b32.xlu0 %v3892, 8
        %v3898 = vpop.permute.xlu0 %3897
        %3899 = vrot.lane.b32.xlu0 %v3894, 8
        %v3900 = vpop.permute.xlu0 %3899
        %3901 = vrot.lane.b32.xlu0 %v3893, 8
        %v3902 = vpop.permute.xlu0 %3901
        %v3907 = vsel %vm835, %v448, %v3794
        %v3908 = vsel %vm835, %v449, %v3796
        %v3909 = vsel %vm835, %v450, %v3798
        %v3910 = vsel %vm835, %v451, %v3800
        %v3911 = vsel %vm840, %v3907, %v3806
        %v3912 = vsel %vm840, %v3908, %v3808
        %v3913 = vsel %vm840, %v3909, %v3810
        %v3914 = vsel %vm840, %v3910, %v3812
        %v3915 = vsel %vm845, %v3911, %v3818
        %v3916 = vsel %vm845, %v3912, %v3820
        %v3917 = vsel %vm845, %v3913, %v3822
        %v3918 = vsel %vm845, %v3914, %v3824
        %v3919 = vsel %vm850, %v3915, %v3830
        %v3920 = vsel %vm850, %v3916, %v3832
        %v3921 = vsel %vm850, %v3917, %v3834
        %v3922 = vsel %vm850, %v3918, %v3836
        %v3923 = vsel %vm855, %v3919, %v3842
        %v3924 = vsel %vm855, %v3920, %v3844
        %v3925 = vsel %vm855, %v3921, %v3846
        %v3926 = vsel %vm855, %v3922, %v3848
        %v3927 = vsel %vm860, %v3923, %v3858
        %v3928 = vsel %vm860, %v3924, %v3860
        %v3929 = vsel %vm860, %v3925, %v3862
        %v3930 = vsel %vm860, %v3926, %v3864
        %v3931 = vsel %vm865, %v3927, %v3877
        %v3932 = vsel %vm865, %v3928, %v3879
        %v3933 = vsel %vm865, %v3929, %v3881
        %v3934 = vsel %vm865, %v3930, %v3883
        %v3935 = vsel %vm870, %v3931, %v3896
        %v3936 = vsel %vm870, %v3932, %v3898
        %v3937 = vsel %vm870, %v3933, %v3900
        %v3938 = vsel %vm870, %v3934, %v3902
        %v3940 = vsel %vm878, %v3935, 0
        %v3943 = vsel %vm878, %v3936, 0
        %v3946 = vsel %vm878, %v3937, 0
        %v3949 = vsel %vm878, %v3938, 0
        %3951 = vmatpush.msra.mxu0 0.0
        %3952 = vmatpush.msra.mxu0 0.0
        %3953 = vmatpush.msra.mxu0 0.0
        %3954 = vmatpush.msra.mxu0 0.0
        %3955 = vmatpush.msra.mxu0 0.0
        %3956 = vmatpush.msra.mxu0 0.0
        %3957 = vmatpush.msra.mxu0 0.0
        %3958 = vmatpush.msra.mxu0 0.0
        %3959 = vmatpush.msra.mxu0 0.0
        %3960 = vmatpush.msra.mxu0 0.0
        %3961 = vmatpush.msra.mxu0 0.0
        %3962 = vmatpush.msra.mxu0 0.0
        %3963 = vmatpush.msra.mxu0 0.0
        %3964 = vmatpush.msra.mxu0 0.0
        %3965 = vmatpush.msra.mxu0 %v893
        %3966 = vmatpush.msra.mxu0 %v488
        %3967 = vmatmul.f32.gmra.mxu0 %v3940
        %v3968 = vpop.f32.mrf.mxu0
        %v3969 = vadd.f32 %v876, %v3968
        %3970 = vmatmul.f32.gmra.mxu0 %v3943
        %v3971 = vpop.f32.mrf.mxu0
        %v3972 = vadd.f32 %v876, %v3971
        %3973 = vmatmul.f32.gmra.mxu0 %v3946
        %v3974 = vpop.f32.mrf.mxu0
        %v3975 = vadd.f32 %v876, %v3974
        %3976 = vmatmul.f32.gmra.mxu0 %v3949
        %v3977 = vpop.f32.mrf.mxu0
        %v3978 = vadd.f32 %v876, %v3977
        %3979 = vdwg.mxu0
        %v3980 = vmax.f32 %v3969, 0.0
        %v3981 = vmax.f32 %v3972, 0.0
        %v3982 = vmax.f32 %v3975, 0.0
        %v3983 = vmax.f32 %v3978, 0.0
        %3984 = vrot.lane.b32.xlu0 %v3680, 1
        %v3985 = vpop.permute.xlu0 %3984
        %3986 = vrot.lane.b32.xlu0 %v3682, 1
        %v3987 = vpop.permute.xlu0 %3986
        %3988 = vrot.lane.b32.xlu0 %v3684, 1
        %v3989 = vpop.permute.xlu0 %3988
        %3990 = vrot.lane.b32.xlu0 %v3683, 1
        %v3991 = vpop.permute.xlu0 %3990
        %3996 = vrot.lane.b32.xlu0 %v3699, 2
        %v3997 = vpop.permute.xlu0 %3996
        %3998 = vrot.lane.b32.xlu0 %v3701, 2
        %v3999 = vpop.permute.xlu0 %3998
        %4000 = vrot.lane.b32.xlu0 %v3703, 2
        %v4001 = vpop.permute.xlu0 %4000
        %4002 = vrot.lane.b32.xlu0 %v3702, 2
        %v4003 = vpop.permute.xlu0 %4002
        %4008 = vrot.lane.b32.xlu0 %v456, 3
        %v4009 = vpop.permute.xlu0 %4008
        %4010 = vrot.lane.b32.xlu0 %v457, 3
        %v4011 = vpop.permute.xlu0 %4010
        %4012 = vrot.lane.b32.xlu0 %v458, 3
        %v4013 = vpop.permute.xlu0 %4012
        %4014 = vrot.lane.b32.xlu0 %v459, 3
        %v4015 = vpop.permute.xlu0 %4014
        %4020 = vrot.lane.b32.xlu0 %v3871, 4
        %v4021 = vpop.permute.xlu0 %4020
        %4022 = vrot.lane.b32.xlu0 %v3873, 4
        %v4023 = vpop.permute.xlu0 %4022
        %4024 = vrot.lane.b32.xlu0 %v3875, 4
        %v4025 = vpop.permute.xlu0 %4024
        %4026 = vrot.lane.b32.xlu0 %v3874, 4
        %v4027 = vpop.permute.xlu0 %4026
        %4032 = vrot.lane.b32.xlu0 %v3890, 5
        %v4033 = vpop.permute.xlu0 %4032
        %4034 = vrot.lane.b32.xlu0 %v3892, 5
        %v4035 = vpop.permute.xlu0 %4034
        %4036 = vrot.lane.b32.xlu0 %v3894, 5
        %v4037 = vpop.permute.xlu0 %4036
        %4038 = vrot.lane.b32.xlu0 %v3893, 5
        %v4039 = vpop.permute.xlu0 %4038
        %4048 = vrot.lane.b32.xlu0 %v460, 6
        %v4049 = vpop.permute.xlu0 %4048
        %4050 = vrot.lane.b32.xlu0 %v461, 6
        %v4051 = vpop.permute.xlu0 %4050
        %4052 = vrot.lane.b32.xlu0 %v462, 6
        %v4053 = vpop.permute.xlu0 %4052
        %4054 = vrot.lane.b32.xlu0 %v463, 6
        %v4055 = vpop.permute.xlu0 %4054
        %v4060 = vrot.slane %v460, 1
        %v4061 = vrot.slane %v461, 1
        %v4062 = vsel %vm687, %v4060, %v4061
        %v4063 = vrot.slane %v462, 1
        %v4064 = vsel %vm687, %v4061, %v4063
        %v4065 = vrot.slane %v463, 1
        %v4066 = vsel %vm687, %v4063, %v4065
        %4067 = vrot.lane.b32.xlu0 %v4062, 7
        %v4068 = vpop.permute.xlu0 %4067
        %4069 = vrot.lane.b32.xlu0 %v4064, 7
        %v4070 = vpop.permute.xlu0 %4069
        %4071 = vrot.lane.b32.xlu0 %v4066, 7
        %v4072 = vpop.permute.xlu0 %4071
        %4073 = vrot.lane.b32.xlu0 %v4065, 7
        %v4074 = vpop.permute.xlu0 %4073
        %v4079 = vrot.slane %v460, 2
        %v4080 = vrot.slane %v461, 2
        %v4081 = vsel %vm707, %v4079, %v4080
        %v4082 = vrot.slane %v462, 2
        %v4083 = vsel %vm707, %v4080, %v4082
        %v4084 = vrot.slane %v463, 2
        %v4085 = vsel %vm707, %v4082, %v4084
        %4086 = vrot.lane.b32.xlu0 %v4081, 8
        %v4087 = vpop.permute.xlu0 %4086
        %4088 = vrot.lane.b32.xlu0 %v4083, 8
        %v4089 = vpop.permute.xlu0 %4088
        %4090 = vrot.lane.b32.xlu0 %v4085, 8
        %v4091 = vpop.permute.xlu0 %4090
        %4092 = vrot.lane.b32.xlu0 %v4084, 8
        %v4093 = vpop.permute.xlu0 %4092
        %v4098 = vsel %vm835, %v452, %v3985
        %v4099 = vsel %vm835, %v453, %v3987
        %v4100 = vsel %vm835, %v454, %v3989
        %v4101 = vsel %vm835, %v455, %v3991
        %v4102 = vsel %vm840, %v4098, %v3997
        %v4103 = vsel %vm840, %v4099, %v3999
        %v4104 = vsel %vm840, %v4100, %v4001
        %v4105 = vsel %vm840, %v4101, %v4003
        %v4106 = vsel %vm845, %v4102, %v4009
        %v4107 = vsel %vm845, %v4103, %v4011
        %v4108 = vsel %vm845, %v4104, %v4013
        %v4109 = vsel %vm845, %v4105, %v4015
        %v4110 = vsel %vm850, %v4106, %v4021
        %v4111 = vsel %vm850, %v4107, %v4023
        %v4112 = vsel %vm850, %v4108, %v4025
        %v4113 = vsel %vm850, %v4109, %v4027
        %v4114 = vsel %vm855, %v4110, %v4033
        %v4115 = vsel %vm855, %v4111, %v4035
        %v4116 = vsel %vm855, %v4112, %v4037
        %v4117 = vsel %vm855, %v4113, %v4039
        %v4118 = vsel %vm860, %v4114, %v4049
        %v4119 = vsel %vm860, %v4115, %v4051
        %v4120 = vsel %vm860, %v4116, %v4053
        %v4121 = vsel %vm860, %v4117, %v4055
        %v4122 = vsel %vm865, %v4118, %v4068
        %v4123 = vsel %vm865, %v4119, %v4070
        %v4124 = vsel %vm865, %v4120, %v4072
        %v4125 = vsel %vm865, %v4121, %v4074
        %v4126 = vsel %vm870, %v4122, %v4087
        %v4127 = vsel %vm870, %v4123, %v4089
        %v4128 = vsel %vm870, %v4124, %v4091
        %v4129 = vsel %vm870, %v4125, %v4093
        %v4131 = vsel %vm878, %v4126, 0
        %v4134 = vsel %vm878, %v4127, 0
        %v4137 = vsel %vm878, %v4128, 0
        %v4140 = vsel %vm878, %v4129, 0
        %4142 = vmatpush.msra.mxu0 0.0
        %4143 = vmatpush.msra.mxu0 0.0
        %4144 = vmatpush.msra.mxu0 0.0
        %4145 = vmatpush.msra.mxu0 0.0
        %4146 = vmatpush.msra.mxu0 0.0
        %4147 = vmatpush.msra.mxu0 0.0
        %4148 = vmatpush.msra.mxu0 0.0
        %4149 = vmatpush.msra.mxu0 0.0
        %4150 = vmatpush.msra.mxu0 0.0
        %4151 = vmatpush.msra.mxu0 0.0
        %4152 = vmatpush.msra.mxu0 0.0
        %4153 = vmatpush.msra.mxu0 0.0
        %4154 = vmatpush.msra.mxu0 0.0
        %4155 = vmatpush.msra.mxu0 0.0
        %4156 = vmatpush.msra.mxu0 %v893
        %4157 = vmatpush.msra.mxu0 %v488
        %4158 = vmatmul.f32.gmra.mxu0 %v4131
        %v4159 = vpop.f32.mrf.mxu0
        %v4160 = vadd.f32 %v876, %v4159
        %4161 = vmatmul.f32.gmra.mxu0 %v4134
        %v4162 = vpop.f32.mrf.mxu0
        %v4163 = vadd.f32 %v876, %v4162
        %4164 = vmatmul.f32.gmra.mxu0 %v4137
        %v4165 = vpop.f32.mrf.mxu0
        %v4166 = vadd.f32 %v876, %v4165
        %4167 = vmatmul.f32.gmra.mxu0 %v4140
        %v4168 = vpop.f32.mrf.mxu0
        %v4169 = vadd.f32 %v876, %v4168
        %4170 = vdwg.mxu0
        %v4171 = vmax.f32 %v4160, 0.0
        %v4172 = vmax.f32 %v4163, 0.0
        %v4173 = vmax.f32 %v4166, 0.0
        %v4174 = vmax.f32 %v4169, 0.0
        %4175 = vrot.lane.b32.xlu0 %v3871, 1
        %v4176 = vpop.permute.xlu0 %4175
        %4177 = vrot.lane.b32.xlu0 %v3873, 1
        %v4178 = vpop.permute.xlu0 %4177
        %4179 = vrot.lane.b32.xlu0 %v3875, 1
        %v4180 = vpop.permute.xlu0 %4179
        %4181 = vrot.lane.b32.xlu0 %v3874, 1
        %v4182 = vpop.permute.xlu0 %4181
        %4187 = vrot.lane.b32.xlu0 %v3890, 2
        %v4188 = vpop.permute.xlu0 %4187
        %4189 = vrot.lane.b32.xlu0 %v3892, 2
        %v4190 = vpop.permute.xlu0 %4189
        %4191 = vrot.lane.b32.xlu0 %v3894, 2
        %v4192 = vpop.permute.xlu0 %4191
        %4193 = vrot.lane.b32.xlu0 %v3893, 2
        %v4194 = vpop.permute.xlu0 %4193
        %4199 = vrot.lane.b32.xlu0 %v460, 3
        %v4200 = vpop.permute.xlu0 %4199
        %4201 = vrot.lane.b32.xlu0 %v461, 3
        %v4202 = vpop.permute.xlu0 %4201
        %4203 = vrot.lane.b32.xlu0 %v462, 3
        %v4204 = vpop.permute.xlu0 %4203
        %4205 = vrot.lane.b32.xlu0 %v463, 3
        %v4206 = vpop.permute.xlu0 %4205
        %4211 = vrot.lane.b32.xlu0 %v4062, 4
        %v4212 = vpop.permute.xlu0 %4211
        %4213 = vrot.lane.b32.xlu0 %v4064, 4
        %v4214 = vpop.permute.xlu0 %4213
        %4215 = vrot.lane.b32.xlu0 %v4066, 4
        %v4216 = vpop.permute.xlu0 %4215
        %4217 = vrot.lane.b32.xlu0 %v4065, 4
        %v4218 = vpop.permute.xlu0 %4217
        %4223 = vrot.lane.b32.xlu0 %v4081, 5
        %v4224 = vpop.permute.xlu0 %4223
        %4225 = vrot.lane.b32.xlu0 %v4083, 5
        %v4226 = vpop.permute.xlu0 %4225
        %4227 = vrot.lane.b32.xlu0 %v4085, 5
        %v4228 = vpop.permute.xlu0 %4227
        %4229 = vrot.lane.b32.xlu0 %v4084, 5
        %v4230 = vpop.permute.xlu0 %4229
        %4239 = vrot.lane.b32.xlu0 %v464, 6
        %v4240 = vpop.permute.xlu0 %4239
        %4241 = vrot.lane.b32.xlu0 %v465, 6
        %v4242 = vpop.permute.xlu0 %4241
        %4243 = vrot.lane.b32.xlu0 %v466, 6
        %v4244 = vpop.permute.xlu0 %4243
        %4245 = vrot.lane.b32.xlu0 %v467, 6
        %v4246 = vpop.permute.xlu0 %4245
        %v4251 = vrot.slane %v464, 1
        %v4252 = vrot.slane %v465, 1
        %v4253 = vsel %vm687, %v4251, %v4252
        %v4254 = vrot.slane %v466, 1
        %v4255 = vsel %vm687, %v4252, %v4254
        %v4256 = vrot.slane %v467, 1
        %v4257 = vsel %vm687, %v4254, %v4256
        %4258 = vrot.lane.b32.xlu0 %v4253, 7
        %v4259 = vpop.permute.xlu0 %4258
        %4260 = vrot.lane.b32.xlu0 %v4255, 7
        %v4261 = vpop.permute.xlu0 %4260
        %4262 = vrot.lane.b32.xlu0 %v4257, 7
        %v4263 = vpop.permute.xlu0 %4262
        %4264 = vrot.lane.b32.xlu0 %v4256, 7
        %v4265 = vpop.permute.xlu0 %4264
        %v4270 = vrot.slane %v464, 2
        %v4271 = vrot.slane %v465, 2
        %v4272 = vsel %vm707, %v4270, %v4271
        %v4273 = vrot.slane %v466, 2
        %v4274 = vsel %vm707, %v4271, %v4273
        %v4275 = vrot.slane %v467, 2
        %v4276 = vsel %vm707, %v4273, %v4275
        %4277 = vrot.lane.b32.xlu0 %v4272, 8
        %v4278 = vpop.permute.xlu0 %4277
        %4279 = vrot.lane.b32.xlu0 %v4274, 8
        %v4280 = vpop.permute.xlu0 %4279
        %4281 = vrot.lane.b32.xlu0 %v4276, 8
        %v4282 = vpop.permute.xlu0 %4281
        %4283 = vrot.lane.b32.xlu0 %v4275, 8
        %v4284 = vpop.permute.xlu0 %4283
        %v4289 = vsel %vm835, %v456, %v4176
        %v4290 = vsel %vm835, %v457, %v4178
        %v4291 = vsel %vm835, %v458, %v4180
        %v4292 = vsel %vm835, %v459, %v4182
        %v4293 = vsel %vm840, %v4289, %v4188
        %v4294 = vsel %vm840, %v4290, %v4190
        %v4295 = vsel %vm840, %v4291, %v4192
        %v4296 = vsel %vm840, %v4292, %v4194
        %v4297 = vsel %vm845, %v4293, %v4200
        %v4298 = vsel %vm845, %v4294, %v4202
        %v4299 = vsel %vm845, %v4295, %v4204
        %v4300 = vsel %vm845, %v4296, %v4206
        %v4301 = vsel %vm850, %v4297, %v4212
        %v4302 = vsel %vm850, %v4298, %v4214
        %v4303 = vsel %vm850, %v4299, %v4216
        %v4304 = vsel %vm850, %v4300, %v4218
        %v4305 = vsel %vm855, %v4301, %v4224
        %v4306 = vsel %vm855, %v4302, %v4226
        %v4307 = vsel %vm855, %v4303, %v4228
        %v4308 = vsel %vm855, %v4304, %v4230
        %v4309 = vsel %vm860, %v4305, %v4240
        %v4310 = vsel %vm860, %v4306, %v4242
        %v4311 = vsel %vm860, %v4307, %v4244
        %v4312 = vsel %vm860, %v4308, %v4246
        %v4313 = vsel %vm865, %v4309, %v4259
        %v4314 = vsel %vm865, %v4310, %v4261
        %v4315 = vsel %vm865, %v4311, %v4263
        %v4316 = vsel %vm865, %v4312, %v4265
        %v4317 = vsel %vm870, %v4313, %v4278
        %v4318 = vsel %vm870, %v4314, %v4280
        %v4319 = vsel %vm870, %v4315, %v4282
        %v4320 = vsel %vm870, %v4316, %v4284
        %v4322 = vsel %vm878, %v4317, 0
        %v4325 = vsel %vm878, %v4318, 0
        %v4328 = vsel %vm878, %v4319, 0
        %v4331 = vsel %vm878, %v4320, 0
        %4333 = vmatpush.msra.mxu0 0.0
        %4334 = vmatpush.msra.mxu0 0.0
        %4335 = vmatpush.msra.mxu0 0.0
        %4336 = vmatpush.msra.mxu0 0.0
        %4337 = vmatpush.msra.mxu0 0.0
        %4338 = vmatpush.msra.mxu0 0.0
        %4339 = vmatpush.msra.mxu0 0.0
        %4340 = vmatpush.msra.mxu0 0.0
        %4341 = vmatpush.msra.mxu0 0.0
        %4342 = vmatpush.msra.mxu0 0.0
        %4343 = vmatpush.msra.mxu0 0.0
        %4344 = vmatpush.msra.mxu0 0.0
        %4345 = vmatpush.msra.mxu0 0.0
        %4346 = vmatpush.msra.mxu0 0.0
        %4347 = vmatpush.msra.mxu0 %v893
        %4348 = vmatpush.msra.mxu0 %v488
        %4349 = vmatmul.f32.gmra.mxu0 %v4322
        %v4350 = vpop.f32.mrf.mxu0
        %v4351 = vadd.f32 %v876, %v4350
        %4352 = vmatmul.f32.gmra.mxu0 %v4325
        %v4353 = vpop.f32.mrf.mxu0
        %v4354 = vadd.f32 %v876, %v4353
        %4355 = vmatmul.f32.gmra.mxu0 %v4328
        %v4356 = vpop.f32.mrf.mxu0
        %v4357 = vadd.f32 %v876, %v4356
        %4358 = vmatmul.f32.gmra.mxu0 %v4331
        %v4359 = vpop.f32.mrf.mxu0
        %v4360 = vadd.f32 %v876, %v4359
        %4361 = vdwg.mxu0
        %v4362 = vmax.f32 %v4351, 0.0
        %v4363 = vmax.f32 %v4354, 0.0
        %v4364 = vmax.f32 %v4357, 0.0
        %v4365 = vmax.f32 %v4360, 0.0
        %4366 = vrot.lane.b32.xlu0 %v4062, 1
        %v4367 = vpop.permute.xlu0 %4366
        %4368 = vrot.lane.b32.xlu0 %v4064, 1
        %v4369 = vpop.permute.xlu0 %4368
        %4370 = vrot.lane.b32.xlu0 %v4066, 1
        %v4371 = vpop.permute.xlu0 %4370
        %4372 = vrot.lane.b32.xlu0 %v4065, 1
        %v4373 = vpop.permute.xlu0 %4372
        %4378 = vrot.lane.b32.xlu0 %v4081, 2
        %v4379 = vpop.permute.xlu0 %4378
        %4380 = vrot.lane.b32.xlu0 %v4083, 2
        %v4381 = vpop.permute.xlu0 %4380
        %4382 = vrot.lane.b32.xlu0 %v4085, 2
        %v4383 = vpop.permute.xlu0 %4382
        %4384 = vrot.lane.b32.xlu0 %v4084, 2
        %v4385 = vpop.permute.xlu0 %4384
        %4390 = vrot.lane.b32.xlu0 %v464, 3
        %v4391 = vpop.permute.xlu0 %4390
        %4392 = vrot.lane.b32.xlu0 %v465, 3
        %v4393 = vpop.permute.xlu0 %4392
        %4394 = vrot.lane.b32.xlu0 %v466, 3
        %v4395 = vpop.permute.xlu0 %4394
        %4396 = vrot.lane.b32.xlu0 %v467, 3
        %v4397 = vpop.permute.xlu0 %4396
        %4402 = vrot.lane.b32.xlu0 %v4253, 4
        %v4403 = vpop.permute.xlu0 %4402
        %4404 = vrot.lane.b32.xlu0 %v4255, 4
        %v4405 = vpop.permute.xlu0 %4404
        %4406 = vrot.lane.b32.xlu0 %v4257, 4
        %v4407 = vpop.permute.xlu0 %4406
        %4408 = vrot.lane.b32.xlu0 %v4256, 4
        %v4409 = vpop.permute.xlu0 %4408
        %4414 = vrot.lane.b32.xlu0 %v4272, 5
        %v4415 = vpop.permute.xlu0 %4414
        %4416 = vrot.lane.b32.xlu0 %v4274, 5
        %v4417 = vpop.permute.xlu0 %4416
        %4418 = vrot.lane.b32.xlu0 %v4276, 5
        %v4419 = vpop.permute.xlu0 %4418
        %4420 = vrot.lane.b32.xlu0 %v4275, 5
        %v4421 = vpop.permute.xlu0 %4420
        %4430 = vrot.lane.b32.xlu0 %v468, 6
        %v4431 = vpop.permute.xlu0 %4430
        %4432 = vrot.lane.b32.xlu0 %v469, 6
        %v4433 = vpop.permute.xlu0 %4432
        %4434 = vrot.lane.b32.xlu0 %v470, 6
        %v4435 = vpop.permute.xlu0 %4434
        %4436 = vrot.lane.b32.xlu0 %v471, 6
        %v4437 = vpop.permute.xlu0 %4436
        %v4442 = vrot.slane %v468, 1
        %v4443 = vrot.slane %v469, 1
        %v4444 = vsel %vm687, %v4442, %v4443
        %v4445 = vrot.slane %v470, 1
        %v4446 = vsel %vm687, %v4443, %v4445
        %v4447 = vrot.slane %v471, 1
        %v4448 = vsel %vm687, %v4445, %v4447
        %4449 = vrot.lane.b32.xlu0 %v4444, 7
        %v4450 = vpop.permute.xlu0 %4449
        %4451 = vrot.lane.b32.xlu0 %v4446, 7
        %v4452 = vpop.permute.xlu0 %4451
        %4453 = vrot.lane.b32.xlu0 %v4448, 7
        %v4454 = vpop.permute.xlu0 %4453
        %4455 = vrot.lane.b32.xlu0 %v4447, 7
        %v4456 = vpop.permute.xlu0 %4455
        %v4461 = vrot.slane %v468, 2
        %v4462 = vrot.slane %v469, 2
        %v4463 = vsel %vm707, %v4461, %v4462
        %v4464 = vrot.slane %v470, 2
        %v4465 = vsel %vm707, %v4462, %v4464
        %v4466 = vrot.slane %v471, 2
        %v4467 = vsel %vm707, %v4464, %v4466
        %4468 = vrot.lane.b32.xlu0 %v4463, 8
        %v4469 = vpop.permute.xlu0 %4468
        %4470 = vrot.lane.b32.xlu0 %v4465, 8
        %v4471 = vpop.permute.xlu0 %4470
        %4472 = vrot.lane.b32.xlu0 %v4467, 8
        %v4473 = vpop.permute.xlu0 %4472
        %4474 = vrot.lane.b32.xlu0 %v4466, 8
        %v4475 = vpop.permute.xlu0 %4474
        %v4480 = vsel %vm835, %v460, %v4367
        %v4481 = vsel %vm835, %v461, %v4369
        %v4482 = vsel %vm835, %v462, %v4371
        %v4483 = vsel %vm835, %v463, %v4373
        %v4484 = vsel %vm840, %v4480, %v4379
        %v4485 = vsel %vm840, %v4481, %v4381
        %v4486 = vsel %vm840, %v4482, %v4383
        %v4487 = vsel %vm840, %v4483, %v4385
        %v4488 = vsel %vm845, %v4484, %v4391
        %v4489 = vsel %vm845, %v4485, %v4393
        %v4490 = vsel %vm845, %v4486, %v4395
        %v4491 = vsel %vm845, %v4487, %v4397
        %v4492 = vsel %vm850, %v4488, %v4403
        %v4493 = vsel %vm850, %v4489, %v4405
        %v4494 = vsel %vm850, %v4490, %v4407
        %v4495 = vsel %vm850, %v4491, %v4409
        %v4496 = vsel %vm855, %v4492, %v4415
        %v4497 = vsel %vm855, %v4493, %v4417
        %v4498 = vsel %vm855, %v4494, %v4419
        %v4499 = vsel %vm855, %v4495, %v4421
        %v4500 = vsel %vm860, %v4496, %v4431
        %v4501 = vsel %vm860, %v4497, %v4433
        %v4502 = vsel %vm860, %v4498, %v4435
        %v4503 = vsel %vm860, %v4499, %v4437
        %v4504 = vsel %vm865, %v4500, %v4450
        %v4505 = vsel %vm865, %v4501, %v4452
        %v4506 = vsel %vm865, %v4502, %v4454
        %v4507 = vsel %vm865, %v4503, %v4456
        %v4508 = vsel %vm870, %v4504, %v4469
        %v4509 = vsel %vm870, %v4505, %v4471
        %v4510 = vsel %vm870, %v4506, %v4473
        %v4511 = vsel %vm870, %v4507, %v4475
        %v4513 = vsel %vm878, %v4508, 0
        %v4516 = vsel %vm878, %v4509, 0
        %v4519 = vsel %vm878, %v4510, 0
        %v4522 = vsel %vm878, %v4511, 0
        %4524 = vmatpush.msra.mxu0 0.0
        %4525 = vmatpush.msra.mxu0 0.0
        %4526 = vmatpush.msra.mxu0 0.0
        %4527 = vmatpush.msra.mxu0 0.0
        %4528 = vmatpush.msra.mxu0 0.0
        %4529 = vmatpush.msra.mxu0 0.0
        %4530 = vmatpush.msra.mxu0 0.0
        %4531 = vmatpush.msra.mxu0 0.0
        %4532 = vmatpush.msra.mxu0 0.0
        %4533 = vmatpush.msra.mxu0 0.0
        %4534 = vmatpush.msra.mxu0 0.0
        %4535 = vmatpush.msra.mxu0 0.0
        %4536 = vmatpush.msra.mxu0 0.0
        %4537 = vmatpush.msra.mxu0 0.0
        %4538 = vmatpush.msra.mxu0 %v893
        %4539 = vmatpush.msra.mxu0 %v488
        %4540 = vmatmul.f32.gmra.mxu0 %v4513
        %v4541 = vpop.f32.mrf.mxu0
        %v4542 = vadd.f32 %v876, %v4541
        %4543 = vmatmul.f32.gmra.mxu0 %v4516
        %v4544 = vpop.f32.mrf.mxu0
        %v4545 = vadd.f32 %v876, %v4544
        %4546 = vmatmul.f32.gmra.mxu0 %v4519
        %v4547 = vpop.f32.mrf.mxu0
        %v4548 = vadd.f32 %v876, %v4547
        %4549 = vmatmul.f32.gmra.mxu0 %v4522
        %v4550 = vpop.f32.mrf.mxu0
        %v4551 = vadd.f32 %v876, %v4550
        %4552 = vdwg.mxu0
        %v4553 = vmax.f32 %v4542, 0.0
        %v4554 = vmax.f32 %v4545, 0.0
        %v4555 = vmax.f32 %v4548, 0.0
        %v4556 = vmax.f32 %v4551, 0.0
        %4557 = vrot.lane.b32.xlu0 %v4253, 1
        %v4558 = vpop.permute.xlu0 %4557
        %4559 = vrot.lane.b32.xlu0 %v4255, 1
        %v4560 = vpop.permute.xlu0 %4559
        %4561 = vrot.lane.b32.xlu0 %v4257, 1
        %v4562 = vpop.permute.xlu0 %4561
        %4563 = vrot.lane.b32.xlu0 %v4256, 1
        %v4564 = vpop.permute.xlu0 %4563
        %4569 = vrot.lane.b32.xlu0 %v4272, 2
        %v4570 = vpop.permute.xlu0 %4569
        %4571 = vrot.lane.b32.xlu0 %v4274, 2
        %v4572 = vpop.permute.xlu0 %4571
        %4573 = vrot.lane.b32.xlu0 %v4276, 2
        %v4574 = vpop.permute.xlu0 %4573
        %4575 = vrot.lane.b32.xlu0 %v4275, 2
        %v4576 = vpop.permute.xlu0 %4575
        %4581 = vrot.lane.b32.xlu0 %v468, 3
        %v4582 = vpop.permute.xlu0 %4581
        %4583 = vrot.lane.b32.xlu0 %v469, 3
        %v4584 = vpop.permute.xlu0 %4583
        %4585 = vrot.lane.b32.xlu0 %v470, 3
        %v4586 = vpop.permute.xlu0 %4585
        %4587 = vrot.lane.b32.xlu0 %v471, 3
        %v4588 = vpop.permute.xlu0 %4587
        %4593 = vrot.lane.b32.xlu0 %v4444, 4
        %v4594 = vpop.permute.xlu0 %4593
        %4595 = vrot.lane.b32.xlu0 %v4446, 4
        %v4596 = vpop.permute.xlu0 %4595
        %4597 = vrot.lane.b32.xlu0 %v4448, 4
        %v4598 = vpop.permute.xlu0 %4597
        %4599 = vrot.lane.b32.xlu0 %v4447, 4
        %v4600 = vpop.permute.xlu0 %4599
        %4605 = vrot.lane.b32.xlu0 %v4463, 5
        %v4606 = vpop.permute.xlu0 %4605
        %4607 = vrot.lane.b32.xlu0 %v4465, 5
        %v4608 = vpop.permute.xlu0 %4607
        %4609 = vrot.lane.b32.xlu0 %v4467, 5
        %v4610 = vpop.permute.xlu0 %4609
        %4611 = vrot.lane.b32.xlu0 %v4466, 5
        %v4612 = vpop.permute.xlu0 %4611
        %4621 = vrot.lane.b32.xlu0 %v472, 6
        %v4622 = vpop.permute.xlu0 %4621
        %4623 = vrot.lane.b32.xlu0 %v473, 6
        %v4624 = vpop.permute.xlu0 %4623
        %4625 = vrot.lane.b32.xlu0 %v474, 6
        %v4626 = vpop.permute.xlu0 %4625
        %4627 = vrot.lane.b32.xlu0 %v475, 6
        %v4628 = vpop.permute.xlu0 %4627
        %v4633 = vrot.slane %v472, 1
        %v4634 = vrot.slane %v473, 1
        %v4635 = vsel %vm687, %v4633, %v4634
        %v4636 = vrot.slane %v474, 1
        %v4637 = vsel %vm687, %v4634, %v4636
        %v4638 = vrot.slane %v475, 1
        %v4639 = vsel %vm687, %v4636, %v4638
        %4640 = vrot.lane.b32.xlu0 %v4635, 7
        %v4641 = vpop.permute.xlu0 %4640
        %4642 = vrot.lane.b32.xlu0 %v4637, 7
        %v4643 = vpop.permute.xlu0 %4642
        %4644 = vrot.lane.b32.xlu0 %v4639, 7
        %v4645 = vpop.permute.xlu0 %4644
        %4646 = vrot.lane.b32.xlu0 %v4638, 7
        %v4647 = vpop.permute.xlu0 %4646
        %v4652 = vrot.slane %v472, 2
        %v4653 = vrot.slane %v473, 2
        %v4654 = vsel %vm707, %v4652, %v4653
        %v4655 = vrot.slane %v474, 2
        %v4656 = vsel %vm707, %v4653, %v4655
        %v4657 = vrot.slane %v475, 2
        %v4658 = vsel %vm707, %v4655, %v4657
        %4659 = vrot.lane.b32.xlu0 %v4654, 8
        %v4660 = vpop.permute.xlu0 %4659
        %4661 = vrot.lane.b32.xlu0 %v4656, 8
        %v4662 = vpop.permute.xlu0 %4661
        %4663 = vrot.lane.b32.xlu0 %v4658, 8
        %v4664 = vpop.permute.xlu0 %4663
        %4665 = vrot.lane.b32.xlu0 %v4657, 8
        %v4666 = vpop.permute.xlu0 %4665
        %v4671 = vsel %vm835, %v464, %v4558
        %v4672 = vsel %vm835, %v465, %v4560
        %v4673 = vsel %vm835, %v466, %v4562
        %v4674 = vsel %vm835, %v467, %v4564
        %v4675 = vsel %vm840, %v4671, %v4570
        %v4676 = vsel %vm840, %v4672, %v4572
        %v4677 = vsel %vm840, %v4673, %v4574
        %v4678 = vsel %vm840, %v4674, %v4576
        %v4679 = vsel %vm845, %v4675, %v4582
        %v4680 = vsel %vm845, %v4676, %v4584
        %v4681 = vsel %vm845, %v4677, %v4586
        %v4682 = vsel %vm845, %v4678, %v4588
        %v4683 = vsel %vm850, %v4679, %v4594
        %v4684 = vsel %vm850, %v4680, %v4596
        %v4685 = vsel %vm850, %v4681, %v4598
        %v4686 = vsel %vm850, %v4682, %v4600
        %v4687 = vsel %vm855, %v4683, %v4606
        %v4688 = vsel %vm855, %v4684, %v4608
        %v4689 = vsel %vm855, %v4685, %v4610
        %v4690 = vsel %vm855, %v4686, %v4612
        %v4691 = vsel %vm860, %v4687, %v4622
        %v4692 = vsel %vm860, %v4688, %v4624
        %v4693 = vsel %vm860, %v4689, %v4626
        %v4694 = vsel %vm860, %v4690, %v4628
        %v4695 = vsel %vm865, %v4691, %v4641
        %v4696 = vsel %vm865, %v4692, %v4643
        %v4697 = vsel %vm865, %v4693, %v4645
        %v4698 = vsel %vm865, %v4694, %v4647
        %v4699 = vsel %vm870, %v4695, %v4660
        %v4700 = vsel %vm870, %v4696, %v4662
        %v4701 = vsel %vm870, %v4697, %v4664
        %v4702 = vsel %vm870, %v4698, %v4666
        %v4704 = vsel %vm878, %v4699, 0
        %v4707 = vsel %vm878, %v4700, 0
        %v4710 = vsel %vm878, %v4701, 0
        %v4713 = vsel %vm878, %v4702, 0
        %4715 = vmatpush.msra.mxu0 0.0
        %4716 = vmatpush.msra.mxu0 0.0
        %4717 = vmatpush.msra.mxu0 0.0
        %4718 = vmatpush.msra.mxu0 0.0
        %4719 = vmatpush.msra.mxu0 0.0
        %4720 = vmatpush.msra.mxu0 0.0
        %4721 = vmatpush.msra.mxu0 0.0
        %4722 = vmatpush.msra.mxu0 0.0
        %4723 = vmatpush.msra.mxu0 0.0
        %4724 = vmatpush.msra.mxu0 0.0
        %4725 = vmatpush.msra.mxu0 0.0
        %4726 = vmatpush.msra.mxu0 0.0
        %4727 = vmatpush.msra.mxu0 0.0
        %4728 = vmatpush.msra.mxu0 0.0
        %4729 = vmatpush.msra.mxu0 %v893
        %4730 = vmatpush.msra.mxu0 %v488
        %4731 = vmatmul.f32.gmra.mxu0 %v4704
        %v4732 = vpop.f32.mrf.mxu0
        %v4733 = vadd.f32 %v876, %v4732
        %4734 = vmatmul.f32.gmra.mxu0 %v4707
        %v4735 = vpop.f32.mrf.mxu0
        %v4736 = vadd.f32 %v876, %v4735
        %4737 = vmatmul.f32.gmra.mxu0 %v4710
        %v4738 = vpop.f32.mrf.mxu0
        %v4739 = vadd.f32 %v876, %v4738
        %4740 = vmatmul.f32.gmra.mxu0 %v4713
        %v4741 = vpop.f32.mrf.mxu0
        %v4742 = vadd.f32 %v876, %v4741
        %4743 = vdwg.mxu0
        %v4744 = vmax.f32 %v4733, 0.0
        %v4745 = vmax.f32 %v4736, 0.0
        %v4746 = vmax.f32 %v4739, 0.0
        %v4747 = vmax.f32 %v4742, 0.0
        %4748 = vrot.lane.b32.xlu0 %v4444, 1
        %v4749 = vpop.permute.xlu0 %4748
        %4750 = vrot.lane.b32.xlu0 %v4446, 1
        %v4751 = vpop.permute.xlu0 %4750
        %4752 = vrot.lane.b32.xlu0 %v4448, 1
        %v4753 = vpop.permute.xlu0 %4752
        %4754 = vrot.lane.b32.xlu0 %v4447, 1
        %v4755 = vpop.permute.xlu0 %4754
        %4760 = vrot.lane.b32.xlu0 %v4463, 2
        %v4761 = vpop.permute.xlu0 %4760
        %4762 = vrot.lane.b32.xlu0 %v4465, 2
        %v4763 = vpop.permute.xlu0 %4762
        %4764 = vrot.lane.b32.xlu0 %v4467, 2
        %v4765 = vpop.permute.xlu0 %4764
        %4766 = vrot.lane.b32.xlu0 %v4466, 2
        %v4767 = vpop.permute.xlu0 %4766
        %4772 = vrot.lane.b32.xlu0 %v472, 3
        %v4773 = vpop.permute.xlu0 %4772
        %4774 = vrot.lane.b32.xlu0 %v473, 3
        %v4775 = vpop.permute.xlu0 %4774
        %4776 = vrot.lane.b32.xlu0 %v474, 3
        %v4777 = vpop.permute.xlu0 %4776
        %4778 = vrot.lane.b32.xlu0 %v475, 3
        %v4779 = vpop.permute.xlu0 %4778
        %4784 = vrot.lane.b32.xlu0 %v4635, 4
        %v4785 = vpop.permute.xlu0 %4784
        %4786 = vrot.lane.b32.xlu0 %v4637, 4
        %v4787 = vpop.permute.xlu0 %4786
        %4788 = vrot.lane.b32.xlu0 %v4639, 4
        %v4789 = vpop.permute.xlu0 %4788
        %4790 = vrot.lane.b32.xlu0 %v4638, 4
        %v4791 = vpop.permute.xlu0 %4790
        %4796 = vrot.lane.b32.xlu0 %v4654, 5
        %v4797 = vpop.permute.xlu0 %4796
        %4798 = vrot.lane.b32.xlu0 %v4656, 5
        %v4799 = vpop.permute.xlu0 %4798
        %4800 = vrot.lane.b32.xlu0 %v4658, 5
        %v4801 = vpop.permute.xlu0 %4800
        %4802 = vrot.lane.b32.xlu0 %v4657, 5
        %v4803 = vpop.permute.xlu0 %4802
        %4812 = vrot.lane.b32.xlu0 %v476, 6
        %v4813 = vpop.permute.xlu0 %4812
        %4814 = vrot.lane.b32.xlu0 %v477, 6
        %v4815 = vpop.permute.xlu0 %4814
        %4816 = vrot.lane.b32.xlu0 %v478, 6
        %v4817 = vpop.permute.xlu0 %4816
        %4818 = vrot.lane.b32.xlu0 %v479, 6
        %v4819 = vpop.permute.xlu0 %4818
        %v4824 = vrot.slane %v476, 1
        %v4825 = vrot.slane %v477, 1
        %v4826 = vsel %vm687, %v4824, %v4825
        %v4827 = vrot.slane %v478, 1
        %v4828 = vsel %vm687, %v4825, %v4827
        %v4829 = vrot.slane %v479, 1
        %v4830 = vsel %vm687, %v4827, %v4829
        %4831 = vrot.lane.b32.xlu0 %v4826, 7
        %v4832 = vpop.permute.xlu0 %4831
        %4833 = vrot.lane.b32.xlu0 %v4828, 7
        %v4834 = vpop.permute.xlu0 %4833
        %4835 = vrot.lane.b32.xlu0 %v4830, 7
        %v4836 = vpop.permute.xlu0 %4835
        %4837 = vrot.lane.b32.xlu0 %v4829, 7
        %v4838 = vpop.permute.xlu0 %4837
        %v4843 = vrot.slane %v476, 2
        %v4844 = vrot.slane %v477, 2
        %v4845 = vsel %vm707, %v4843, %v4844
        %v4846 = vrot.slane %v478, 2
        %v4847 = vsel %vm707, %v4844, %v4846
        %v4848 = vrot.slane %v479, 2
        %v4849 = vsel %vm707, %v4846, %v4848
        %4850 = vrot.lane.b32.xlu0 %v4845, 8
        %v4851 = vpop.permute.xlu0 %4850
        %4852 = vrot.lane.b32.xlu0 %v4847, 8
        %v4853 = vpop.permute.xlu0 %4852
        %4854 = vrot.lane.b32.xlu0 %v4849, 8
        %v4855 = vpop.permute.xlu0 %4854
        %4856 = vrot.lane.b32.xlu0 %v4848, 8
        %v4857 = vpop.permute.xlu0 %4856
        %v4862 = vsel %vm835, %v468, %v4749
        %v4863 = vsel %vm835, %v469, %v4751
        %v4864 = vsel %vm835, %v470, %v4753
        %v4865 = vsel %vm835, %v471, %v4755
        %v4866 = vsel %vm840, %v4862, %v4761
        %v4867 = vsel %vm840, %v4863, %v4763
        %v4868 = vsel %vm840, %v4864, %v4765
        %v4869 = vsel %vm840, %v4865, %v4767
        %v4870 = vsel %vm845, %v4866, %v4773
        %v4871 = vsel %vm845, %v4867, %v4775
        %v4872 = vsel %vm845, %v4868, %v4777
        %v4873 = vsel %vm845, %v4869, %v4779
        %v4874 = vsel %vm850, %v4870, %v4785
        %v4875 = vsel %vm850, %v4871, %v4787
        %v4876 = vsel %vm850, %v4872, %v4789
        %v4877 = vsel %vm850, %v4873, %v4791
        %v4878 = vsel %vm855, %v4874, %v4797
        %v4879 = vsel %vm855, %v4875, %v4799
        %v4880 = vsel %vm855, %v4876, %v4801
        %v4881 = vsel %vm855, %v4877, %v4803
        %v4882 = vsel %vm860, %v4878, %v4813
        %v4883 = vsel %vm860, %v4879, %v4815
        %v4884 = vsel %vm860, %v4880, %v4817
        %v4885 = vsel %vm860, %v4881, %v4819
        %v4886 = vsel %vm865, %v4882, %v4832
        %v4887 = vsel %vm865, %v4883, %v4834
        %v4888 = vsel %vm865, %v4884, %v4836
        %v4889 = vsel %vm865, %v4885, %v4838
        %v4890 = vsel %vm870, %v4886, %v4851
        %v4891 = vsel %vm870, %v4887, %v4853
        %v4892 = vsel %vm870, %v4888, %v4855
        %v4893 = vsel %vm870, %v4889, %v4857
        %v4895 = vsel %vm878, %v4890, 0
        %v4898 = vsel %vm878, %v4891, 0
        %v4901 = vsel %vm878, %v4892, 0
        %v4904 = vsel %vm878, %v4893, 0
        %4906 = vmatpush.msra.mxu0 0.0
        %4907 = vmatpush.msra.mxu0 0.0
        %4908 = vmatpush.msra.mxu0 0.0
        %4909 = vmatpush.msra.mxu0 0.0
        %4910 = vmatpush.msra.mxu0 0.0
        %4911 = vmatpush.msra.mxu0 0.0
        %4912 = vmatpush.msra.mxu0 0.0
        %4913 = vmatpush.msra.mxu0 0.0
        %4914 = vmatpush.msra.mxu0 0.0
        %4915 = vmatpush.msra.mxu0 0.0
        %4916 = vmatpush.msra.mxu0 0.0
        %4917 = vmatpush.msra.mxu0 0.0
        %4918 = vmatpush.msra.mxu0 0.0
        %4919 = vmatpush.msra.mxu0 0.0
        %4920 = vmatpush.msra.mxu0 %v893
        %4921 = vmatpush.msra.mxu0 %v488
        %4922 = vmatmul.f32.gmra.mxu0 %v4895
        %v4923 = vpop.f32.mrf.mxu0
        %v4924 = vadd.f32 %v876, %v4923
        %4925 = vmatmul.f32.gmra.mxu0 %v4898
        %v4926 = vpop.f32.mrf.mxu0
        %v4927 = vadd.f32 %v876, %v4926
        %4928 = vmatmul.f32.gmra.mxu0 %v4901
        %v4929 = vpop.f32.mrf.mxu0
        %v4930 = vadd.f32 %v876, %v4929
        %4931 = vmatmul.f32.gmra.mxu0 %v4904
        %v4932 = vpop.f32.mrf.mxu0
        %v4933 = vadd.f32 %v876, %v4932
        %4934 = vdwg.mxu0
        %v4935 = vmax.f32 %v4924, 0.0
        %v4936 = vmax.f32 %v4927, 0.0
        %v4937 = vmax.f32 %v4930, 0.0
        %v4938 = vmax.f32 %v4933, 0.0
        %4939 = vrot.lane.b32.xlu0 %v4635, 1
        %v4940 = vpop.permute.xlu0 %4939
        %4941 = vrot.lane.b32.xlu0 %v4637, 1
        %v4942 = vpop.permute.xlu0 %4941
        %4943 = vrot.lane.b32.xlu0 %v4639, 1
        %v4944 = vpop.permute.xlu0 %4943
        %4945 = vrot.lane.b32.xlu0 %v4638, 1
        %v4946 = vpop.permute.xlu0 %4945
        %4951 = vrot.lane.b32.xlu0 %v4654, 2
        %v4952 = vpop.permute.xlu0 %4951
        %4953 = vrot.lane.b32.xlu0 %v4656, 2
        %v4954 = vpop.permute.xlu0 %4953
        %4955 = vrot.lane.b32.xlu0 %v4658, 2
        %v4956 = vpop.permute.xlu0 %4955
        %4957 = vrot.lane.b32.xlu0 %v4657, 2
        %v4958 = vpop.permute.xlu0 %4957
        %4963 = vrot.lane.b32.xlu0 %v476, 3
        %v4964 = vpop.permute.xlu0 %4963
        %4965 = vrot.lane.b32.xlu0 %v477, 3
        %v4966 = vpop.permute.xlu0 %4965
        %4967 = vrot.lane.b32.xlu0 %v478, 3
        %v4968 = vpop.permute.xlu0 %4967
        %4969 = vrot.lane.b32.xlu0 %v479, 3
        %v4970 = vpop.permute.xlu0 %4969
        %4975 = vrot.lane.b32.xlu0 %v4826, 4
        %v4976 = vpop.permute.xlu0 %4975
        %4977 = vrot.lane.b32.xlu0 %v4828, 4
        %v4978 = vpop.permute.xlu0 %4977
        %4979 = vrot.lane.b32.xlu0 %v4830, 4
        %v4980 = vpop.permute.xlu0 %4979
        %4981 = vrot.lane.b32.xlu0 %v4829, 4
        %v4982 = vpop.permute.xlu0 %4981
        %4987 = vrot.lane.b32.xlu0 %v4845, 5
        %v4988 = vpop.permute.xlu0 %4987
        %4989 = vrot.lane.b32.xlu0 %v4847, 5
        %v4990 = vpop.permute.xlu0 %4989
        %4991 = vrot.lane.b32.xlu0 %v4849, 5
        %v4992 = vpop.permute.xlu0 %4991
        %4993 = vrot.lane.b32.xlu0 %v4848, 5
        %v4994 = vpop.permute.xlu0 %4993
        %5003 = vrot.lane.b32.xlu0 %v480, 6
        %v5004 = vpop.permute.xlu0 %5003
        %5005 = vrot.lane.b32.xlu0 %v481, 6
        %v5006 = vpop.permute.xlu0 %5005
        %5007 = vrot.lane.b32.xlu0 %v482, 6
        %v5008 = vpop.permute.xlu0 %5007
        %5009 = vrot.lane.b32.xlu0 %v483, 6
        %v5010 = vpop.permute.xlu0 %5009
        %v5015 = vrot.slane %v480, 1
        %v5016 = vrot.slane %v481, 1
        %v5017 = vsel %vm687, %v5015, %v5016
        %v5018 = vrot.slane %v482, 1
        %v5019 = vsel %vm687, %v5016, %v5018
        %v5020 = vrot.slane %v483, 1
        %v5021 = vsel %vm687, %v5018, %v5020
        %5022 = vrot.lane.b32.xlu0 %v5017, 7
        %v5023 = vpop.permute.xlu0 %5022
        %5024 = vrot.lane.b32.xlu0 %v5019, 7
        %v5025 = vpop.permute.xlu0 %5024
        %5026 = vrot.lane.b32.xlu0 %v5021, 7
        %v5027 = vpop.permute.xlu0 %5026
        %5028 = vrot.lane.b32.xlu0 %v5020, 7
        %v5029 = vpop.permute.xlu0 %5028
        %v5034 = vrot.slane %v480, 2
        %v5035 = vrot.slane %v481, 2
        %v5036 = vsel %vm707, %v5034, %v5035
        %v5037 = vrot.slane %v482, 2
        %v5038 = vsel %vm707, %v5035, %v5037
        %v5039 = vrot.slane %v483, 2
        %v5040 = vsel %vm707, %v5037, %v5039
        %5041 = vrot.lane.b32.xlu0 %v5036, 8
        %v5042 = vpop.permute.xlu0 %5041
        %5043 = vrot.lane.b32.xlu0 %v5038, 8
        %v5044 = vpop.permute.xlu0 %5043
        %5045 = vrot.lane.b32.xlu0 %v5040, 8
        %v5046 = vpop.permute.xlu0 %5045
        %5047 = vrot.lane.b32.xlu0 %v5039, 8
        %v5048 = vpop.permute.xlu0 %5047
        %v5053 = vsel %vm835, %v472, %v4940
        %v5054 = vsel %vm835, %v473, %v4942
        %v5055 = vsel %vm835, %v474, %v4944
        %v5056 = vsel %vm835, %v475, %v4946
        %v5057 = vsel %vm840, %v5053, %v4952
        %v5058 = vsel %vm840, %v5054, %v4954
        %v5059 = vsel %vm840, %v5055, %v4956
        %v5060 = vsel %vm840, %v5056, %v4958
        %v5061 = vsel %vm845, %v5057, %v4964
        %v5062 = vsel %vm845, %v5058, %v4966
        %v5063 = vsel %vm845, %v5059, %v4968
        %v5064 = vsel %vm845, %v5060, %v4970
        %v5065 = vsel %vm850, %v5061, %v4976
        %v5066 = vsel %vm850, %v5062, %v4978
        %v5067 = vsel %vm850, %v5063, %v4980
        %v5068 = vsel %vm850, %v5064, %v4982
        %v5069 = vsel %vm855, %v5065, %v4988
        %v5070 = vsel %vm855, %v5066, %v4990
        %v5071 = vsel %vm855, %v5067, %v4992
        %v5072 = vsel %vm855, %v5068, %v4994
        %v5073 = vsel %vm860, %v5069, %v5004
        %v5074 = vsel %vm860, %v5070, %v5006
        %v5075 = vsel %vm860, %v5071, %v5008
        %v5076 = vsel %vm860, %v5072, %v5010
        %v5077 = vsel %vm865, %v5073, %v5023
        %v5078 = vsel %vm865, %v5074, %v5025
        %v5079 = vsel %vm865, %v5075, %v5027
        %v5080 = vsel %vm865, %v5076, %v5029
        %v5081 = vsel %vm870, %v5077, %v5042
        %v5082 = vsel %vm870, %v5078, %v5044
        %v5083 = vsel %vm870, %v5079, %v5046
        %v5084 = vsel %vm870, %v5080, %v5048
        %v5086 = vsel %vm878, %v5081, 0
        %v5089 = vsel %vm878, %v5082, 0
        %v5092 = vsel %vm878, %v5083, 0
        %v5095 = vsel %vm878, %v5084, 0
        %5097 = vmatpush.msra.mxu0 0.0
        %5098 = vmatpush.msra.mxu0 0.0
        %5099 = vmatpush.msra.mxu0 0.0
        %5100 = vmatpush.msra.mxu0 0.0
        %5101 = vmatpush.msra.mxu0 0.0
        %5102 = vmatpush.msra.mxu0 0.0
        %5103 = vmatpush.msra.mxu0 0.0
        %5104 = vmatpush.msra.mxu0 0.0
        %5105 = vmatpush.msra.mxu0 0.0
        %5106 = vmatpush.msra.mxu0 0.0
        %5107 = vmatpush.msra.mxu0 0.0
        %5108 = vmatpush.msra.mxu0 0.0
        %5109 = vmatpush.msra.mxu0 0.0
        %5110 = vmatpush.msra.mxu0 0.0
        %5111 = vmatpush.msra.mxu0 %v893
        %5112 = vmatpush.msra.mxu0 %v488
        %5113 = vmatmul.f32.gmra.mxu0 %v5086
        %v5114 = vpop.f32.mrf.mxu0
        %v5115 = vadd.f32 %v876, %v5114
        %5116 = vmatmul.f32.gmra.mxu0 %v5089
        %v5117 = vpop.f32.mrf.mxu0
        %v5118 = vadd.f32 %v876, %v5117
        %5119 = vmatmul.f32.gmra.mxu0 %v5092
        %v5120 = vpop.f32.mrf.mxu0
        %v5121 = vadd.f32 %v876, %v5120
        %5122 = vmatmul.f32.gmra.mxu0 %v5095
        %v5123 = vpop.f32.mrf.mxu0
        %v5124 = vadd.f32 %v876, %v5123
        %5125 = vdwg.mxu0
        %v5126 = vmax.f32 %v5115, 0.0
        %v5127 = vmax.f32 %v5118, 0.0
        %v5128 = vmax.f32 %v5121, 0.0
        %v5129 = vmax.f32 %v5124, 0.0
        %5130 = vrot.lane.b32.xlu0 %v4826, 1
        %v5131 = vpop.permute.xlu0 %5130
        %5132 = vrot.lane.b32.xlu0 %v4828, 1
        %v5133 = vpop.permute.xlu0 %5132
        %5134 = vrot.lane.b32.xlu0 %v4830, 1
        %v5135 = vpop.permute.xlu0 %5134
        %5136 = vrot.lane.b32.xlu0 %v4829, 1
        %v5137 = vpop.permute.xlu0 %5136
        %5142 = vrot.lane.b32.xlu0 %v4845, 2
        %v5143 = vpop.permute.xlu0 %5142
        %5144 = vrot.lane.b32.xlu0 %v4847, 2
        %v5145 = vpop.permute.xlu0 %5144
        %5146 = vrot.lane.b32.xlu0 %v4849, 2
        %v5147 = vpop.permute.xlu0 %5146
        %5148 = vrot.lane.b32.xlu0 %v4848, 2
        %v5149 = vpop.permute.xlu0 %5148
        %5154 = vrot.lane.b32.xlu0 %v480, 3
        %v5155 = vpop.permute.xlu0 %5154
        %5156 = vrot.lane.b32.xlu0 %v481, 3
        %v5157 = vpop.permute.xlu0 %5156
        %5158 = vrot.lane.b32.xlu0 %v482, 3
        %v5159 = vpop.permute.xlu0 %5158
        %5160 = vrot.lane.b32.xlu0 %v483, 3
        %v5161 = vpop.permute.xlu0 %5160
        %5166 = vrot.lane.b32.xlu0 %v5017, 4
        %v5167 = vpop.permute.xlu0 %5166
        %5168 = vrot.lane.b32.xlu0 %v5019, 4
        %v5169 = vpop.permute.xlu0 %5168
        %5170 = vrot.lane.b32.xlu0 %v5021, 4
        %v5171 = vpop.permute.xlu0 %5170
        %5172 = vrot.lane.b32.xlu0 %v5020, 4
        %v5173 = vpop.permute.xlu0 %5172
        %5178 = vrot.lane.b32.xlu0 %v5036, 5
        %v5179 = vpop.permute.xlu0 %5178
        %5180 = vrot.lane.b32.xlu0 %v5038, 5
        %v5181 = vpop.permute.xlu0 %5180
        %5182 = vrot.lane.b32.xlu0 %v5040, 5
        %v5183 = vpop.permute.xlu0 %5182
        %5184 = vrot.lane.b32.xlu0 %v5039, 5
        %v5185 = vpop.permute.xlu0 %5184
        %5194 = vrot.lane.b32.xlu0 %v484, 6
        %v5195 = vpop.permute.xlu0 %5194
        %5196 = vrot.lane.b32.xlu0 %v485, 6
        %v5197 = vpop.permute.xlu0 %5196
        %5198 = vrot.lane.b32.xlu0 %v486, 6
        %v5199 = vpop.permute.xlu0 %5198
        %5200 = vrot.lane.b32.xlu0 %v487, 6
        %v5201 = vpop.permute.xlu0 %5200
        %v5206 = vrot.slane %v484, 1
        %v5207 = vrot.slane %v485, 1
        %v5208 = vsel %vm687, %v5206, %v5207
        %v5209 = vrot.slane %v486, 1
        %v5210 = vsel %vm687, %v5207, %v5209
        %v5211 = vrot.slane %v487, 1
        %v5212 = vsel %vm687, %v5209, %v5211
        %5213 = vrot.lane.b32.xlu0 %v5208, 7
        %v5214 = vpop.permute.xlu0 %5213
        %5215 = vrot.lane.b32.xlu0 %v5210, 7
        %v5216 = vpop.permute.xlu0 %5215
        %5217 = vrot.lane.b32.xlu0 %v5212, 7
        %v5218 = vpop.permute.xlu0 %5217
        %5219 = vrot.lane.b32.xlu0 %v5211, 7
        %v5220 = vpop.permute.xlu0 %5219
        %v5225 = vrot.slane %v484, 2
        %v5226 = vrot.slane %v485, 2
        %v5227 = vsel %vm707, %v5225, %v5226
        %v5228 = vrot.slane %v486, 2
        %v5229 = vsel %vm707, %v5226, %v5228
        %v5230 = vrot.slane %v487, 2
        %v5231 = vsel %vm707, %v5228, %v5230
        %5232 = vrot.lane.b32.xlu0 %v5227, 8
        %v5233 = vpop.permute.xlu0 %5232
        %5234 = vrot.lane.b32.xlu0 %v5229, 8
        %v5235 = vpop.permute.xlu0 %5234
        %5236 = vrot.lane.b32.xlu0 %v5231, 8
        %v5237 = vpop.permute.xlu0 %5236
        %5238 = vrot.lane.b32.xlu0 %v5230, 8
        %v5239 = vpop.permute.xlu0 %5238
        %v5244 = vsel %vm835, %v476, %v5131
        %v5245 = vsel %vm835, %v477, %v5133
        %v5246 = vsel %vm835, %v478, %v5135
        %v5247 = vsel %vm835, %v479, %v5137
        %v5248 = vsel %vm840, %v5244, %v5143
        %v5249 = vsel %vm840, %v5245, %v5145
        %v5250 = vsel %vm840, %v5246, %v5147
        %v5251 = vsel %vm840, %v5247, %v5149
        %v5252 = vsel %vm845, %v5248, %v5155
        %v5253 = vsel %vm845, %v5249, %v5157
        %v5254 = vsel %vm845, %v5250, %v5159
        %v5255 = vsel %vm845, %v5251, %v5161
        %v5256 = vsel %vm850, %v5252, %v5167
        %v5257 = vsel %vm850, %v5253, %v5169
        %v5258 = vsel %vm850, %v5254, %v5171
        %v5259 = vsel %vm850, %v5255, %v5173
        %v5260 = vsel %vm855, %v5256, %v5179
        %v5261 = vsel %vm855, %v5257, %v5181
        %v5262 = vsel %vm855, %v5258, %v5183
        %v5263 = vsel %vm855, %v5259, %v5185
        %v5264 = vsel %vm860, %v5260, %v5195
        %v5265 = vsel %vm860, %v5261, %v5197
        %v5266 = vsel %vm860, %v5262, %v5199
        %v5267 = vsel %vm860, %v5263, %v5201
        %v5268 = vsel %vm865, %v5264, %v5214
        %v5269 = vsel %vm865, %v5265, %v5216
        %v5270 = vsel %vm865, %v5266, %v5218
        %v5271 = vsel %vm865, %v5267, %v5220
        %v5272 = vsel %vm870, %v5268, %v5233
        %v5273 = vsel %vm870, %v5269, %v5235
        %v5274 = vsel %vm870, %v5270, %v5237
        %v5275 = vsel %vm870, %v5271, %v5239
        %v5277 = vsel %vm878, %v5272, 0
        %v5280 = vsel %vm878, %v5273, 0
        %v5283 = vsel %vm878, %v5274, 0
        %v5286 = vsel %vm878, %v5275, 0
        %5288 = vmatpush.msra.mxu0 0.0
        %5289 = vmatpush.msra.mxu0 0.0
        %5290 = vmatpush.msra.mxu0 0.0
        %5291 = vmatpush.msra.mxu0 0.0
        %5292 = vmatpush.msra.mxu0 0.0
        %5293 = vmatpush.msra.mxu0 0.0
        %5294 = vmatpush.msra.mxu0 0.0
        %5295 = vmatpush.msra.mxu0 0.0
        %5296 = vmatpush.msra.mxu0 0.0
        %5297 = vmatpush.msra.mxu0 0.0
        %5298 = vmatpush.msra.mxu0 0.0
        %5299 = vmatpush.msra.mxu0 0.0
        %5300 = vmatpush.msra.mxu0 0.0
        %5301 = vmatpush.msra.mxu0 0.0
        %5302 = vmatpush.msra.mxu0 %v893
        %5303 = vmatpush.msra.mxu0 %v488
        %5304 = vmatmul.f32.gmra.mxu0 %v5277
        %v5305 = vpop.f32.mrf.mxu0
        %v5306 = vadd.f32 %v876, %v5305
        %5307 = vmatmul.f32.gmra.mxu0 %v5280
        %v5308 = vpop.f32.mrf.mxu0
        %v5309 = vadd.f32 %v876, %v5308
        %5310 = vmatmul.f32.gmra.mxu0 %v5283
        %v5311 = vpop.f32.mrf.mxu0
        %v5312 = vadd.f32 %v876, %v5311
        %5313 = vmatmul.f32.gmra.mxu0 %v5286
        %v5314 = vpop.f32.mrf.mxu0
        %v5315 = vadd.f32 %v876, %v5314
        %5316 = vdwg.mxu0
        %v5317 = vmax.f32 %v5306, 0.0
        %v5318 = vmax.f32 %v5309, 0.0
        %v5319 = vmax.f32 %v5312, 0.0
        %v5320 = vmax.f32 %v5315, 0.0
        %v5321 = vmax.f32 %v924, %v1115
        %v5322 = vmax.f32 %v925, %v1116
        %v5323 = vmax.f32 %v926, %v1117
        %v5324 = vmax.f32 %v927, %v1118
        %v5326 = vrot.slane %v5321, 1
        %v5328 = vmax.f32 %v5321, %v5326
        %v5330 = vrot.slane %v5322, 1
        %v5332 = vmax.f32 %v5322, %v5330
        %v5334 = vrot.slane %v5323, 1
        %v5336 = vmax.f32 %v5323, %v5334
        %v5338 = vrot.slane %v5324, 1
        %v5340 = vmax.f32 %v5324, %v5338
        %v5342 = vrot.slane %v5328, 1
        %v5344 = vrot.slane %v5328, 2
        %v5346 = vrot.slane %v5328, 3
        %v5349 = vrot.slane %v5332, 4
        %v5351 = vrot.slane %v5332, 5
        %v5353 = vrot.slane %v5332, 6
        %v5355 = vrot.slane %v5332, 7
        %v5358 = vrot.slane %v5336, 1
        %v5360 = vrot.slane %v5336, 2
        %v5362 = vrot.slane %v5336, 3
        %v5365 = vrot.slane %v5340, 4
        %v5367 = vsel %vm891, %v5328, %v5342
        %vm5368 = vcmask 1041408
        %v5369 = vsel %vm5368, %v5367, %v5344
        %vm5370 = vcmask 1042432
        %v5371 = vsel %vm5370, %v5369, %v5346
        %vm5372 = vcmask 1043456
        %v5373 = vsel %vm5372, %v5371, %v5349
        %vm5374 = vcmask 1044480
        %v5375 = vsel %vm5374, %v5373, %v5351
        %v5376 = vsel %vm707, %v5375, %v5353
        %v5377 = vsel %vm687, %v5376, %v5355
        %v5378 = vsel %vm891, %v5336, %v5358
        %v5379 = vsel %vm5368, %v5378, %v5360
        %v5380 = vsel %vm5370, %v5379, %v5362
        %v5381 = vsel %vm5372, %v5380, %v5365
        %v5382 = vmax.f32 %v1306, %v1497
        %v5383 = vmax.f32 %v1307, %v1498
        %v5384 = vmax.f32 %v1308, %v1499
        %v5385 = vmax.f32 %v1309, %v1500
        %v5387 = vrot.slane %v5382, 1
        %v5389 = vmax.f32 %v5382, %v5387
        %v5391 = vrot.slane %v5383, 1
        %v5393 = vmax.f32 %v5383, %v5391
        %v5395 = vrot.slane %v5384, 1
        %v5397 = vmax.f32 %v5384, %v5395
        %v5399 = vrot.slane %v5385, 1
        %v5401 = vmax.f32 %v5385, %v5399
        %v5403 = vrot.slane %v5389, 1
        %v5405 = vrot.slane %v5389, 2
        %v5407 = vrot.slane %v5389, 3
        %v5410 = vrot.slane %v5393, 4
        %v5412 = vrot.slane %v5393, 5
        %v5414 = vrot.slane %v5393, 6
        %v5416 = vrot.slane %v5393, 7
        %v5419 = vrot.slane %v5397, 1
        %v5421 = vrot.slane %v5397, 2
        %v5423 = vrot.slane %v5397, 3
        %v5426 = vrot.slane %v5401, 4
        %v5428 = vsel %vm891, %v5389, %v5403
        %v5429 = vsel %vm5368, %v5428, %v5405
        %v5430 = vsel %vm5370, %v5429, %v5407
        %v5431 = vsel %vm5372, %v5430, %v5410
        %v5432 = vsel %vm5374, %v5431, %v5412
        %v5433 = vsel %vm707, %v5432, %v5414
        %v5434 = vsel %vm687, %v5433, %v5416
        %v5435 = vsel %vm891, %v5397, %v5419
        %v5436 = vsel %vm5368, %v5435, %v5421
        %v5437 = vsel %vm5370, %v5436, %v5423
        %v5438 = vsel %vm5372, %v5437, %v5426
        %v5439 = vmax.f32 %v1688, %v1879
        %v5440 = vmax.f32 %v1689, %v1880
        %v5441 = vmax.f32 %v1690, %v1881
        %v5442 = vmax.f32 %v1691, %v1882
        %v5444 = vrot.slane %v5439, 1
        %v5446 = vmax.f32 %v5439, %v5444
        %v5448 = vrot.slane %v5440, 1
        %v5450 = vmax.f32 %v5440, %v5448
        %v5452 = vrot.slane %v5441, 1
        %v5454 = vmax.f32 %v5441, %v5452
        %v5456 = vrot.slane %v5442, 1
        %v5458 = vmax.f32 %v5442, %v5456
        %v5460 = vrot.slane %v5446, 1
        %v5462 = vrot.slane %v5446, 2
        %v5464 = vrot.slane %v5446, 3
        %v5467 = vrot.slane %v5450, 4
        %v5469 = vrot.slane %v5450, 5
        %v5471 = vrot.slane %v5450, 6
        %v5473 = vrot.slane %v5450, 7
        %v5476 = vrot.slane %v5454, 1
        %v5478 = vrot.slane %v5454, 2
        %v5480 = vrot.slane %v5454, 3
        %v5483 = vrot.slane %v5458, 4
        %v5485 = vsel %vm891, %v5446, %v5460
        %v5486 = vsel %vm5368, %v5485, %v5462
        %v5487 = vsel %vm5370, %v5486, %v5464
        %v5488 = vsel %vm5372, %v5487, %v5467
        %v5489 = vsel %vm5374, %v5488, %v5469
        %v5490 = vsel %vm707, %v5489, %v5471
        %v5491 = vsel %vm687, %v5490, %v5473
        %v5492 = vsel %vm891, %v5454, %v5476
        %v5493 = vsel %vm5368, %v5492, %v5478
        %v5494 = vsel %vm5370, %v5493, %v5480
        %v5495 = vsel %vm5372, %v5494, %v5483
        %v5496 = vmax.f32 %v2070, %v2261
        %v5497 = vmax.f32 %v2071, %v2262
        %v5498 = vmax.f32 %v2072, %v2263
        %v5499 = vmax.f32 %v2073, %v2264
        %v5501 = vrot.slane %v5496, 1
        %v5503 = vmax.f32 %v5496, %v5501
        %v5505 = vrot.slane %v5497, 1
        %v5507 = vmax.f32 %v5497, %v5505
        %v5509 = vrot.slane %v5498, 1
        %v5511 = vmax.f32 %v5498, %v5509
        %v5513 = vrot.slane %v5499, 1
        %v5515 = vmax.f32 %v5499, %v5513
        %v5517 = vrot.slane %v5503, 1
        %v5519 = vrot.slane %v5503, 2
        %v5521 = vrot.slane %v5503, 3
        %v5524 = vrot.slane %v5507, 4
        %v5526 = vrot.slane %v5507, 5
        %v5528 = vrot.slane %v5507, 6
        %v5530 = vrot.slane %v5507, 7
        %v5533 = vrot.slane %v5511, 1
        %v5535 = vrot.slane %v5511, 2
        %v5537 = vrot.slane %v5511, 3
        %v5540 = vrot.slane %v5515, 4
        %v5542 = vsel %vm891, %v5503, %v5517
        %v5543 = vsel %vm5368, %v5542, %v5519
        %v5544 = vsel %vm5370, %v5543, %v5521
        %v5545 = vsel %vm5372, %v5544, %v5524
        %v5546 = vsel %vm5374, %v5545, %v5526
        %v5547 = vsel %vm707, %v5546, %v5528
        %v5548 = vsel %vm687, %v5547, %v5530
        %v5549 = vsel %vm891, %v5511, %v5533
        %v5550 = vsel %vm5368, %v5549, %v5535
        %v5551 = vsel %vm5370, %v5550, %v5537
        %v5552 = vsel %vm5372, %v5551, %v5540
        %v5553 = vmax.f32 %v2452, %v2643
        %v5554 = vmax.f32 %v2453, %v2644
        %v5555 = vmax.f32 %v2454, %v2645
        %v5556 = vmax.f32 %v2455, %v2646
        %v5558 = vrot.slane %v5553, 1
        %v5560 = vmax.f32 %v5553, %v5558
        %v5562 = vrot.slane %v5554, 1
        %v5564 = vmax.f32 %v5554, %v5562
        %v5566 = vrot.slane %v5555, 1
        %v5568 = vmax.f32 %v5555, %v5566
        %v5570 = vrot.slane %v5556, 1
        %v5572 = vmax.f32 %v5556, %v5570
        %v5574 = vrot.slane %v5560, 1
        %v5576 = vrot.slane %v5560, 2
        %v5578 = vrot.slane %v5560, 3
        %v5581 = vrot.slane %v5564, 4
        %v5583 = vrot.slane %v5564, 5
        %v5585 = vrot.slane %v5564, 6
        %v5587 = vrot.slane %v5564, 7
        %v5590 = vrot.slane %v5568, 1
        %v5592 = vrot.slane %v5568, 2
        %v5594 = vrot.slane %v5568, 3
        %v5597 = vrot.slane %v5572, 4
        %v5599 = vsel %vm891, %v5560, %v5574
        %v5600 = vsel %vm5368, %v5599, %v5576
        %v5601 = vsel %vm5370, %v5600, %v5578
        %v5602 = vsel %vm5372, %v5601, %v5581
        %v5603 = vsel %vm5374, %v5602, %v5583
        %v5604 = vsel %vm707, %v5603, %v5585
        %v5605 = vsel %vm687, %v5604, %v5587
        %v5606 = vsel %vm891, %v5568, %v5590
        %v5607 = vsel %vm5368, %v5606, %v5592
        %v5608 = vsel %vm5370, %v5607, %v5594
        %v5609 = vsel %vm5372, %v5608, %v5597
        %v5610 = vmax.f32 %v2834, %v3025
        %v5611 = vmax.f32 %v2835, %v3026
        %v5612 = vmax.f32 %v2836, %v3027
        %v5613 = vmax.f32 %v2837, %v3028
        %v5615 = vrot.slane %v5610, 1
        %v5617 = vmax.f32 %v5610, %v5615
        %v5619 = vrot.slane %v5611, 1
        %v5621 = vmax.f32 %v5611, %v5619
        %v5623 = vrot.slane %v5612, 1
        %v5625 = vmax.f32 %v5612, %v5623
        %v5627 = vrot.slane %v5613, 1
        %v5629 = vmax.f32 %v5613, %v5627
        %v5631 = vrot.slane %v5617, 1
        %v5633 = vrot.slane %v5617, 2
        %v5635 = vrot.slane %v5617, 3
        %v5638 = vrot.slane %v5621, 4
        %v5640 = vrot.slane %v5621, 5
        %v5642 = vrot.slane %v5621, 6
        %v5644 = vrot.slane %v5621, 7
        %v5647 = vrot.slane %v5625, 1
        %v5649 = vrot.slane %v5625, 2
        %v5651 = vrot.slane %v5625, 3
        %v5654 = vrot.slane %v5629, 4
        %v5656 = vsel %vm891, %v5617, %v5631
        %v5657 = vsel %vm5368, %v5656, %v5633
        %v5658 = vsel %vm5370, %v5657, %v5635
        %v5659 = vsel %vm5372, %v5658, %v5638
        %v5660 = vsel %vm5374, %v5659, %v5640
        %v5661 = vsel %vm707, %v5660, %v5642
        %v5662 = vsel %vm687, %v5661, %v5644
        %v5663 = vsel %vm891, %v5625, %v5647
        %v5664 = vsel %vm5368, %v5663, %v5649
        %v5665 = vsel %vm5370, %v5664, %v5651
        %v5666 = vsel %vm5372, %v5665, %v5654
        %v5667 = vmax.f32 %v3216, %v3407
        %v5668 = vmax.f32 %v3217, %v3408
        %v5669 = vmax.f32 %v3218, %v3409
        %v5670 = vmax.f32 %v3219, %v3410
        %v5672 = vrot.slane %v5667, 1
        %v5674 = vmax.f32 %v5667, %v5672
        %v5676 = vrot.slane %v5668, 1
        %v5678 = vmax.f32 %v5668, %v5676
        %v5680 = vrot.slane %v5669, 1
        %v5682 = vmax.f32 %v5669, %v5680
        %v5684 = vrot.slane %v5670, 1
        %v5686 = vmax.f32 %v5670, %v5684
        %v5688 = vrot.slane %v5674, 1
        %v5690 = vrot.slane %v5674, 2
        %v5692 = vrot.slane %v5674, 3
        %v5695 = vrot.slane %v5678, 4
        %v5697 = vrot.slane %v5678, 5
        %v5699 = vrot.slane %v5678, 6
        %v5701 = vrot.slane %v5678, 7
        %v5704 = vrot.slane %v5682, 1
        %v5706 = vrot.slane %v5682, 2
        %v5708 = vrot.slane %v5682, 3
        %v5711 = vrot.slane %v5686, 4
        %v5713 = vsel %vm891, %v5674, %v5688
        %v5714 = vsel %vm5368, %v5713, %v5690
        %v5715 = vsel %vm5370, %v5714, %v5692
        %v5716 = vsel %vm5372, %v5715, %v5695
        %v5717 = vsel %vm5374, %v5716, %v5697
        %v5718 = vsel %vm707, %v5717, %v5699
        %v5719 = vsel %vm687, %v5718, %v5701
        %v5720 = vsel %vm891, %v5682, %v5704
        %v5721 = vsel %vm5368, %v5720, %v5706
        %v5722 = vsel %vm5370, %v5721, %v5708
        %v5723 = vsel %vm5372, %v5722, %v5711
        %v5724 = vmax.f32 %v3598, %v3789
        %v5725 = vmax.f32 %v3599, %v3790
        %v5726 = vmax.f32 %v3600, %v3791
        %v5727 = vmax.f32 %v3601, %v3792
        %v5729 = vrot.slane %v5724, 1
        %v5731 = vmax.f32 %v5724, %v5729
        %v5733 = vrot.slane %v5725, 1
        %v5735 = vmax.f32 %v5725, %v5733
        %v5737 = vrot.slane %v5726, 1
        %v5739 = vmax.f32 %v5726, %v5737
        %v5741 = vrot.slane %v5727, 1
        %v5743 = vmax.f32 %v5727, %v5741
        %v5745 = vrot.slane %v5731, 1
        %v5747 = vrot.slane %v5731, 2
        %v5749 = vrot.slane %v5731, 3
        %v5752 = vrot.slane %v5735, 4
        %v5754 = vrot.slane %v5735, 5
        %v5756 = vrot.slane %v5735, 6
        %v5758 = vrot.slane %v5735, 7
        %v5761 = vrot.slane %v5739, 1
        %v5763 = vrot.slane %v5739, 2
        %v5765 = vrot.slane %v5739, 3
        %v5768 = vrot.slane %v5743, 4
        %v5770 = vsel %vm891, %v5731, %v5745
        %v5771 = vsel %vm5368, %v5770, %v5747
        %v5772 = vsel %vm5370, %v5771, %v5749
        %v5773 = vsel %vm5372, %v5772, %v5752
        %v5774 = vsel %vm5374, %v5773, %v5754
        %v5775 = vsel %vm707, %v5774, %v5756
        %v5776 = vsel %vm687, %v5775, %v5758
        %v5777 = vsel %vm891, %v5739, %v5761
        %v5778 = vsel %vm5368, %v5777, %v5763
        %v5779 = vsel %vm5370, %v5778, %v5765
        %v5780 = vsel %vm5372, %v5779, %v5768
        %v5781 = vmax.f32 %v3980, %v4171
        %v5782 = vmax.f32 %v3981, %v4172
        %v5783 = vmax.f32 %v3982, %v4173
        %v5784 = vmax.f32 %v3983, %v4174
        %v5786 = vrot.slane %v5781, 1
        %v5788 = vmax.f32 %v5781, %v5786
        %v5790 = vrot.slane %v5782, 1
        %v5792 = vmax.f32 %v5782, %v5790
        %v5794 = vrot.slane %v5783, 1
        %v5796 = vmax.f32 %v5783, %v5794
        %v5798 = vrot.slane %v5784, 1
        %v5800 = vmax.f32 %v5784, %v5798
        %v5802 = vrot.slane %v5788, 1
        %v5804 = vrot.slane %v5788, 2
        %v5806 = vrot.slane %v5788, 3
        %v5809 = vrot.slane %v5792, 4
        %v5811 = vrot.slane %v5792, 5
        %v5813 = vrot.slane %v5792, 6
        %v5815 = vrot.slane %v5792, 7
        %v5818 = vrot.slane %v5796, 1
        %v5820 = vrot.slane %v5796, 2
        %v5822 = vrot.slane %v5796, 3
        %v5825 = vrot.slane %v5800, 4
        %v5827 = vsel %vm891, %v5788, %v5802
        %v5828 = vsel %vm5368, %v5827, %v5804
        %v5829 = vsel %vm5370, %v5828, %v5806
        %v5830 = vsel %vm5372, %v5829, %v5809
        %v5831 = vsel %vm5374, %v5830, %v5811
        %v5832 = vsel %vm707, %v5831, %v5813
        %v5833 = vsel %vm687, %v5832, %v5815
        %v5834 = vsel %vm891, %v5796, %v5818
        %v5835 = vsel %vm5368, %v5834, %v5820
        %v5836 = vsel %vm5370, %v5835, %v5822
        %v5837 = vsel %vm5372, %v5836, %v5825
        %v5838 = vmax.f32 %v4362, %v4553
        %v5839 = vmax.f32 %v4363, %v4554
        %v5840 = vmax.f32 %v4364, %v4555
        %v5841 = vmax.f32 %v4365, %v4556
        %v5843 = vrot.slane %v5838, 1
        %v5845 = vmax.f32 %v5838, %v5843
        %v5847 = vrot.slane %v5839, 1
        %v5849 = vmax.f32 %v5839, %v5847
        %v5851 = vrot.slane %v5840, 1
        %v5853 = vmax.f32 %v5840, %v5851
        %v5855 = vrot.slane %v5841, 1
        %v5857 = vmax.f32 %v5841, %v5855
        %v5859 = vrot.slane %v5845, 1
        %v5861 = vrot.slane %v5845, 2
        %v5863 = vrot.slane %v5845, 3
        %v5866 = vrot.slane %v5849, 4
        %v5868 = vrot.slane %v5849, 5
        %v5870 = vrot.slane %v5849, 6
        %v5872 = vrot.slane %v5849, 7
        %v5875 = vrot.slane %v5853, 1
        %v5877 = vrot.slane %v5853, 2
        %v5879 = vrot.slane %v5853, 3
        %v5882 = vrot.slane %v5857, 4
        %v5884 = vsel %vm891, %v5845, %v5859
        %v5885 = vsel %vm5368, %v5884, %v5861
        %v5886 = vsel %vm5370, %v5885, %v5863
        %v5887 = vsel %vm5372, %v5886, %v5866
        %v5888 = vsel %vm5374, %v5887, %v5868
        %v5889 = vsel %vm707, %v5888, %v5870
        %v5890 = vsel %vm687, %v5889, %v5872
        %v5891 = vsel %vm891, %v5853, %v5875
        %v5892 = vsel %vm5368, %v5891, %v5877
        %v5893 = vsel %vm5370, %v5892, %v5879
        %v5894 = vsel %vm5372, %v5893, %v5882
        %v5895 = vmax.f32 %v4744, %v4935
        %v5896 = vmax.f32 %v4745, %v4936
        %v5897 = vmax.f32 %v4746, %v4937
        %v5898 = vmax.f32 %v4747, %v4938
        %v5900 = vrot.slane %v5895, 1
        %v5902 = vmax.f32 %v5895, %v5900
        %v5904 = vrot.slane %v5896, 1
        %v5906 = vmax.f32 %v5896, %v5904
        %v5908 = vrot.slane %v5897, 1
        %v5910 = vmax.f32 %v5897, %v5908
        %v5912 = vrot.slane %v5898, 1
        %v5914 = vmax.f32 %v5898, %v5912
        %v5916 = vrot.slane %v5902, 1
        %v5918 = vrot.slane %v5902, 2
        %v5920 = vrot.slane %v5902, 3
        %v5923 = vrot.slane %v5906, 4
        %v5925 = vrot.slane %v5906, 5
        %v5927 = vrot.slane %v5906, 6
        %v5929 = vrot.slane %v5906, 7
        %v5932 = vrot.slane %v5910, 1
        %v5934 = vrot.slane %v5910, 2
        %v5936 = vrot.slane %v5910, 3
        %v5939 = vrot.slane %v5914, 4
        %v5941 = vsel %vm891, %v5902, %v5916
        %v5942 = vsel %vm5368, %v5941, %v5918
        %v5943 = vsel %vm5370, %v5942, %v5920
        %v5944 = vsel %vm5372, %v5943, %v5923
        %v5945 = vsel %vm5374, %v5944, %v5925
        %v5946 = vsel %vm707, %v5945, %v5927
        %v5947 = vsel %vm687, %v5946, %v5929
        %v5948 = vsel %vm891, %v5910, %v5932
        %v5949 = vsel %vm5368, %v5948, %v5934
        %v5950 = vsel %vm5370, %v5949, %v5936
        %v5951 = vsel %vm5372, %v5950, %v5939
        %v5952 = vmax.f32 %v5126, %v5317
        %v5953 = vmax.f32 %v5127, %v5318
        %v5954 = vmax.f32 %v5128, %v5319
        %v5955 = vmax.f32 %v5129, %v5320
        %v5957 = vrot.slane %v5952, 1
        %v5959 = vmax.f32 %v5952, %v5957
        %v5961 = vrot.slane %v5953, 1
        %v5963 = vmax.f32 %v5953, %v5961
        %v5965 = vrot.slane %v5954, 1
        %v5967 = vmax.f32 %v5954, %v5965
        %v5969 = vrot.slane %v5955, 1
        %v5971 = vmax.f32 %v5955, %v5969
        %v5973 = vrot.slane %v5959, 1
        %v5975 = vrot.slane %v5959, 2
        %v5977 = vrot.slane %v5959, 3
        %v5980 = vrot.slane %v5963, 4
        %v5982 = vrot.slane %v5963, 5
        %v5984 = vrot.slane %v5963, 6
        %v5986 = vrot.slane %v5963, 7
        %v5989 = vrot.slane %v5967, 1
        %v5991 = vrot.slane %v5967, 2
        %v5993 = vrot.slane %v5967, 3
        %v5996 = vrot.slane %v5971, 4
        %v5998 = vsel %vm891, %v5959, %v5973
        %v5999 = vsel %vm5368, %v5998, %v5975
        %v6000 = vsel %vm5370, %v5999, %v5977
        %v6001 = vsel %vm5372, %v6000, %v5980
        %v6002 = vsel %vm5374, %v6001, %v5982
        %v6003 = vsel %vm707, %v6002, %v5984
        %v6004 = vsel %vm687, %v6003, %v5986
        %v6005 = vsel %vm891, %v5967, %v5989
        %v6006 = vsel %vm5368, %v6005, %v5991
        %v6007 = vsel %vm5370, %v6006, %v5993
        %v6008 = vsel %vm5372, %v6007, %v5996
        %v6011 = vrot.slane %v5377, 1
        %v6012 = vrot.slane %v5381, 1
        %v6013 = vsel %vm687, %v6011, %v6012
        %6014 = vrot.lane.b32.xlu0 %v6013, 32
        %v6015 = vpop.permute.xlu0 %6014
        %6016 = vrot.lane.b32.xlu0 %v6012, 32
        %v6017 = vpop.permute.xlu0 %6016
        %v6020 = vrot.slane %v5377, 2
        %v6021 = vrot.slane %v5381, 2
        %v6022 = vsel %vm707, %v6020, %v6021
        %6023 = vrot.lane.b32.xlu0 %v6022, 64
        %v6024 = vpop.permute.xlu0 %6023
        %6025 = vrot.lane.b32.xlu0 %v6021, 64
        %v6026 = vpop.permute.xlu0 %6025
        %6031 = vrot.lane.b32.xlu0 %v5434, 96
        %v6032 = vpop.permute.xlu0 %6031
        %6033 = vrot.lane.b32.xlu0 %v5438, 96
        %v6034 = vpop.permute.xlu0 %6033
        %v6037 = vrot.slane %v5434, 1
        %v6038 = vrot.slane %v5438, 1
        %v6039 = vsel %vm687, %v6037, %v6038
        %v6042 = vrot.slane %v5434, 2
        %v6043 = vrot.slane %v5438, 2
        %v6044 = vsel %vm707, %v6042, %v6043
        %6045 = vrot.lane.b32.xlu0 %v6044, 32
        %v6046 = vpop.permute.xlu0 %6045
        %6047 = vrot.lane.b32.xlu0 %v6043, 32
        %v6048 = vpop.permute.xlu0 %6047
        %6053 = vrot.lane.b32.xlu0 %v5491, 64
        %v6054 = vpop.permute.xlu0 %6053
        %6055 = vrot.lane.b32.xlu0 %v5495, 64
        %v6056 = vpop.permute.xlu0 %6055
        %v6059 = vrot.slane %v5491, 1
        %v6060 = vrot.slane %v5495, 1
        %v6061 = vsel %vm687, %v6059, %v6060
        %6062 = vrot.lane.b32.xlu0 %v6061, 96
        %v6063 = vpop.permute.xlu0 %6062
        %6064 = vrot.lane.b32.xlu0 %v6060, 96
        %v6065 = vpop.permute.xlu0 %6064
        %v6068 = vrot.slane %v5491, 2
        %v6069 = vrot.slane %v5495, 2
        %v6070 = vsel %vm707, %v6068, %v6069
        %vm6071 = vcmask 261120
        %v6072 = vsel %vm6071, %v5377, %v6015
        %v6073 = vsel %vm6071, %v5381, %v6017
        %vm6074 = vcmask 523264
        %v6075 = vsel %vm6074, %v6072, %v6024
        %v6076 = vsel %vm6074, %v6073, %v6026
        %vm6077 = vcmask 785408
        %v6078 = vsel %vm6077, %v6075, %v6032
        %v6079 = vsel %vm6077, %v6076, %v6034
        %v6080 = vsel %vm6071, %v6039, %v6046
        %v6081 = vsel %vm6071, %v6038, %v6048
        %v6082 = vsel %vm6074, %v6080, %v6054
        %v6083 = vsel %vm6074, %v6081, %v6056
        %v6084 = vsel %vm6077, %v6082, %v6063
        %v6085 = vsel %vm6077, %v6083, %v6065
        %v6087 = vperm.slane %v527, 0
        %v6089 = vsel %vm6071, %v6070, 0
        %v6091 = vsel %vm6071, %v6069, 0
        %6093 = vmatpush.msra.mxu0 %v506
        %6094 = vmatpush.msra.mxu0 %v505
        %6095 = vmatpush.msra.mxu0 %v504
        %6096 = vmatpush.msra.mxu0 %v503
        %6097 = vmatpush.msra.mxu0 %v502
        %6098 = vmatpush.msra.mxu0 %v501
        %6099 = vmatpush.msra.mxu0 %v500
        %6100 = vmatpush.msra.mxu0 %v499
        %6101 = vmatpush.msra.mxu0 %v498
        %6102 = vmatpush.msra.mxu0 %v497
        %6103 = vmatpush.msra.mxu0 %v496
        %6104 = vmatpush.msra.mxu0 %v495
        %6105 = vmatpush.msra.mxu0 %v494
        %6106 = vmatpush.msra.mxu0 %v493
        %6107 = vmatpush.msra.mxu0 %v492
        %6108 = vmatpush.msra.mxu0 %v491
        %6109 = vmatmul.f32.gmra.mxu0 %v6078
        %v6110 = vpop.f32.mrf.mxu0
        %v6111 = vadd.f32 %v6087, %v6110
        %6112 = vmatmul.f32.gmra.mxu0 %v6079
        %v6113 = vpop.f32.mrf.mxu0
        %v6114 = vadd.f32 %v6087, %v6113
        %6115 = vdwg.mxu0
        %6116 = vmatpush.msra.mxu0 %v522
        %6117 = vmatpush.msra.mxu0 %v521
        %6118 = vmatpush.msra.mxu0 %v520
        %6119 = vmatpush.msra.mxu0 %v519
        %6120 = vmatpush.msra.mxu0 %v518
        %6121 = vmatpush.msra.mxu0 %v517
        %6122 = vmatpush.msra.mxu0 %v516
        %6123 = vmatpush.msra.mxu0 %v515
        %6124 = vmatpush.msra.mxu0 %v514
        %6125 = vmatpush.msra.mxu0 %v513
        %6126 = vmatpush.msra.mxu0 %v512
        %6127 = vmatpush.msra.mxu0 %v511
        %6128 = vmatpush.msra.mxu0 %v510
        %6129 = vmatpush.msra.mxu0 %v509
        %6130 = vmatpush.msra.mxu0 %v508
        %6131 = vmatpush.msra.mxu0 %v507
        %6132 = vmatmul.f32.gmra.mxu0 %v6084
        %v6133 = vpop.f32.mrf.mxu0
        %v6134 = vadd.f32 %v6111, %v6133
        %6135 = vmatmul.f32.gmra.mxu0 %v6085
        %v6136 = vpop.f32.mrf.mxu0
        %v6137 = vadd.f32 %v6114, %v6136
        %6138 = vdwg.mxu0
        %6139 = vmatpush.msra.mxu0 0.0
        %6140 = vmatpush.msra.mxu0 0.0
        %6141 = vmatpush.msra.mxu0 0.0
        %6142 = vmatpush.msra.mxu0 0.0
        %6143 = vmatpush.msra.mxu0 0.0
        %6144 = vmatpush.msra.mxu0 0.0
        %6145 = vmatpush.msra.mxu0 0.0
        %6146 = vmatpush.msra.mxu0 0.0
        %6147 = vmatpush.msra.mxu0 0.0
        %6148 = vmatpush.msra.mxu0 0.0
        %6149 = vmatpush.msra.mxu0 0.0
        %6150 = vmatpush.msra.mxu0 0.0
        %6151 = vmatpush.msra.mxu0 %v526
        %6152 = vmatpush.msra.mxu0 %v525
        %6153 = vmatpush.msra.mxu0 %v524
        %6154 = vmatpush.msra.mxu0 %v523
        %6155 = vmatmul.f32.gmra.mxu0 %v6089
        %v6156 = vpop.f32.mrf.mxu0
        %v6157 = vadd.f32 %v6134, %v6156
        %6158 = vmatmul.f32.gmra.mxu0 %v6091
        %v6159 = vpop.f32.mrf.mxu0
        %v6160 = vadd.f32 %v6137, %v6159
        %6161 = vdwg.mxu0
        %v6162 = vmax.f32 %v6157, 0.0
        %v6163 = vmax.f32 %v6160, 0.0
        %6164 = vrot.lane.b32.xlu0 %v6039, 32
        %v6165 = vpop.permute.xlu0 %6164
        %6166 = vrot.lane.b32.xlu0 %v6038, 32
        %v6167 = vpop.permute.xlu0 %6166
        %6170 = vrot.lane.b32.xlu0 %v6044, 64
        %v6171 = vpop.permute.xlu0 %6170
        %6172 = vrot.lane.b32.xlu0 %v6043, 64
        %v6173 = vpop.permute.xlu0 %6172
        %6176 = vrot.lane.b32.xlu0 %v5491, 96
        %v6177 = vpop.permute.xlu0 %6176
        %6178 = vrot.lane.b32.xlu0 %v5495, 96
        %v6179 = vpop.permute.xlu0 %6178
        %6184 = vrot.lane.b32.xlu0 %v6070, 32
        %v6185 = vpop.permute.xlu0 %6184
        %6186 = vrot.lane.b32.xlu0 %v6069, 32
        %v6187 = vpop.permute.xlu0 %6186
        %6192 = vrot.lane.b32.xlu0 %v5548, 64
        %v6193 = vpop.permute.xlu0 %6192
        %6194 = vrot.lane.b32.xlu0 %v5552, 64
        %v6195 = vpop.permute.xlu0 %6194
        %v6198 = vrot.slane %v5548, 1
        %v6199 = vrot.slane %v5552, 1
        %v6200 = vsel %vm687, %v6198, %v6199
        %6201 = vrot.lane.b32.xlu0 %v6200, 96
        %v6202 = vpop.permute.xlu0 %6201
        %6203 = vrot.lane.b32.xlu0 %v6199, 96
        %v6204 = vpop.permute.xlu0 %6203
        %v6207 = vrot.slane %v5548, 2
        %v6208 = vrot.slane %v5552, 2
        %v6209 = vsel %vm707, %v6207, %v6208
        %v6210 = vsel %vm6071, %v5434, %v6165
        %v6211 = vsel %vm6071, %v5438, %v6167
        %v6212 = vsel %vm6074, %v6210, %v6171
        %v6213 = vsel %vm6074, %v6211, %v6173
        %v6214 = vsel %vm6077, %v6212, %v6177
        %v6215 = vsel %vm6077, %v6213, %v6179
        %v6216 = vsel %vm6071, %v6061, %v6185
        %v6217 = vsel %vm6071, %v6060, %v6187
        %v6218 = vsel %vm6074, %v6216, %v6193
        %v6219 = vsel %vm6074, %v6217, %v6195
        %v6220 = vsel %vm6077, %v6218, %v6202
        %v6221 = vsel %vm6077, %v6219, %v6204
        %v6222 = vsel %vm6071, %v6209, 0
        %v6224 = vsel %vm6071, %v6208, 0
        %6226 = vmatpush.msra.mxu0 %v506
        %6227 = vmatpush.msra.mxu0 %v505
        %6228 = vmatpush.msra.mxu0 %v504
        %6229 = vmatpush.msra.mxu0 %v503
        %6230 = vmatpush.msra.mxu0 %v502
        %6231 = vmatpush.msra.mxu0 %v501
        %6232 = vmatpush.msra.mxu0 %v500
        %6233 = vmatpush.msra.mxu0 %v499
        %6234 = vmatpush.msra.mxu0 %v498
        %6235 = vmatpush.msra.mxu0 %v497
        %6236 = vmatpush.msra.mxu0 %v496
        %6237 = vmatpush.msra.mxu0 %v495
        %6238 = vmatpush.msra.mxu0 %v494
        %6239 = vmatpush.msra.mxu0 %v493
        %6240 = vmatpush.msra.mxu0 %v492
        %6241 = vmatpush.msra.mxu0 %v491
        %6242 = vmatmul.f32.gmra.mxu0 %v6214
        %v6243 = vpop.f32.mrf.mxu0
        %v6244 = vadd.f32 %v6087, %v6243
        %6245 = vmatmul.f32.gmra.mxu0 %v6215
        %v6246 = vpop.f32.mrf.mxu0
        %v6247 = vadd.f32 %v6087, %v6246
        %6248 = vdwg.mxu0
        %6249 = vmatpush.msra.mxu0 %v522
        %6250 = vmatpush.msra.mxu0 %v521
        %6251 = vmatpush.msra.mxu0 %v520
        %6252 = vmatpush.msra.mxu0 %v519
        %6253 = vmatpush.msra.mxu0 %v518
        %6254 = vmatpush.msra.mxu0 %v517
        %6255 = vmatpush.msra.mxu0 %v516
        %6256 = vmatpush.msra.mxu0 %v515
        %6257 = vmatpush.msra.mxu0 %v514
        %6258 = vmatpush.msra.mxu0 %v513
        %6259 = vmatpush.msra.mxu0 %v512
        %6260 = vmatpush.msra.mxu0 %v511
        %6261 = vmatpush.msra.mxu0 %v510
        %6262 = vmatpush.msra.mxu0 %v509
        %6263 = vmatpush.msra.mxu0 %v508
        %6264 = vmatpush.msra.mxu0 %v507
        %6265 = vmatmul.f32.gmra.mxu0 %v6220
        %v6266 = vpop.f32.mrf.mxu0
        %v6267 = vadd.f32 %v6244, %v6266
        %6268 = vmatmul.f32.gmra.mxu0 %v6221
        %v6269 = vpop.f32.mrf.mxu0
        %v6270 = vadd.f32 %v6247, %v6269
        %6271 = vdwg.mxu0
        %6272 = vmatpush.msra.mxu0 0.0
        %6273 = vmatpush.msra.mxu0 0.0
        %6274 = vmatpush.msra.mxu0 0.0
        %6275 = vmatpush.msra.mxu0 0.0
        %6276 = vmatpush.msra.mxu0 0.0
        %6277 = vmatpush.msra.mxu0 0.0
        %6278 = vmatpush.msra.mxu0 0.0
        %6279 = vmatpush.msra.mxu0 0.0
        %6280 = vmatpush.msra.mxu0 0.0
        %6281 = vmatpush.msra.mxu0 0.0
        %6282 = vmatpush.msra.mxu0 0.0
        %6283 = vmatpush.msra.mxu0 0.0
        %6284 = vmatpush.msra.mxu0 %v526
        %6285 = vmatpush.msra.mxu0 %v525
        %6286 = vmatpush.msra.mxu0 %v524
        %6287 = vmatpush.msra.mxu0 %v523
        %6288 = vmatmul.f32.gmra.mxu0 %v6222
        %v6289 = vpop.f32.mrf.mxu0
        %v6290 = vadd.f32 %v6267, %v6289
        %6291 = vmatmul.f32.gmra.mxu0 %v6224
        %v6292 = vpop.f32.mrf.mxu0
        %v6293 = vadd.f32 %v6270, %v6292
        %6294 = vdwg.mxu0
        %v6295 = vmax.f32 %v6290, 0.0
        %v6296 = vmax.f32 %v6293, 0.0
        %6297 = vrot.lane.b32.xlu0 %v6061, 32
        %v6298 = vpop.permute.xlu0 %6297
        %6299 = vrot.lane.b32.xlu0 %v6060, 32
        %v6300 = vpop.permute.xlu0 %6299
        %6303 = vrot.lane.b32.xlu0 %v6070, 64
        %v6304 = vpop.permute.xlu0 %6303
        %6305 = vrot.lane.b32.xlu0 %v6069, 64
        %v6306 = vpop.permute.xlu0 %6305
        %6309 = vrot.lane.b32.xlu0 %v5548, 96
        %v6310 = vpop.permute.xlu0 %6309
        %6311 = vrot.lane.b32.xlu0 %v5552, 96
        %v6312 = vpop.permute.xlu0 %6311
        %6317 = vrot.lane.b32.xlu0 %v6209, 32
        %v6318 = vpop.permute.xlu0 %6317
        %6319 = vrot.lane.b32.xlu0 %v6208, 32
        %v6320 = vpop.permute.xlu0 %6319
        %6325 = vrot.lane.b32.xlu0 %v5605, 64
        %v6326 = vpop.permute.xlu0 %6325
        %6327 = vrot.lane.b32.xlu0 %v5609, 64
        %v6328 = vpop.permute.xlu0 %6327
        %v6331 = vrot.slane %v5605, 1
        %v6332 = vrot.slane %v5609, 1
        %v6333 = vsel %vm687, %v6331, %v6332
        %6334 = vrot.lane.b32.xlu0 %v6333, 96
        %v6335 = vpop.permute.xlu0 %6334
        %6336 = vrot.lane.b32.xlu0 %v6332, 96
        %v6337 = vpop.permute.xlu0 %6336
        %v6340 = vrot.slane %v5605, 2
        %v6341 = vrot.slane %v5609, 2
        %v6342 = vsel %vm707, %v6340, %v6341
        %v6343 = vsel %vm6071, %v5491, %v6298
        %v6344 = vsel %vm6071, %v5495, %v6300
        %v6345 = vsel %vm6074, %v6343, %v6304
        %v6346 = vsel %vm6074, %v6344, %v6306
        %v6347 = vsel %vm6077, %v6345, %v6310
        %v6348 = vsel %vm6077, %v6346, %v6312
        %v6349 = vsel %vm6071, %v6200, %v6318
        %v6350 = vsel %vm6071, %v6199, %v6320
        %v6351 = vsel %vm6074, %v6349, %v6326
        %v6352 = vsel %vm6074, %v6350, %v6328
        %v6353 = vsel %vm6077, %v6351, %v6335
        %v6354 = vsel %vm6077, %v6352, %v6337
        %v6355 = vsel %vm6071, %v6342, 0
        %v6357 = vsel %vm6071, %v6341, 0
        %6359 = vmatpush.msra.mxu0 %v506
        %6360 = vmatpush.msra.mxu0 %v505
        %6361 = vmatpush.msra.mxu0 %v504
        %6362 = vmatpush.msra.mxu0 %v503
        %6363 = vmatpush.msra.mxu0 %v502
        %6364 = vmatpush.msra.mxu0 %v501
        %6365 = vmatpush.msra.mxu0 %v500
        %6366 = vmatpush.msra.mxu0 %v499
        %6367 = vmatpush.msra.mxu0 %v498
        %6368 = vmatpush.msra.mxu0 %v497
        %6369 = vmatpush.msra.mxu0 %v496
        %6370 = vmatpush.msra.mxu0 %v495
        %6371 = vmatpush.msra.mxu0 %v494
        %6372 = vmatpush.msra.mxu0 %v493
        %6373 = vmatpush.msra.mxu0 %v492
        %6374 = vmatpush.msra.mxu0 %v491
        %6375 = vmatmul.f32.gmra.mxu0 %v6347
        %v6376 = vpop.f32.mrf.mxu0
        %v6377 = vadd.f32 %v6087, %v6376
        %6378 = vmatmul.f32.gmra.mxu0 %v6348
        %v6379 = vpop.f32.mrf.mxu0
        %v6380 = vadd.f32 %v6087, %v6379
        %6381 = vdwg.mxu0
        %6382 = vmatpush.msra.mxu0 %v522
        %6383 = vmatpush.msra.mxu0 %v521
        %6384 = vmatpush.msra.mxu0 %v520
        %6385 = vmatpush.msra.mxu0 %v519
        %6386 = vmatpush.msra.mxu0 %v518
        %6387 = vmatpush.msra.mxu0 %v517
        %6388 = vmatpush.msra.mxu0 %v516
        %6389 = vmatpush.msra.mxu0 %v515
        %6390 = vmatpush.msra.mxu0 %v514
        %6391 = vmatpush.msra.mxu0 %v513
        %6392 = vmatpush.msra.mxu0 %v512
        %6393 = vmatpush.msra.mxu0 %v511
        %6394 = vmatpush.msra.mxu0 %v510
        %6395 = vmatpush.msra.mxu0 %v509
        %6396 = vmatpush.msra.mxu0 %v508
        %6397 = vmatpush.msra.mxu0 %v507
        %6398 = vmatmul.f32.gmra.mxu0 %v6353
        %v6399 = vpop.f32.mrf.mxu0
        %v6400 = vadd.f32 %v6377, %v6399
        %6401 = vmatmul.f32.gmra.mxu0 %v6354
        %v6402 = vpop.f32.mrf.mxu0
        %v6403 = vadd.f32 %v6380, %v6402
        %6404 = vdwg.mxu0
        %6405 = vmatpush.msra.mxu0 0.0
        %6406 = vmatpush.msra.mxu0 0.0
        %6407 = vmatpush.msra.mxu0 0.0
        %6408 = vmatpush.msra.mxu0 0.0
        %6409 = vmatpush.msra.mxu0 0.0
        %6410 = vmatpush.msra.mxu0 0.0
        %6411 = vmatpush.msra.mxu0 0.0
        %6412 = vmatpush.msra.mxu0 0.0
        %6413 = vmatpush.msra.mxu0 0.0
        %6414 = vmatpush.msra.mxu0 0.0
        %6415 = vmatpush.msra.mxu0 0.0
        %6416 = vmatpush.msra.mxu0 0.0
        %6417 = vmatpush.msra.mxu0 %v526
        %6418 = vmatpush.msra.mxu0 %v525
        %6419 = vmatpush.msra.mxu0 %v524
        %6420 = vmatpush.msra.mxu0 %v523
        %6421 = vmatmul.f32.gmra.mxu0 %v6355
        %v6422 = vpop.f32.mrf.mxu0
        %v6423 = vadd.f32 %v6400, %v6422
        %6424 = vmatmul.f32.gmra.mxu0 %v6357
        %v6425 = vpop.f32.mrf.mxu0
        %v6426 = vadd.f32 %v6403, %v6425
        %6427 = vdwg.mxu0
        %v6428 = vmax.f32 %v6423, 0.0
        %v6429 = vmax.f32 %v6426, 0.0
        %6430 = vrot.lane.b32.xlu0 %v6200, 32
        %v6431 = vpop.permute.xlu0 %6430
        %6432 = vrot.lane.b32.xlu0 %v6199, 32
        %v6433 = vpop.permute.xlu0 %6432
        %6436 = vrot.lane.b32.xlu0 %v6209, 64
        %v6437 = vpop.permute.xlu0 %6436
        %6438 = vrot.lane.b32.xlu0 %v6208, 64
        %v6439 = vpop.permute.xlu0 %6438
        %6442 = vrot.lane.b32.xlu0 %v5605, 96
        %v6443 = vpop.permute.xlu0 %6442
        %6444 = vrot.lane.b32.xlu0 %v5609, 96
        %v6445 = vpop.permute.xlu0 %6444
        %6450 = vrot.lane.b32.xlu0 %v6342, 32
        %v6451 = vpop.permute.xlu0 %6450
        %6452 = vrot.lane.b32.xlu0 %v6341, 32
        %v6453 = vpop.permute.xlu0 %6452
        %6458 = vrot.lane.b32.xlu0 %v5662, 64
        %v6459 = vpop.permute.xlu0 %6458
        %6460 = vrot.lane.b32.xlu0 %v5666, 64
        %v6461 = vpop.permute.xlu0 %6460
        %v6464 = vrot.slane %v5662, 1
        %v6465 = vrot.slane %v5666, 1
        %v6466 = vsel %vm687, %v6464, %v6465
        %6467 = vrot.lane.b32.xlu0 %v6466, 96
        %v6468 = vpop.permute.xlu0 %6467
        %6469 = vrot.lane.b32.xlu0 %v6465, 96
        %v6470 = vpop.permute.xlu0 %6469
        %v6473 = vrot.slane %v5662, 2
        %v6474 = vrot.slane %v5666, 2
        %v6475 = vsel %vm707, %v6473, %v6474
        %v6476 = vsel %vm6071, %v5548, %v6431
        %v6477 = vsel %vm6071, %v5552, %v6433
        %v6478 = vsel %vm6074, %v6476, %v6437
        %v6479 = vsel %vm6074, %v6477, %v6439
        %v6480 = vsel %vm6077, %v6478, %v6443
        %v6481 = vsel %vm6077, %v6479, %v6445
        %v6482 = vsel %vm6071, %v6333, %v6451
        %v6483 = vsel %vm6071, %v6332, %v6453
        %v6484 = vsel %vm6074, %v6482, %v6459
        %v6485 = vsel %vm6074, %v6483, %v6461
        %v6486 = vsel %vm6077, %v6484, %v6468
        %v6487 = vsel %vm6077, %v6485, %v6470
        %v6488 = vsel %vm6071, %v6475, 0
        %v6490 = vsel %vm6071, %v6474, 0
        %6492 = vmatpush.msra.mxu0 %v506
        %6493 = vmatpush.msra.mxu0 %v505
        %6494 = vmatpush.msra.mxu0 %v504
        %6495 = vmatpush.msra.mxu0 %v503
        %6496 = vmatpush.msra.mxu0 %v502
        %6497 = vmatpush.msra.mxu0 %v501
        %6498 = vmatpush.msra.mxu0 %v500
        %6499 = vmatpush.msra.mxu0 %v499
        %6500 = vmatpush.msra.mxu0 %v498
        %6501 = vmatpush.msra.mxu0 %v497
        %6502 = vmatpush.msra.mxu0 %v496
        %6503 = vmatpush.msra.mxu0 %v495
        %6504 = vmatpush.msra.mxu0 %v494
        %6505 = vmatpush.msra.mxu0 %v493
        %6506 = vmatpush.msra.mxu0 %v492
        %6507 = vmatpush.msra.mxu0 %v491
        %6508 = vmatmul.f32.gmra.mxu0 %v6480
        %v6509 = vpop.f32.mrf.mxu0
        %v6510 = vadd.f32 %v6087, %v6509
        %6511 = vmatmul.f32.gmra.mxu0 %v6481
        %v6512 = vpop.f32.mrf.mxu0
        %v6513 = vadd.f32 %v6087, %v6512
        %6514 = vdwg.mxu0
        %6515 = vmatpush.msra.mxu0 %v522
        %6516 = vmatpush.msra.mxu0 %v521
        %6517 = vmatpush.msra.mxu0 %v520
        %6518 = vmatpush.msra.mxu0 %v519
        %6519 = vmatpush.msra.mxu0 %v518
        %6520 = vmatpush.msra.mxu0 %v517
        %6521 = vmatpush.msra.mxu0 %v516
        %6522 = vmatpush.msra.mxu0 %v515
        %6523 = vmatpush.msra.mxu0 %v514
        %6524 = vmatpush.msra.mxu0 %v513
        %6525 = vmatpush.msra.mxu0 %v512
        %6526 = vmatpush.msra.mxu0 %v511
        %6527 = vmatpush.msra.mxu0 %v510
        %6528 = vmatpush.msra.mxu0 %v509
        %6529 = vmatpush.msra.mxu0 %v508
        %6530 = vmatpush.msra.mxu0 %v507
        %6531 = vmatmul.f32.gmra.mxu0 %v6486
        %v6532 = vpop.f32.mrf.mxu0
        %v6533 = vadd.f32 %v6510, %v6532
        %6534 = vmatmul.f32.gmra.mxu0 %v6487
        %v6535 = vpop.f32.mrf.mxu0
        %v6536 = vadd.f32 %v6513, %v6535
        %6537 = vdwg.mxu0
        %6538 = vmatpush.msra.mxu0 0.0
        %6539 = vmatpush.msra.mxu0 0.0
        %6540 = vmatpush.msra.mxu0 0.0
        %6541 = vmatpush.msra.mxu0 0.0
        %6542 = vmatpush.msra.mxu0 0.0
        %6543 = vmatpush.msra.mxu0 0.0
        %6544 = vmatpush.msra.mxu0 0.0
        %6545 = vmatpush.msra.mxu0 0.0
        %6546 = vmatpush.msra.mxu0 0.0
        %6547 = vmatpush.msra.mxu0 0.0
        %6548 = vmatpush.msra.mxu0 0.0
        %6549 = vmatpush.msra.mxu0 0.0
        %6550 = vmatpush.msra.mxu0 %v526
        %6551 = vmatpush.msra.mxu0 %v525
        %6552 = vmatpush.msra.mxu0 %v524
        %6553 = vmatpush.msra.mxu0 %v523
        %6554 = vmatmul.f32.gmra.mxu0 %v6488
        %v6555 = vpop.f32.mrf.mxu0
        %v6556 = vadd.f32 %v6533, %v6555
        %6557 = vmatmul.f32.gmra.mxu0 %v6490
        %v6558 = vpop.f32.mrf.mxu0
        %v6559 = vadd.f32 %v6536, %v6558
        %6560 = vdwg.mxu0
        %v6561 = vmax.f32 %v6556, 0.0
        %v6562 = vmax.f32 %v6559, 0.0
        %6563 = vrot.lane.b32.xlu0 %v6333, 32
        %v6564 = vpop.permute.xlu0 %6563
        %6565 = vrot.lane.b32.xlu0 %v6332, 32
        %v6566 = vpop.permute.xlu0 %6565
        %6569 = vrot.lane.b32.xlu0 %v6342, 64
        %v6570 = vpop.permute.xlu0 %6569
        %6571 = vrot.lane.b32.xlu0 %v6341, 64
        %v6572 = vpop.permute.xlu0 %6571
        %6575 = vrot.lane.b32.xlu0 %v5662, 96
        %v6576 = vpop.permute.xlu0 %6575
        %6577 = vrot.lane.b32.xlu0 %v5666, 96
        %v6578 = vpop.permute.xlu0 %6577
        %6583 = vrot.lane.b32.xlu0 %v6475, 32
        %v6584 = vpop.permute.xlu0 %6583
        %6585 = vrot.lane.b32.xlu0 %v6474, 32
        %v6586 = vpop.permute.xlu0 %6585
        %6591 = vrot.lane.b32.xlu0 %v5719, 64
        %v6592 = vpop.permute.xlu0 %6591
        %6593 = vrot.lane.b32.xlu0 %v5723, 64
        %v6594 = vpop.permute.xlu0 %6593
        %v6597 = vrot.slane %v5719, 1
        %v6598 = vrot.slane %v5723, 1
        %v6599 = vsel %vm687, %v6597, %v6598
        %6600 = vrot.lane.b32.xlu0 %v6599, 96
        %v6601 = vpop.permute.xlu0 %6600
        %6602 = vrot.lane.b32.xlu0 %v6598, 96
        %v6603 = vpop.permute.xlu0 %6602
        %v6606 = vrot.slane %v5719, 2
        %v6607 = vrot.slane %v5723, 2
        %v6608 = vsel %vm707, %v6606, %v6607
        %v6609 = vsel %vm6071, %v5605, %v6564
        %v6610 = vsel %vm6071, %v5609, %v6566
        %v6611 = vsel %vm6074, %v6609, %v6570
        %v6612 = vsel %vm6074, %v6610, %v6572
        %v6613 = vsel %vm6077, %v6611, %v6576
        %v6614 = vsel %vm6077, %v6612, %v6578
        %v6615 = vsel %vm6071, %v6466, %v6584
        %v6616 = vsel %vm6071, %v6465, %v6586
        %v6617 = vsel %vm6074, %v6615, %v6592
        %v6618 = vsel %vm6074, %v6616, %v6594
        %v6619 = vsel %vm6077, %v6617, %v6601
        %v6620 = vsel %vm6077, %v6618, %v6603
        %v6621 = vsel %vm6071, %v6608, 0
        %v6623 = vsel %vm6071, %v6607, 0
        %6625 = vmatpush.msra.mxu0 %v506
        %6626 = vmatpush.msra.mxu0 %v505
        %6627 = vmatpush.msra.mxu0 %v504
        %6628 = vmatpush.msra.mxu0 %v503
        %6629 = vmatpush.msra.mxu0 %v502
        %6630 = vmatpush.msra.mxu0 %v501
        %6631 = vmatpush.msra.mxu0 %v500
        %6632 = vmatpush.msra.mxu0 %v499
        %6633 = vmatpush.msra.mxu0 %v498
        %6634 = vmatpush.msra.mxu0 %v497
        %6635 = vmatpush.msra.mxu0 %v496
        %6636 = vmatpush.msra.mxu0 %v495
        %6637 = vmatpush.msra.mxu0 %v494
        %6638 = vmatpush.msra.mxu0 %v493
        %6639 = vmatpush.msra.mxu0 %v492
        %6640 = vmatpush.msra.mxu0 %v491
        %6641 = vmatmul.f32.gmra.mxu0 %v6613
        %v6642 = vpop.f32.mrf.mxu0
        %v6643 = vadd.f32 %v6087, %v6642
        %6644 = vmatmul.f32.gmra.mxu0 %v6614
        %v6645 = vpop.f32.mrf.mxu0
        %v6646 = vadd.f32 %v6087, %v6645
        %6647 = vdwg.mxu0
        %6648 = vmatpush.msra.mxu0 %v522
        %6649 = vmatpush.msra.mxu0 %v521
        %6650 = vmatpush.msra.mxu0 %v520
        %6651 = vmatpush.msra.mxu0 %v519
        %6652 = vmatpush.msra.mxu0 %v518
        %6653 = vmatpush.msra.mxu0 %v517
        %6654 = vmatpush.msra.mxu0 %v516
        %6655 = vmatpush.msra.mxu0 %v515
        %6656 = vmatpush.msra.mxu0 %v514
        %6657 = vmatpush.msra.mxu0 %v513
        %6658 = vmatpush.msra.mxu0 %v512
        %6659 = vmatpush.msra.mxu0 %v511
        %6660 = vmatpush.msra.mxu0 %v510
        %6661 = vmatpush.msra.mxu0 %v509
        %6662 = vmatpush.msra.mxu0 %v508
        %6663 = vmatpush.msra.mxu0 %v507
        %6664 = vmatmul.f32.gmra.mxu0 %v6619
        %v6665 = vpop.f32.mrf.mxu0
        %v6666 = vadd.f32 %v6643, %v6665
        %6667 = vmatmul.f32.gmra.mxu0 %v6620
        %v6668 = vpop.f32.mrf.mxu0
        %v6669 = vadd.f32 %v6646, %v6668
        %6670 = vdwg.mxu0
        %6671 = vmatpush.msra.mxu0 0.0
        %6672 = vmatpush.msra.mxu0 0.0
        %6673 = vmatpush.msra.mxu0 0.0
        %6674 = vmatpush.msra.mxu0 0.0
        %6675 = vmatpush.msra.mxu0 0.0
        %6676 = vmatpush.msra.mxu0 0.0
        %6677 = vmatpush.msra.mxu0 0.0
        %6678 = vmatpush.msra.mxu0 0.0
        %6679 = vmatpush.msra.mxu0 0.0
        %6680 = vmatpush.msra.mxu0 0.0
        %6681 = vmatpush.msra.mxu0 0.0
        %6682 = vmatpush.msra.mxu0 0.0
        %6683 = vmatpush.msra.mxu0 %v526
        %6684 = vmatpush.msra.mxu0 %v525
        %6685 = vmatpush.msra.mxu0 %v524
        %6686 = vmatpush.msra.mxu0 %v523
        %6687 = vmatmul.f32.gmra.mxu0 %v6621
        %v6688 = vpop.f32.mrf.mxu0
        %v6689 = vadd.f32 %v6666, %v6688
        %6690 = vmatmul.f32.gmra.mxu0 %v6623
        %v6691 = vpop.f32.mrf.mxu0
        %v6692 = vadd.f32 %v6669, %v6691
        %6693 = vdwg.mxu0
        %v6694 = vmax.f32 %v6689, 0.0
        %v6695 = vmax.f32 %v6692, 0.0
        %6696 = vrot.lane.b32.xlu0 %v6466, 32
        %v6697 = vpop.permute.xlu0 %6696
        %6698 = vrot.lane.b32.xlu0 %v6465, 32
        %v6699 = vpop.permute.xlu0 %6698
        %6702 = vrot.lane.b32.xlu0 %v6475, 64
        %v6703 = vpop.permute.xlu0 %6702
        %6704 = vrot.lane.b32.xlu0 %v6474, 64
        %v6705 = vpop.permute.xlu0 %6704
        %6708 = vrot.lane.b32.xlu0 %v5719, 96
        %v6709 = vpop.permute.xlu0 %6708
        %6710 = vrot.lane.b32.xlu0 %v5723, 96
        %v6711 = vpop.permute.xlu0 %6710
        %6716 = vrot.lane.b32.xlu0 %v6608, 32
        %v6717 = vpop.permute.xlu0 %6716
        %6718 = vrot.lane.b32.xlu0 %v6607, 32
        %v6719 = vpop.permute.xlu0 %6718
        %6724 = vrot.lane.b32.xlu0 %v5776, 64
        %v6725 = vpop.permute.xlu0 %6724
        %6726 = vrot.lane.b32.xlu0 %v5780, 64
        %v6727 = vpop.permute.xlu0 %6726
        %v6730 = vrot.slane %v5776, 1
        %v6731 = vrot.slane %v5780, 1
        %v6732 = vsel %vm687, %v6730, %v6731
        %6733 = vrot.lane.b32.xlu0 %v6732, 96
        %v6734 = vpop.permute.xlu0 %6733
        %6735 = vrot.lane.b32.xlu0 %v6731, 96
        %v6736 = vpop.permute.xlu0 %6735
        %v6739 = vrot.slane %v5776, 2
        %v6740 = vrot.slane %v5780, 2
        %v6741 = vsel %vm707, %v6739, %v6740
        %v6742 = vsel %vm6071, %v5662, %v6697
        %v6743 = vsel %vm6071, %v5666, %v6699
        %v6744 = vsel %vm6074, %v6742, %v6703
        %v6745 = vsel %vm6074, %v6743, %v6705
        %v6746 = vsel %vm6077, %v6744, %v6709
        %v6747 = vsel %vm6077, %v6745, %v6711
        %v6748 = vsel %vm6071, %v6599, %v6717
        %v6749 = vsel %vm6071, %v6598, %v6719
        %v6750 = vsel %vm6074, %v6748, %v6725
        %v6751 = vsel %vm6074, %v6749, %v6727
        %v6752 = vsel %vm6077, %v6750, %v6734
        %v6753 = vsel %vm6077, %v6751, %v6736
        %v6754 = vsel %vm6071, %v6741, 0
        %v6756 = vsel %vm6071, %v6740, 0
        %6758 = vmatpush.msra.mxu0 %v506
        %6759 = vmatpush.msra.mxu0 %v505
        %6760 = vmatpush.msra.mxu0 %v504
        %6761 = vmatpush.msra.mxu0 %v503
        %6762 = vmatpush.msra.mxu0 %v502
        %6763 = vmatpush.msra.mxu0 %v501
        %6764 = vmatpush.msra.mxu0 %v500
        %6765 = vmatpush.msra.mxu0 %v499
        %6766 = vmatpush.msra.mxu0 %v498
        %6767 = vmatpush.msra.mxu0 %v497
        %6768 = vmatpush.msra.mxu0 %v496
        %6769 = vmatpush.msra.mxu0 %v495
        %6770 = vmatpush.msra.mxu0 %v494
        %6771 = vmatpush.msra.mxu0 %v493
        %6772 = vmatpush.msra.mxu0 %v492
        %6773 = vmatpush.msra.mxu0 %v491
        %6774 = vmatmul.f32.gmra.mxu0 %v6746
        %v6775 = vpop.f32.mrf.mxu0
        %v6776 = vadd.f32 %v6087, %v6775
        %6777 = vmatmul.f32.gmra.mxu0 %v6747
        %v6778 = vpop.f32.mrf.mxu0
        %v6779 = vadd.f32 %v6087, %v6778
        %6780 = vdwg.mxu0
        %6781 = vmatpush.msra.mxu0 %v522
        %6782 = vmatpush.msra.mxu0 %v521
        %6783 = vmatpush.msra.mxu0 %v520
        %6784 = vmatpush.msra.mxu0 %v519
        %6785 = vmatpush.msra.mxu0 %v518
        %6786 = vmatpush.msra.mxu0 %v517
        %6787 = vmatpush.msra.mxu0 %v516
        %6788 = vmatpush.msra.mxu0 %v515
        %6789 = vmatpush.msra.mxu0 %v514
        %6790 = vmatpush.msra.mxu0 %v513
        %6791 = vmatpush.msra.mxu0 %v512
        %6792 = vmatpush.msra.mxu0 %v511
        %6793 = vmatpush.msra.mxu0 %v510
        %6794 = vmatpush.msra.mxu0 %v509
        %6795 = vmatpush.msra.mxu0 %v508
        %6796 = vmatpush.msra.mxu0 %v507
        %6797 = vmatmul.f32.gmra.mxu0 %v6752
        %v6798 = vpop.f32.mrf.mxu0
        %v6799 = vadd.f32 %v6776, %v6798
        %6800 = vmatmul.f32.gmra.mxu0 %v6753
        %v6801 = vpop.f32.mrf.mxu0
        %v6802 = vadd.f32 %v6779, %v6801
        %6803 = vdwg.mxu0
        %6804 = vmatpush.msra.mxu0 0.0
        %6805 = vmatpush.msra.mxu0 0.0
        %6806 = vmatpush.msra.mxu0 0.0
        %6807 = vmatpush.msra.mxu0 0.0
        %6808 = vmatpush.msra.mxu0 0.0
        %6809 = vmatpush.msra.mxu0 0.0
        %6810 = vmatpush.msra.mxu0 0.0
        %6811 = vmatpush.msra.mxu0 0.0
        %6812 = vmatpush.msra.mxu0 0.0
        %6813 = vmatpush.msra.mxu0 0.0
        %6814 = vmatpush.msra.mxu0 0.0
        %6815 = vmatpush.msra.mxu0 0.0
        %6816 = vmatpush.msra.mxu0 %v526
        %6817 = vmatpush.msra.mxu0 %v525
        %6818 = vmatpush.msra.mxu0 %v524
        %6819 = vmatpush.msra.mxu0 %v523
        %6820 = vmatmul.f32.gmra.mxu0 %v6754
        %v6821 = vpop.f32.mrf.mxu0
        %v6822 = vadd.f32 %v6799, %v6821
        %6823 = vmatmul.f32.gmra.mxu0 %v6756
        %v6824 = vpop.f32.mrf.mxu0
        %v6825 = vadd.f32 %v6802, %v6824
        %6826 = vdwg.mxu0
        %v6827 = vmax.f32 %v6822, 0.0
        %v6828 = vmax.f32 %v6825, 0.0
        %6829 = vrot.lane.b32.xlu0 %v6599, 32
        %v6830 = vpop.permute.xlu0 %6829
        %6831 = vrot.lane.b32.xlu0 %v6598, 32
        %v6832 = vpop.permute.xlu0 %6831
        %6835 = vrot.lane.b32.xlu0 %v6608, 64
        %v6836 = vpop.permute.xlu0 %6835
        %6837 = vrot.lane.b32.xlu0 %v6607, 64
        %v6838 = vpop.permute.xlu0 %6837
        %6841 = vrot.lane.b32.xlu0 %v5776, 96
        %v6842 = vpop.permute.xlu0 %6841
        %6843 = vrot.lane.b32.xlu0 %v5780, 96
        %v6844 = vpop.permute.xlu0 %6843
        %6849 = vrot.lane.b32.xlu0 %v6741, 32
        %v6850 = vpop.permute.xlu0 %6849
        %6851 = vrot.lane.b32.xlu0 %v6740, 32
        %v6852 = vpop.permute.xlu0 %6851
        %6857 = vrot.lane.b32.xlu0 %v5833, 64
        %v6858 = vpop.permute.xlu0 %6857
        %6859 = vrot.lane.b32.xlu0 %v5837, 64
        %v6860 = vpop.permute.xlu0 %6859
        %v6863 = vrot.slane %v5833, 1
        %v6864 = vrot.slane %v5837, 1
        %v6865 = vsel %vm687, %v6863, %v6864
        %6866 = vrot.lane.b32.xlu0 %v6865, 96
        %v6867 = vpop.permute.xlu0 %6866
        %6868 = vrot.lane.b32.xlu0 %v6864, 96
        %v6869 = vpop.permute.xlu0 %6868
        %v6872 = vrot.slane %v5833, 2
        %v6873 = vrot.slane %v5837, 2
        %v6874 = vsel %vm707, %v6872, %v6873
        %v6875 = vsel %vm6071, %v5719, %v6830
        %v6876 = vsel %vm6071, %v5723, %v6832
        %v6877 = vsel %vm6074, %v6875, %v6836
        %v6878 = vsel %vm6074, %v6876, %v6838
        %v6879 = vsel %vm6077, %v6877, %v6842
        %v6880 = vsel %vm6077, %v6878, %v6844
        %v6881 = vsel %vm6071, %v6732, %v6850
        %v6882 = vsel %vm6071, %v6731, %v6852
        %v6883 = vsel %vm6074, %v6881, %v6858
        %v6884 = vsel %vm6074, %v6882, %v6860
        %v6885 = vsel %vm6077, %v6883, %v6867
        %v6886 = vsel %vm6077, %v6884, %v6869
        %v6887 = vsel %vm6071, %v6874, 0
        %v6889 = vsel %vm6071, %v6873, 0
        %6891 = vmatpush.msra.mxu0 %v506
        %6892 = vmatpush.msra.mxu0 %v505
        %6893 = vmatpush.msra.mxu0 %v504
        %6894 = vmatpush.msra.mxu0 %v503
        %6895 = vmatpush.msra.mxu0 %v502
        %6896 = vmatpush.msra.mxu0 %v501
        %6897 = vmatpush.msra.mxu0 %v500
        %6898 = vmatpush.msra.mxu0 %v499
        %6899 = vmatpush.msra.mxu0 %v498
        %6900 = vmatpush.msra.mxu0 %v497
        %6901 = vmatpush.msra.mxu0 %v496
        %6902 = vmatpush.msra.mxu0 %v495
        %6903 = vmatpush.msra.mxu0 %v494
        %6904 = vmatpush.msra.mxu0 %v493
        %6905 = vmatpush.msra.mxu0 %v492
        %6906 = vmatpush.msra.mxu0 %v491
        %6907 = vmatmul.f32.gmra.mxu0 %v6879
        %v6908 = vpop.f32.mrf.mxu0
        %v6909 = vadd.f32 %v6087, %v6908
        %6910 = vmatmul.f32.gmra.mxu0 %v6880
        %v6911 = vpop.f32.mrf.mxu0
        %v6912 = vadd.f32 %v6087, %v6911
        %6913 = vdwg.mxu0
        %6914 = vmatpush.msra.mxu0 %v522
        %6915 = vmatpush.msra.mxu0 %v521
        %6916 = vmatpush.msra.mxu0 %v520
        %6917 = vmatpush.msra.mxu0 %v519
        %6918 = vmatpush.msra.mxu0 %v518
        %6919 = vmatpush.msra.mxu0 %v517
        %6920 = vmatpush.msra.mxu0 %v516
        %6921 = vmatpush.msra.mxu0 %v515
        %6922 = vmatpush.msra.mxu0 %v514
        %6923 = vmatpush.msra.mxu0 %v513
        %6924 = vmatpush.msra.mxu0 %v512
        %6925 = vmatpush.msra.mxu0 %v511
        %6926 = vmatpush.msra.mxu0 %v510
        %6927 = vmatpush.msra.mxu0 %v509
        %6928 = vmatpush.msra.mxu0 %v508
        %6929 = vmatpush.msra.mxu0 %v507
        %6930 = vmatmul.f32.gmra.mxu0 %v6885
        %v6931 = vpop.f32.mrf.mxu0
        %v6932 = vadd.f32 %v6909, %v6931
        %6933 = vmatmul.f32.gmra.mxu0 %v6886
        %v6934 = vpop.f32.mrf.mxu0
        %v6935 = vadd.f32 %v6912, %v6934
        %6936 = vdwg.mxu0
        %6937 = vmatpush.msra.mxu0 0.0
        %6938 = vmatpush.msra.mxu0 0.0
        %6939 = vmatpush.msra.mxu0 0.0
        %6940 = vmatpush.msra.mxu0 0.0
        %6941 = vmatpush.msra.mxu0 0.0
        %6942 = vmatpush.msra.mxu0 0.0
        %6943 = vmatpush.msra.mxu0 0.0
        %6944 = vmatpush.msra.mxu0 0.0
        %6945 = vmatpush.msra.mxu0 0.0
        %6946 = vmatpush.msra.mxu0 0.0
        %6947 = vmatpush.msra.mxu0 0.0
        %6948 = vmatpush.msra.mxu0 0.0
        %6949 = vmatpush.msra.mxu0 %v526
        %6950 = vmatpush.msra.mxu0 %v525
        %6951 = vmatpush.msra.mxu0 %v524
        %6952 = vmatpush.msra.mxu0 %v523
        %6953 = vmatmul.f32.gmra.mxu0 %v6887
        %v6954 = vpop.f32.mrf.mxu0
        %v6955 = vadd.f32 %v6932, %v6954
        %6956 = vmatmul.f32.gmra.mxu0 %v6889
        %v6957 = vpop.f32.mrf.mxu0
        %v6958 = vadd.f32 %v6935, %v6957
        %6959 = vdwg.mxu0
        %v6960 = vmax.f32 %v6955, 0.0
        %v6961 = vmax.f32 %v6958, 0.0
        %6962 = vrot.lane.b32.xlu0 %v6732, 32
        %v6963 = vpop.permute.xlu0 %6962
        %6964 = vrot.lane.b32.xlu0 %v6731, 32
        %v6965 = vpop.permute.xlu0 %6964
        %6968 = vrot.lane.b32.xlu0 %v6741, 64
        %v6969 = vpop.permute.xlu0 %6968
        %6970 = vrot.lane.b32.xlu0 %v6740, 64
        %v6971 = vpop.permute.xlu0 %6970
        %6974 = vrot.lane.b32.xlu0 %v5833, 96
        %v6975 = vpop.permute.xlu0 %6974
        %6976 = vrot.lane.b32.xlu0 %v5837, 96
        %v6977 = vpop.permute.xlu0 %6976
        %6982 = vrot.lane.b32.xlu0 %v6874, 32
        %v6983 = vpop.permute.xlu0 %6982
        %6984 = vrot.lane.b32.xlu0 %v6873, 32
        %v6985 = vpop.permute.xlu0 %6984
        %6990 = vrot.lane.b32.xlu0 %v5890, 64
        %v6991 = vpop.permute.xlu0 %6990
        %6992 = vrot.lane.b32.xlu0 %v5894, 64
        %v6993 = vpop.permute.xlu0 %6992
        %v6996 = vrot.slane %v5890, 1
        %v6997 = vrot.slane %v5894, 1
        %v6998 = vsel %vm687, %v6996, %v6997
        %6999 = vrot.lane.b32.xlu0 %v6998, 96
        %v7000 = vpop.permute.xlu0 %6999
        %7001 = vrot.lane.b32.xlu0 %v6997, 96
        %v7002 = vpop.permute.xlu0 %7001
        %v7005 = vrot.slane %v5890, 2
        %v7006 = vrot.slane %v5894, 2
        %v7007 = vsel %vm707, %v7005, %v7006
        %v7008 = vsel %vm6071, %v5776, %v6963
        %v7009 = vsel %vm6071, %v5780, %v6965
        %v7010 = vsel %vm6074, %v7008, %v6969
        %v7011 = vsel %vm6074, %v7009, %v6971
        %v7012 = vsel %vm6077, %v7010, %v6975
        %v7013 = vsel %vm6077, %v7011, %v6977
        %v7014 = vsel %vm6071, %v6865, %v6983
        %v7015 = vsel %vm6071, %v6864, %v6985
        %v7016 = vsel %vm6074, %v7014, %v6991
        %v7017 = vsel %vm6074, %v7015, %v6993
        %v7018 = vsel %vm6077, %v7016, %v7000
        %v7019 = vsel %vm6077, %v7017, %v7002
        %v7020 = vsel %vm6071, %v7007, 0
        %v7022 = vsel %vm6071, %v7006, 0
        %7024 = vmatpush.msra.mxu0 %v506
        %7025 = vmatpush.msra.mxu0 %v505
        %7026 = vmatpush.msra.mxu0 %v504
        %7027 = vmatpush.msra.mxu0 %v503
        %7028 = vmatpush.msra.mxu0 %v502
        %7029 = vmatpush.msra.mxu0 %v501
        %7030 = vmatpush.msra.mxu0 %v500
        %7031 = vmatpush.msra.mxu0 %v499
        %7032 = vmatpush.msra.mxu0 %v498
        %7033 = vmatpush.msra.mxu0 %v497
        %7034 = vmatpush.msra.mxu0 %v496
        %7035 = vmatpush.msra.mxu0 %v495
        %7036 = vmatpush.msra.mxu0 %v494
        %7037 = vmatpush.msra.mxu0 %v493
        %7038 = vmatpush.msra.mxu0 %v492
        %7039 = vmatpush.msra.mxu0 %v491
        %7040 = vmatmul.f32.gmra.mxu0 %v7012
        %v7041 = vpop.f32.mrf.mxu0
        %v7042 = vadd.f32 %v6087, %v7041
        %7043 = vmatmul.f32.gmra.mxu0 %v7013
        %v7044 = vpop.f32.mrf.mxu0
        %v7045 = vadd.f32 %v6087, %v7044
        %7046 = vdwg.mxu0
        %7047 = vmatpush.msra.mxu0 %v522
        %7048 = vmatpush.msra.mxu0 %v521
        %7049 = vmatpush.msra.mxu0 %v520
        %7050 = vmatpush.msra.mxu0 %v519
        %7051 = vmatpush.msra.mxu0 %v518
        %7052 = vmatpush.msra.mxu0 %v517
        %7053 = vmatpush.msra.mxu0 %v516
        %7054 = vmatpush.msra.mxu0 %v515
        %7055 = vmatpush.msra.mxu0 %v514
        %7056 = vmatpush.msra.mxu0 %v513
        %7057 = vmatpush.msra.mxu0 %v512
        %7058 = vmatpush.msra.mxu0 %v511
        %7059 = vmatpush.msra.mxu0 %v510
        %7060 = vmatpush.msra.mxu0 %v509
        %7061 = vmatpush.msra.mxu0 %v508
        %7062 = vmatpush.msra.mxu0 %v507
        %7063 = vmatmul.f32.gmra.mxu0 %v7018
        %v7064 = vpop.f32.mrf.mxu0
        %v7065 = vadd.f32 %v7042, %v7064
        %7066 = vmatmul.f32.gmra.mxu0 %v7019
        %v7067 = vpop.f32.mrf.mxu0
        %v7068 = vadd.f32 %v7045, %v7067
        %7069 = vdwg.mxu0
        %7070 = vmatpush.msra.mxu0 0.0
        %7071 = vmatpush.msra.mxu0 0.0
        %7072 = vmatpush.msra.mxu0 0.0
        %7073 = vmatpush.msra.mxu0 0.0
        %7074 = vmatpush.msra.mxu0 0.0
        %7075 = vmatpush.msra.mxu0 0.0
        %7076 = vmatpush.msra.mxu0 0.0
        %7077 = vmatpush.msra.mxu0 0.0
        %7078 = vmatpush.msra.mxu0 0.0
        %7079 = vmatpush.msra.mxu0 0.0
        %7080 = vmatpush.msra.mxu0 0.0
        %7081 = vmatpush.msra.mxu0 0.0
        %7082 = vmatpush.msra.mxu0 %v526
        %7083 = vmatpush.msra.mxu0 %v525
        %7084 = vmatpush.msra.mxu0 %v524
        %7085 = vmatpush.msra.mxu0 %v523
        %7086 = vmatmul.f32.gmra.mxu0 %v7020
        %v7087 = vpop.f32.mrf.mxu0
        %v7088 = vadd.f32 %v7065, %v7087
        %7089 = vmatmul.f32.gmra.mxu0 %v7022
        %v7090 = vpop.f32.mrf.mxu0
        %v7091 = vadd.f32 %v7068, %v7090
        %7092 = vdwg.mxu0
        %v7093 = vmax.f32 %v7088, 0.0
        %v7094 = vmax.f32 %v7091, 0.0
        %7095 = vrot.lane.b32.xlu0 %v6865, 32
        %v7096 = vpop.permute.xlu0 %7095
        %7097 = vrot.lane.b32.xlu0 %v6864, 32
        %v7098 = vpop.permute.xlu0 %7097
        %7101 = vrot.lane.b32.xlu0 %v6874, 64
        %v7102 = vpop.permute.xlu0 %7101
        %7103 = vrot.lane.b32.xlu0 %v6873, 64
        %v7104 = vpop.permute.xlu0 %7103
        %7107 = vrot.lane.b32.xlu0 %v5890, 96
        %v7108 = vpop.permute.xlu0 %7107
        %7109 = vrot.lane.b32.xlu0 %v5894, 96
        %v7110 = vpop.permute.xlu0 %7109
        %7115 = vrot.lane.b32.xlu0 %v7007, 32
        %v7116 = vpop.permute.xlu0 %7115
        %7117 = vrot.lane.b32.xlu0 %v7006, 32
        %v7118 = vpop.permute.xlu0 %7117
        %7123 = vrot.lane.b32.xlu0 %v5947, 64
        %v7124 = vpop.permute.xlu0 %7123
        %7125 = vrot.lane.b32.xlu0 %v5951, 64
        %v7126 = vpop.permute.xlu0 %7125
        %v7129 = vrot.slane %v5947, 1
        %v7130 = vrot.slane %v5951, 1
        %v7131 = vsel %vm687, %v7129, %v7130
        %7132 = vrot.lane.b32.xlu0 %v7131, 96
        %v7133 = vpop.permute.xlu0 %7132
        %7134 = vrot.lane.b32.xlu0 %v7130, 96
        %v7135 = vpop.permute.xlu0 %7134
        %v7138 = vrot.slane %v5947, 2
        %v7139 = vrot.slane %v5951, 2
        %v7140 = vsel %vm707, %v7138, %v7139
        %v7141 = vsel %vm6071, %v5833, %v7096
        %v7142 = vsel %vm6071, %v5837, %v7098
        %v7143 = vsel %vm6074, %v7141, %v7102
        %v7144 = vsel %vm6074, %v7142, %v7104
        %v7145 = vsel %vm6077, %v7143, %v7108
        %v7146 = vsel %vm6077, %v7144, %v7110
        %v7147 = vsel %vm6071, %v6998, %v7116
        %v7148 = vsel %vm6071, %v6997, %v7118
        %v7149 = vsel %vm6074, %v7147, %v7124
        %v7150 = vsel %vm6074, %v7148, %v7126
        %v7151 = vsel %vm6077, %v7149, %v7133
        %v7152 = vsel %vm6077, %v7150, %v7135
        %v7153 = vsel %vm6071, %v7140, 0
        %v7155 = vsel %vm6071, %v7139, 0
        %7157 = vmatpush.msra.mxu0 %v506
        %7158 = vmatpush.msra.mxu0 %v505
        %7159 = vmatpush.msra.mxu0 %v504
        %7160 = vmatpush.msra.mxu0 %v503
        %7161 = vmatpush.msra.mxu0 %v502
        %7162 = vmatpush.msra.mxu0 %v501
        %7163 = vmatpush.msra.mxu0 %v500
        %7164 = vmatpush.msra.mxu0 %v499
        %7165 = vmatpush.msra.mxu0 %v498
        %7166 = vmatpush.msra.mxu0 %v497
        %7167 = vmatpush.msra.mxu0 %v496
        %7168 = vmatpush.msra.mxu0 %v495
        %7169 = vmatpush.msra.mxu0 %v494
        %7170 = vmatpush.msra.mxu0 %v493
        %7171 = vmatpush.msra.mxu0 %v492
        %7172 = vmatpush.msra.mxu0 %v491
        %7173 = vmatmul.f32.gmra.mxu0 %v7145
        %v7174 = vpop.f32.mrf.mxu0
        %v7175 = vadd.f32 %v6087, %v7174
        %7176 = vmatmul.f32.gmra.mxu0 %v7146
        %v7177 = vpop.f32.mrf.mxu0
        %v7178 = vadd.f32 %v6087, %v7177
        %7179 = vdwg.mxu0
        %7180 = vmatpush.msra.mxu0 %v522
        %7181 = vmatpush.msra.mxu0 %v521
        %7182 = vmatpush.msra.mxu0 %v520
        %7183 = vmatpush.msra.mxu0 %v519
        %7184 = vmatpush.msra.mxu0 %v518
        %7185 = vmatpush.msra.mxu0 %v517
        %7186 = vmatpush.msra.mxu0 %v516
        %7187 = vmatpush.msra.mxu0 %v515
        %7188 = vmatpush.msra.mxu0 %v514
        %7189 = vmatpush.msra.mxu0 %v513
        %7190 = vmatpush.msra.mxu0 %v512
        %7191 = vmatpush.msra.mxu0 %v511
        %7192 = vmatpush.msra.mxu0 %v510
        %7193 = vmatpush.msra.mxu0 %v509
        %7194 = vmatpush.msra.mxu0 %v508
        %7195 = vmatpush.msra.mxu0 %v507
        %7196 = vmatmul.f32.gmra.mxu0 %v7151
        %v7197 = vpop.f32.mrf.mxu0
        %v7198 = vadd.f32 %v7175, %v7197
        %7199 = vmatmul.f32.gmra.mxu0 %v7152
        %v7200 = vpop.f32.mrf.mxu0
        %v7201 = vadd.f32 %v7178, %v7200
        %7202 = vdwg.mxu0
        %7203 = vmatpush.msra.mxu0 0.0
        %7204 = vmatpush.msra.mxu0 0.0
        %7205 = vmatpush.msra.mxu0 0.0
        %7206 = vmatpush.msra.mxu0 0.0
        %7207 = vmatpush.msra.mxu0 0.0
        %7208 = vmatpush.msra.mxu0 0.0
        %7209 = vmatpush.msra.mxu0 0.0
        %7210 = vmatpush.msra.mxu0 0.0
        %7211 = vmatpush.msra.mxu0 0.0
        %7212 = vmatpush.msra.mxu0 0.0
        %7213 = vmatpush.msra.mxu0 0.0
        %7214 = vmatpush.msra.mxu0 0.0
        %7215 = vmatpush.msra.mxu0 %v526
        %7216 = vmatpush.msra.mxu0 %v525
        %7217 = vmatpush.msra.mxu0 %v524
        %7218 = vmatpush.msra.mxu0 %v523
        %7219 = vmatmul.f32.gmra.mxu0 %v7153
        %v7220 = vpop.f32.mrf.mxu0
        %v7221 = vadd.f32 %v7198, %v7220
        %7222 = vmatmul.f32.gmra.mxu0 %v7155
        %v7223 = vpop.f32.mrf.mxu0
        %v7224 = vadd.f32 %v7201, %v7223
        %7225 = vdwg.mxu0
        %v7226 = vmax.f32 %v7221, 0.0
        %v7227 = vmax.f32 %v7224, 0.0
        %7228 = vrot.lane.b32.xlu0 %v6998, 32
        %v7229 = vpop.permute.xlu0 %7228
        %7230 = vrot.lane.b32.xlu0 %v6997, 32
        %v7231 = vpop.permute.xlu0 %7230
        %7234 = vrot.lane.b32.xlu0 %v7007, 64
        %v7235 = vpop.permute.xlu0 %7234
        %7236 = vrot.lane.b32.xlu0 %v7006, 64
        %v7237 = vpop.permute.xlu0 %7236
        %7240 = vrot.lane.b32.xlu0 %v5947, 96
        %v7241 = vpop.permute.xlu0 %7240
        %7242 = vrot.lane.b32.xlu0 %v5951, 96
        %v7243 = vpop.permute.xlu0 %7242
        %7248 = vrot.lane.b32.xlu0 %v7140, 32
        %v7249 = vpop.permute.xlu0 %7248
        %7250 = vrot.lane.b32.xlu0 %v7139, 32
        %v7251 = vpop.permute.xlu0 %7250
        %7256 = vrot.lane.b32.xlu0 %v6004, 64
        %v7257 = vpop.permute.xlu0 %7256
        %7258 = vrot.lane.b32.xlu0 %v6008, 64
        %v7259 = vpop.permute.xlu0 %7258
        %v7262 = vrot.slane %v6004, 1
        %v7263 = vrot.slane %v6008, 1
        %v7264 = vsel %vm687, %v7262, %v7263
        %7265 = vrot.lane.b32.xlu0 %v7264, 96
        %v7266 = vpop.permute.xlu0 %7265
        %7267 = vrot.lane.b32.xlu0 %v7263, 96
        %v7268 = vpop.permute.xlu0 %7267
        %v7271 = vrot.slane %v6004, 2
        %v7272 = vrot.slane %v6008, 2
        %v7273 = vsel %vm707, %v7271, %v7272
        %v7274 = vsel %vm6071, %v5890, %v7229
        %v7275 = vsel %vm6071, %v5894, %v7231
        %v7276 = vsel %vm6074, %v7274, %v7235
        %v7277 = vsel %vm6074, %v7275, %v7237
        %v7278 = vsel %vm6077, %v7276, %v7241
        %v7279 = vsel %vm6077, %v7277, %v7243
        %v7280 = vsel %vm6071, %v7131, %v7249
        %v7281 = vsel %vm6071, %v7130, %v7251
        %v7282 = vsel %vm6074, %v7280, %v7257
        %v7283 = vsel %vm6074, %v7281, %v7259
        %v7284 = vsel %vm6077, %v7282, %v7266
        %v7285 = vsel %vm6077, %v7283, %v7268
        %v7286 = vsel %vm6071, %v7273, 0
        %v7288 = vsel %vm6071, %v7272, 0
        %7290 = vmatpush.msra.mxu0 %v506
        %7291 = vmatpush.msra.mxu0 %v505
        %7292 = vmatpush.msra.mxu0 %v504
        %7293 = vmatpush.msra.mxu0 %v503
        %7294 = vmatpush.msra.mxu0 %v502
        %7295 = vmatpush.msra.mxu0 %v501
        %7296 = vmatpush.msra.mxu0 %v500
        %7297 = vmatpush.msra.mxu0 %v499
        %7298 = vmatpush.msra.mxu0 %v498
        %7299 = vmatpush.msra.mxu0 %v497
        %7300 = vmatpush.msra.mxu0 %v496
        %7301 = vmatpush.msra.mxu0 %v495
        %7302 = vmatpush.msra.mxu0 %v494
        %7303 = vmatpush.msra.mxu0 %v493
        %7304 = vmatpush.msra.mxu0 %v492
        %7305 = vmatpush.msra.mxu0 %v491
        %7306 = vmatmul.f32.gmra.mxu0 %v7278
        %v7307 = vpop.f32.mrf.mxu0
        %v7308 = vadd.f32 %v6087, %v7307
        %7309 = vmatmul.f32.gmra.mxu0 %v7279
        %v7310 = vpop.f32.mrf.mxu0
        %v7311 = vadd.f32 %v6087, %v7310
        %7312 = vdwg.mxu0
        %7313 = vmatpush.msra.mxu0 %v522
        %7314 = vmatpush.msra.mxu0 %v521
        %7315 = vmatpush.msra.mxu0 %v520
        %7316 = vmatpush.msra.mxu0 %v519
        %7317 = vmatpush.msra.mxu0 %v518
        %7318 = vmatpush.msra.mxu0 %v517
        %7319 = vmatpush.msra.mxu0 %v516
        %7320 = vmatpush.msra.mxu0 %v515
        %7321 = vmatpush.msra.mxu0 %v514
        %7322 = vmatpush.msra.mxu0 %v513
        %7323 = vmatpush.msra.mxu0 %v512
        %7324 = vmatpush.msra.mxu0 %v511
        %7325 = vmatpush.msra.mxu0 %v510
        %7326 = vmatpush.msra.mxu0 %v509
        %7327 = vmatpush.msra.mxu0 %v508
        %7328 = vmatpush.msra.mxu0 %v507
        %7329 = vmatmul.f32.gmra.mxu0 %v7284
        %v7330 = vpop.f32.mrf.mxu0
        %v7331 = vadd.f32 %v7308, %v7330
        %7332 = vmatmul.f32.gmra.mxu0 %v7285
        %v7333 = vpop.f32.mrf.mxu0
        %v7334 = vadd.f32 %v7311, %v7333
        %7335 = vdwg.mxu0
        %7336 = vmatpush.msra.mxu0 0.0
        %7337 = vmatpush.msra.mxu0 0.0
        %7338 = vmatpush.msra.mxu0 0.0
        %7339 = vmatpush.msra.mxu0 0.0
        %7340 = vmatpush.msra.mxu0 0.0
        %7341 = vmatpush.msra.mxu0 0.0
        %7342 = vmatpush.msra.mxu0 0.0
        %7343 = vmatpush.msra.mxu0 0.0
        %7344 = vmatpush.msra.mxu0 0.0
        %7345 = vmatpush.msra.mxu0 0.0
        %7346 = vmatpush.msra.mxu0 0.0
        %7347 = vmatpush.msra.mxu0 0.0
        %7348 = vmatpush.msra.mxu0 %v526
        %7349 = vmatpush.msra.mxu0 %v525
        %7350 = vmatpush.msra.mxu0 %v524
        %7351 = vmatpush.msra.mxu0 %v523
        %7352 = vmatmul.f32.gmra.mxu0 %v7286
        %v7353 = vpop.f32.mrf.mxu0
        %v7354 = vadd.f32 %v7331, %v7353
        %7355 = vmatmul.f32.gmra.mxu0 %v7288
        %v7356 = vpop.f32.mrf.mxu0
        %v7357 = vadd.f32 %v7334, %v7356
        %7358 = vdwg.mxu0
        %v7359 = vmax.f32 %v7354, 0.0
        %v7360 = vmax.f32 %v7357, 0.0
        %v7361 = vmax.f32 %v6162, %v6295
        %v7362 = vmax.f32 %v6163, %v6296
        %v7364 = vrot.slane %v7361, 1
        %v7366 = vmax.f32 %v7361, %v7364
        %v7368 = vrot.slane %v7362, 1
        %v7370 = vmax.f32 %v7362, %v7368
        %v7372 = vrot.slane %v7366, 1
        %v7374 = vrot.slane %v7366, 2
        %v7376 = vrot.slane %v7366, 3
        %v7379 = vrot.slane %v7370, 4
        %v7381 = vsel %vm891, %v7366, %v7372
        %v7382 = vsel %vm5368, %v7381, %v7374
        %v7383 = vsel %vm5370, %v7382, %v7376
        %v7384 = vsel %vm5372, %v7383, %v7379
        %v7385 = vmax.f32 %v6428, %v6561
        %v7386 = vmax.f32 %v6429, %v6562
        %v7388 = vrot.slane %v7385, 1
        %v7390 = vmax.f32 %v7385, %v7388
        %v7392 = vrot.slane %v7386, 1
        %v7394 = vmax.f32 %v7386, %v7392
        %v7396 = vrot.slane %v7390, 1
        %v7398 = vrot.slane %v7390, 2
        %v7400 = vrot.slane %v7390, 3
        %v7403 = vrot.slane %v7394, 4
        %v7405 = vsel %vm891, %v7390, %v7396
        %v7406 = vsel %vm5368, %v7405, %v7398
        %v7407 = vsel %vm5370, %v7406, %v7400
        %v7408 = vsel %vm5372, %v7407, %v7403
        %v7409 = vmax.f32 %v6694, %v6827
        %v7410 = vmax.f32 %v6695, %v6828
        %v7412 = vrot.slane %v7409, 1
        %v7414 = vmax.f32 %v7409, %v7412
        %v7416 = vrot.slane %v7410, 1
        %v7418 = vmax.f32 %v7410, %v7416
        %v7420 = vrot.slane %v7414, 1
        %v7422 = vrot.slane %v7414, 2
        %v7424 = vrot.slane %v7414, 3
        %v7427 = vrot.slane %v7418, 4
        %v7429 = vsel %vm891, %v7414, %v7420
        %v7430 = vsel %vm5368, %v7429, %v7422
        %v7431 = vsel %vm5370, %v7430, %v7424
        %v7432 = vsel %vm5372, %v7431, %v7427
        %v7433 = vmax.f32 %v6960, %v7093
        %v7434 = vmax.f32 %v6961, %v7094
        %v7436 = vrot.slane %v7433, 1
        %v7438 = vmax.f32 %v7433, %v7436
        %v7440 = vrot.slane %v7434, 1
        %v7442 = vmax.f32 %v7434, %v7440
        %v7444 = vrot.slane %v7438, 1
        %v7446 = vrot.slane %v7438, 2
        %v7448 = vrot.slane %v7438, 3
        %v7451 = vrot.slane %v7442, 4
        %v7453 = vsel %vm891, %v7438, %v7444
        %v7454 = vsel %vm5368, %v7453, %v7446
        %v7455 = vsel %vm5370, %v7454, %v7448
        %v7456 = vsel %vm5372, %v7455, %v7451
        %v7457 = vmax.f32 %v7226, %v7359
        %v7458 = vmax.f32 %v7227, %v7360
        %v7460 = vrot.slane %v7457, 1
        %v7462 = vmax.f32 %v7457, %v7460
        %v7464 = vrot.slane %v7458, 1
        %v7466 = vmax.f32 %v7458, %v7464
        %v7468 = vrot.slane %v7462, 1
        %v7470 = vrot.slane %v7462, 2
        %v7472 = vrot.slane %v7462, 3
        %v7475 = vrot.slane %v7466, 4
        %v7477 = vsel %vm891, %v7462, %v7468
        %v7478 = vsel %vm5368, %v7477, %v7470
        %v7479 = vsel %vm5370, %v7478, %v7472
        %v7480 = vsel %vm5372, %v7479, %v7475
        %v7482 = vrot.slane %v7384, 1
        %7483 = vrot.lane.b32.xlu0 %v7482, 64
        %v7484 = vpop.permute.xlu0 %7483
        %v7486 = vrot.slane %v7384, 2
        %7489 = vrot.lane.b32.xlu0 %v7408, 64
        %v7490 = vpop.permute.xlu0 %7489
        %v7492 = vrot.slane %v7408, 1
        %v7494 = vrot.slane %v7408, 2
        %7495 = vrot.lane.b32.xlu0 %v7494, 64
        %v7496 = vpop.permute.xlu0 %7495
        %v7499 = vrot.slane %v7432, 1
        %7500 = vrot.lane.b32.xlu0 %v7499, 64
        %v7501 = vpop.permute.xlu0 %7500
        %v7503 = vrot.slane %v7432, 2
        %v7504 = vsel %vm6074, %v7384, %v7484
        %v7505 = vsel %vm6074, %v7486, %v7490
        %v7506 = vsel %vm6074, %v7492, %v7496
        %v7507 = vsel %vm6074, %v7432, %v7501
        %v7509 = vperm.slane %v600, 0
        %v7511 = vsel %vm6074, %v7503, 0
        %7513 = vmatpush.msra.mxu0 %v543
        %7514 = vmatpush.msra.mxu0 %v542
        %7515 = vmatpush.msra.mxu0 %v541
        %7516 = vmatpush.msra.mxu0 %v540
        %7517 = vmatpush.msra.mxu0 %v539
        %7518 = vmatpush.msra.mxu0 %v538
        %7519 = vmatpush.msra.mxu0 %v537
        %7520 = vmatpush.msra.mxu0 %v536
        %7521 = vmatpush.msra.mxu0 %v535
        %7522 = vmatpush.msra.mxu0 %v534
        %7523 = vmatpush.msra.mxu0 %v533
        %7524 = vmatpush.msra.mxu0 %v532
        %7525 = vmatpush.msra.mxu0 %v531
        %7526 = vmatpush.msra.mxu0 %v530
        %7527 = vmatpush.msra.mxu0 %v529
        %7528 = vmatpush.msra.mxu0 %v528
        %7529 = vmatmul.f32.gmra.mxu0 %v7504
        %v7530 = vpop.f32.mrf.mxu0
        %v7531 = vadd.f32 %v7509, %v7530
        %7532 = vdwg.mxu0
        %7533 = vmatpush.msra.mxu0 %v559
        %7534 = vmatpush.msra.mxu0 %v558
        %7535 = vmatpush.msra.mxu0 %v557
        %7536 = vmatpush.msra.mxu0 %v556
        %7537 = vmatpush.msra.mxu0 %v555
        %7538 = vmatpush.msra.mxu0 %v554
        %7539 = vmatpush.msra.mxu0 %v553
        %7540 = vmatpush.msra.mxu0 %v552
        %7541 = vmatpush.msra.mxu0 %v551
        %7542 = vmatpush.msra.mxu0 %v550
        %7543 = vmatpush.msra.mxu0 %v549
        %7544 = vmatpush.msra.mxu0 %v548
        %7545 = vmatpush.msra.mxu0 %v547
        %7546 = vmatpush.msra.mxu0 %v546
        %7547 = vmatpush.msra.mxu0 %v545
        %7548 = vmatpush.msra.mxu0 %v544
        %7549 = vmatmul.f32.gmra.mxu0 %v7505
        %v7550 = vpop.f32.mrf.mxu0
        %v7551 = vadd.f32 %v7531, %v7550
        %7552 = vdwg.mxu0
        %7553 = vmatpush.msra.mxu0 %v575
        %7554 = vmatpush.msra.mxu0 %v574
        %7555 = vmatpush.msra.mxu0 %v573
        %7556 = vmatpush.msra.mxu0 %v572
        %7557 = vmatpush.msra.mxu0 %v571
        %7558 = vmatpush.msra.mxu0 %v570
        %7559 = vmatpush.msra.mxu0 %v569
        %7560 = vmatpush.msra.mxu0 %v568
        %7561 = vmatpush.msra.mxu0 %v567
        %7562 = vmatpush.msra.mxu0 %v566
        %7563 = vmatpush.msra.mxu0 %v565
        %7564 = vmatpush.msra.mxu0 %v564
        %7565 = vmatpush.msra.mxu0 %v563
        %7566 = vmatpush.msra.mxu0 %v562
        %7567 = vmatpush.msra.mxu0 %v561
        %7568 = vmatpush.msra.mxu0 %v560
        %7569 = vmatmul.f32.gmra.mxu0 %v7506
        %v7570 = vpop.f32.mrf.mxu0
        %v7571 = vadd.f32 %v7551, %v7570
        %7572 = vdwg.mxu0
        %7573 = vmatpush.msra.mxu0 %v591
        %7574 = vmatpush.msra.mxu0 %v590
        %7575 = vmatpush.msra.mxu0 %v589
        %7576 = vmatpush.msra.mxu0 %v588
        %7577 = vmatpush.msra.mxu0 %v587
        %7578 = vmatpush.msra.mxu0 %v586
        %7579 = vmatpush.msra.mxu0 %v585
        %7580 = vmatpush.msra.mxu0 %v584
        %7581 = vmatpush.msra.mxu0 %v583
        %7582 = vmatpush.msra.mxu0 %v582
        %7583 = vmatpush.msra.mxu0 %v581
        %7584 = vmatpush.msra.mxu0 %v580
        %7585 = vmatpush.msra.mxu0 %v579
        %7586 = vmatpush.msra.mxu0 %v578
        %7587 = vmatpush.msra.mxu0 %v577
        %7588 = vmatpush.msra.mxu0 %v576
        %7589 = vmatmul.f32.gmra.mxu0 %v7507
        %v7590 = vpop.f32.mrf.mxu0
        %v7591 = vadd.f32 %v7571, %v7590
        %7592 = vdwg.mxu0
        %7593 = vmatpush.msra.mxu0 0.0
        %7594 = vmatpush.msra.mxu0 0.0
        %7595 = vmatpush.msra.mxu0 0.0
        %7596 = vmatpush.msra.mxu0 0.0
        %7597 = vmatpush.msra.mxu0 0.0
        %7598 = vmatpush.msra.mxu0 0.0
        %7599 = vmatpush.msra.mxu0 0.0
        %7600 = vmatpush.msra.mxu0 0.0
        %7601 = vmatpush.msra.mxu0 %v599
        %7602 = vmatpush.msra.mxu0 %v598
        %7603 = vmatpush.msra.mxu0 %v597
        %7604 = vmatpush.msra.mxu0 %v596
        %7605 = vmatpush.msra.mxu0 %v595
        %7606 = vmatpush.msra.mxu0 %v594
        %7607 = vmatpush.msra.mxu0 %v593
        %7608 = vmatpush.msra.mxu0 %v592
        %7609 = vmatmul.f32.gmra.mxu0 %v7511
        %v7610 = vpop.f32.mrf.mxu0
        %v7611 = vadd.f32 %v7591, %v7610
        %7612 = vdwg.mxu0
        %v7613 = vmax.f32 %v7611, 0.0
        %7614 = vrot.lane.b32.xlu0 %v7492, 64
        %v7615 = vpop.permute.xlu0 %7614
        %7618 = vrot.lane.b32.xlu0 %v7432, 64
        %v7619 = vpop.permute.xlu0 %7618
        %7622 = vrot.lane.b32.xlu0 %v7503, 64
        %v7623 = vpop.permute.xlu0 %7622
        %v7626 = vrot.slane %v7456, 1
        %7627 = vrot.lane.b32.xlu0 %v7626, 64
        %v7628 = vpop.permute.xlu0 %7627
        %v7630 = vrot.slane %v7456, 2
        %v7631 = vsel %vm6074, %v7408, %v7615
        %v7632 = vsel %vm6074, %v7494, %v7619
        %v7633 = vsel %vm6074, %v7499, %v7623
        %v7634 = vsel %vm6074, %v7456, %v7628
        %v7635 = vsel %vm6074, %v7630, 0
        %7637 = vmatpush.msra.mxu0 %v543
        %7638 = vmatpush.msra.mxu0 %v542
        %7639 = vmatpush.msra.mxu0 %v541
        %7640 = vmatpush.msra.mxu0 %v540
        %7641 = vmatpush.msra.mxu0 %v539
        %7642 = vmatpush.msra.mxu0 %v538
        %7643 = vmatpush.msra.mxu0 %v537
        %7644 = vmatpush.msra.mxu0 %v536
        %7645 = vmatpush.msra.mxu0 %v535
        %7646 = vmatpush.msra.mxu0 %v534
        %7647 = vmatpush.msra.mxu0 %v533
        %7648 = vmatpush.msra.mxu0 %v532
        %7649 = vmatpush.msra.mxu0 %v531
        %7650 = vmatpush.msra.mxu0 %v530
        %7651 = vmatpush.msra.mxu0 %v529
        %7652 = vmatpush.msra.mxu0 %v528
        %7653 = vmatmul.f32.gmra.mxu0 %v7631
        %v7654 = vpop.f32.mrf.mxu0
        %v7655 = vadd.f32 %v7509, %v7654
        %7656 = vdwg.mxu0
        %7657 = vmatpush.msra.mxu0 %v559
        %7658 = vmatpush.msra.mxu0 %v558
        %7659 = vmatpush.msra.mxu0 %v557
        %7660 = vmatpush.msra.mxu0 %v556
        %7661 = vmatpush.msra.mxu0 %v555
        %7662 = vmatpush.msra.mxu0 %v554
        %7663 = vmatpush.msra.mxu0 %v553
        %7664 = vmatpush.msra.mxu0 %v552
        %7665 = vmatpush.msra.mxu0 %v551
        %7666 = vmatpush.msra.mxu0 %v550
        %7667 = vmatpush.msra.mxu0 %v549
        %7668 = vmatpush.msra.mxu0 %v548
        %7669 = vmatpush.msra.mxu0 %v547
        %7670 = vmatpush.msra.mxu0 %v546
        %7671 = vmatpush.msra.mxu0 %v545
        %7672 = vmatpush.msra.mxu0 %v544
        %7673 = vmatmul.f32.gmra.mxu0 %v7632
        %v7674 = vpop.f32.mrf.mxu0
        %v7675 = vadd.f32 %v7655, %v7674
        %7676 = vdwg.mxu0
        %7677 = vmatpush.msra.mxu0 %v575
        %7678 = vmatpush.msra.mxu0 %v574
        %7679 = vmatpush.msra.mxu0 %v573
        %7680 = vmatpush.msra.mxu0 %v572
        %7681 = vmatpush.msra.mxu0 %v571
        %7682 = vmatpush.msra.mxu0 %v570
        %7683 = vmatpush.msra.mxu0 %v569
        %7684 = vmatpush.msra.mxu0 %v568
        %7685 = vmatpush.msra.mxu0 %v567
        %7686 = vmatpush.msra.mxu0 %v566
        %7687 = vmatpush.msra.mxu0 %v565
        %7688 = vmatpush.msra.mxu0 %v564
        %7689 = vmatpush.msra.mxu0 %v563
        %7690 = vmatpush.msra.mxu0 %v562
        %7691 = vmatpush.msra.mxu0 %v561
        %7692 = vmatpush.msra.mxu0 %v560
        %7693 = vmatmul.f32.gmra.mxu0 %v7633
        %v7694 = vpop.f32.mrf.mxu0
        %v7695 = vadd.f32 %v7675, %v7694
        %7696 = vdwg.mxu0
        %7697 = vmatpush.msra.mxu0 %v591
        %7698 = vmatpush.msra.mxu0 %v590
        %7699 = vmatpush.msra.mxu0 %v589
        %7700 = vmatpush.msra.mxu0 %v588
        %7701 = vmatpush.msra.mxu0 %v587
        %7702 = vmatpush.msra.mxu0 %v586
        %7703 = vmatpush.msra.mxu0 %v585
        %7704 = vmatpush.msra.mxu0 %v584
        %7705 = vmatpush.msra.mxu0 %v583
        %7706 = vmatpush.msra.mxu0 %v582
        %7707 = vmatpush.msra.mxu0 %v581
        %7708 = vmatpush.msra.mxu0 %v580
        %7709 = vmatpush.msra.mxu0 %v579
        %7710 = vmatpush.msra.mxu0 %v578
        %7711 = vmatpush.msra.mxu0 %v577
        %7712 = vmatpush.msra.mxu0 %v576
        %7713 = vmatmul.f32.gmra.mxu0 %v7634
        %v7714 = vpop.f32.mrf.mxu0
        %v7715 = vadd.f32 %v7695, %v7714
        %7716 = vdwg.mxu0
        %7717 = vmatpush.msra.mxu0 0.0
        %7718 = vmatpush.msra.mxu0 0.0
        %7719 = vmatpush.msra.mxu0 0.0
        %7720 = vmatpush.msra.mxu0 0.0
        %7721 = vmatpush.msra.mxu0 0.0
        %7722 = vmatpush.msra.mxu0 0.0
        %7723 = vmatpush.msra.mxu0 0.0
        %7724 = vmatpush.msra.mxu0 0.0
        %7725 = vmatpush.msra.mxu0 %v599
        %7726 = vmatpush.msra.mxu0 %v598
        %7727 = vmatpush.msra.mxu0 %v597
        %7728 = vmatpush.msra.mxu0 %v596
        %7729 = vmatpush.msra.mxu0 %v595
        %7730 = vmatpush.msra.mxu0 %v594
        %7731 = vmatpush.msra.mxu0 %v593
        %7732 = vmatpush.msra.mxu0 %v592
        %7733 = vmatmul.f32.gmra.mxu0 %v7635
        %v7734 = vpop.f32.mrf.mxu0
        %v7735 = vadd.f32 %v7715, %v7734
        %7736 = vdwg.mxu0
        %v7737 = vmax.f32 %v7735, 0.0
        %7739 = vrot.lane.b32.xlu0 %v7456, 64
        %v7740 = vpop.permute.xlu0 %7739
        %7743 = vrot.lane.b32.xlu0 %v7630, 64
        %v7744 = vpop.permute.xlu0 %7743
        %v7747 = vrot.slane %v7480, 1
        %7748 = vrot.lane.b32.xlu0 %v7747, 64
        %v7749 = vpop.permute.xlu0 %7748
        %v7751 = vrot.slane %v7480, 2
        %v7752 = vsel %vm6074, %v7503, %v7740
        %v7753 = vsel %vm6074, %v7626, %v7744
        %v7754 = vsel %vm6074, %v7480, %v7749
        %v7755 = vsel %vm6074, %v7751, 0
        %7757 = vmatpush.msra.mxu0 %v543
        %7758 = vmatpush.msra.mxu0 %v542
        %7759 = vmatpush.msra.mxu0 %v541
        %7760 = vmatpush.msra.mxu0 %v540
        %7761 = vmatpush.msra.mxu0 %v539
        %7762 = vmatpush.msra.mxu0 %v538
        %7763 = vmatpush.msra.mxu0 %v537
        %7764 = vmatpush.msra.mxu0 %v536
        %7765 = vmatpush.msra.mxu0 %v535
        %7766 = vmatpush.msra.mxu0 %v534
        %7767 = vmatpush.msra.mxu0 %v533
        %7768 = vmatpush.msra.mxu0 %v532
        %7769 = vmatpush.msra.mxu0 %v531
        %7770 = vmatpush.msra.mxu0 %v530
        %7771 = vmatpush.msra.mxu0 %v529
        %7772 = vmatpush.msra.mxu0 %v528
        %7773 = vmatmul.f32.gmra.mxu0 %v7507
        %v7774 = vpop.f32.mrf.mxu0
        %v7775 = vadd.f32 %v7509, %v7774
        %7776 = vdwg.mxu0
        %7777 = vmatpush.msra.mxu0 %v559
        %7778 = vmatpush.msra.mxu0 %v558
        %7779 = vmatpush.msra.mxu0 %v557
        %7780 = vmatpush.msra.mxu0 %v556
        %7781 = vmatpush.msra.mxu0 %v555
        %7782 = vmatpush.msra.mxu0 %v554
        %7783 = vmatpush.msra.mxu0 %v553
        %7784 = vmatpush.msra.mxu0 %v552
        %7785 = vmatpush.msra.mxu0 %v551
        %7786 = vmatpush.msra.mxu0 %v550
        %7787 = vmatpush.msra.mxu0 %v549
        %7788 = vmatpush.msra.mxu0 %v548
        %7789 = vmatpush.msra.mxu0 %v547
        %7790 = vmatpush.msra.mxu0 %v546
        %7791 = vmatpush.msra.mxu0 %v545
        %7792 = vmatpush.msra.mxu0 %v544
        %7793 = vmatmul.f32.gmra.mxu0 %v7752
        %v7794 = vpop.f32.mrf.mxu0
        %v7795 = vadd.f32 %v7775, %v7794
        %7796 = vdwg.mxu0
        %7797 = vmatpush.msra.mxu0 %v575
        %7798 = vmatpush.msra.mxu0 %v574
        %7799 = vmatpush.msra.mxu0 %v573
        %7800 = vmatpush.msra.mxu0 %v572
        %7801 = vmatpush.msra.mxu0 %v571
        %7802 = vmatpush.msra.mxu0 %v570
        %7803 = vmatpush.msra.mxu0 %v569
        %7804 = vmatpush.msra.mxu0 %v568
        %7805 = vmatpush.msra.mxu0 %v567
        %7806 = vmatpush.msra.mxu0 %v566
        %7807 = vmatpush.msra.mxu0 %v565
        %7808 = vmatpush.msra.mxu0 %v564
        %7809 = vmatpush.msra.mxu0 %v563
        %7810 = vmatpush.msra.mxu0 %v562
        %7811 = vmatpush.msra.mxu0 %v561
        %7812 = vmatpush.msra.mxu0 %v560
        %7813 = vmatmul.f32.gmra.mxu0 %v7753
        %v7814 = vpop.f32.mrf.mxu0
        %v7815 = vadd.f32 %v7795, %v7814
        %7816 = vdwg.mxu0
        %7817 = vmatpush.msra.mxu0 %v591
        %7818 = vmatpush.msra.mxu0 %v590
        %7819 = vmatpush.msra.mxu0 %v589
        %7820 = vmatpush.msra.mxu0 %v588
        %7821 = vmatpush.msra.mxu0 %v587
        %7822 = vmatpush.msra.mxu0 %v586
        %7823 = vmatpush.msra.mxu0 %v585
        %7824 = vmatpush.msra.mxu0 %v584
        %7825 = vmatpush.msra.mxu0 %v583
        %7826 = vmatpush.msra.mxu0 %v582
        %7827 = vmatpush.msra.mxu0 %v581
        %7828 = vmatpush.msra.mxu0 %v580
        %7829 = vmatpush.msra.mxu0 %v579
        %7830 = vmatpush.msra.mxu0 %v578
        %7831 = vmatpush.msra.mxu0 %v577
        %7832 = vmatpush.msra.mxu0 %v576
        %7833 = vmatmul.f32.gmra.mxu0 %v7754
        %v7834 = vpop.f32.mrf.mxu0
        %v7835 = vadd.f32 %v7815, %v7834
        %7836 = vdwg.mxu0
        %7837 = vmatpush.msra.mxu0 0.0
        %7838 = vmatpush.msra.mxu0 0.0
        %7839 = vmatpush.msra.mxu0 0.0
        %7840 = vmatpush.msra.mxu0 0.0
        %7841 = vmatpush.msra.mxu0 0.0
        %7842 = vmatpush.msra.mxu0 0.0
        %7843 = vmatpush.msra.mxu0 0.0
        %7844 = vmatpush.msra.mxu0 0.0
        %7845 = vmatpush.msra.mxu0 %v599
        %7846 = vmatpush.msra.mxu0 %v598
        %7847 = vmatpush.msra.mxu0 %v597
        %7848 = vmatpush.msra.mxu0 %v596
        %7849 = vmatpush.msra.mxu0 %v595
        %7850 = vmatpush.msra.mxu0 %v594
        %7851 = vmatpush.msra.mxu0 %v593
        %7852 = vmatpush.msra.mxu0 %v592
        %7853 = vmatmul.f32.gmra.mxu0 %v7755
        %v7854 = vpop.f32.mrf.mxu0
        %v7855 = vadd.f32 %v7835, %v7854
        %7856 = vdwg.mxu0
        %v7857 = vmax.f32 %v7855, 0.0
        %v7859 = vrot.slane %v7613, 1
        %7860 = vrot.lane.b32.xlu0 %v7859, 64
        %v7861 = vpop.permute.xlu0 %7860
        %v7863 = vrot.slane %v7613, 2
        %7866 = vrot.lane.b32.xlu0 %v7737, 64
        %v7867 = vpop.permute.xlu0 %7866
        %v7869 = vrot.slane %v7737, 1
        %v7871 = vrot.slane %v7737, 2
        %7872 = vrot.lane.b32.xlu0 %v7871, 64
        %v7873 = vpop.permute.xlu0 %7872
        %v7876 = vrot.slane %v7857, 1
        %7877 = vrot.lane.b32.xlu0 %v7876, 64
        %v7878 = vpop.permute.xlu0 %7877
        %v7880 = vrot.slane %v7857, 2
        %v7881 = vsel %vm6074, %v7613, %v7861
        %v7882 = vsel %vm6074, %v7863, %v7867
        %v7883 = vsel %vm6074, %v7869, %v7873
        %v7884 = vsel %vm6074, %v7857, %v7878
        %v7885 = vsel %vm6074, %v7880, 0
        %7887 = vmatpush.msra.mxu0 %v616
        %7888 = vmatpush.msra.mxu0 %v615
        %7889 = vmatpush.msra.mxu0 %v614
        %7890 = vmatpush.msra.mxu0 %v613
        %7891 = vmatpush.msra.mxu0 %v612
        %7892 = vmatpush.msra.mxu0 %v611
        %7893 = vmatpush.msra.mxu0 %v610
        %7894 = vmatpush.msra.mxu0 %v609
        %7895 = vmatpush.msra.mxu0 %v608
        %7896 = vmatpush.msra.mxu0 %v607
        %7897 = vmatpush.msra.mxu0 %v606
        %7898 = vmatpush.msra.mxu0 %v605
        %7899 = vmatpush.msra.mxu0 %v604
        %7900 = vmatpush.msra.mxu0 %v603
        %7901 = vmatpush.msra.mxu0 %v602
        %7902 = vmatpush.msra.mxu0 %v601
        %7903 = vmatmul.f32.gmra.mxu0 %v7881
        %v7904 = vpop.f32.mrf.mxu0
        %v7905 = vadd.f32 %v673, %v7904
        %7906 = vdwg.mxu0
        %7907 = vmatpush.msra.mxu0 %v632
        %7908 = vmatpush.msra.mxu0 %v631
        %7909 = vmatpush.msra.mxu0 %v630
        %7910 = vmatpush.msra.mxu0 %v629
        %7911 = vmatpush.msra.mxu0 %v628
        %7912 = vmatpush.msra.mxu0 %v627
        %7913 = vmatpush.msra.mxu0 %v626
        %7914 = vmatpush.msra.mxu0 %v625
        %7915 = vmatpush.msra.mxu0 %v624
        %7916 = vmatpush.msra.mxu0 %v623
        %7917 = vmatpush.msra.mxu0 %v622
        %7918 = vmatpush.msra.mxu0 %v621
        %7919 = vmatpush.msra.mxu0 %v620
        %7920 = vmatpush.msra.mxu0 %v619
        %7921 = vmatpush.msra.mxu0 %v618
        %7922 = vmatpush.msra.mxu0 %v617
        %7923 = vmatmul.f32.gmra.mxu0 %v7882
        %v7924 = vpop.f32.mrf.mxu0
        %v7925 = vadd.f32 %v7905, %v7924
        %7926 = vdwg.mxu0
        %7927 = vmatpush.msra.mxu0 %v648
        %7928 = vmatpush.msra.mxu0 %v647
        %7929 = vmatpush.msra.mxu0 %v646
        %7930 = vmatpush.msra.mxu0 %v645
        %7931 = vmatpush.msra.mxu0 %v644
        %7932 = vmatpush.msra.mxu0 %v643
        %7933 = vmatpush.msra.mxu0 %v642
        %7934 = vmatpush.msra.mxu0 %v641
        %7935 = vmatpush.msra.mxu0 %v640
        %7936 = vmatpush.msra.mxu0 %v639
        %7937 = vmatpush.msra.mxu0 %v638
        %7938 = vmatpush.msra.mxu0 %v637
        %7939 = vmatpush.msra.mxu0 %v636
        %7940 = vmatpush.msra.mxu0 %v635
        %7941 = vmatpush.msra.mxu0 %v634
        %7942 = vmatpush.msra.mxu0 %v633
        %7943 = vmatmul.f32.gmra.mxu0 %v7883
        %v7944 = vpop.f32.mrf.mxu0
        %v7945 = vadd.f32 %v7925, %v7944
        %7946 = vdwg.mxu0
        %7947 = vmatpush.msra.mxu0 %v664
        %7948 = vmatpush.msra.mxu0 %v663
        %7949 = vmatpush.msra.mxu0 %v662
        %7950 = vmatpush.msra.mxu0 %v661
        %7951 = vmatpush.msra.mxu0 %v660
        %7952 = vmatpush.msra.mxu0 %v659
        %7953 = vmatpush.msra.mxu0 %v658
        %7954 = vmatpush.msra.mxu0 %v657
        %7955 = vmatpush.msra.mxu0 %v656
        %7956 = vmatpush.msra.mxu0 %v655
        %7957 = vmatpush.msra.mxu0 %v654
        %7958 = vmatpush.msra.mxu0 %v653
        %7959 = vmatpush.msra.mxu0 %v652
        %7960 = vmatpush.msra.mxu0 %v651
        %7961 = vmatpush.msra.mxu0 %v650
        %7962 = vmatpush.msra.mxu0 %v649
        %7963 = vmatmul.f32.gmra.mxu0 %v7884
        %v7964 = vpop.f32.mrf.mxu0
        %v7965 = vadd.f32 %v7945, %v7964
        %7966 = vdwg.mxu0
        %7967 = vmatpush.msra.mxu0 0.0
        %7968 = vmatpush.msra.mxu0 0.0
        %7969 = vmatpush.msra.mxu0 0.0
        %7970 = vmatpush.msra.mxu0 0.0
        %7971 = vmatpush.msra.mxu0 0.0
        %7972 = vmatpush.msra.mxu0 0.0
        %7973 = vmatpush.msra.mxu0 0.0
        %7974 = vmatpush.msra.mxu0 0.0
        %7975 = vmatpush.msra.mxu0 %v672
        %7976 = vmatpush.msra.mxu0 %v671
        %7977 = vmatpush.msra.mxu0 %v670
        %7978 = vmatpush.msra.mxu0 %v669
        %7979 = vmatpush.msra.mxu0 %v668
        %7980 = vmatpush.msra.mxu0 %v667
        %7981 = vmatpush.msra.mxu0 %v666
        %7982 = vmatpush.msra.mxu0 %v665
        %7983 = vmatmul.f32.gmra.mxu0 %v7885
        %v7984 = vpop.f32.mrf.mxu0
        %v7985 = vadd.f32 %v7965, %v7984
        %7986 = vdwg.mxu0
        %v7987 = vmax.f32 %v7985, 0.0
        %v7989 = vsel %vm6074, %v7987, 0
        %7991 = vmatpush.msra.mxu0 0.0
        %7992 = vmatpush.msra.mxu0 0.0
        %7993 = vmatpush.msra.mxu0 0.0
        %7994 = vmatpush.msra.mxu0 0.0
        %7995 = vmatpush.msra.mxu0 0.0
        %7996 = vmatpush.msra.mxu0 0.0
        %7997 = vmatpush.msra.mxu0 0.0
        %7998 = vmatpush.msra.mxu0 0.0
        %7999 = vmatpush.msra.mxu0 %v681
        %8000 = vmatpush.msra.mxu0 %v680
        %8001 = vmatpush.msra.mxu0 %v679
        %8002 = vmatpush.msra.mxu0 %v678
        %8003 = vmatpush.msra.mxu0 %v677
        %8004 = vmatpush.msra.mxu0 %v676
        %8005 = vmatpush.msra.mxu0 %v675
        %8006 = vmatpush.msra.mxu0 %v674
        %8007 = vmatmul.f32.gmra.mxu0 %v7989
        %v8008 = vpop.f32.mrf.mxu0
        %v8009 = vadd.f32 %v682, %v8008
        %8010 = vdwg.mxu0
        %vm8011 = vcmask 73728
        %8012 = vst.msk [vmem:[%s378] sm:$0x1] %vm8011, %v8009
        %s8013 = sand.u32 %s269, 1
        %s8014 = scalar_lea.sflag [#allocation3], %s8013
        %s8015 = sand.u32 %s269, 1
        %s8016 = scalar_lea.vmem [#allocation2], %s8015
        // Predicated region
        $region65: #{mnist_cnn_forward.1} parent=63 // pred_check
          %p8017 = pneg %p279
        $region66: #{mnist_cnn_forward.1} parent=63 // pred_check_branch
          %8019 = sbr.rel (%p8017) target = $region68
        $region67: #{mnist_cnn_forward.1} parent=63 // pred_region
          %8021 = vsyncadd %s8014, 0
          %s8022 = scalar_lea.hbm %s11, %s25
          %s8024 = sshll.u32 %s8016, 4
          %s8025 = int_to_ptr.vmem [resolvable:$true] %s8024
          %s8026 = sshll.u32 %s8022, 4
          %s8027 = int_to_ptr.hbm [resolvable:$true] %s8026
          %8029 = dma.vmem_to_hbm [thread:$0]  %s8025, 16, %s8027, %s8014
        $region68: #{mnist_cnn_forward.1} parent=63 // pred_fallthru
          _
      $region64: #{mnist_cnn_forward.1} parent=5 // pred_fallthru
        _
      %p8030 = scmp.le.s32.totalorder 2, %s20
      // Predicated region
      $region69: #{mnist_cnn_forward.1} parent=5 // pred_check
        %p8031 = pneg %p8030
      $region70: #{mnist_cnn_forward.1} parent=5 // pred_check_branch
        %8033 = sbr.rel (%p8031) target = $region72
      $region71: #{mnist_cnn_forward.1} parent=5 // pred_region
        %s8034 = ssub.s32 %s20, 2
        // Predicated region
        $region73: #{mnist_cnn_forward.1} parent=71 // pred_check
          %p8035 = pneg %p285
        $region74: #{mnist_cnn_forward.1} parent=71 // pred_check_branch
          %8037 = sbr.rel (%p8035) target = $region76
        $region75: #{mnist_cnn_forward.1} parent=71 // pred_region
          %s8038 = sand.u32 %s270, 1
          %s8039 = scalar_lea.sflag [#allocation3], %s8038
          %s8040 = sand.u32 %s270, 1
          %s8041 = scalar_lea.vmem [#allocation2], %s8040
          %8043 = dma.done %s8039, 16
        $region76: #{mnist_cnn_forward.1} parent=71 // pred_fallthru
          _
      $region72: #{mnist_cnn_forward.1} parent=5 // pred_fallthru
        _
    $region6: #{mnist_cnn_forward.1} parent=1 // loop_footer
      %s24 = sadd.s32 1, %s20
    $region7: #{mnist_cnn_forward.1} parent=1 // loop_footer_branch
      %19 = sbr.rel target = $region3
    $region8: #{mnist_cnn_forward.1} parent=1 // loop_exit
      _
    %8044 = vsyncpa [#allocation3], 1
    %s8045 = scalar_lea.sflag [#allocation3], 1
    %8046 = vsyncpa %s8045, 1

</llo_original>
